<compile_context>
chip_gen: v5e
topology: v5e:2x2
jax: 0.10.0
libtpu: 0.0.40
codegen_flags: <defaults>
</compile_context>

<pallas_src>
import functools

import numpy as np
import jax
import jax.numpy as jnp
from jax.experimental import pallas as pl
from jax.experimental.pallas import tpu as pltpu


# ----------------------------------------------------------------------------
# helpers (mirror torchvision semantics)
# ----------------------------------------------------------------------------
def make_divisible(v, divisor=8, min_value=None):
    if min_value is None:
        min_value = divisor
    new_v = max(min_value, int(v + divisor / 2) // divisor * divisor)
    if new_v < 0.9 * v:
        new_v += divisor
    return new_v


# ----------------------------------------------------------------------------
# prepare-time construction of the R/K conv factors and block-diagonal weights
# ----------------------------------------------------------------------------
def _rk_conv3x3(batch, h, w, cin, cout, stride, wk):
    """R/K factors so that  sum_dy R[dy] @ X_pad @ K[dy]  equals the padded-layout
    output of a 3x3 / pad-1 / stride-`stride` cross-correlation with weights
    wk (3,3,cin,cout).  Input layout (batch*(h+2), (w+2)*cin), output layout
    (batch*(ho+2), (wo+2)*cout); both have an exactly-zero border."""
    ho = (h - 1) // stride + 1
    wo = (w - 1) // stride + 1
    R = np.zeros((3, batch * (ho + 2), batch * (h + 2)), np.float32)
    for dy in range(3):
        for n in range(batch):
            for r in range(ho):
                R[dy, n * (ho + 2) + 1 + r, n * (h + 2) + r * stride + dy] = 1.0
    K = np.zeros((3, (w + 2) * cin, (wo + 2) * cout), np.float32)
    for dy in range(3):
        for dx in range(3):
            for c in range(wo):
                li = (c * stride + dx) * cin
                lo = (1 + c) * cout
                K[dy, li:li + cin, lo:lo + cout] += wk[dy, dx]
    return R, K


def _blockdiag_1x1(wp, w1x1):
    """(wp*cin, wp*cout) block-diagonal weight for a 1x1 conv in (rows, W*C) layout."""
    return np.kron(np.eye(wp, dtype=np.float32), np.asarray(w1x1, np.float32))


# ----------------------------------------------------------------------------
# the single fused Pallas kernel
# ----------------------------------------------------------------------------
def _network_kernel(*refs, plan):
    """Whole-network forward on one row-slab; grid=(1,), everything VMEM-resident."""
    out_ref = refs[-1]
    it = iter(refs[:-1])
    nxt = lambda: next(it)
    f32 = jnp.float32

    def mm(a, b):  # bf16 MXU matmul (weights pre-cast to bf16), f32 accumulation
        return jnp.dot(a.astype(jnp.bfloat16), b.astype(jnp.bfloat16),
                       preferred_element_type=f32)

    def conv3x3(x, r_ref, k_ref):
        # 3x3 conv (pad 1; stride/padding/BN-scale folded into R/K):
        #   sum_dy  R[dy] @ (X @ K[dy])
        xb = x.astype(jnp.bfloat16)
        acc = None
        for dy in range(3):
            z = jnp.dot(xb, k_ref[dy], preferred_element_type=f32)      # lane-space weights
            t = jnp.dot(r_ref[dy], z, preferred_element_type=f32)       # 0/1 row selection
            acc = t if acc is None else acc + t
        return acc

    x = nxt()[...]                      # padded-layout network input, f32
    dev = nxt()[...]                    # (N, embed_dim) device embeddings, f32

    # ---- stem: Conv3x3/s2 + BN + ReLU, twice ----
    for _ in range(plan['n_stem']):
        r_ref, k_ref = nxt(), nxt()
        x = jnp.maximum(conv3x3(x, r_ref, k_ref), 0.0)

    # ---- inverted-residual blocks ----
    for kind in plan['blocks']:
        we_ref, rd_ref, kd_ref, wp_ref = nxt(), nxt(), nxt(), nxt()
        ka_ref = nxt() if kind == 'avgpool' else None
        e = jnp.maximum(mm(x, we_ref[...]), 0.0)               # expand 1x1 + BN + ReLU
        d = jnp.maximum(conv3x3(e, rd_ref, kd_ref), 0.0)       # depthwise 3x3 + BN + ReLU
        p = mm(d, wp_ref[...])                                 # project 1x1 + BN
        if kind == 'identity':
            p = p + x                                          # identity shortcut
        elif kind == 'avgpool':
            p = p + conv3x3(x, rd_ref, ka_ref)                 # AvgPool2d(3, s, 1) shortcut
        x = jnp.maximum(p, 0.0)                                # after-block ReLU

    # ---- head: avg-pool + feature_extractor 1x1 conv + BN + classifier ----
    (ar_ref, fe_ref, feb_ref, w1a_ref, w1b_ref, b1_ref, w2_ref, b2_ref) = (
        nxt(), nxt(), nxt(), nxt(), nxt(), nxt(), nxt(), nxt())
    pooled = jnp.dot(ar_ref[...], x, preferred_element_type=f32)   # spatial mean (rows)
    feat = mm(pooled, fe_ref[...]) + feb_ref[...]                  # (N, 512): pool cols +
    h = mm(feat, w1a_ref[...]) + mm(dev, w1b_ref[...]) + b1_ref[...]   # fe conv + BN folded
    h = jnp.maximum(h, 0.0)                                        # fc1 + ReLU
    out_ref[...] = mm(h, w2_ref[...]) + b2_ref[...]                # fc2 logits


# ----------------------------------------------------------------------------
# parameter construction (deterministic, mirrors Network.__init__)
# ----------------------------------------------------------------------------
def build_params(key, config, embed_dim=32):
    n_classes = config['n_classes']
    in_channels = config['in_channels']
    base_channels = make_divisible(config['base_channels'], 8)
    channels_multiplier = config['channels_multiplier']
    expansion_rate = config['expansion_rate']
    n_blocks = config['n_blocks']
    strides = config['strides']
    n_stages = len(n_blocks)
    channels_per_stage = [base_channels] + [
        make_divisible(base_channels * channels_multiplier ** s, 8)
        for s in range(n_stages)]

    keys = iter(jax.random.split(key, 256))

    def conv_w(kh, kw, cin, cout):           # kaiming_normal_(fan_out)
        std = (2.0 / (cout * kh * kw)) ** 0.5
        return std * jax.random.normal(next(keys), (kh, kw, cin, cout), jnp.float32)

    eps = 1e-5

    def bn(c):  # fresh BatchNorm2d (eval mode): gamma=1, beta=0, mean=0, var=1
        return (jnp.full((c,), 1.0 / (1.0 + eps) ** 0.5, jnp.float32),
                jnp.zeros((c,), jnp.float32))

    params = {}
    c0 = channels_per_stage[0]
    s0, b0 = bn(c0 // 4)
    s1, b1 = bn(c0)
    params['in_c'] = [
        dict(w=conv_w(3, 3, in_channels, c0 // 4), s=s0, b=b0, stride=2),
        dict(w=conv_w(3, 3, c0 // 4, c0), s=s1, b=b1, stride=2),
    ]

    blocks = []
    block_count = 0
    for stage_id in range(n_stages):
        cin = channels_per_stage[stage_id]
        cout = channels_per_stage[stage_id + 1]
        for _ in range(n_blocks[stage_id]):
            block_count += 1
            bname = f'b{block_count}'
            stride = tuple(strides[bname]) if bname in strides else (1, 1)
            cexp = make_divisible(cin * expansion_rate, 8)
            es, eb = bn(cexp)
            ds, db = bn(cexp)
            ps, pb = bn(cout)
            dw_std = (2.0 / (cexp * 9)) ** 0.5   # torch fan_out for (cexp,1,3,3)
            dw_w = dw_std * jax.random.normal(next(keys), (3, 3, cexp), jnp.float32)
            blocks.append(dict(
                exp_w=conv_w(1, 1, cin, cexp).reshape(cin, cexp), exp_s=es, exp_b=eb,
                dw_w=dw_w, dw_s=ds, dw_b=db,
                proj_w=conv_w(1, 1, cexp, cout).reshape(cexp, cout), proj_s=ps, proj_b=pb,
                stride=stride, use_shortcut=(cin == cout)))
            cin = cout
    params['blocks'] = blocks

    clast = channels_per_stage[-1]
    fs, fb = bn(512)
    params['fe_w'] = conv_w(1, 1, clast, 512).reshape(clast, 512)
    params['fe_s'] = fs
    params['fe_b'] = fb
    params['embed'] = jax.random.normal(next(keys), (9, embed_dim), jnp.float32)
    params['fc1_w'] = 0.01 * jax.random.normal(next(keys), (512 + embed_dim, 128), jnp.float32)
    params['fc1_b'] = jnp.zeros((128,), jnp.float32)
    params['fc2_w'] = 0.01 * jax.random.normal(next(keys), (128, n_classes), jnp.float32)
    params['fc2_b'] = jnp.zeros((n_classes,), jnp.float32)
    return params


# ----------------------------------------------------------------------------
# fold all parameters into the kernel operand list (done once, outside jit)
# ----------------------------------------------------------------------------
def prepare(params, batch, height, width):
    bf16 = jnp.bfloat16

    def npf(a):
        return np.asarray(a, np.float32)

    weights = []
    plan_blocks = []
    cur_h, cur_w = height, width

    # --- stem ---
    for layer in params['in_c']:
        wk = npf(layer['w']) * npf(layer['s'])[None, None, None, :]     # fold BN scale
        cin, cout = wk.shape[2], wk.shape[3]
        R, K = _rk_conv3x3(batch, cur_h, cur_w, cin, cout, layer['stride'], wk)
        weights += [jnp.asarray(R, jnp.float32), jnp.asarray(K, bf16)]
        cur_h = (cur_h - 1) // layer['stride'] + 1
        cur_w = (cur_w - 1) // layer['stride'] + 1

    # --- blocks ---
    for bp in params['blocks']:
        stride = bp['stride']
        assert stride[0] == stride[1], 'only square strides supported'
        s = stride[0]
        cin, cexp = bp['exp_w'].shape
        cout = bp['proj_w'].shape[1]

        we = _blockdiag_1x1(cur_w + 2, npf(bp['exp_w']) * npf(bp['exp_s'])[None, :])

        dw = npf(bp['dw_w']) * npf(bp['dw_s'])[None, None, :]           # (3,3,cexp)
        dw9 = np.zeros((3, 3, cexp, cexp), np.float32)
        for dy in range(3):
            for dx in range(3):
                dw9[dy, dx] = np.diag(dw[dy, dx])
        Rd, Kd = _rk_conv3x3(batch, cur_h, cur_w, cexp, cexp, s, dw9)

        out_h = (cur_h - 1) // s + 1
        out_w = (cur_w - 1) // s + 1
        wp = _blockdiag_1x1(out_w + 2, npf(bp['proj_w']) * npf(bp['proj_s'])[None, :])

        weights += [jnp.asarray(we, bf16), jnp.asarray(Rd, jnp.float32),
                    jnp.asarray(Kd, bf16), jnp.asarray(wp, bf16)]

        if bp['use_shortcut'] and s != 1:
            # AvgPool2d(kernel=3, stride=s, padding=1), count_include_pad=True -> /9
            av9 = np.tile(np.eye(cin, dtype=np.float32) / 9.0, (3, 3, 1, 1))
            _, Ka = _rk_conv3x3(batch, cur_h, cur_w, cin, cin, s, av9)
            weights.append(jnp.asarray(Ka, bf16))
            plan_blocks.append('avgpool')
        elif bp['use_shortcut']:
            plan_blocks.append('identity')
        else:
            plan_blocks.append('none')

        cur_h, cur_w = out_h, out_w

    # --- head: AdaptiveAvgPool((1,1)) + feature_extractor conv/BN + classifier ---
    clast, nfeat = params['fe_w'].shape
    arows = np.zeros((batch, batch * (cur_h + 2)), np.float32)
    for n in range(batch):
        arows[n, n * (cur_h + 2) + 1: n * (cur_h + 2) + 1 + cur_h] = 1.0 / (cur_h * cur_w)
    acols = np.zeros(((cur_w + 2) * clast, clast), np.float32)
    for wo in range(cur_w):
        acols[(1 + wo) * clast:(2 + wo) * clast, :] = np.eye(clast, dtype=np.float32)
    # fold (pool over lanes) o (1x1 conv) o (BN scale); exact because both are affine
    # and there is no nonlinearity between the fe BN and the pooling.
    fe_fold = acols @ (npf(params['fe_w']) * npf(params['fe_s'])[None, :])

    fc1_w = npf(params['fc1_w'])
    weights += [
        jnp.asarray(arows, jnp.float32),
        jnp.asarray(fe_fold, bf16),
        jnp.asarray(npf(params['fe_b']).reshape(1, -1), jnp.float32),
        jnp.asarray(fc1_w[:nfeat], bf16),                     # features part of fc1
        jnp.asarray(fc1_w[nfeat:], bf16),                     # device-embedding part
        jnp.asarray(npf(params['fc1_b']).reshape(1, -1), jnp.float32),
        jnp.asarray(npf(params['fc2_w']), bf16),
        jnp.asarray(npf(params['fc2_b']).reshape(1, -1), jnp.float32),
    ]

    return dict(weights=weights,
                plan=dict(n_stem=len(params['in_c']), blocks=tuple(plan_blocks)),
                embed=params['embed'],
                n_classes=int(params['fc2_w'].shape[1]))


# ----------------------------------------------------------------------------
# forward pass: one pallas_call, trivial JAX glue for input layout + embedding
# ----------------------------------------------------------------------------
def _full_spec(a):
    return pl.BlockSpec(a.shape, lambda i, _nd=a.ndim: (0,) * _nd)


def network_forward(prep, x_nchw, device_id):
    n, cin, h, w = x_nchw.shape
    x = jnp.transpose(x_nchw, (0, 2, 3, 1)).astype(jnp.float32)        # NHWC
    x = jnp.pad(x, ((0, 0), (1, 1), (1, 1), (0, 0)))                   # conv zero padding
    x0 = x.reshape(n * (h + 2), (w + 2) * cin)                         # padded 2D layout
    dev = prep['embed'][device_id].astype(jnp.float32)                 # (N, embed_dim)

    args = [x0, dev] + list(prep['weights'])
    return pl.pallas_call(
        functools.partial(_network_kernel, plan=prep['plan']),
        out_shape=jax.ShapeDtypeStruct((n, prep['n_classes']), jnp.float32),
        grid=(1,),
        in_specs=[_full_spec(a) for a in args],
        out_specs=pl.BlockSpec((n, prep['n_classes']), lambda i: (0, 0)),
        compiler_params=pltpu.CompilerParams(dimension_semantics=("arbitrary",)),
    )(*args)


# ----------------------------------------------------------------------------
# main
# ----------------------------------------------------------------------------
if __name__ == "__main__":
    config = dict(
        n_classes=10,
        in_channels=1,
        base_channels=16,
        channels_multiplier=2.0,
        expansion_rate=2.0,
        n_blocks=(2, 1),              # blocks b1, b2 (stride 2, avgpool shortcut), b3
        strides={'b2': (2, 2)},
    )
    embed_dim = 32
    N, H, W = 2, 32, 32

    key = jax.random.PRNGKey(0)
    pkey, xkey = jax.random.split(key)
    params = build_params(pkey, config, embed_dim=embed_dim)
    prep = prepare(params, N, H, W)

    x = jax.random.normal(xkey, (N, config['in_channels'], H, W), jnp.float32)  # NCHW
    device_id = jnp.array([0, 3], dtype=jnp.int32)
    assert int(device_id.max()) < params['embed'].shape[0], 'Device index out of range!'

    fwd = jax.jit(lambda xx, did: network_forward(prep, xx, did))
    logits = fwd(x, device_id)
    logits = jax.block_until_ready(logits)
    assert logits.shape == (N, config['n_classes'])
    assert bool(jnp.all(jnp.isfinite(logits)))
    print("KERNEL_OK")
</pallas_src>

<mosaic_0001>
module attributes {stable_mosaic.version = 11 : i64} {
  func.func @_network_kernel(%arg0: i32, %arg1: memref<68x34xf32, #tpu.memory_space<vmem>>, %arg2: memref<2x32xf32, #tpu.memory_space<vmem>>, %arg3: memref<3x36x68xf32, #tpu.memory_space<vmem>>, %arg4: memref<3x34x72xbf16, #tpu.memory_space<vmem>>, %arg5: memref<3x20x36xf32, #tpu.memory_space<vmem>>, %arg6: memref<3x72x160xbf16, #tpu.memory_space<vmem>>, %arg7: memref<160x320xbf16, #tpu.memory_space<vmem>>, %arg8: memref<3x20x20xf32, #tpu.memory_space<vmem>>, %arg9: memref<3x320x320xbf16, #tpu.memory_space<vmem>>, %arg10: memref<320x160xbf16, #tpu.memory_space<vmem>>, %arg11: memref<160x320xbf16, #tpu.memory_space<vmem>>, %arg12: memref<3x12x20xf32, #tpu.memory_space<vmem>>, %arg13: memref<3x320x192xbf16, #tpu.memory_space<vmem>>, %arg14: memref<192x96xbf16, #tpu.memory_space<vmem>>, %arg15: memref<3x160x96xbf16, #tpu.memory_space<vmem>>, %arg16: memref<96x192xbf16, #tpu.memory_space<vmem>>, %arg17: memref<3x12x12xf32, #tpu.memory_space<vmem>>, %arg18: memref<3x192x192xbf16, #tpu.memory_space<vmem>>, %arg19: memref<192x192xbf16, #tpu.memory_space<vmem>>, %arg20: memref<2x12xf32, #tpu.memory_space<vmem>>, %arg21: memref<192x512xbf16, #tpu.memory_space<vmem>>, %arg22: memref<1x512xf32, #tpu.memory_space<vmem>>, %arg23: memref<512x128xbf16, #tpu.memory_space<vmem>>, %arg24: memref<32x128xbf16, #tpu.memory_space<vmem>>, %arg25: memref<1x128xf32, #tpu.memory_space<vmem>>, %arg26: memref<128x10xbf16, #tpu.memory_space<vmem>>, %arg27: memref<1x10xf32, #tpu.memory_space<vmem>>, %arg28: memref<2x10xf32, #tpu.memory_space<vmem>>) attributes {dimension_semantics = [#tpu.dimension_semantics<arbitrary>], iteration_bounds = array<i64: 1>, scalar_prefetch = 0 : i64, scratch_operands = 0 : i64, tpu.core_type = #tpu.core_type<tc>, window_params = [{pipeline_mode = #tpu.pipeline_mode<synchronous>, transform_indices = @transform_0, window_bounds = array<i64: 68, 34>}, {pipeline_mode = #tpu.pipeline_mode<synchronous>, transform_indices = @transform_1, window_bounds = array<i64: 2, 32>}, {pipeline_mode = #tpu.pipeline_mode<synchronous>, transform_indices = @transform_2, window_bounds = array<i64: 3, 36, 68>}, {pipeline_mode = #tpu.pipeline_mode<synchronous>, transform_indices = @transform_3, window_bounds = array<i64: 3, 34, 72>}, {pipeline_mode = #tpu.pipeline_mode<synchronous>, transform_indices = @transform_4, window_bounds = array<i64: 3, 20, 36>}, {pipeline_mode = #tpu.pipeline_mode<synchronous>, transform_indices = @transform_5, window_bounds = array<i64: 3, 72, 160>}, {pipeline_mode = #tpu.pipeline_mode<synchronous>, transform_indices = @transform_6, window_bounds = array<i64: 160, 320>}, {pipeline_mode = #tpu.pipeline_mode<synchronous>, transform_indices = @transform_7, window_bounds = array<i64: 3, 20, 20>}, {pipeline_mode = #tpu.pipeline_mode<synchronous>, transform_indices = @transform_8, window_bounds = array<i64: 3, 320, 320>}, {pipeline_mode = #tpu.pipeline_mode<synchronous>, transform_indices = @transform_9, window_bounds = array<i64: 320, 160>}, {pipeline_mode = #tpu.pipeline_mode<synchronous>, transform_indices = @transform_10, window_bounds = array<i64: 160, 320>}, {pipeline_mode = #tpu.pipeline_mode<synchronous>, transform_indices = @transform_11, window_bounds = array<i64: 3, 12, 20>}, {pipeline_mode = #tpu.pipeline_mode<synchronous>, transform_indices = @transform_12, window_bounds = array<i64: 3, 320, 192>}, {pipeline_mode = #tpu.pipeline_mode<synchronous>, transform_indices = @transform_13, window_bounds = array<i64: 192, 96>}, {pipeline_mode = #tpu.pipeline_mode<synchronous>, transform_indices = @transform_14, window_bounds = array<i64: 3, 160, 96>}, {pipeline_mode = #tpu.pipeline_mode<synchronous>, transform_indices = @transform_15, window_bounds = array<i64: 96, 192>}, {pipeline_mode = #tpu.pipeline_mode<synchronous>, transform_indices = @transform_16, window_bounds = array<i64: 3, 12, 12>}, {pipeline_mode = #tpu.pipeline_mode<synchronous>, transform_indices = @transform_17, window_bounds = array<i64: 3, 192, 192>}, {pipeline_mode = #tpu.pipeline_mode<synchronous>, transform_indices = @transform_18, window_bounds = array<i64: 192, 192>}, {pipeline_mode = #tpu.pipeline_mode<synchronous>, transform_indices = @transform_19, window_bounds = array<i64: 2, 12>}, {pipeline_mode = #tpu.pipeline_mode<synchronous>, transform_indices = @transform_20, window_bounds = array<i64: 192, 512>}, {pipeline_mode = #tpu.pipeline_mode<synchronous>, transform_indices = @transform_21, window_bounds = array<i64: 1, 512>}, {pipeline_mode = #tpu.pipeline_mode<synchronous>, transform_indices = @transform_22, window_bounds = array<i64: 512, 128>}, {pipeline_mode = #tpu.pipeline_mode<synchronous>, transform_indices = @transform_23, window_bounds = array<i64: 32, 128>}, {pipeline_mode = #tpu.pipeline_mode<synchronous>, transform_indices = @transform_24, window_bounds = array<i64: 1, 128>}, {pipeline_mode = #tpu.pipeline_mode<synchronous>, transform_indices = @transform_25, window_bounds = array<i64: 128, 10>}, {pipeline_mode = #tpu.pipeline_mode<synchronous>, transform_indices = @transform_26, window_bounds = array<i64: 1, 10>}, {pipeline_mode = #tpu.pipeline_mode<synchronous>, transform_indices = @transform_27, window_bounds = array<i64: 2, 10>}]} {
    %c0 = arith.constant 0 : index
    %c0_0 = arith.constant 0 : index
    %0 = vector.load %arg1[%c0, %c0_0] : memref<68x34xf32, #tpu.memory_space<vmem>>, vector<68x34xf32>
    %c0_1 = arith.constant 0 : index
    %c0_2 = arith.constant 0 : index
    %1 = vector.load %arg2[%c0_1, %c0_2] : memref<2x32xf32, #tpu.memory_space<vmem>>, vector<2x32xf32>
    %2 = arith.truncf %0 : vector<68x34xf32> to vector<68x34xbf16>
    %c0_3 = arith.constant 0 : index
    %c0_4 = arith.constant 0 : index
    %c0_5 = arith.constant 0 : index
    %3 = vector.load %arg4[%c0_3, %c0_4, %c0_5] : memref<3x34x72xbf16, #tpu.memory_space<vmem>>, vector<1x34x72xbf16>
    %4 = vector.shape_cast %3 : vector<1x34x72xbf16> to vector<34x72xbf16>
    %cst = arith.constant dense<0.000000e+00> : vector<68x72xf32>
    %5 = tpu.matmul %2, %4, %cst {dimension_numbers = #tpu.dot_dimension_numbers<[1], [0], [0], [1], [0, 0, 1, 1], [], []>} : vector<68x34xbf16>, vector<34x72xbf16>, vector<68x72xf32> -> vector<68x72xf32>
    %c0_6 = arith.constant 0 : index
    %c0_7 = arith.constant 0 : index
    %c0_8 = arith.constant 0 : index
    %6 = vector.load %arg3[%c0_6, %c0_7, %c0_8] : memref<3x36x68xf32, #tpu.memory_space<vmem>>, vector<1x36x68xf32>
    %7 = vector.shape_cast %6 : vector<1x36x68xf32> to vector<36x68xf32>
    %cst_9 = arith.constant dense<0.000000e+00> : vector<36x72xf32>
    %8 = tpu.matmul %7, %5, %cst_9 {dimension_numbers = #tpu.dot_dimension_numbers<[1], [0], [0], [1], [0, 0, 1, 1], [], []>} : vector<36x68xf32>, vector<68x72xf32>, vector<36x72xf32> -> vector<36x72xf32>
    %c1 = arith.constant 1 : index
    %c0_10 = arith.constant 0 : index
    %c0_11 = arith.constant 0 : index
    %9 = vector.load %arg4[%c1, %c0_10, %c0_11] : memref<3x34x72xbf16, #tpu.memory_space<vmem>>, vector<1x34x72xbf16>
    %10 = vector.shape_cast %9 : vector<1x34x72xbf16> to vector<34x72xbf16>
    %cst_12 = arith.constant dense<0.000000e+00> : vector<68x72xf32>
    %11 = tpu.matmul %2, %10, %cst_12 {dimension_numbers = #tpu.dot_dimension_numbers<[1], [0], [0], [1], [0, 0, 1, 1], [], []>} : vector<68x34xbf16>, vector<34x72xbf16>, vector<68x72xf32> -> vector<68x72xf32>
    %c1_13 = arith.constant 1 : index
    %c0_14 = arith.constant 0 : index
    %c0_15 = arith.constant 0 : index
    %12 = vector.load %arg3[%c1_13, %c0_14, %c0_15] : memref<3x36x68xf32, #tpu.memory_space<vmem>>, vector<1x36x68xf32>
    %13 = vector.shape_cast %12 : vector<1x36x68xf32> to vector<36x68xf32>
    %cst_16 = arith.constant dense<0.000000e+00> : vector<36x72xf32>
    %14 = tpu.matmul %13, %11, %cst_16 {dimension_numbers = #tpu.dot_dimension_numbers<[1], [0], [0], [1], [0, 0, 1, 1], [], []>} : vector<36x68xf32>, vector<68x72xf32>, vector<36x72xf32> -> vector<36x72xf32>
    %15 = arith.addf %8, %14 : vector<36x72xf32>
    %c2 = arith.constant 2 : index
    %c0_17 = arith.constant 0 : index
    %c0_18 = arith.constant 0 : index
    %16 = vector.load %arg4[%c2, %c0_17, %c0_18] : memref<3x34x72xbf16, #tpu.memory_space<vmem>>, vector<1x34x72xbf16>
    %17 = vector.shape_cast %16 : vector<1x34x72xbf16> to vector<34x72xbf16>
    %cst_19 = arith.constant dense<0.000000e+00> : vector<68x72xf32>
    %18 = tpu.matmul %2, %17, %cst_19 {dimension_numbers = #tpu.dot_dimension_numbers<[1], [0], [0], [1], [0, 0, 1, 1], [], []>} : vector<68x34xbf16>, vector<34x72xbf16>, vector<68x72xf32> -> vector<68x72xf32>
    %c2_20 = arith.constant 2 : index
    %c0_21 = arith.constant 0 : index
    %c0_22 = arith.constant 0 : index
    %19 = vector.load %arg3[%c2_20, %c0_21, %c0_22] : memref<3x36x68xf32, #tpu.memory_space<vmem>>, vector<1x36x68xf32>
    %20 = vector.shape_cast %19 : vector<1x36x68xf32> to vector<36x68xf32>
    %cst_23 = arith.constant dense<0.000000e+00> : vector<36x72xf32>
    %21 = tpu.matmul %20, %18, %cst_23 {dimension_numbers = #tpu.dot_dimension_numbers<[1], [0], [0], [1], [0, 0, 1, 1], [], []>} : vector<36x68xf32>, vector<68x72xf32>, vector<36x72xf32> -> vector<36x72xf32>
    %22 = arith.addf %15, %21 : vector<36x72xf32>
    %cst_24 = arith.constant 0.000000e+00 : f32
    %23 = vector.broadcast %cst_24 : f32 to vector<36x72xf32>
    %24 = arith.maximumf %22, %23 : vector<36x72xf32>
    %25 = arith.truncf %24 : vector<36x72xf32> to vector<36x72xbf16>
    %c0_25 = arith.constant 0 : index
    %c0_26 = arith.constant 0 : index
    %c0_27 = arith.constant 0 : index
    %26 = vector.load %arg6[%c0_25, %c0_26, %c0_27] : memref<3x72x160xbf16, #tpu.memory_space<vmem>>, vector<1x72x160xbf16>
    %27 = vector.shape_cast %26 : vector<1x72x160xbf16> to vector<72x160xbf16>
    %cst_28 = arith.constant dense<0.000000e+00> : vector<36x160xf32>
    %28 = tpu.matmul %25, %27, %cst_28 {dimension_numbers = #tpu.dot_dimension_numbers<[1], [0], [0], [1], [0, 0, 1, 1], [], []>} : vector<36x72xbf16>, vector<72x160xbf16>, vector<36x160xf32> -> vector<36x160xf32>
    %c0_29 = arith.constant 0 : index
    %c0_30 = arith.constant 0 : index
    %c0_31 = arith.constant 0 : index
    %29 = vector.load %arg5[%c0_29, %c0_30, %c0_31] : memref<3x20x36xf32, #tpu.memory_space<vmem>>, vector<1x20x36xf32>
    %30 = vector.shape_cast %29 : vector<1x20x36xf32> to vector<20x36xf32>
    %cst_32 = arith.constant dense<0.000000e+00> : vector<20x160xf32>
    %31 = tpu.matmul %30, %28, %cst_32 {dimension_numbers = #tpu.dot_dimension_numbers<[1], [0], [0], [1], [0, 0, 1, 1], [], []>} : vector<20x36xf32>, vector<36x160xf32>, vector<20x160xf32> -> vector<20x160xf32>
    %c1_33 = arith.constant 1 : index
    %c0_34 = arith.constant 0 : index
    %c0_35 = arith.constant 0 : index
    %32 = vector.load %arg6[%c1_33, %c0_34, %c0_35] : memref<3x72x160xbf16, #tpu.memory_space<vmem>>, vector<1x72x160xbf16>
    %33 = vector.shape_cast %32 : vector<1x72x160xbf16> to vector<72x160xbf16>
    %cst_36 = arith.constant dense<0.000000e+00> : vector<36x160xf32>
    %34 = tpu.matmul %25, %33, %cst_36 {dimension_numbers = #tpu.dot_dimension_numbers<[1], [0], [0], [1], [0, 0, 1, 1], [], []>} : vector<36x72xbf16>, vector<72x160xbf16>, vector<36x160xf32> -> vector<36x160xf32>
    %c1_37 = arith.constant 1 : index
    %c0_38 = arith.constant 0 : index
    %c0_39 = arith.constant 0 : index
    %35 = vector.load %arg5[%c1_37, %c0_38, %c0_39] : memref<3x20x36xf32, #tpu.memory_space<vmem>>, vector<1x20x36xf32>
    %36 = vector.shape_cast %35 : vector<1x20x36xf32> to vector<20x36xf32>
    %cst_40 = arith.constant dense<0.000000e+00> : vector<20x160xf32>
    %37 = tpu.matmul %36, %34, %cst_40 {dimension_numbers = #tpu.dot_dimension_numbers<[1], [0], [0], [1], [0, 0, 1, 1], [], []>} : vector<20x36xf32>, vector<36x160xf32>, vector<20x160xf32> -> vector<20x160xf32>
    %38 = arith.addf %31, %37 : vector<20x160xf32>
    %c2_41 = arith.constant 2 : index
    %c0_42 = arith.constant 0 : index
    %c0_43 = arith.constant 0 : index
    %39 = vector.load %arg6[%c2_41, %c0_42, %c0_43] : memref<3x72x160xbf16, #tpu.memory_space<vmem>>, vector<1x72x160xbf16>
    %40 = vector.shape_cast %39 : vector<1x72x160xbf16> to vector<72x160xbf16>
    %cst_44 = arith.constant dense<0.000000e+00> : vector<36x160xf32>
    %41 = tpu.matmul %25, %40, %cst_44 {dimension_numbers = #tpu.dot_dimension_numbers<[1], [0], [0], [1], [0, 0, 1, 1], [], []>} : vector<36x72xbf16>, vector<72x160xbf16>, vector<36x160xf32> -> vector<36x160xf32>
    %c2_45 = arith.constant 2 : index
    %c0_46 = arith.constant 0 : index
    %c0_47 = arith.constant 0 : index
    %42 = vector.load %arg5[%c2_45, %c0_46, %c0_47] : memref<3x20x36xf32, #tpu.memory_space<vmem>>, vector<1x20x36xf32>
    %43 = vector.shape_cast %42 : vector<1x20x36xf32> to vector<20x36xf32>
    %cst_48 = arith.constant dense<0.000000e+00> : vector<20x160xf32>
    %44 = tpu.matmul %43, %41, %cst_48 {dimension_numbers = #tpu.dot_dimension_numbers<[1], [0], [0], [1], [0, 0, 1, 1], [], []>} : vector<20x36xf32>, vector<36x160xf32>, vector<20x160xf32> -> vector<20x160xf32>
    %45 = arith.addf %38, %44 : vector<20x160xf32>
    %cst_49 = arith.constant 0.000000e+00 : f32
    %46 = vector.broadcast %cst_49 : f32 to vector<20x160xf32>
    %47 = arith.maximumf %45, %46 : vector<20x160xf32>
    %c0_50 = arith.constant 0 : index
    %c0_51 = arith.constant 0 : index
    %48 = vector.load %arg7[%c0_50, %c0_51] : memref<160x320xbf16, #tpu.memory_space<vmem>>, vector<160x320xbf16>
    %49 = arith.truncf %47 : vector<20x160xf32> to vector<20x160xbf16>
    %cst_52 = arith.constant dense<0.000000e+00> : vector<20x320xf32>
    %50 = tpu.matmul %49, %48, %cst_52 {dimension_numbers = #tpu.dot_dimension_numbers<[1], [0], [0], [1], [0, 0, 1, 1], [], []>} : vector<20x160xbf16>, vector<160x320xbf16>, vector<20x320xf32> -> vector<20x320xf32>
    %cst_53 = arith.constant 0.000000e+00 : f32
    %51 = vector.broadcast %cst_53 : f32 to vector<20x320xf32>
    %52 = arith.maximumf %50, %51 : vector<20x320xf32>
    %53 = arith.truncf %52 : vector<20x320xf32> to vector<20x320xbf16>
    %c0_54 = arith.constant 0 : index
    %c0_55 = arith.constant 0 : index
    %c0_56 = arith.constant 0 : index
    %54 = vector.load %arg9[%c0_54, %c0_55, %c0_56] : memref<3x320x320xbf16, #tpu.memory_space<vmem>>, vector<1x320x320xbf16>
    %55 = vector.shape_cast %54 : vector<1x320x320xbf16> to vector<320x320xbf16>
    %cst_57 = arith.constant dense<0.000000e+00> : vector<20x320xf32>
    %56 = tpu.matmul %53, %55, %cst_57 {dimension_numbers = #tpu.dot_dimension_numbers<[1], [0], [0], [1], [0, 0, 1, 1], [], []>} : vector<20x320xbf16>, vector<320x320xbf16>, vector<20x320xf32> -> vector<20x320xf32>
    %c0_58 = arith.constant 0 : index
    %c0_59 = arith.constant 0 : index
    %c0_60 = arith.constant 0 : index
    %57 = vector.load %arg8[%c0_58, %c0_59, %c0_60] : memref<3x20x20xf32, #tpu.memory_space<vmem>>, vector<1x20x20xf32>
    %58 = vector.shape_cast %57 : vector<1x20x20xf32> to vector<20x20xf32>
    %cst_61 = arith.constant dense<0.000000e+00> : vector<20x320xf32>
    %59 = tpu.matmul %58, %56, %cst_61 {dimension_numbers = #tpu.dot_dimension_numbers<[1], [0], [0], [1], [0, 0, 1, 1], [], []>} : vector<20x20xf32>, vector<20x320xf32>, vector<20x320xf32> -> vector<20x320xf32>
    %c1_62 = arith.constant 1 : index
    %c0_63 = arith.constant 0 : index
    %c0_64 = arith.constant 0 : index
    %60 = vector.load %arg9[%c1_62, %c0_63, %c0_64] : memref<3x320x320xbf16, #tpu.memory_space<vmem>>, vector<1x320x320xbf16>
    %61 = vector.shape_cast %60 : vector<1x320x320xbf16> to vector<320x320xbf16>
    %cst_65 = arith.constant dense<0.000000e+00> : vector<20x320xf32>
    %62 = tpu.matmul %53, %61, %cst_65 {dimension_numbers = #tpu.dot_dimension_numbers<[1], [0], [0], [1], [0, 0, 1, 1], [], []>} : vector<20x320xbf16>, vector<320x320xbf16>, vector<20x320xf32> -> vector<20x320xf32>
    %c1_66 = arith.constant 1 : index
    %c0_67 = arith.constant 0 : index
    %c0_68 = arith.constant 0 : index
    %63 = vector.load %arg8[%c1_66, %c0_67, %c0_68] : memref<3x20x20xf32, #tpu.memory_space<vmem>>, vector<1x20x20xf32>
    %64 = vector.shape_cast %63 : vector<1x20x20xf32> to vector<20x20xf32>
    %cst_69 = arith.constant dense<0.000000e+00> : vector<20x320xf32>
    %65 = tpu.matmul %64, %62, %cst_69 {dimension_numbers = #tpu.dot_dimension_numbers<[1], [0], [0], [1], [0, 0, 1, 1], [], []>} : vector<20x20xf32>, vector<20x320xf32>, vector<20x320xf32> -> vector<20x320xf32>
    %66 = arith.addf %59, %65 : vector<20x320xf32>
    %c2_70 = arith.constant 2 : index
    %c0_71 = arith.constant 0 : index
    %c0_72 = arith.constant 0 : index
    %67 = vector.load %arg9[%c2_70, %c0_71, %c0_72] : memref<3x320x320xbf16, #tpu.memory_space<vmem>>, vector<1x320x320xbf16>
    %68 = vector.shape_cast %67 : vector<1x320x320xbf16> to vector<320x320xbf16>
    %cst_73 = arith.constant dense<0.000000e+00> : vector<20x320xf32>
    %69 = tpu.matmul %53, %68, %cst_73 {dimension_numbers = #tpu.dot_dimension_numbers<[1], [0], [0], [1], [0, 0, 1, 1], [], []>} : vector<20x320xbf16>, vector<320x320xbf16>, vector<20x320xf32> -> vector<20x320xf32>
    %c2_74 = arith.constant 2 : index
    %c0_75 = arith.constant 0 : index
    %c0_76 = arith.constant 0 : index
    %70 = vector.load %arg8[%c2_74, %c0_75, %c0_76] : memref<3x20x20xf32, #tpu.memory_space<vmem>>, vector<1x20x20xf32>
    %71 = vector.shape_cast %70 : vector<1x20x20xf32> to vector<20x20xf32>
    %cst_77 = arith.constant dense<0.000000e+00> : vector<20x320xf32>
    %72 = tpu.matmul %71, %69, %cst_77 {dimension_numbers = #tpu.dot_dimension_numbers<[1], [0], [0], [1], [0, 0, 1, 1], [], []>} : vector<20x20xf32>, vector<20x320xf32>, vector<20x320xf32> -> vector<20x320xf32>
    %73 = arith.addf %66, %72 : vector<20x320xf32>
    %cst_78 = arith.constant 0.000000e+00 : f32
    %74 = vector.broadcast %cst_78 : f32 to vector<20x320xf32>
    %75 = arith.maximumf %73, %74 : vector<20x320xf32>
    %c0_79 = arith.constant 0 : index
    %c0_80 = arith.constant 0 : index
    %76 = vector.load %arg10[%c0_79, %c0_80] : memref<320x160xbf16, #tpu.memory_space<vmem>>, vector<320x160xbf16>
    %77 = arith.truncf %75 : vector<20x320xf32> to vector<20x320xbf16>
    %cst_81 = arith.constant dense<0.000000e+00> : vector<20x160xf32>
    %78 = tpu.matmul %77, %76, %cst_81 {dimension_numbers = #tpu.dot_dimension_numbers<[1], [0], [0], [1], [0, 0, 1, 1], [], []>} : vector<20x320xbf16>, vector<320x160xbf16>, vector<20x160xf32> -> vector<20x160xf32>
    %79 = arith.addf %78, %47 : vector<20x160xf32>
    %cst_82 = arith.constant 0.000000e+00 : f32
    %80 = vector.broadcast %cst_82 : f32 to vector<20x160xf32>
    %81 = arith.maximumf %79, %80 : vector<20x160xf32>
    %c0_83 = arith.constant 0 : index
    %c0_84 = arith.constant 0 : index
    %82 = vector.load %arg11[%c0_83, %c0_84] : memref<160x320xbf16, #tpu.memory_space<vmem>>, vector<160x320xbf16>
    %83 = arith.truncf %81 : vector<20x160xf32> to vector<20x160xbf16>
    %cst_85 = arith.constant dense<0.000000e+00> : vector<20x320xf32>
    %84 = tpu.matmul %83, %82, %cst_85 {dimension_numbers = #tpu.dot_dimension_numbers<[1], [0], [0], [1], [0, 0, 1, 1], [], []>} : vector<20x160xbf16>, vector<160x320xbf16>, vector<20x320xf32> -> vector<20x320xf32>
    %cst_86 = arith.constant 0.000000e+00 : f32
    %85 = vector.broadcast %cst_86 : f32 to vector<20x320xf32>
    %86 = arith.maximumf %84, %85 : vector<20x320xf32>
    %87 = arith.truncf %86 : vector<20x320xf32> to vector<20x320xbf16>
    %c0_87 = arith.constant 0 : index
    %c0_88 = arith.constant 0 : index
    %c0_89 = arith.constant 0 : index
    %88 = vector.load %arg13[%c0_87, %c0_88, %c0_89] : memref<3x320x192xbf16, #tpu.memory_space<vmem>>, vector<1x320x192xbf16>
    %89 = vector.shape_cast %88 : vector<1x320x192xbf16> to vector<320x192xbf16>
    %cst_90 = arith.constant dense<0.000000e+00> : vector<20x192xf32>
    %90 = tpu.matmul %87, %89, %cst_90 {dimension_numbers = #tpu.dot_dimension_numbers<[1], [0], [0], [1], [0, 0, 1, 1], [], []>} : vector<20x320xbf16>, vector<320x192xbf16>, vector<20x192xf32> -> vector<20x192xf32>
    %c0_91 = arith.constant 0 : index
    %c0_92 = arith.constant 0 : index
    %c0_93 = arith.constant 0 : index
    %91 = vector.load %arg12[%c0_91, %c0_92, %c0_93] : memref<3x12x20xf32, #tpu.memory_space<vmem>>, vector<1x12x20xf32>
    %92 = vector.shape_cast %91 : vector<1x12x20xf32> to vector<12x20xf32>
    %cst_94 = arith.constant dense<0.000000e+00> : vector<12x192xf32>
    %93 = tpu.matmul %92, %90, %cst_94 {dimension_numbers = #tpu.dot_dimension_numbers<[1], [0], [0], [1], [0, 0, 1, 1], [], []>} : vector<12x20xf32>, vector<20x192xf32>, vector<12x192xf32> -> vector<12x192xf32>
    %c1_95 = arith.constant 1 : index
    %c0_96 = arith.constant 0 : index
    %c0_97 = arith.constant 0 : index
    %94 = vector.load %arg13[%c1_95, %c0_96, %c0_97] : memref<3x320x192xbf16, #tpu.memory_space<vmem>>, vector<1x320x192xbf16>
    %95 = vector.shape_cast %94 : vector<1x320x192xbf16> to vector<320x192xbf16>
    %cst_98 = arith.constant dense<0.000000e+00> : vector<20x192xf32>
    %96 = tpu.matmul %87, %95, %cst_98 {dimension_numbers = #tpu.dot_dimension_numbers<[1], [0], [0], [1], [0, 0, 1, 1], [], []>} : vector<20x320xbf16>, vector<320x192xbf16>, vector<20x192xf32> -> vector<20x192xf32>
    %c1_99 = arith.constant 1 : index
    %c0_100 = arith.constant 0 : index
    %c0_101 = arith.constant 0 : index
    %97 = vector.load %arg12[%c1_99, %c0_100, %c0_101] : memref<3x12x20xf32, #tpu.memory_space<vmem>>, vector<1x12x20xf32>
    %98 = vector.shape_cast %97 : vector<1x12x20xf32> to vector<12x20xf32>
    %cst_102 = arith.constant dense<0.000000e+00> : vector<12x192xf32>
    %99 = tpu.matmul %98, %96, %cst_102 {dimension_numbers = #tpu.dot_dimension_numbers<[1], [0], [0], [1], [0, 0, 1, 1], [], []>} : vector<12x20xf32>, vector<20x192xf32>, vector<12x192xf32> -> vector<12x192xf32>
    %100 = arith.addf %93, %99 : vector<12x192xf32>
    %c2_103 = arith.constant 2 : index
    %c0_104 = arith.constant 0 : index
    %c0_105 = arith.constant 0 : index
    %101 = vector.load %arg13[%c2_103, %c0_104, %c0_105] : memref<3x320x192xbf16, #tpu.memory_space<vmem>>, vector<1x320x192xbf16>
    %102 = vector.shape_cast %101 : vector<1x320x192xbf16> to vector<320x192xbf16>
    %cst_106 = arith.constant dense<0.000000e+00> : vector<20x192xf32>
    %103 = tpu.matmul %87, %102, %cst_106 {dimension_numbers = #tpu.dot_dimension_numbers<[1], [0], [0], [1], [0, 0, 1, 1], [], []>} : vector<20x320xbf16>, vector<320x192xbf16>, vector<20x192xf32> -> vector<20x192xf32>
    %c2_107 = arith.constant 2 : index
    %c0_108 = arith.constant 0 : index
    %c0_109 = arith.constant 0 : index
    %104 = vector.load %arg12[%c2_107, %c0_108, %c0_109] : memref<3x12x20xf32, #tpu.memory_space<vmem>>, vector<1x12x20xf32>
    %105 = vector.shape_cast %104 : vector<1x12x20xf32> to vector<12x20xf32>
    %cst_110 = arith.constant dense<0.000000e+00> : vector<12x192xf32>
    %106 = tpu.matmul %105, %103, %cst_110 {dimension_numbers = #tpu.dot_dimension_numbers<[1], [0], [0], [1], [0, 0, 1, 1], [], []>} : vector<12x20xf32>, vector<20x192xf32>, vector<12x192xf32> -> vector<12x192xf32>
    %107 = arith.addf %100, %106 : vector<12x192xf32>
    %cst_111 = arith.constant 0.000000e+00 : f32
    %108 = vector.broadcast %cst_111 : f32 to vector<12x192xf32>
    %109 = arith.maximumf %107, %108 : vector<12x192xf32>
    %c0_112 = arith.constant 0 : index
    %c0_113 = arith.constant 0 : index
    %110 = vector.load %arg14[%c0_112, %c0_113] : memref<192x96xbf16, #tpu.memory_space<vmem>>, vector<192x96xbf16>
    %111 = arith.truncf %109 : vector<12x192xf32> to vector<12x192xbf16>
    %cst_114 = arith.constant dense<0.000000e+00> : vector<12x96xf32>
    %112 = tpu.matmul %111, %110, %cst_114 {dimension_numbers = #tpu.dot_dimension_numbers<[1], [0], [0], [1], [0, 0, 1, 1], [], []>} : vector<12x192xbf16>, vector<192x96xbf16>, vector<12x96xf32> -> vector<12x96xf32>
    %113 = arith.truncf %81 : vector<20x160xf32> to vector<20x160xbf16>
    %c0_115 = arith.constant 0 : index
    %c0_116 = arith.constant 0 : index
    %c0_117 = arith.constant 0 : index
    %114 = vector.load %arg15[%c0_115, %c0_116, %c0_117] : memref<3x160x96xbf16, #tpu.memory_space<vmem>>, vector<1x160x96xbf16>
    %115 = vector.shape_cast %114 : vector<1x160x96xbf16> to vector<160x96xbf16>
    %cst_118 = arith.constant dense<0.000000e+00> : vector<20x96xf32>
    %116 = tpu.matmul %113, %115, %cst_118 {dimension_numbers = #tpu.dot_dimension_numbers<[1], [0], [0], [1], [0, 0, 1, 1], [], []>} : vector<20x160xbf16>, vector<160x96xbf16>, vector<20x96xf32> -> vector<20x96xf32>
    %c0_119 = arith.constant 0 : index
    %c0_120 = arith.constant 0 : index
    %c0_121 = arith.constant 0 : index
    %117 = vector.load %arg12[%c0_119, %c0_120, %c0_121] : memref<3x12x20xf32, #tpu.memory_space<vmem>>, vector<1x12x20xf32>
    %118 = vector.shape_cast %117 : vector<1x12x20xf32> to vector<12x20xf32>
    %cst_122 = arith.constant dense<0.000000e+00> : vector<12x96xf32>
    %119 = tpu.matmul %118, %116, %cst_122 {dimension_numbers = #tpu.dot_dimension_numbers<[1], [0], [0], [1], [0, 0, 1, 1], [], []>} : vector<12x20xf32>, vector<20x96xf32>, vector<12x96xf32> -> vector<12x96xf32>
    %c1_123 = arith.constant 1 : index
    %c0_124 = arith.constant 0 : index
    %c0_125 = arith.constant 0 : index
    %120 = vector.load %arg15[%c1_123, %c0_124, %c0_125] : memref<3x160x96xbf16, #tpu.memory_space<vmem>>, vector<1x160x96xbf16>
    %121 = vector.shape_cast %120 : vector<1x160x96xbf16> to vector<160x96xbf16>
    %cst_126 = arith.constant dense<0.000000e+00> : vector<20x96xf32>
    %122 = tpu.matmul %113, %121, %cst_126 {dimension_numbers = #tpu.dot_dimension_numbers<[1], [0], [0], [1], [0, 0, 1, 1], [], []>} : vector<20x160xbf16>, vector<160x96xbf16>, vector<20x96xf32> -> vector<20x96xf32>
    %c1_127 = arith.constant 1 : index
    %c0_128 = arith.constant 0 : index
    %c0_129 = arith.constant 0 : index
    %123 = vector.load %arg12[%c1_127, %c0_128, %c0_129] : memref<3x12x20xf32, #tpu.memory_space<vmem>>, vector<1x12x20xf32>
    %124 = vector.shape_cast %123 : vector<1x12x20xf32> to vector<12x20xf32>
    %cst_130 = arith.constant dense<0.000000e+00> : vector<12x96xf32>
    %125 = tpu.matmul %124, %122, %cst_130 {dimension_numbers = #tpu.dot_dimension_numbers<[1], [0], [0], [1], [0, 0, 1, 1], [], []>} : vector<12x20xf32>, vector<20x96xf32>, vector<12x96xf32> -> vector<12x96xf32>
    %126 = arith.addf %119, %125 : vector<12x96xf32>
    %c2_131 = arith.constant 2 : index
    %c0_132 = arith.constant 0 : index
    %c0_133 = arith.constant 0 : index
    %127 = vector.load %arg15[%c2_131, %c0_132, %c0_133] : memref<3x160x96xbf16, #tpu.memory_space<vmem>>, vector<1x160x96xbf16>
    %128 = vector.shape_cast %127 : vector<1x160x96xbf16> to vector<160x96xbf16>
    %cst_134 = arith.constant dense<0.000000e+00> : vector<20x96xf32>
    %129 = tpu.matmul %113, %128, %cst_134 {dimension_numbers = #tpu.dot_dimension_numbers<[1], [0], [0], [1], [0, 0, 1, 1], [], []>} : vector<20x160xbf16>, vector<160x96xbf16>, vector<20x96xf32> -> vector<20x96xf32>
    %c2_135 = arith.constant 2 : index
    %c0_136 = arith.constant 0 : index
    %c0_137 = arith.constant 0 : index
    %130 = vector.load %arg12[%c2_135, %c0_136, %c0_137] : memref<3x12x20xf32, #tpu.memory_space<vmem>>, vector<1x12x20xf32>
    %131 = vector.shape_cast %130 : vector<1x12x20xf32> to vector<12x20xf32>
    %cst_138 = arith.constant dense<0.000000e+00> : vector<12x96xf32>
    %132 = tpu.matmul %131, %129, %cst_138 {dimension_numbers = #tpu.dot_dimension_numbers<[1], [0], [0], [1], [0, 0, 1, 1], [], []>} : vector<12x20xf32>, vector<20x96xf32>, vector<12x96xf32> -> vector<12x96xf32>
    %133 = arith.addf %126, %132 : vector<12x96xf32>
    %134 = arith.addf %112, %133 : vector<12x96xf32>
    %cst_139 = arith.constant 0.000000e+00 : f32
    %135 = vector.broadcast %cst_139 : f32 to vector<12x96xf32>
    %136 = arith.maximumf %134, %135 : vector<12x96xf32>
    %c0_140 = arith.constant 0 : index
    %c0_141 = arith.constant 0 : index
    %137 = vector.load %arg16[%c0_140, %c0_141] : memref<96x192xbf16, #tpu.memory_space<vmem>>, vector<96x192xbf16>
    %138 = arith.truncf %136 : vector<12x96xf32> to vector<12x96xbf16>
    %cst_142 = arith.constant dense<0.000000e+00> : vector<12x192xf32>
    %139 = tpu.matmul %138, %137, %cst_142 {dimension_numbers = #tpu.dot_dimension_numbers<[1], [0], [0], [1], [0, 0, 1, 1], [], []>} : vector<12x96xbf16>, vector<96x192xbf16>, vector<12x192xf32> -> vector<12x192xf32>
    %cst_143 = arith.constant 0.000000e+00 : f32
    %140 = vector.broadcast %cst_143 : f32 to vector<12x192xf32>
    %141 = arith.maximumf %139, %140 : vector<12x192xf32>
    %142 = arith.truncf %141 : vector<12x192xf32> to vector<12x192xbf16>
    %c0_144 = arith.constant 0 : index
    %c0_145 = arith.constant 0 : index
    %c0_146 = arith.constant 0 : index
    %143 = vector.load %arg18[%c0_144, %c0_145, %c0_146] : memref<3x192x192xbf16, #tpu.memory_space<vmem>>, vector<1x192x192xbf16>
    %144 = vector.shape_cast %143 : vector<1x192x192xbf16> to vector<192x192xbf16>
    %cst_147 = arith.constant dense<0.000000e+00> : vector<12x192xf32>
    %145 = tpu.matmul %142, %144, %cst_147 {dimension_numbers = #tpu.dot_dimension_numbers<[1], [0], [0], [1], [0, 0, 1, 1], [], []>} : vector<12x192xbf16>, vector<192x192xbf16>, vector<12x192xf32> -> vector<12x192xf32>
    %c0_148 = arith.constant 0 : index
    %c0_149 = arith.constant 0 : index
    %c0_150 = arith.constant 0 : index
    %146 = vector.load %arg17[%c0_148, %c0_149, %c0_150] : memref<3x12x12xf32, #tpu.memory_space<vmem>>, vector<1x12x12xf32>
    %147 = vector.shape_cast %146 : vector<1x12x12xf32> to vector<12x12xf32>
    %cst_151 = arith.constant dense<0.000000e+00> : vector<12x192xf32>
    %148 = tpu.matmul %147, %145, %cst_151 {dimension_numbers = #tpu.dot_dimension_numbers<[1], [0], [0], [1], [0, 0, 1, 1], [], []>} : vector<12x12xf32>, vector<12x192xf32>, vector<12x192xf32> -> vector<12x192xf32>
    %c1_152 = arith.constant 1 : index
    %c0_153 = arith.constant 0 : index
    %c0_154 = arith.constant 0 : index
    %149 = vector.load %arg18[%c1_152, %c0_153, %c0_154] : memref<3x192x192xbf16, #tpu.memory_space<vmem>>, vector<1x192x192xbf16>
    %150 = vector.shape_cast %149 : vector<1x192x192xbf16> to vector<192x192xbf16>
    %cst_155 = arith.constant dense<0.000000e+00> : vector<12x192xf32>
    %151 = tpu.matmul %142, %150, %cst_155 {dimension_numbers = #tpu.dot_dimension_numbers<[1], [0], [0], [1], [0, 0, 1, 1], [], []>} : vector<12x192xbf16>, vector<192x192xbf16>, vector<12x192xf32> -> vector<12x192xf32>
    %c1_156 = arith.constant 1 : index
    %c0_157 = arith.constant 0 : index
    %c0_158 = arith.constant 0 : index
    %152 = vector.load %arg17[%c1_156, %c0_157, %c0_158] : memref<3x12x12xf32, #tpu.memory_space<vmem>>, vector<1x12x12xf32>
    %153 = vector.shape_cast %152 : vector<1x12x12xf32> to vector<12x12xf32>
    %cst_159 = arith.constant dense<0.000000e+00> : vector<12x192xf32>
    %154 = tpu.matmul %153, %151, %cst_159 {dimension_numbers = #tpu.dot_dimension_numbers<[1], [0], [0], [1], [0, 0, 1, 1], [], []>} : vector<12x12xf32>, vector<12x192xf32>, vector<12x192xf32> -> vector<12x192xf32>
    %155 = arith.addf %148, %154 : vector<12x192xf32>
    %c2_160 = arith.constant 2 : index
    %c0_161 = arith.constant 0 : index
    %c0_162 = arith.constant 0 : index
    %156 = vector.load %arg18[%c2_160, %c0_161, %c0_162] : memref<3x192x192xbf16, #tpu.memory_space<vmem>>, vector<1x192x192xbf16>
    %157 = vector.shape_cast %156 : vector<1x192x192xbf16> to vector<192x192xbf16>
    %cst_163 = arith.constant dense<0.000000e+00> : vector<12x192xf32>
    %158 = tpu.matmul %142, %157, %cst_163 {dimension_numbers = #tpu.dot_dimension_numbers<[1], [0], [0], [1], [0, 0, 1, 1], [], []>} : vector<12x192xbf16>, vector<192x192xbf16>, vector<12x192xf32> -> vector<12x192xf32>
    %c2_164 = arith.constant 2 : index
    %c0_165 = arith.constant 0 : index
    %c0_166 = arith.constant 0 : index
    %159 = vector.load %arg17[%c2_164, %c0_165, %c0_166] : memref<3x12x12xf32, #tpu.memory_space<vmem>>, vector<1x12x12xf32>
    %160 = vector.shape_cast %159 : vector<1x12x12xf32> to vector<12x12xf32>
    %cst_167 = arith.constant dense<0.000000e+00> : vector<12x192xf32>
    %161 = tpu.matmul %160, %158, %cst_167 {dimension_numbers = #tpu.dot_dimension_numbers<[1], [0], [0], [1], [0, 0, 1, 1], [], []>} : vector<12x12xf32>, vector<12x192xf32>, vector<12x192xf32> -> vector<12x192xf32>
    %162 = arith.addf %155, %161 : vector<12x192xf32>
    %cst_168 = arith.constant 0.000000e+00 : f32
    %163 = vector.broadcast %cst_168 : f32 to vector<12x192xf32>
    %164 = arith.maximumf %162, %163 : vector<12x192xf32>
    %c0_169 = arith.constant 0 : index
    %c0_170 = arith.constant 0 : index
    %165 = vector.load %arg19[%c0_169, %c0_170] : memref<192x192xbf16, #tpu.memory_space<vmem>>, vector<192x192xbf16>
    %166 = arith.truncf %164 : vector<12x192xf32> to vector<12x192xbf16>
    %cst_171 = arith.constant dense<0.000000e+00> : vector<12x192xf32>
    %167 = tpu.matmul %166, %165, %cst_171 {dimension_numbers = #tpu.dot_dimension_numbers<[1], [0], [0], [1], [0, 0, 1, 1], [], []>} : vector<12x192xbf16>, vector<192x192xbf16>, vector<12x192xf32> -> vector<12x192xf32>
    %cst_172 = arith.constant 0.000000e+00 : f32
    %168 = vector.broadcast %cst_172 : f32 to vector<12x192xf32>
    %169 = arith.maximumf %167, %168 : vector<12x192xf32>
    %c0_173 = arith.constant 0 : index
    %c0_174 = arith.constant 0 : index
    %170 = vector.load %arg20[%c0_173, %c0_174] : memref<2x12xf32, #tpu.memory_space<vmem>>, vector<2x12xf32>
    %cst_175 = arith.constant dense<0.000000e+00> : vector<2x192xf32>
    %171 = tpu.matmul %170, %169, %cst_175 {dimension_numbers = #tpu.dot_dimension_numbers<[1], [0], [0], [1], [0, 0, 1, 1], [], []>} : vector<2x12xf32>, vector<12x192xf32>, vector<2x192xf32> -> vector<2x192xf32>
    %c0_176 = arith.constant 0 : index
    %c0_177 = arith.constant 0 : index
    %172 = vector.load %arg21[%c0_176, %c0_177] : memref<192x512xbf16, #tpu.memory_space<vmem>>, vector<192x512xbf16>
    %173 = arith.truncf %171 : vector<2x192xf32> to vector<2x192xbf16>
    %cst_178 = arith.constant dense<0.000000e+00> : vector<2x512xf32>
    %174 = tpu.matmul %173, %172, %cst_178 {dimension_numbers = #tpu.dot_dimension_numbers<[1], [0], [0], [1], [0, 0, 1, 1], [], []>} : vector<2x192xbf16>, vector<192x512xbf16>, vector<2x512xf32> -> vector<2x512xf32>
    %c0_179 = arith.constant 0 : index
    %c0_180 = arith.constant 0 : index
    %175 = vector.load %arg22[%c0_179, %c0_180] : memref<1x512xf32, #tpu.memory_space<vmem>>, vector<1x512xf32>
    %176 = vector.broadcast %175 : vector<1x512xf32> to vector<2x512xf32>
    %177 = arith.addf %174, %176 : vector<2x512xf32>
    %c0_181 = arith.constant 0 : index
    %c0_182 = arith.constant 0 : index
    %178 = vector.load %arg23[%c0_181, %c0_182] : memref<512x128xbf16, #tpu.memory_space<vmem>>, vector<512x128xbf16>
    %179 = arith.truncf %177 : vector<2x512xf32> to vector<2x512xbf16>
    %cst_183 = arith.constant dense<0.000000e+00> : vector<2x128xf32>
    %180 = tpu.matmul %179, %178, %cst_183 {dimension_numbers = #tpu.dot_dimension_numbers<[1], [0], [0], [1], [0, 0, 1, 1], [], []>} : vector<2x512xbf16>, vector<512x128xbf16>, vector<2x128xf32> -> vector<2x128xf32>
    %c0_184 = arith.constant 0 : index
    %c0_185 = arith.constant 0 : index
    %181 = vector.load %arg24[%c0_184, %c0_185] : memref<32x128xbf16, #tpu.memory_space<vmem>>, vector<32x128xbf16>
    %182 = arith.truncf %1 : vector<2x32xf32> to vector<2x32xbf16>
    %cst_186 = arith.constant dense<0.000000e+00> : vector<2x128xf32>
    %183 = tpu.matmul %182, %181, %cst_186 {dimension_numbers = #tpu.dot_dimension_numbers<[1], [0], [0], [1], [0, 0, 1, 1], [], []>} : vector<2x32xbf16>, vector<32x128xbf16>, vector<2x128xf32> -> vector<2x128xf32>
    %184 = arith.addf %180, %183 : vector<2x128xf32>
    %c0_187 = arith.constant 0 : index
    %c0_188 = arith.constant 0 : index
    %185 = vector.load %arg25[%c0_187, %c0_188] : memref<1x128xf32, #tpu.memory_space<vmem>>, vector<1x128xf32>
    %186 = vector.broadcast %185 : vector<1x128xf32> to vector<2x128xf32>
    %187 = arith.addf %184, %186 : vector<2x128xf32>
    %cst_189 = arith.constant 0.000000e+00 : f32
    %188 = vector.broadcast %cst_189 : f32 to vector<2x128xf32>
    %189 = arith.maximumf %187, %188 : vector<2x128xf32>
    %c0_190 = arith.constant 0 : index
    %c0_191 = arith.constant 0 : index
    %190 = vector.load %arg26[%c0_190, %c0_191] : memref<128x10xbf16, #tpu.memory_space<vmem>>, vector<128x10xbf16>
    %191 = arith.truncf %189 : vector<2x128xf32> to vector<2x128xbf16>
    %cst_192 = arith.constant dense<0.000000e+00> : vector<2x10xf32>
    %192 = tpu.matmul %191, %190, %cst_192 {dimension_numbers = #tpu.dot_dimension_numbers<[1], [0], [0], [1], [0, 0, 1, 1], [], []>} : vector<2x128xbf16>, vector<128x10xbf16>, vector<2x10xf32> -> vector<2x10xf32>
    %c0_193 = arith.constant 0 : index
    %c0_194 = arith.constant 0 : index
    %193 = vector.load %arg27[%c0_193, %c0_194] : memref<1x10xf32, #tpu.memory_space<vmem>>, vector<1x10xf32>
    %194 = vector.broadcast %193 : vector<1x10xf32> to vector<2x10xf32>
    %195 = arith.addf %192, %194 : vector<2x10xf32>
    %c0_195 = arith.constant 0 : index
    %c0_196 = arith.constant 0 : index
    %196 = vector.load %arg28[%c0_195, %c0_196] : memref<2x10xf32, #tpu.memory_space<vmem>>, vector<2x10xf32>
    tpu.vector_store %arg28[%c0_195, %c0_196], %195 {strides = array<i32>} : memref<2x10xf32, #tpu.memory_space<vmem>>, vector<2x10xf32>,
    return
  }
  func.func @transform_0(%arg0: i32) -> (i32, i32) {
    %c0_i32 = arith.constant 0 : i32
    %c0_i32_0 = arith.constant 0 : i32
    %c0_i32_1 = arith.constant 0 : i32
    return %c0_i32, %c0_i32_0 : i32, i32
  }
  func.func @transform_1(%arg0: i32) -> (i32, i32) {
    %c0_i32 = arith.constant 0 : i32
    %c0_i32_0 = arith.constant 0 : i32
    %c0_i32_1 = arith.constant 0 : i32
    return %c0_i32, %c0_i32_0 : i32, i32
  }
  func.func @transform_2(%arg0: i32) -> (i32, i32, i32) {
    %c0_i32 = arith.constant 0 : i32
    %c0_i32_0 = arith.constant 0 : i32
    %c0_i32_1 = arith.constant 0 : i32
    %c0_i32_2 = arith.constant 0 : i32
    return %c0_i32, %c0_i32_0, %c0_i32_1 : i32, i32, i32
  }
  func.func @transform_3(%arg0: i32) -> (i32, i32, i32) {
    %c0_i32 = arith.constant 0 : i32
    %c0_i32_0 = arith.constant 0 : i32
    %c0_i32_1 = arith.constant 0 : i32
    %c0_i32_2 = arith.constant 0 : i32
    return %c0_i32, %c0_i32_0, %c0_i32_1 : i32, i32, i32
  }
  func.func @transform_4(%arg0: i32) -> (i32, i32, i32) {
    %c0_i32 = arith.constant 0 : i32
    %c0_i32_0 = arith.constant 0 : i32
    %c0_i32_1 = arith.constant 0 : i32
    %c0_i32_2 = arith.constant 0 : i32
    return %c0_i32, %c0_i32_0, %c0_i32_1 : i32, i32, i32
  }
  func.func @transform_5(%arg0: i32) -> (i32, i32, i32) {
    %c0_i32 = arith.constant 0 : i32
    %c0_i32_0 = arith.constant 0 : i32
    %c0_i32_1 = arith.constant 0 : i32
    %c0_i32_2 = arith.constant 0 : i32
    return %c0_i32, %c0_i32_0, %c0_i32_1 : i32, i32, i32
  }
  func.func @transform_6(%arg0: i32) -> (i32, i32) {
    %c0_i32 = arith.constant 0 : i32
    %c0_i32_0 = arith.constant 0 : i32
    %c0_i32_1 = arith.constant 0 : i32
    return %c0_i32, %c0_i32_0 : i32, i32
  }
  func.func @transform_7(%arg0: i32) -> (i32, i32, i32) {
    %c0_i32 = arith.constant 0 : i32
    %c0_i32_0 = arith.constant 0 : i32
    %c0_i32_1 = arith.constant 0 : i32
    %c0_i32_2 = arith.constant 0 : i32
    return %c0_i32, %c0_i32_0, %c0_i32_1 : i32, i32, i32
  }
  func.func @transform_8(%arg0: i32) -> (i32, i32, i32) {
    %c0_i32 = arith.constant 0 : i32
    %c0_i32_0 = arith.constant 0 : i32
    %c0_i32_1 = arith.constant 0 : i32
    %c0_i32_2 = arith.constant 0 : i32
    return %c0_i32, %c0_i32_0, %c0_i32_1 : i32, i32, i32
  }
  func.func @transform_9(%arg0: i32) -> (i32, i32) {
    %c0_i32 = arith.constant 0 : i32
    %c0_i32_0 = arith.constant 0 : i32
    %c0_i32_1 = arith.constant 0 : i32
    return %c0_i32, %c0_i32_0 : i32, i32
  }
  func.func @transform_10(%arg0: i32) -> (i32, i32) {
    %c0_i32 = arith.constant 0 : i32
    %c0_i32_0 = arith.constant 0 : i32
    %c0_i32_1 = arith.constant 0 : i32
    return %c0_i32, %c0_i32_0 : i32, i32
  }
  func.func @transform_11(%arg0: i32) -> (i32, i32, i32) {
    %c0_i32 = arith.constant 0 : i32
    %c0_i32_0 = arith.constant 0 : i32
    %c0_i32_1 = arith.constant 0 : i32
    %c0_i32_2 = arith.constant 0 : i32
    return %c0_i32, %c0_i32_0, %c0_i32_1 : i32, i32, i32
  }
  func.func @transform_12(%arg0: i32) -> (i32, i32, i32) {
    %c0_i32 = arith.constant 0 : i32
    %c0_i32_0 = arith.constant 0 : i32
    %c0_i32_1 = arith.constant 0 : i32
    %c0_i32_2 = arith.constant 0 : i32
    return %c0_i32, %c0_i32_0, %c0_i32_1 : i32, i32, i32
  }
  func.func @transform_13(%arg0: i32) -> (i32, i32) {
    %c0_i32 = arith.constant 0 : i32
    %c0_i32_0 = arith.constant 0 : i32
    %c0_i32_1 = arith.constant 0 : i32
    return %c0_i32, %c0_i32_0 : i32, i32
  }
  func.func @transform_14(%arg0: i32) -> (i32, i32, i32) {
    %c0_i32 = arith.constant 0 : i32
    %c0_i32_0 = arith.constant 0 : i32
    %c0_i32_1 = arith.constant 0 : i32
    %c0_i32_2 = arith.constant 0 : i32
    return %c0_i32, %c0_i32_0, %c0_i32_1 : i32, i32, i32
  }
  func.func @transform_15(%arg0: i32) -> (i32, i32) {
    %c0_i32 = arith.constant 0 : i32
    %c0_i32_0 = arith.constant 0 : i32
    %c0_i32_1 = arith.constant 0 : i32
    return %c0_i32, %c0_i32_0 : i32, i32
  }
  func.func @transform_16(%arg0: i32) -> (i32, i32, i32) {
    %c0_i32 = arith.constant 0 : i32
    %c0_i32_0 = arith.constant 0 : i32
    %c0_i32_1 = arith.constant 0 : i32
    %c0_i32_2 = arith.constant 0 : i32
    return %c0_i32, %c0_i32_0, %c0_i32_1 : i32, i32, i32
  }
  func.func @transform_17(%arg0: i32) -> (i32, i32, i32) {
    %c0_i32 = arith.constant 0 : i32
    %c0_i32_0 = arith.constant 0 : i32
    %c0_i32_1 = arith.constant 0 : i32
    %c0_i32_2 = arith.constant 0 : i32
    return %c0_i32, %c0_i32_0, %c0_i32_1 : i32, i32, i32
  }
  func.func @transform_18(%arg0: i32) -> (i32, i32) {
    %c0_i32 = arith.constant 0 : i32
    %c0_i32_0 = arith.constant 0 : i32
    %c0_i32_1 = arith.constant 0 : i32
    return %c0_i32, %c0_i32_0 : i32, i32
  }
  func.func @transform_19(%arg0: i32) -> (i32, i32) {
    %c0_i32 = arith.constant 0 : i32
    %c0_i32_0 = arith.constant 0 : i32
    %c0_i32_1 = arith.constant 0 : i32
    return %c0_i32, %c0_i32_0 : i32, i32
  }
  func.func @transform_20(%arg0: i32) -> (i32, i32) {
    %c0_i32 = arith.constant 0 : i32
    %c0_i32_0 = arith.constant 0 : i32
    %c0_i32_1 = arith.constant 0 : i32
    return %c0_i32, %c0_i32_0 : i32, i32
  }
  func.func @transform_21(%arg0: i32) -> (i32, i32) {
    %c0_i32 = arith.constant 0 : i32
    %c0_i32_0 = arith.constant 0 : i32
    %c0_i32_1 = arith.constant 0 : i32
    return %c0_i32, %c0_i32_0 : i32, i32
  }
  func.func @transform_22(%arg0: i32) -> (i32, i32) {
    %c0_i32 = arith.constant 0 : i32
    %c0_i32_0 = arith.constant 0 : i32
    %c0_i32_1 = arith.constant 0 : i32
    return %c0_i32, %c0_i32_0 : i32, i32
  }
  func.func @transform_23(%arg0: i32) -> (i32, i32) {
    %c0_i32 = arith.constant 0 : i32
    %c0_i32_0 = arith.constant 0 : i32
    %c0_i32_1 = arith.constant 0 : i32
    return %c0_i32, %c0_i32_0 : i32, i32
  }
  func.func @transform_24(%arg0: i32) -> (i32, i32) {
    %c0_i32 = arith.constant 0 : i32
    %c0_i32_0 = arith.constant 0 : i32
    %c0_i32_1 = arith.constant 0 : i32
    return %c0_i32, %c0_i32_0 : i32, i32
  }
  func.func @transform_25(%arg0: i32) -> (i32, i32) {
    %c0_i32 = arith.constant 0 : i32
    %c0_i32_0 = arith.constant 0 : i32
    %c0_i32_1 = arith.constant 0 : i32
    return %c0_i32, %c0_i32_0 : i32, i32
  }
  func.func @transform_26(%arg0: i32) -> (i32, i32) {
    %c0_i32 = arith.constant 0 : i32
    %c0_i32_0 = arith.constant 0 : i32
    %c0_i32_1 = arith.constant 0 : i32
    return %c0_i32, %c0_i32_0 : i32, i32
  }
  func.func @transform_27(%arg0: i32) -> (i32, i32) {
    %c0_i32 = arith.constant 0 : i32
    %c0_i32_0 = arith.constant 0 : i32
    %c0_i32_1 = arith.constant 0 : i32
    return %c0_i32, %c0_i32_0 : i32, i32
  }
}

</mosaic_0001>

<llo_original>
// kernel: _lambda_.1
$region0: #{_lambda_.1}
  #allocation0 [shape = 'u32[]', space=smem, size = 0x4, offset = 0x4, fixed_abs, tag = 'smem constant byte address 0x4 - core index']
  #allocation1 [shape = 'u32[72,128]{1,0:T(1,128)}', space=vmem, size = 0x9000, scoped, tag = 'internal scratch']
  %s0 = inlined_call_operand.vmem [shape: f32[68,34], index: 0, kind: input, shape index: {}]
  %s1 = inlined_call_operand.vmem [shape: f32[2,32], index: 1, kind: input, shape index: {}]
  %s2 = inlined_call_operand.hbm [shape: f32[3,36,68], index: 2, kind: input, shape index: {}]
  %s3 = inlined_call_operand.hbm [shape: bf16[3,34,72], index: 3, kind: input, shape index: {}]
  %s4 = inlined_call_operand.hbm [shape: f32[3,20,36], index: 4, kind: input, shape index: {}]
  %s5 = inlined_call_operand.hbm [shape: bf16[3,72,160], index: 5, kind: input, shape index: {}]
  %s6 = inlined_call_operand.hbm [shape: bf16[160,320], index: 6, kind: input, shape index: {}]
  %s7 = inlined_call_operand.hbm [shape: f32[3,20,20], index: 7, kind: input, shape index: {}]
  %s8 = inlined_call_operand.hbm [shape: bf16[3,320,320], index: 8, kind: input, shape index: {}]
  %s9 = inlined_call_operand.hbm [shape: bf16[320,160], index: 9, kind: input, shape index: {}]
  %s10 = inlined_call_operand.hbm [shape: bf16[160,320], index: 10, kind: input, shape index: {}]
  %s11 = inlined_call_operand.hbm [shape: f32[3,12,20], index: 11, kind: input, shape index: {}]
  %s12 = inlined_call_operand.hbm [shape: bf16[3,320,192], index: 12, kind: input, shape index: {}]
  %s13 = inlined_call_operand.hbm [shape: bf16[192,96], index: 13, kind: input, shape index: {}]
  %s14 = inlined_call_operand.hbm [shape: bf16[3,160,96], index: 14, kind: input, shape index: {}]
  %s15 = inlined_call_operand.hbm [shape: bf16[96,192], index: 15, kind: input, shape index: {}]
  %s16 = inlined_call_operand.hbm [shape: f32[3,12,12], index: 16, kind: input, shape index: {}]
  %s17 = inlined_call_operand.hbm [shape: bf16[3,192,192], index: 17, kind: input, shape index: {}]
  %s18 = inlined_call_operand.hbm [shape: bf16[192,192], index: 18, kind: input, shape index: {}]
  %s19 = inlined_call_operand.vmem [shape: f32[2,12], index: 19, kind: input, shape index: {}]
  %s20 = inlined_call_operand.hbm [shape: bf16[192,512], index: 20, kind: input, shape index: {}]
  %s21 = inlined_call_operand.vmem [shape: f32[1,512], index: 21, kind: input, shape index: {}]
  %s22 = inlined_call_operand.vmem [shape: bf16[512,128], index: 22, kind: input, shape index: {}]
  %s23 = inlined_call_operand.hbm [shape: bf16[32,128], index: 23, kind: input, shape index: {}]
  %s24 = inlined_call_operand.vmem [shape: f32[1,128], index: 24, kind: input, shape index: {}]
  %s25 = inlined_call_operand.vmem [shape: bf16[128,10], index: 25, kind: input, shape index: {}]
  %s26 = inlined_call_operand.vmem [shape: f32[1,10], index: 26, kind: input, shape index: {}]
  %s27 = inlined_call_operand.hbm [shape: f32[2,10], index: 27, kind: output, shape index: {}]
  %s28 = sld [smem:[#allocation0]]
  $region194: #{_lambda_.1} parent=0
    _
  %s30 = ssub.s32 1, %s28
  %s31 = scalar_select 0, %s30, %s28
  $region1: #{_lambda_.1} parent=0
    #allocation2 [shape = 'u8[61440]{0}', space=vmem, size = 0xf000, scoped, tag = 'input window, operand 2, single buffered']
    #allocation3 [shape = 's32[1]{0}', space=sflag, size = 0x4, scoped, tag = 'scoped memory for _lambda_.1']
    #allocation4 [shape = 's32[1]{0}', space=sflag, size = 0x4, scoped, tag = 'scoped memory for _lambda_.1']
    #allocation5 [shape = 'u8[30720]{0}', space=vmem, size = 0x7800, scoped, tag = 'input window, operand 3, single buffered']
    #allocation6 [shape = 's32[1]{0}', space=sflag, size = 0x4, scoped, tag = 'scoped memory for _lambda_.1']
    #allocation7 [shape = 'u8[36864]{0}', space=vmem, size = 0x9000, scoped, tag = 'input window, operand 4, single buffered']
    #allocation8 [shape = 'u8[110592]{0}', space=vmem, size = 0x1b000, scoped, tag = 'input window, operand 5, single buffered']
    #allocation9 [shape = 's32[1]{0}', space=sflag, size = 0x4, scoped, tag = 'scoped memory for _lambda_.1']
    #allocation10 [shape = 'u8[122880]{0}', space=vmem, size = 0x1e000, scoped, tag = 'input window, operand 6, single buffered']
    #allocation11 [shape = 'u8[36864]{0}', space=vmem, size = 0x9000, scoped, tag = 'input window, operand 7, single buffered']
    #allocation12 [shape = 's32[1]{0}', space=sflag, size = 0x4, scoped, tag = 'scoped memory for _lambda_.1']
    #allocation13 [shape = 'u8[737280]{0}', space=vmem, size = 0xb4000, scoped, tag = 'input window, operand 8, single buffered']
    #allocation14 [shape = 'u8[163840]{0}', space=vmem, size = 0x28000, scoped, tag = 'input window, operand 9, single buffered']
    #allocation15 [shape = 's32[1]{0}', space=sflag, size = 0x4, scoped, tag = 'scoped memory for _lambda_.1']
    #allocation16 [shape = 'u8[122880]{0}', space=vmem, size = 0x1e000, scoped, tag = 'input window, operand 10, single buffered']
    #allocation17 [shape = 'u8[24576]{0}', space=vmem, size = 0x6000, scoped, tag = 'input window, operand 11, single buffered']
    #allocation18 [shape = 's32[1]{0}', space=sflag, size = 0x4, scoped, tag = 'scoped memory for _lambda_.1']
    #allocation19 [shape = 'u8[491520]{0}', space=vmem, size = 0x78000, scoped, tag = 'input window, operand 12, single buffered']
    #allocation20 [shape = 'u8[49152]{0}', space=vmem, size = 0xc000, scoped, tag = 'input window, operand 13, single buffered']
    #allocation21 [shape = 's32[1]{0}', space=sflag, size = 0x4, scoped, tag = 'scoped memory for _lambda_.1']
    #allocation22 [shape = 'u8[122880]{0}', space=vmem, size = 0x1e000, scoped, tag = 'input window, operand 14, single buffered']
    #allocation23 [shape = 'u8[49152]{0}', space=vmem, size = 0xc000, scoped, tag = 'input window, operand 15, single buffered']
    #allocation24 [shape = 's32[1]{0}', space=sflag, size = 0x4, scoped, tag = 'scoped memory for _lambda_.1']
    #allocation25 [shape = 'u8[24576]{0}', space=vmem, size = 0x6000, scoped, tag = 'input window, operand 16, single buffered']
    #allocation26 [shape = 'u8[294912]{0}', space=vmem, size = 0x48000, scoped, tag = 'input window, operand 17, single buffered']
    #allocation27 [shape = 's32[1]{0}', space=sflag, size = 0x4, scoped, tag = 'scoped memory for _lambda_.1']
    #allocation28 [shape = 'u8[98304]{0}', space=vmem, size = 0x18000, scoped, tag = 'input window, operand 18, single buffered']
    #allocation29 [shape = 'u8[196608]{0}', space=vmem, size = 0x30000, scoped, tag = 'input window, operand 20, single buffered']
    #allocation30 [shape = 's32[1]{0}', space=sflag, size = 0x4, scoped, tag = 'scoped memory for _lambda_.1']
    #allocation31 [shape = 'u8[8192]{0}', space=vmem, size = 0x2000, scoped, tag = 'input window, operand 23, single buffered']
    #allocation32 [shape = 'u8[1024]{0}', space=vmem, size = 0x400, scoped, tag = 'output window, operand 0, single buffered']
    %32 = vsyncpa [#allocation3], 0
    %33 = vsyncpa [#allocation6], 0
    %34 = vsyncpa [#allocation9], 0
    %35 = vsyncpa [#allocation12], 0
    %36 = vsyncpa [#allocation15], 0
    %37 = vsyncpa [#allocation18], 0
    %38 = vsyncpa [#allocation21], 0
    %39 = vsyncpa [#allocation24], 0
    %40 = vsyncpa [#allocation27], 0
    %41 = vsyncpa [#allocation30], 0
    %42 = vsyncpa [#allocation4], 0
    // Predicated region
    $region2: #{_lambda_.1} parent=1 // pred_check
      _
    $region3: #{_lambda_.1} parent=1 // pred_check_branch
      %44 = sbr.rel (0) target = $region5
    $region4: #{_lambda_.1} parent=1 // pred_region
      _
    $region5: #{_lambda_.1} parent=1 // pred_fallthru
      _
    // Predicated region
    $region6: #{_lambda_.1} parent=1 // pred_check
      _
    $region7: #{_lambda_.1} parent=1 // pred_check_branch
      %46 = sbr.rel (0) target = $region9
    $region8: #{_lambda_.1} parent=1 // pred_region
      _
    $region9: #{_lambda_.1} parent=1 // pred_fallthru
      _
    // Predicated region
    $region10: #{_lambda_.1} parent=1 // pred_check
      _
    $region11: #{_lambda_.1} parent=1 // pred_check_branch
      %48 = sbr.rel (0) target = $region13
    $region12: #{_lambda_.1} parent=1 // pred_region
      %50 = vsyncadd [#allocation3], 0
      %s51 = sshll.u32 %s2, 4
      %s52 = int_to_ptr.hbm [resolvable:$true] %s51
      %s53 = sshll.u32 [#allocation2], 4
      %s54 = int_to_ptr.vmem [resolvable:$true] %s53
      %59 = dma.hbm_to_vmem [thread:$0]  %s52, 1920, %s54, [#allocation3], 128, 128, 8
    $region13: #{_lambda_.1} parent=1 // pred_fallthru
      _
    // Predicated region
    $region14: #{_lambda_.1} parent=1 // pred_check
      _
    $region15: #{_lambda_.1} parent=1 // pred_check_branch
      %61 = sbr.rel (0) target = $region17
    $region16: #{_lambda_.1} parent=1 // pred_region
      %63 = vsyncadd [#allocation6], 0
      %s64 = sshll.u32 %s3, 4
      %s65 = int_to_ptr.hbm [resolvable:$true] %s64
      %s66 = sshll.u32 [#allocation5], 4
      %s67 = int_to_ptr.vmem [resolvable:$true] %s66
      %72 = dma.hbm_to_vmem [thread:$0]  %s65, 960, %s67, [#allocation6], 64, 64, 4
    $region17: #{_lambda_.1} parent=1 // pred_fallthru
      _
    // Predicated region
    $region18: #{_lambda_.1} parent=1 // pred_check
      _
    $region19: #{_lambda_.1} parent=1 // pred_check_branch
      %74 = sbr.rel (0) target = $region21
    $region20: #{_lambda_.1} parent=1 // pred_region
      %76 = vsyncadd [#allocation6], 0
      %s77 = sshll.u32 %s4, 4
      %s78 = int_to_ptr.hbm [resolvable:$true] %s77
      %s79 = sshll.u32 [#allocation7], 4
      %s80 = int_to_ptr.vmem [resolvable:$true] %s79
      %85 = dma.hbm_to_vmem [thread:$0]  %s78, 1152, %s80, [#allocation6], 128, 128, 8
    $region21: #{_lambda_.1} parent=1 // pred_fallthru
      _
    // Predicated region
    $region22: #{_lambda_.1} parent=1 // pred_check
      _
    $region23: #{_lambda_.1} parent=1 // pred_check_branch
      %87 = sbr.rel (0) target = $region25
    $region24: #{_lambda_.1} parent=1 // pred_region
      %89 = vsyncadd [#allocation9], 0
      %s90 = sshll.u32 %s5, 4
      %s91 = int_to_ptr.hbm [resolvable:$true] %s90
      %s92 = sshll.u32 [#allocation8], 4
      %s93 = int_to_ptr.vmem [resolvable:$true] %s92
      %98 = dma.hbm_to_vmem [thread:$0]  %s91, 3456, %s93, [#allocation9], 128, 128, 8
    $region25: #{_lambda_.1} parent=1 // pred_fallthru
      _
    // Predicated region
    $region26: #{_lambda_.1} parent=1 // pred_check
      _
    $region27: #{_lambda_.1} parent=1 // pred_check_branch
      %100 = sbr.rel (0) target = $region29
    $region28: #{_lambda_.1} parent=1 // pred_region
      %102 = vsyncadd [#allocation9], 0
      %s103 = sshll.u32 %s6, 4
      %s104 = int_to_ptr.hbm [resolvable:$true] %s103
      %s105 = sshll.u32 [#allocation10], 4
      %s106 = int_to_ptr.vmem [resolvable:$true] %s105
      %111 = dma.hbm_to_vmem [thread:$0]  %s104, 3840, %s106, [#allocation9], 192, 192, 12
    $region29: #{_lambda_.1} parent=1 // pred_fallthru
      _
    // Predicated region
    $region30: #{_lambda_.1} parent=1 // pred_check
      _
    $region31: #{_lambda_.1} parent=1 // pred_check_branch
      %113 = sbr.rel (0) target = $region33
    $region32: #{_lambda_.1} parent=1 // pred_region
      %115 = vsyncadd [#allocation12], 0
      %s116 = sshll.u32 %s7, 4
      %s117 = int_to_ptr.hbm [resolvable:$true] %s116
      %s118 = sshll.u32 [#allocation11], 4
      %s119 = int_to_ptr.vmem [resolvable:$true] %s118
      %124 = dma.hbm_to_vmem [thread:$0]  %s117, 1152, %s119, [#allocation12], 128, 128, 8
    $region33: #{_lambda_.1} parent=1 // pred_fallthru
      _
    // Predicated region
    $region34: #{_lambda_.1} parent=1 // pred_check
      _
    $region35: #{_lambda_.1} parent=1 // pred_check_branch
      %126 = sbr.rel (0) target = $region37
    $region36: #{_lambda_.1} parent=1 // pred_region
      %128 = vsyncadd [#allocation12], 0
      %s129 = sshll.u32 %s8, 4
      %s130 = int_to_ptr.hbm [resolvable:$true] %s129
      %s131 = sshll.u32 [#allocation13], 4
      %s132 = int_to_ptr.vmem [resolvable:$true] %s131
      %137 = dma.hbm_to_vmem [thread:$0]  %s130, 23040, %s132, [#allocation12], 192, 192, 12
    $region37: #{_lambda_.1} parent=1 // pred_fallthru
      _
    // Predicated region
    $region38: #{_lambda_.1} parent=1 // pred_check
      _
    $region39: #{_lambda_.1} parent=1 // pred_check_branch
      %139 = sbr.rel (0) target = $region41
    $region40: #{_lambda_.1} parent=1 // pred_region
      %141 = vsyncadd [#allocation15], 0
      %s142 = sshll.u32 %s9, 4
      %s143 = int_to_ptr.hbm [resolvable:$true] %s142
      %s144 = sshll.u32 [#allocation14], 4
      %s145 = int_to_ptr.vmem [resolvable:$true] %s144
      %150 = dma.hbm_to_vmem [thread:$0]  %s143, 5120, %s145, [#allocation15], 128, 128, 8
    $region41: #{_lambda_.1} parent=1 // pred_fallthru
      _
    // Predicated region
    $region42: #{_lambda_.1} parent=1 // pred_check
      _
    $region43: #{_lambda_.1} parent=1 // pred_check_branch
      %152 = sbr.rel (0) target = $region45
    $region44: #{_lambda_.1} parent=1 // pred_region
      %154 = vsyncadd [#allocation15], 0
      %s155 = sshll.u32 %s10, 4
      %s156 = int_to_ptr.hbm [resolvable:$true] %s155
      %s157 = sshll.u32 [#allocation16], 4
      %s158 = int_to_ptr.vmem [resolvable:$true] %s157
      %163 = dma.hbm_to_vmem [thread:$0]  %s156, 3840, %s158, [#allocation15], 192, 192, 12
    $region45: #{_lambda_.1} parent=1 // pred_fallthru
      _
    // Predicated region
    $region46: #{_lambda_.1} parent=1 // pred_check
      _
    $region47: #{_lambda_.1} parent=1 // pred_check_branch
      %165 = sbr.rel (0) target = $region49
    $region48: #{_lambda_.1} parent=1 // pred_region
      %167 = vsyncadd [#allocation18], 0
      %s168 = sshll.u32 %s11, 4
      %s169 = int_to_ptr.hbm [resolvable:$true] %s168
      %s170 = sshll.u32 [#allocation17], 4
      %s171 = int_to_ptr.vmem [resolvable:$true] %s170
      %176 = dma.hbm_to_vmem [thread:$0]  %s169, 768, %s171, [#allocation18], 128, 128, 8
    $region49: #{_lambda_.1} parent=1 // pred_fallthru
      _
    // Predicated region
    $region50: #{_lambda_.1} parent=1 // pred_check
      _
    $region51: #{_lambda_.1} parent=1 // pred_check_branch
      %178 = sbr.rel (0) target = $region53
    $region52: #{_lambda_.1} parent=1 // pred_region
      %180 = vsyncadd [#allocation18], 0
      %s181 = sshll.u32 %s12, 4
      %s182 = int_to_ptr.hbm [resolvable:$true] %s181
      %s183 = sshll.u32 [#allocation19], 4
      %s184 = int_to_ptr.vmem [resolvable:$true] %s183
      %189 = dma.hbm_to_vmem [thread:$0]  %s182, 15360, %s184, [#allocation18], 128, 128, 8
    $region53: #{_lambda_.1} parent=1 // pred_fallthru
      _
    // Predicated region
    $region54: #{_lambda_.1} parent=1 // pred_check
      _
    $region55: #{_lambda_.1} parent=1 // pred_check_branch
      %191 = sbr.rel (0) target = $region57
    $region56: #{_lambda_.1} parent=1 // pred_region
      %193 = vsyncadd [#allocation21], 0
      %s194 = sshll.u32 %s13, 4
      %s195 = int_to_ptr.hbm [resolvable:$true] %s194
      %s196 = sshll.u32 [#allocation20], 4
      %s197 = int_to_ptr.vmem [resolvable:$true] %s196
      %202 = dma.hbm_to_vmem [thread:$0]  %s195, 1536, %s197, [#allocation21], 64, 64, 4
    $region57: #{_lambda_.1} parent=1 // pred_fallthru
      _
    // Predicated region
    $region58: #{_lambda_.1} parent=1 // pred_check
      _
    $region59: #{_lambda_.1} parent=1 // pred_check_branch
      %204 = sbr.rel (0) target = $region61
    $region60: #{_lambda_.1} parent=1 // pred_region
      %206 = vsyncadd [#allocation21], 0
      %s207 = sshll.u32 %s14, 4
      %s208 = int_to_ptr.hbm [resolvable:$true] %s207
      %s209 = sshll.u32 [#allocation22], 4
      %s210 = int_to_ptr.vmem [resolvable:$true] %s209
      %215 = dma.hbm_to_vmem [thread:$0]  %s208, 3840, %s210, [#allocation21], 64, 64, 4
    $region61: #{_lambda_.1} parent=1 // pred_fallthru
      _
    // Predicated region
    $region62: #{_lambda_.1} parent=1 // pred_check
      _
    $region63: #{_lambda_.1} parent=1 // pred_check_branch
      %217 = sbr.rel (0) target = $region65
    $region64: #{_lambda_.1} parent=1 // pred_region
      %219 = vsyncadd [#allocation24], 0
      %s220 = sshll.u32 %s15, 4
      %s221 = int_to_ptr.hbm [resolvable:$true] %s220
      %s222 = sshll.u32 [#allocation23], 4
      %s223 = int_to_ptr.vmem [resolvable:$true] %s222
      %228 = dma.hbm_to_vmem [thread:$0]  %s221, 1536, %s223, [#allocation24], 128, 128, 8
    $region65: #{_lambda_.1} parent=1 // pred_fallthru
      _
    // Predicated region
    $region66: #{_lambda_.1} parent=1 // pred_check
      _
    $region67: #{_lambda_.1} parent=1 // pred_check_branch
      %230 = sbr.rel (0) target = $region69
    $region68: #{_lambda_.1} parent=1 // pred_region
      %232 = vsyncadd [#allocation24], 0
      %s233 = sshll.u32 %s16, 4
      %s234 = int_to_ptr.hbm [resolvable:$true] %s233
      %s235 = sshll.u32 [#allocation25], 4
      %s236 = int_to_ptr.vmem [resolvable:$true] %s235
      %241 = dma.hbm_to_vmem [thread:$0]  %s234, 768, %s236, [#allocation24], 128, 128, 8
    $region69: #{_lambda_.1} parent=1 // pred_fallthru
      _
    // Predicated region
    $region70: #{_lambda_.1} parent=1 // pred_check
      _
    $region71: #{_lambda_.1} parent=1 // pred_check_branch
      %243 = sbr.rel (0) target = $region73
    $region72: #{_lambda_.1} parent=1 // pred_region
      %245 = vsyncadd [#allocation27], 0
      %s246 = sshll.u32 %s17, 4
      %s247 = int_to_ptr.hbm [resolvable:$true] %s246
      %s248 = sshll.u32 [#allocation26], 4
      %s249 = int_to_ptr.vmem [resolvable:$true] %s248
      %254 = dma.hbm_to_vmem [thread:$0]  %s247, 9216, %s249, [#allocation27], 128, 128, 8
    $region73: #{_lambda_.1} parent=1 // pred_fallthru
      _
    // Predicated region
    $region74: #{_lambda_.1} parent=1 // pred_check
      _
    $region75: #{_lambda_.1} parent=1 // pred_check_branch
      %256 = sbr.rel (0) target = $region77
    $region76: #{_lambda_.1} parent=1 // pred_region
      %258 = vsyncadd [#allocation27], 0
      %s259 = sshll.u32 %s18, 4
      %s260 = int_to_ptr.hbm [resolvable:$true] %s259
      %s261 = sshll.u32 [#allocation28], 4
      %s262 = int_to_ptr.vmem [resolvable:$true] %s261
      %267 = dma.hbm_to_vmem [thread:$0]  %s260, 3072, %s262, [#allocation27], 128, 128, 8
    $region77: #{_lambda_.1} parent=1 // pred_fallthru
      _
    // Predicated region
    $region78: #{_lambda_.1} parent=1 // pred_check
      _
    $region79: #{_lambda_.1} parent=1 // pred_check_branch
      %269 = sbr.rel (0) target = $region81
    $region80: #{_lambda_.1} parent=1 // pred_region
      _
    $region81: #{_lambda_.1} parent=1 // pred_fallthru
      _
    // Predicated region
    $region82: #{_lambda_.1} parent=1 // pred_check
      _
    $region83: #{_lambda_.1} parent=1 // pred_check_branch
      %271 = sbr.rel (0) target = $region85
    $region84: #{_lambda_.1} parent=1 // pred_region
      %273 = vsyncadd [#allocation30], 0
      %s274 = sshll.u32 %s20, 4
      %s275 = int_to_ptr.hbm [resolvable:$true] %s274
      %s276 = sshll.u32 [#allocation29], 4
      %s277 = int_to_ptr.vmem [resolvable:$true] %s276
      %282 = dma.hbm_to_vmem [thread:$0]  %s275, 6144, %s277, [#allocation30], 256, 256, 16
    $region85: #{_lambda_.1} parent=1 // pred_fallthru
      _
    // Predicated region
    $region86: #{_lambda_.1} parent=1 // pred_check
      _
    $region87: #{_lambda_.1} parent=1 // pred_check_branch
      %284 = sbr.rel (0) target = $region89
    $region88: #{_lambda_.1} parent=1 // pred_region
      _
    $region89: #{_lambda_.1} parent=1 // pred_fallthru
      _
    // Predicated region
    $region90: #{_lambda_.1} parent=1 // pred_check
      _
    $region91: #{_lambda_.1} parent=1 // pred_check_branch
      %286 = sbr.rel (0) target = $region93
    $region92: #{_lambda_.1} parent=1 // pred_region
      _
    $region93: #{_lambda_.1} parent=1 // pred_fallthru
      _
    // Predicated region
    $region94: #{_lambda_.1} parent=1 // pred_check
      _
    $region95: #{_lambda_.1} parent=1 // pred_check_branch
      %288 = sbr.rel (0) target = $region97
    $region96: #{_lambda_.1} parent=1 // pred_region
      %290 = vsyncadd [#allocation30], 0
      %s291 = sshll.u32 %s23, 4
      %s292 = int_to_ptr.hbm [resolvable:$true] %s291
      %s293 = sshll.u32 [#allocation31], 4
      %s294 = int_to_ptr.vmem [resolvable:$true] %s293
      %299 = dma.hbm_to_vmem [thread:$0]  %s292, 256, %s294, [#allocation30], 64, 64, 4
    $region97: #{_lambda_.1} parent=1 // pred_fallthru
      _
    // Predicated region
    $region98: #{_lambda_.1} parent=1 // pred_check
      _
    $region99: #{_lambda_.1} parent=1 // pred_check_branch
      %301 = sbr.rel (0) target = $region101
    $region100: #{_lambda_.1} parent=1 // pred_region
      _
    $region101: #{_lambda_.1} parent=1 // pred_fallthru
      _
    // Predicated region
    $region102: #{_lambda_.1} parent=1 // pred_check
      _
    $region103: #{_lambda_.1} parent=1 // pred_check_branch
      %303 = sbr.rel (0) target = $region105
    $region104: #{_lambda_.1} parent=1 // pred_region
      _
    $region105: #{_lambda_.1} parent=1 // pred_fallthru
      _
    // Predicated region
    $region106: #{_lambda_.1} parent=1 // pred_check
      _
    $region107: #{_lambda_.1} parent=1 // pred_check_branch
      %305 = sbr.rel (0) target = $region109
    $region108: #{_lambda_.1} parent=1 // pred_region
      _
    $region109: #{_lambda_.1} parent=1 // pred_fallthru
      _
    // Predicated region
    $region110: #{_lambda_.1} parent=1 // pred_check
      _
    $region111: #{_lambda_.1} parent=1 // pred_check_branch
      %307 = sbr.rel (0) target = $region113
    $region112: #{_lambda_.1} parent=1 // pred_region
      %309 = dma.done [#allocation3], 1920
    $region113: #{_lambda_.1} parent=1 // pred_fallthru
      _
    // Predicated region
    $region114: #{_lambda_.1} parent=1 // pred_check
      _
    $region115: #{_lambda_.1} parent=1 // pred_check_branch
      %311 = sbr.rel (0) target = $region117
    $region116: #{_lambda_.1} parent=1 // pred_region
      %313 = dma.done [#allocation6], 960
    $region117: #{_lambda_.1} parent=1 // pred_fallthru
      _
    // Predicated region
    $region118: #{_lambda_.1} parent=1 // pred_check
      _
    $region119: #{_lambda_.1} parent=1 // pred_check_branch
      %315 = sbr.rel (0) target = $region121
    $region120: #{_lambda_.1} parent=1 // pred_region
      %317 = dma.done [#allocation6], 1152
    $region121: #{_lambda_.1} parent=1 // pred_fallthru
      _
    // Predicated region
    $region122: #{_lambda_.1} parent=1 // pred_check
      _
    $region123: #{_lambda_.1} parent=1 // pred_check_branch
      %319 = sbr.rel (0) target = $region125
    $region124: #{_lambda_.1} parent=1 // pred_region
      %321 = dma.done [#allocation9], 3456
    $region125: #{_lambda_.1} parent=1 // pred_fallthru
      _
    // Predicated region
    $region126: #{_lambda_.1} parent=1 // pred_check
      _
    $region127: #{_lambda_.1} parent=1 // pred_check_branch
      %323 = sbr.rel (0) target = $region129
    $region128: #{_lambda_.1} parent=1 // pred_region
      %325 = dma.done [#allocation9], 3840
    $region129: #{_lambda_.1} parent=1 // pred_fallthru
      _
    // Predicated region
    $region130: #{_lambda_.1} parent=1 // pred_check
      _
    $region131: #{_lambda_.1} parent=1 // pred_check_branch
      %327 = sbr.rel (0) target = $region133
    $region132: #{_lambda_.1} parent=1 // pred_region
      %329 = dma.done [#allocation12], 1152
    $region133: #{_lambda_.1} parent=1 // pred_fallthru
      _
    // Predicated region
    $region134: #{_lambda_.1} parent=1 // pred_check
      _
    $region135: #{_lambda_.1} parent=1 // pred_check_branch
      %331 = sbr.rel (0) target = $region137
    $region136: #{_lambda_.1} parent=1 // pred_region
      %333 = dma.done [#allocation12], 23040
    $region137: #{_lambda_.1} parent=1 // pred_fallthru
      _
    // Predicated region
    $region138: #{_lambda_.1} parent=1 // pred_check
      _
    $region139: #{_lambda_.1} parent=1 // pred_check_branch
      %335 = sbr.rel (0) target = $region141
    $region140: #{_lambda_.1} parent=1 // pred_region
      %337 = dma.done [#allocation15], 5120
    $region141: #{_lambda_.1} parent=1 // pred_fallthru
      _
    // Predicated region
    $region142: #{_lambda_.1} parent=1 // pred_check
      _
    $region143: #{_lambda_.1} parent=1 // pred_check_branch
      %339 = sbr.rel (0) target = $region145
    $region144: #{_lambda_.1} parent=1 // pred_region
      %341 = dma.done [#allocation15], 3840
    $region145: #{_lambda_.1} parent=1 // pred_fallthru
      _
    // Predicated region
    $region146: #{_lambda_.1} parent=1 // pred_check
      _
    $region147: #{_lambda_.1} parent=1 // pred_check_branch
      %343 = sbr.rel (0) target = $region149
    $region148: #{_lambda_.1} parent=1 // pred_region
      %345 = dma.done [#allocation18], 768
    $region149: #{_lambda_.1} parent=1 // pred_fallthru
      _
    // Predicated region
    $region150: #{_lambda_.1} parent=1 // pred_check
      _
    $region151: #{_lambda_.1} parent=1 // pred_check_branch
      %347 = sbr.rel (0) target = $region153
    $region152: #{_lambda_.1} parent=1 // pred_region
      %349 = dma.done [#allocation18], 15360
    $region153: #{_lambda_.1} parent=1 // pred_fallthru
      _
    // Predicated region
    $region154: #{_lambda_.1} parent=1 // pred_check
      _
    $region155: #{_lambda_.1} parent=1 // pred_check_branch
      %351 = sbr.rel (0) target = $region157
    $region156: #{_lambda_.1} parent=1 // pred_region
      %353 = dma.done [#allocation21], 1536
    $region157: #{_lambda_.1} parent=1 // pred_fallthru
      _
    // Predicated region
    $region158: #{_lambda_.1} parent=1 // pred_check
      _
    $region159: #{_lambda_.1} parent=1 // pred_check_branch
      %355 = sbr.rel (0) target = $region161
    $region160: #{_lambda_.1} parent=1 // pred_region
      %357 = dma.done [#allocation21], 3840
    $region161: #{_lambda_.1} parent=1 // pred_fallthru
      _
    // Predicated region
    $region162: #{_lambda_.1} parent=1 // pred_check
      _
    $region163: #{_lambda_.1} parent=1 // pred_check_branch
      %359 = sbr.rel (0) target = $region165
    $region164: #{_lambda_.1} parent=1 // pred_region
      %361 = dma.done [#allocation24], 1536
    $region165: #{_lambda_.1} parent=1 // pred_fallthru
      _
    // Predicated region
    $region166: #{_lambda_.1} parent=1 // pred_check
      _
    $region167: #{_lambda_.1} parent=1 // pred_check_branch
      %363 = sbr.rel (0) target = $region169
    $region168: #{_lambda_.1} parent=1 // pred_region
      %365 = dma.done [#allocation24], 768
    $region169: #{_lambda_.1} parent=1 // pred_fallthru
      _
    // Predicated region
    $region170: #{_lambda_.1} parent=1 // pred_check
      _
    $region171: #{_lambda_.1} parent=1 // pred_check_branch
      %367 = sbr.rel (0) target = $region173
    $region172: #{_lambda_.1} parent=1 // pred_region
      %369 = dma.done [#allocation27], 9216
    $region173: #{_lambda_.1} parent=1 // pred_fallthru
      _
    // Predicated region
    $region174: #{_lambda_.1} parent=1 // pred_check
      _
    $region175: #{_lambda_.1} parent=1 // pred_check_branch
      %371 = sbr.rel (0) target = $region177
    $region176: #{_lambda_.1} parent=1 // pred_region
      %373 = dma.done [#allocation27], 3072
    $region177: #{_lambda_.1} parent=1 // pred_fallthru
      _
    // Predicated region
    $region178: #{_lambda_.1} parent=1 // pred_check
      _
    $region179: #{_lambda_.1} parent=1 // pred_check_branch
      %375 = sbr.rel (0) target = $region181
    $region180: #{_lambda_.1} parent=1 // pred_region
      %377 = dma.done [#allocation30], 6144
    $region181: #{_lambda_.1} parent=1 // pred_fallthru
      _
    // Predicated region
    $region182: #{_lambda_.1} parent=1 // pred_check
      _
    $region183: #{_lambda_.1} parent=1 // pred_check_branch
      %379 = sbr.rel (0) target = $region185
    $region184: #{_lambda_.1} parent=1 // pred_region
      %381 = dma.done [#allocation30], 256
    $region185: #{_lambda_.1} parent=1 // pred_fallthru
      _
    %v383 = vld [vmem:[%s0] sm:$0xff]
    %v384 = vld [vmem:[%s0 + $0x8] sm:$0xff]
    %v385 = vld [vmem:[%s0 + $0x10] sm:$0xff]
    %v386 = vld [vmem:[%s0 + $0x18] sm:$0xff]
    %v387 = vld [vmem:[%s0 + $0x20] sm:$0xff]
    %v388 = vld [vmem:[%s0 + $0x28] sm:$0xff]
    %v389 = vld [vmem:[%s0 + $0x30] sm:$0xff]
    %v390 = vld [vmem:[%s0 + $0x38] sm:$0xff]
    %v391 = vld [vmem:[%s0 + $0x40] sm:$0xf]
    %v392 = vld [vmem:[%s1] sm:$0x3]
    %v393 = vpack.c.bf16 %v384, %v383
    %v394 = vpack.c.bf16 %v386, %v385
    %v395 = vpack.c.bf16 %v388, %v387
    %v396 = vpack.c.bf16 %v390, %v389
    %v397 = vpack.c.bf16 %v391, %v391
    %v398 = vld [vmem:[#allocation5] sm:$0xf]
    %v399 = vld [vmem:[#allocation5 + $0x4] sm:$0xf]
    %v400 = vld [vmem:[#allocation5 + $0x8] sm:$0xf]
    %v401 = vld [vmem:[#allocation5 + $0xc] sm:$0xf]
    %v402 = vld [vmem:[#allocation5 + $0x10] sm:$0x1]
    %v408 = vunpack.c.l.b16 %v398
    %v409 = vunpack.c.l.b16 %v399
    %v410 = vunpack.c.l.b16 %v400
    %v411 = vunpack.c.l.b16 %v401
    %v412 = vunpack.c.l.b16 %v402
    %v413 = vpack.c.b16 %v409, %v408
    %v414 = vpack.c.b16 %v411, %v410
    %v415 = vpack.c.b16 %v412, %v412
    %vm418 = vcmask 277504
    %v420 = vsel %vm418, %v393, 0
    %v423 = vsel %vm418, %v394, 0
    %v426 = vsel %vm418, %v395, 0
    %v429 = vsel %vm418, %v396, 0
    %v432 = vsel %vm418, %v397, 0
    %vm434 = vcmask 1040384
    %v436 = vsel %vm434, %v415, 0
    %438 = vmatpush.bf16.msra.mxu0 0
    %439 = vmatpush.bf16.msra.mxu0 0
    %440 = vmatpush.bf16.msra.mxu0 0
    %441 = vmatpush.bf16.msra.mxu0 0
    %442 = vmatpush.bf16.msra.mxu0 0
    %443 = vmatpush.bf16.msra.mxu0 %v436
    %444 = vmatpush.bf16.msra.mxu0 %v414
    %445 = vmatpush.bf16.msra.mxu0 %v413
    %446 = vmatmul.bf16.gmra.mxu0 %v420
    %v447 = vpop.f32.mrf.mxu0
    %v448 = vadd.f32 0.0, %v447
    %v449 = vpop.f32.mrf.mxu0
    %v450 = vadd.f32 0.0, %v449
    %451 = vmatmul.bf16.gmra.mxu0 %v423
    %v452 = vpop.f32.mrf.mxu0
    %v453 = vadd.f32 0.0, %v452
    %v454 = vpop.f32.mrf.mxu0
    %v455 = vadd.f32 0.0, %v454
    %456 = vmatmul.bf16.gmra.mxu0 %v426
    %v457 = vpop.f32.mrf.mxu0
    %v458 = vadd.f32 0.0, %v457
    %v459 = vpop.f32.mrf.mxu0
    %v460 = vadd.f32 0.0, %v459
    %461 = vmatmul.bf16.gmra.mxu0 %v429
    %v462 = vpop.f32.mrf.mxu0
    %v463 = vadd.f32 0.0, %v462
    %v464 = vpop.f32.mrf.mxu0
    %v465 = vadd.f32 0.0, %v464
    %466 = vmatmul.bf16.gmra.mxu0 %v432
    %v467 = vpop.f32.mrf.mxu0
    %v468 = vadd.f32 0.0, %v467
    %v469 = vpop.f32.mrf.mxu0
    %470 = vdwg.mxu0
    %v471 = vld [vmem:[#allocation2] sm:$0xff]
    %v472 = vld [vmem:[#allocation2 + $0x8] sm:$0xff]
    %v473 = vld [vmem:[#allocation2 + $0x10] sm:$0xff]
    %v474 = vld [vmem:[#allocation2 + $0x18] sm:$0xff]
    %v475 = vld [vmem:[#allocation2 + $0x20] sm:$0xf]
    %s476 = scalar_lea.vmem [#allocation5], 20
    %v477 = vld [vmem:[%s476] sm:$0xf]
    %v478 = vld [vmem:[%s476 + $0x4] sm:$0xf]
    %v479 = vld [vmem:[%s476 + $0x8] sm:$0xf]
    %v480 = vld [vmem:[%s476 + $0xc] sm:$0xf]
    %v481 = vld [vmem:[%s476 + $0x10] sm:$0x1]
    %v487 = vunpack.c.l.b16 %v477
    %v488 = vunpack.c.l.b16 %v478
    %v489 = vunpack.c.l.b16 %v479
    %v490 = vunpack.c.l.b16 %v480
    %v491 = vunpack.c.l.b16 %v481
    %v492 = vpack.c.b16 %v488, %v487
    %v493 = vpack.c.b16 %v490, %v489
    %v494 = vpack.c.b16 %v491, %v491
    %v498 = vsel %vm434, %v494, 0
    %500 = vmatpush.bf16.msra.mxu0 0
    %501 = vmatpush.bf16.msra.mxu0 0
    %502 = vmatpush.bf16.msra.mxu0 0
    %503 = vmatpush.bf16.msra.mxu0 0
    %504 = vmatpush.bf16.msra.mxu0 0
    %505 = vmatpush.bf16.msra.mxu0 %v498
    %506 = vmatpush.bf16.msra.mxu0 %v493
    %507 = vmatpush.bf16.msra.mxu0 %v492
    %508 = vmatmul.bf16.gmra.mxu0 %v420
    %v509 = vpop.f32.mrf.mxu0
    %v510 = vadd.f32 0.0, %v509
    %v511 = vpop.f32.mrf.mxu0
    %v512 = vadd.f32 0.0, %v511
    %513 = vmatmul.bf16.gmra.mxu0 %v423
    %v514 = vpop.f32.mrf.mxu0
    %v515 = vadd.f32 0.0, %v514
    %v516 = vpop.f32.mrf.mxu0
    %v517 = vadd.f32 0.0, %v516
    %518 = vmatmul.bf16.gmra.mxu0 %v426
    %v519 = vpop.f32.mrf.mxu0
    %v520 = vadd.f32 0.0, %v519
    %v521 = vpop.f32.mrf.mxu0
    %v522 = vadd.f32 0.0, %v521
    %523 = vmatmul.bf16.gmra.mxu0 %v429
    %v524 = vpop.f32.mrf.mxu0
    %v525 = vadd.f32 0.0, %v524
    %v526 = vpop.f32.mrf.mxu0
    %v527 = vadd.f32 0.0, %v526
    %528 = vmatmul.bf16.gmra.mxu0 %v432
    %v529 = vpop.f32.mrf.mxu0
    %v530 = vadd.f32 0.0, %v529
    %v531 = vpop.f32.mrf.mxu0
    %532 = vdwg.mxu0
    %s533 = scalar_lea.vmem [#allocation2], 40
    %v534 = vld [vmem:[%s533] sm:$0xff]
    %v535 = vld [vmem:[%s533 + $0x8] sm:$0xff]
    %v536 = vld [vmem:[%s533 + $0x10] sm:$0xff]
    %v537 = vld [vmem:[%s533 + $0x18] sm:$0xff]
    %v538 = vld [vmem:[%s533 + $0x20] sm:$0xf]
    %vm539 = vcmask 556032
    %v541 = vsel %vm539, %v534, 0
    %v544 = vsel %vm539, %v535, 0
    %v547 = vsel %vm539, %v536, 0
    %v550 = vsel %vm539, %v537, 0
    %v553 = vsel %vm539, %v538, 0
    %vm555 = vcmask 1043456
    %v557 = vsel %vm555, %v530, 0
    %559 = vmatpush.msra.mxu0 0.0
    %560 = vmatpush.msra.mxu0 0.0
    %561 = vmatpush.msra.mxu0 0.0
    %562 = vmatpush.msra.mxu0 0.0
    %563 = vmatpush.msra.mxu0 0.0
    %564 = vmatpush.msra.mxu0 0.0
    %565 = vmatpush.msra.mxu0 0.0
    %566 = vmatpush.msra.mxu0 %v557
    %567 = vmatpush.msra.mxu0 %v527
    %568 = vmatpush.msra.mxu0 %v525
    %569 = vmatpush.msra.mxu0 %v522
    %570 = vmatpush.msra.mxu0 %v520
    %571 = vmatpush.msra.mxu0 %v517
    %572 = vmatpush.msra.mxu0 %v515
    %573 = vmatpush.msra.mxu0 %v512
    %574 = vmatpush.msra.mxu0 %v510
    %575 = vmatmul.f32.gmra.mxu0 %v541
    %v576 = vpop.f32.mrf.mxu0
    %v577 = vadd.f32 0.0, %v576
    %578 = vmatmul.f32.gmra.mxu0 %v544
    %v579 = vpop.f32.mrf.mxu0
    %v580 = vadd.f32 0.0, %v579
    %581 = vmatmul.f32.gmra.mxu0 %v547
    %v582 = vpop.f32.mrf.mxu0
    %v583 = vadd.f32 0.0, %v582
    %584 = vmatmul.f32.gmra.mxu0 %v550
    %v585 = vpop.f32.mrf.mxu0
    %v586 = vadd.f32 0.0, %v585
    %587 = vmatmul.f32.gmra.mxu0 %v553
    %v588 = vpop.f32.mrf.mxu0
    %v589 = vadd.f32 0.0, %v588
    %590 = vdwg.mxu0
    %v592 = vsel %vm539, %v471, 0
    %v595 = vsel %vm539, %v472, 0
    %v598 = vsel %vm539, %v473, 0
    %v601 = vsel %vm539, %v474, 0
    %v604 = vsel %vm539, %v475, 0
    %v607 = vsel %vm555, %v468, 0
    %609 = vmatpush.msra.mxu0 0.0
    %610 = vmatpush.msra.mxu0 0.0
    %611 = vmatpush.msra.mxu0 0.0
    %612 = vmatpush.msra.mxu0 0.0
    %613 = vmatpush.msra.mxu0 0.0
    %614 = vmatpush.msra.mxu0 0.0
    %615 = vmatpush.msra.mxu0 0.0
    %616 = vmatpush.msra.mxu0 %v607
    %617 = vmatpush.msra.mxu0 %v465
    %618 = vmatpush.msra.mxu0 %v463
    %619 = vmatpush.msra.mxu0 %v460
    %620 = vmatpush.msra.mxu0 %v458
    %621 = vmatpush.msra.mxu0 %v455
    %622 = vmatpush.msra.mxu0 %v453
    %623 = vmatpush.msra.mxu0 %v450
    %624 = vmatpush.msra.mxu0 %v448
    %625 = vmatmul.f32.gmra.mxu0 %v592
    %v626 = vpop.f32.mrf.mxu0
    %v627 = vadd.f32 %v577, %v626
    %628 = vmatmul.f32.gmra.mxu0 %v595
    %v629 = vpop.f32.mrf.mxu0
    %v630 = vadd.f32 %v580, %v629
    %631 = vmatmul.f32.gmra.mxu0 %v598
    %v632 = vpop.f32.mrf.mxu0
    %v633 = vadd.f32 %v583, %v632
    %634 = vmatmul.f32.gmra.mxu0 %v601
    %v635 = vpop.f32.mrf.mxu0
    %v636 = vadd.f32 %v586, %v635
    %637 = vmatmul.f32.gmra.mxu0 %v604
    %v638 = vpop.f32.mrf.mxu0
    %v639 = vadd.f32 %v589, %v638
    %640 = vdwg.mxu0
    %s641 = scalar_lea.vmem [#allocation5], 40
    %v642 = vld [vmem:[%s641] sm:$0xf]
    %v643 = vld [vmem:[%s641 + $0x4] sm:$0xf]
    %v644 = vld [vmem:[%s641 + $0x8] sm:$0xf]
    %v645 = vld [vmem:[%s641 + $0xc] sm:$0xf]
    %v646 = vld [vmem:[%s641 + $0x10] sm:$0x1]
    %v652 = vunpack.c.l.b16 %v642
    %v653 = vunpack.c.l.b16 %v643
    %v654 = vunpack.c.l.b16 %v644
    %v655 = vunpack.c.l.b16 %v645
    %v656 = vunpack.c.l.b16 %v646
    %v657 = vpack.c.b16 %v653, %v652
    %v658 = vpack.c.b16 %v655, %v654
    %v659 = vpack.c.b16 %v656, %v656
    %v663 = vsel %vm434, %v659, 0
    %665 = vmatpush.bf16.msra.mxu0 0
    %666 = vmatpush.bf16.msra.mxu0 0
    %667 = vmatpush.bf16.msra.mxu0 0
    %668 = vmatpush.bf16.msra.mxu0 0
    %669 = vmatpush.bf16.msra.mxu0 0
    %670 = vmatpush.bf16.msra.mxu0 %v663
    %671 = vmatpush.bf16.msra.mxu0 %v658
    %672 = vmatpush.bf16.msra.mxu0 %v657
    %673 = vmatmul.bf16.gmra.mxu0 %v420
    %v674 = vpop.f32.mrf.mxu0
    %v675 = vadd.f32 0.0, %v674
    %v676 = vpop.f32.mrf.mxu0
    %v677 = vadd.f32 0.0, %v676
    %678 = vmatmul.bf16.gmra.mxu0 %v423
    %v679 = vpop.f32.mrf.mxu0
    %v680 = vadd.f32 0.0, %v679
    %v681 = vpop.f32.mrf.mxu0
    %v682 = vadd.f32 0.0, %v681
    %683 = vmatmul.bf16.gmra.mxu0 %v426
    %v684 = vpop.f32.mrf.mxu0
    %v685 = vadd.f32 0.0, %v684
    %v686 = vpop.f32.mrf.mxu0
    %v687 = vadd.f32 0.0, %v686
    %688 = vmatmul.bf16.gmra.mxu0 %v429
    %v689 = vpop.f32.mrf.mxu0
    %v690 = vadd.f32 0.0, %v689
    %v691 = vpop.f32.mrf.mxu0
    %v692 = vadd.f32 0.0, %v691
    %693 = vmatmul.bf16.gmra.mxu0 %v432
    %v694 = vpop.f32.mrf.mxu0
    %v695 = vadd.f32 0.0, %v694
    %v696 = vpop.f32.mrf.mxu0
    %697 = vdwg.mxu0
    %s698 = scalar_lea.vmem [#allocation2], 80
    %v699 = vld [vmem:[%s698] sm:$0xff]
    %v700 = vld [vmem:[%s698 + $0x8] sm:$0xff]
    %v701 = vld [vmem:[%s698 + $0x10] sm:$0xff]
    %v702 = vld [vmem:[%s698 + $0x18] sm:$0xff]
    %v703 = vld [vmem:[%s698 + $0x20] sm:$0xf]
    %v705 = vsel %vm539, %v699, 0
    %v708 = vsel %vm539, %v700, 0
    %v711 = vsel %vm539, %v701, 0
    %v714 = vsel %vm539, %v702, 0
    %v717 = vsel %vm539, %v703, 0
    %v720 = vsel %vm555, %v695, 0
    %722 = vmatpush.msra.mxu0 0.0
    %723 = vmatpush.msra.mxu0 0.0
    %724 = vmatpush.msra.mxu0 0.0
    %725 = vmatpush.msra.mxu0 0.0
    %726 = vmatpush.msra.mxu0 0.0
    %727 = vmatpush.msra.mxu0 0.0
    %728 = vmatpush.msra.mxu0 0.0
    %729 = vmatpush.msra.mxu0 %v720
    %730 = vmatpush.msra.mxu0 %v692
    %731 = vmatpush.msra.mxu0 %v690
    %732 = vmatpush.msra.mxu0 %v687
    %733 = vmatpush.msra.mxu0 %v685
    %734 = vmatpush.msra.mxu0 %v682
    %735 = vmatpush.msra.mxu0 %v680
    %736 = vmatpush.msra.mxu0 %v677
    %737 = vmatpush.msra.mxu0 %v675
    %738 = vmatmul.f32.gmra.mxu0 %v705
    %v739 = vpop.f32.mrf.mxu0
    %v740 = vadd.f32 0.0, %v739
    %741 = vmatmul.f32.gmra.mxu0 %v708
    %v742 = vpop.f32.mrf.mxu0
    %v743 = vadd.f32 0.0, %v742
    %744 = vmatmul.f32.gmra.mxu0 %v711
    %v745 = vpop.f32.mrf.mxu0
    %v746 = vadd.f32 0.0, %v745
    %747 = vmatmul.f32.gmra.mxu0 %v714
    %v748 = vpop.f32.mrf.mxu0
    %v749 = vadd.f32 0.0, %v748
    %750 = vmatmul.f32.gmra.mxu0 %v717
    %v751 = vpop.f32.mrf.mxu0
    %v752 = vadd.f32 0.0, %v751
    %753 = vdwg.mxu0
    %v754 = vadd.f32 %v627, %v740
    %v755 = vadd.f32 %v630, %v743
    %v756 = vadd.f32 %v633, %v746
    %v757 = vadd.f32 %v636, %v749
    %v758 = vadd.f32 %v639, %v752
    %v759 = vmax.f32 %v754, 0.0
    %v760 = vmax.f32 %v755, 0.0
    %v761 = vmax.f32 %v756, 0.0
    %v762 = vmax.f32 %v757, 0.0
    %v763 = vmax.f32 %v758, 0.0
    %v764 = vpack.c.bf16 %v760, %v759
    %v765 = vpack.c.bf16 %v762, %v761
    %v766 = vpack.c.bf16 %v763, %v763
    %v767 = vld [vmem:[#allocation8] sm:$0xff]
    %v768 = vld [vmem:[#allocation8 + $0x8] sm:$0xff]
    %v769 = vld [vmem:[#allocation8 + $0x10] sm:$0xff]
    %v770 = vld [vmem:[#allocation8 + $0x18] sm:$0xff]
    %v771 = vld [vmem:[#allocation8 + $0x20] sm:$0xff]
    %v772 = vld [vmem:[#allocation8 + $0x28] sm:$0xff]
    %v773 = vld [vmem:[#allocation8 + $0x30] sm:$0xff]
    %v774 = vld [vmem:[#allocation8 + $0x38] sm:$0xff]
    %v775 = vld [vmem:[#allocation8 + $0x40] sm:$0xff]
    %v785 = vunpack.c.l.b16 %v767
    %v786 = vunpack.c.h.b16 %v767
    %v787 = vunpack.c.l.b16 %v768
    %v788 = vunpack.c.h.b16 %v768
    %v789 = vunpack.c.l.b16 %v769
    %v790 = vunpack.c.h.b16 %v769
    %v791 = vunpack.c.l.b16 %v770
    %v792 = vunpack.c.h.b16 %v770
    %v793 = vunpack.c.l.b16 %v771
    %v794 = vunpack.c.h.b16 %v771
    %v795 = vunpack.c.l.b16 %v772
    %v796 = vunpack.c.h.b16 %v772
    %v797 = vunpack.c.l.b16 %v773
    %v798 = vunpack.c.h.b16 %v773
    %v799 = vunpack.c.l.b16 %v774
    %v800 = vunpack.c.h.b16 %v774
    %v801 = vunpack.c.l.b16 %v775
    %v802 = vunpack.c.h.b16 %v775
    %v803 = vpack.c.b16 %v787, %v785
    %v804 = vpack.c.b16 %v788, %v786
    %v805 = vpack.c.b16 %v791, %v789
    %v806 = vpack.c.b16 %v792, %v790
    %v807 = vpack.c.b16 %v795, %v793
    %v808 = vpack.c.b16 %v796, %v794
    %v809 = vpack.c.b16 %v799, %v797
    %v810 = vpack.c.b16 %v800, %v798
    %v811 = vpack.c.b16 %v801, %v801
    %v812 = vpack.c.b16 %v802, %v802
    %vm821 = vcmask 588800
    %v823 = vsel %vm821, %v764, 0
    %v826 = vsel %vm821, %v765, 0
    %v829 = vsel %vm821, %v766, 0
    %v832 = vsel %vm555, %v811, 0
    %v835 = vsel %vm555, %v812, 0
    %837 = vmatpush.bf16.msra.mxu0 0
    %838 = vmatpush.bf16.msra.mxu0 0
    %839 = vmatpush.bf16.msra.mxu0 0
    %840 = vmatpush.bf16.msra.mxu0 %v832
    %841 = vmatpush.bf16.msra.mxu0 %v809
    %842 = vmatpush.bf16.msra.mxu0 %v807
    %843 = vmatpush.bf16.msra.mxu0 %v805
    %844 = vmatpush.bf16.msra.mxu0 %v803
    %845 = vmatmul.bf16.gmra.mxu0 %v823
    %v846 = vpop.f32.mrf.mxu0
    %v847 = vadd.f32 0.0, %v846
    %v848 = vpop.f32.mrf.mxu0
    %v849 = vadd.f32 0.0, %v848
    %850 = vmatmul.bf16.gmra.mxu0 %v826
    %v851 = vpop.f32.mrf.mxu0
    %v852 = vadd.f32 0.0, %v851
    %v853 = vpop.f32.mrf.mxu0
    %v854 = vadd.f32 0.0, %v853
    %855 = vmatmul.bf16.gmra.mxu0 %v829
    %v856 = vpop.f32.mrf.mxu0
    %v857 = vadd.f32 0.0, %v856
    %v858 = vpop.f32.mrf.mxu0
    %859 = vdwg.mxu0
    %860 = vmatpush.bf16.msra.mxu0 0
    %861 = vmatpush.bf16.msra.mxu0 0
    %862 = vmatpush.bf16.msra.mxu0 0
    %863 = vmatpush.bf16.msra.mxu0 %v835
    %864 = vmatpush.bf16.msra.mxu0 %v810
    %865 = vmatpush.bf16.msra.mxu0 %v808
    %866 = vmatpush.bf16.msra.mxu0 %v806
    %867 = vmatpush.bf16.msra.mxu0 %v804
    %868 = vmatmul.bf16.gmra.mxu0 %v823
    %v869 = vpop.f32.mrf.mxu0
    %v870 = vadd.f32 0.0, %v869
    %v871 = vpop.f32.mrf.mxu0
    %v872 = vadd.f32 0.0, %v871
    %873 = vmatmul.bf16.gmra.mxu0 %v826
    %v874 = vpop.f32.mrf.mxu0
    %v875 = vadd.f32 0.0, %v874
    %v876 = vpop.f32.mrf.mxu0
    %v877 = vadd.f32 0.0, %v876
    %878 = vmatmul.bf16.gmra.mxu0 %v829
    %v879 = vpop.f32.mrf.mxu0
    %v880 = vadd.f32 0.0, %v879
    %v881 = vpop.f32.mrf.mxu0
    %882 = vdwg.mxu0
    %v883 = vld [vmem:[#allocation7] sm:$0xff]
    %v884 = vld [vmem:[#allocation7 + $0x8] sm:$0xff]
    %v885 = vld [vmem:[#allocation7 + $0x10] sm:$0xf]
    %s886 = scalar_lea.vmem [#allocation8], 72
    %v887 = vld [vmem:[%s886] sm:$0xff]
    %v888 = vld [vmem:[%s886 + $0x8] sm:$0xff]
    %v889 = vld [vmem:[%s886 + $0x10] sm:$0xff]
    %v890 = vld [vmem:[%s886 + $0x18] sm:$0xff]
    %v891 = vld [vmem:[%s886 + $0x20] sm:$0xff]
    %v892 = vld [vmem:[%s886 + $0x28] sm:$0xff]
    %v893 = vld [vmem:[%s886 + $0x30] sm:$0xff]
    %v894 = vld [vmem:[%s886 + $0x38] sm:$0xff]
    %v895 = vld [vmem:[%s886 + $0x40] sm:$0xff]
    %v905 = vunpack.c.l.b16 %v887
    %v906 = vunpack.c.h.b16 %v887
    %v907 = vunpack.c.l.b16 %v888
    %v908 = vunpack.c.h.b16 %v888
    %v909 = vunpack.c.l.b16 %v889
    %v910 = vunpack.c.h.b16 %v889
    %v911 = vunpack.c.l.b16 %v890
    %v912 = vunpack.c.h.b16 %v890
    %v913 = vunpack.c.l.b16 %v891
    %v914 = vunpack.c.h.b16 %v891
    %v915 = vunpack.c.l.b16 %v892
    %v916 = vunpack.c.h.b16 %v892
    %v917 = vunpack.c.l.b16 %v893
    %v918 = vunpack.c.h.b16 %v893
    %v919 = vunpack.c.l.b16 %v894
    %v920 = vunpack.c.h.b16 %v894
    %v921 = vunpack.c.l.b16 %v895
    %v922 = vunpack.c.h.b16 %v895
    %v923 = vpack.c.b16 %v907, %v905
    %v924 = vpack.c.b16 %v908, %v906
    %v925 = vpack.c.b16 %v911, %v909
    %v926 = vpack.c.b16 %v912, %v910
    %v927 = vpack.c.b16 %v915, %v913
    %v928 = vpack.c.b16 %v916, %v914
    %v929 = vpack.c.b16 %v919, %v917
    %v930 = vpack.c.b16 %v920, %v918
    %v931 = vpack.c.b16 %v921, %v921
    %v932 = vpack.c.b16 %v922, %v922
    %v942 = vsel %vm555, %v931, 0
    %v945 = vsel %vm555, %v932, 0
    %947 = vmatpush.bf16.msra.mxu0 0
    %948 = vmatpush.bf16.msra.mxu0 0
    %949 = vmatpush.bf16.msra.mxu0 0
    %950 = vmatpush.bf16.msra.mxu0 %v942
    %951 = vmatpush.bf16.msra.mxu0 %v929
    %952 = vmatpush.bf16.msra.mxu0 %v927
    %953 = vmatpush.bf16.msra.mxu0 %v925
    %954 = vmatpush.bf16.msra.mxu0 %v923
    %955 = vmatmul.bf16.gmra.mxu0 %v823
    %v956 = vpop.f32.mrf.mxu0
    %v957 = vadd.f32 0.0, %v956
    %v958 = vpop.f32.mrf.mxu0
    %v959 = vadd.f32 0.0, %v958
    %960 = vmatmul.bf16.gmra.mxu0 %v826
    %v961 = vpop.f32.mrf.mxu0
    %v962 = vadd.f32 0.0, %v961
    %v963 = vpop.f32.mrf.mxu0
    %v964 = vadd.f32 0.0, %v963
    %965 = vmatmul.bf16.gmra.mxu0 %v829
    %v966 = vpop.f32.mrf.mxu0
    %v967 = vadd.f32 0.0, %v966
    %v968 = vpop.f32.mrf.mxu0
    %969 = vdwg.mxu0
    %970 = vmatpush.bf16.msra.mxu0 0
    %971 = vmatpush.bf16.msra.mxu0 0
    %972 = vmatpush.bf16.msra.mxu0 0
    %973 = vmatpush.bf16.msra.mxu0 %v945
    %974 = vmatpush.bf16.msra.mxu0 %v930
    %975 = vmatpush.bf16.msra.mxu0 %v928
    %976 = vmatpush.bf16.msra.mxu0 %v926
    %977 = vmatpush.bf16.msra.mxu0 %v924
    %978 = vmatmul.bf16.gmra.mxu0 %v823
    %v979 = vpop.f32.mrf.mxu0
    %v980 = vadd.f32 0.0, %v979
    %v981 = vpop.f32.mrf.mxu0
    %v982 = vadd.f32 0.0, %v981
    %983 = vmatmul.bf16.gmra.mxu0 %v826
    %v984 = vpop.f32.mrf.mxu0
    %v985 = vadd.f32 0.0, %v984
    %v986 = vpop.f32.mrf.mxu0
    %v987 = vadd.f32 0.0, %v986
    %988 = vmatmul.bf16.gmra.mxu0 %v829
    %v989 = vpop.f32.mrf.mxu0
    %v990 = vadd.f32 0.0, %v989
    %v991 = vpop.f32.mrf.mxu0
    %992 = vdwg.mxu0
    %s993 = scalar_lea.vmem [#allocation7], 24
    %v994 = vld [vmem:[%s993] sm:$0xff]
    %v995 = vld [vmem:[%s993 + $0x8] sm:$0xff]
    %v996 = vld [vmem:[%s993 + $0x10] sm:$0xf]
    %vm997 = vcmask 293888
    %v999 = vsel %vm997, %v994, 0
    %v1002 = vsel %vm997, %v995, 0
    %v1005 = vsel %vm997, %v996, 0
    %v1008 = vsel %vm555, %v967, 0
    %v1011 = vsel %vm555, %v990, 0
    %1013 = vmatpush.msra.mxu0 0.0
    %1014 = vmatpush.msra.mxu0 0.0
    %1015 = vmatpush.msra.mxu0 0.0
    %1016 = vmatpush.msra.mxu0 0.0
    %1017 = vmatpush.msra.mxu0 0.0
    %1018 = vmatpush.msra.mxu0 0.0
    %1019 = vmatpush.msra.mxu0 0.0
    %1020 = vmatpush.msra.mxu0 0.0
    %1021 = vmatpush.msra.mxu0 0.0
    %1022 = vmatpush.msra.mxu0 0.0
    %1023 = vmatpush.msra.mxu0 0.0
    %1024 = vmatpush.msra.mxu0 %v1008
    %1025 = vmatpush.msra.mxu0 %v964
    %1026 = vmatpush.msra.mxu0 %v962
    %1027 = vmatpush.msra.mxu0 %v959
    %1028 = vmatpush.msra.mxu0 %v957
    %1029 = vmatmul.f32.gmra.mxu0 %v999
    %v1030 = vpop.f32.mrf.mxu0
    %v1031 = vadd.f32 0.0, %v1030
    %1032 = vmatmul.f32.gmra.mxu0 %v1002
    %v1033 = vpop.f32.mrf.mxu0
    %v1034 = vadd.f32 0.0, %v1033
    %1035 = vmatmul.f32.gmra.mxu0 %v1005
    %v1036 = vpop.f32.mrf.mxu0
    %v1037 = vadd.f32 0.0, %v1036
    %1038 = vdwg.mxu0
    %1039 = vmatpush.msra.mxu0 0.0
    %1040 = vmatpush.msra.mxu0 0.0
    %1041 = vmatpush.msra.mxu0 0.0
    %1042 = vmatpush.msra.mxu0 0.0
    %1043 = vmatpush.msra.mxu0 0.0
    %1044 = vmatpush.msra.mxu0 0.0
    %1045 = vmatpush.msra.mxu0 0.0
    %1046 = vmatpush.msra.mxu0 0.0
    %1047 = vmatpush.msra.mxu0 0.0
    %1048 = vmatpush.msra.mxu0 0.0
    %1049 = vmatpush.msra.mxu0 0.0
    %1050 = vmatpush.msra.mxu0 %v1011
    %1051 = vmatpush.msra.mxu0 %v987
    %1052 = vmatpush.msra.mxu0 %v985
    %1053 = vmatpush.msra.mxu0 %v982
    %1054 = vmatpush.msra.mxu0 %v980
    %1055 = vmatmul.f32.gmra.mxu0 %v999
    %v1056 = vpop.f32.mrf.mxu0
    %v1057 = vadd.f32 0.0, %v1056
    %1058 = vmatmul.f32.gmra.mxu0 %v1002
    %v1059 = vpop.f32.mrf.mxu0
    %v1060 = vadd.f32 0.0, %v1059
    %1061 = vmatmul.f32.gmra.mxu0 %v1005
    %v1062 = vpop.f32.mrf.mxu0
    %v1063 = vadd.f32 0.0, %v1062
    %1064 = vdwg.mxu0
    %v1066 = vsel %vm997, %v883, 0
    %v1069 = vsel %vm997, %v884, 0
    %v1072 = vsel %vm997, %v885, 0
    %v1075 = vsel %vm555, %v857, 0
    %v1078 = vsel %vm555, %v880, 0
    %1080 = vmatpush.msra.mxu0 0.0
    %1081 = vmatpush.msra.mxu0 0.0
    %1082 = vmatpush.msra.mxu0 0.0
    %1083 = vmatpush.msra.mxu0 0.0
    %1084 = vmatpush.msra.mxu0 0.0
    %1085 = vmatpush.msra.mxu0 0.0
    %1086 = vmatpush.msra.mxu0 0.0
    %1087 = vmatpush.msra.mxu0 0.0
    %1088 = vmatpush.msra.mxu0 0.0
    %1089 = vmatpush.msra.mxu0 0.0
    %1090 = vmatpush.msra.mxu0 0.0
    %1091 = vmatpush.msra.mxu0 %v1075
    %1092 = vmatpush.msra.mxu0 %v854
    %1093 = vmatpush.msra.mxu0 %v852
    %1094 = vmatpush.msra.mxu0 %v849
    %1095 = vmatpush.msra.mxu0 %v847
    %1096 = vmatmul.f32.gmra.mxu0 %v1066
    %v1097 = vpop.f32.mrf.mxu0
    %v1098 = vadd.f32 %v1031, %v1097
    %1099 = vmatmul.f32.gmra.mxu0 %v1069
    %v1100 = vpop.f32.mrf.mxu0
    %v1101 = vadd.f32 %v1034, %v1100
    %1102 = vmatmul.f32.gmra.mxu0 %v1072
    %v1103 = vpop.f32.mrf.mxu0
    %v1104 = vadd.f32 %v1037, %v1103
    %1105 = vdwg.mxu0
    %1106 = vmatpush.msra.mxu0 0.0
    %1107 = vmatpush.msra.mxu0 0.0
    %1108 = vmatpush.msra.mxu0 0.0
    %1109 = vmatpush.msra.mxu0 0.0
    %1110 = vmatpush.msra.mxu0 0.0
    %1111 = vmatpush.msra.mxu0 0.0
    %1112 = vmatpush.msra.mxu0 0.0
    %1113 = vmatpush.msra.mxu0 0.0
    %1114 = vmatpush.msra.mxu0 0.0
    %1115 = vmatpush.msra.mxu0 0.0
    %1116 = vmatpush.msra.mxu0 0.0
    %1117 = vmatpush.msra.mxu0 %v1078
    %1118 = vmatpush.msra.mxu0 %v877
    %1119 = vmatpush.msra.mxu0 %v875
    %1120 = vmatpush.msra.mxu0 %v872
    %1121 = vmatpush.msra.mxu0 %v870
    %1122 = vmatmul.f32.gmra.mxu0 %v1066
    %v1123 = vpop.f32.mrf.mxu0
    %v1124 = vadd.f32 %v1057, %v1123
    %1125 = vmatmul.f32.gmra.mxu0 %v1069
    %v1126 = vpop.f32.mrf.mxu0
    %v1127 = vadd.f32 %v1060, %v1126
    %1128 = vmatmul.f32.gmra.mxu0 %v1072
    %v1129 = vpop.f32.mrf.mxu0
    %v1130 = vadd.f32 %v1063, %v1129
    %1131 = vdwg.mxu0
    %s1132 = scalar_lea.vmem [#allocation8], 144
    %v1133 = vld [vmem:[%s1132] sm:$0xff]
    %v1134 = vld [vmem:[%s1132 + $0x8] sm:$0xff]
    %v1135 = vld [vmem:[%s1132 + $0x10] sm:$0xff]
    %v1136 = vld [vmem:[%s1132 + $0x18] sm:$0xff]
    %v1137 = vld [vmem:[%s1132 + $0x20] sm:$0xff]
    %v1138 = vld [vmem:[%s1132 + $0x28] sm:$0xff]
    %v1139 = vld [vmem:[%s1132 + $0x30] sm:$0xff]
    %v1140 = vld [vmem:[%s1132 + $0x38] sm:$0xff]
    %v1141 = vld [vmem:[%s1132 + $0x40] sm:$0xff]
    %v1151 = vunpack.c.l.b16 %v1133
    %v1152 = vunpack.c.h.b16 %v1133
    %v1153 = vunpack.c.l.b16 %v1134
    %v1154 = vunpack.c.h.b16 %v1134
    %v1155 = vunpack.c.l.b16 %v1135
    %v1156 = vunpack.c.h.b16 %v1135
    %v1157 = vunpack.c.l.b16 %v1136
    %v1158 = vunpack.c.h.b16 %v1136
    %v1159 = vunpack.c.l.b16 %v1137
    %v1160 = vunpack.c.h.b16 %v1137
    %v1161 = vunpack.c.l.b16 %v1138
    %v1162 = vunpack.c.h.b16 %v1138
    %v1163 = vunpack.c.l.b16 %v1139
    %v1164 = vunpack.c.h.b16 %v1139
    %v1165 = vunpack.c.l.b16 %v1140
    %v1166 = vunpack.c.h.b16 %v1140
    %v1167 = vunpack.c.l.b16 %v1141
    %v1168 = vunpack.c.h.b16 %v1141
    %v1169 = vpack.c.b16 %v1153, %v1151
    %v1170 = vpack.c.b16 %v1154, %v1152
    %v1171 = vpack.c.b16 %v1157, %v1155
    %v1172 = vpack.c.b16 %v1158, %v1156
    %v1173 = vpack.c.b16 %v1161, %v1159
    %v1174 = vpack.c.b16 %v1162, %v1160
    %v1175 = vpack.c.b16 %v1165, %v1163
    %v1176 = vpack.c.b16 %v1166, %v1164
    %v1177 = vpack.c.b16 %v1167, %v1167
    %v1178 = vpack.c.b16 %v1168, %v1168
    %v1188 = vsel %vm555, %v1177, 0
    %v1191 = vsel %vm555, %v1178, 0
    %1193 = vmatpush.bf16.msra.mxu0 0
    %1194 = vmatpush.bf16.msra.mxu0 0
    %1195 = vmatpush.bf16.msra.mxu0 0
    %1196 = vmatpush.bf16.msra.mxu0 %v1188
    %1197 = vmatpush.bf16.msra.mxu0 %v1175
    %1198 = vmatpush.bf16.msra.mxu0 %v1173
    %1199 = vmatpush.bf16.msra.mxu0 %v1171
    %1200 = vmatpush.bf16.msra.mxu0 %v1169
    %1201 = vmatmul.bf16.gmra.mxu0 %v823
    %v1202 = vpop.f32.mrf.mxu0
    %v1203 = vadd.f32 0.0, %v1202
    %v1204 = vpop.f32.mrf.mxu0
    %v1205 = vadd.f32 0.0, %v1204
    %1206 = vmatmul.bf16.gmra.mxu0 %v826
    %v1207 = vpop.f32.mrf.mxu0
    %v1208 = vadd.f32 0.0, %v1207
    %v1209 = vpop.f32.mrf.mxu0
    %v1210 = vadd.f32 0.0, %v1209
    %1211 = vmatmul.bf16.gmra.mxu0 %v829
    %v1212 = vpop.f32.mrf.mxu0
    %v1213 = vadd.f32 0.0, %v1212
    %v1214 = vpop.f32.mrf.mxu0
    %1215 = vdwg.mxu0
    %1216 = vmatpush.bf16.msra.mxu0 0
    %1217 = vmatpush.bf16.msra.mxu0 0
    %1218 = vmatpush.bf16.msra.mxu0 0
    %1219 = vmatpush.bf16.msra.mxu0 %v1191
    %1220 = vmatpush.bf16.msra.mxu0 %v1176
    %1221 = vmatpush.bf16.msra.mxu0 %v1174
    %1222 = vmatpush.bf16.msra.mxu0 %v1172
    %1223 = vmatpush.bf16.msra.mxu0 %v1170
    %1224 = vmatmul.bf16.gmra.mxu0 %v823
    %v1225 = vpop.f32.mrf.mxu0
    %v1226 = vadd.f32 0.0, %v1225
    %v1227 = vpop.f32.mrf.mxu0
    %v1228 = vadd.f32 0.0, %v1227
    %1229 = vmatmul.bf16.gmra.mxu0 %v826
    %v1230 = vpop.f32.mrf.mxu0
    %v1231 = vadd.f32 0.0, %v1230
    %v1232 = vpop.f32.mrf.mxu0
    %v1233 = vadd.f32 0.0, %v1232
    %1234 = vmatmul.bf16.gmra.mxu0 %v829
    %v1235 = vpop.f32.mrf.mxu0
    %v1236 = vadd.f32 0.0, %v1235
    %v1237 = vpop.f32.mrf.mxu0
    %1238 = vdwg.mxu0
    %s1239 = scalar_lea.vmem [#allocation7], 48
    %v1240 = vld [vmem:[%s1239] sm:$0xff]
    %v1241 = vld [vmem:[%s1239 + $0x8] sm:$0xff]
    %v1242 = vld [vmem:[%s1239 + $0x10] sm:$0xf]
    %v1244 = vsel %vm997, %v1240, 0
    %v1247 = vsel %vm997, %v1241, 0
    %v1250 = vsel %vm997, %v1242, 0
    %v1253 = vsel %vm555, %v1213, 0
    %v1256 = vsel %vm555, %v1236, 0
    %1258 = vmatpush.msra.mxu0 0.0
    %1259 = vmatpush.msra.mxu0 0.0
    %1260 = vmatpush.msra.mxu0 0.0
    %1261 = vmatpush.msra.mxu0 0.0
    %1262 = vmatpush.msra.mxu0 0.0
    %1263 = vmatpush.msra.mxu0 0.0
    %1264 = vmatpush.msra.mxu0 0.0
    %1265 = vmatpush.msra.mxu0 0.0
    %1266 = vmatpush.msra.mxu0 0.0
    %1267 = vmatpush.msra.mxu0 0.0
    %1268 = vmatpush.msra.mxu0 0.0
    %1269 = vmatpush.msra.mxu0 %v1253
    %1270 = vmatpush.msra.mxu0 %v1210
    %1271 = vmatpush.msra.mxu0 %v1208
    %1272 = vmatpush.msra.mxu0 %v1205
    %1273 = vmatpush.msra.mxu0 %v1203
    %1274 = vmatmul.f32.gmra.mxu0 %v1244
    %v1275 = vpop.f32.mrf.mxu0
    %v1276 = vadd.f32 0.0, %v1275
    %1277 = vmatmul.f32.gmra.mxu0 %v1247
    %v1278 = vpop.f32.mrf.mxu0
    %v1279 = vadd.f32 0.0, %v1278
    %1280 = vmatmul.f32.gmra.mxu0 %v1250
    %v1281 = vpop.f32.mrf.mxu0
    %v1282 = vadd.f32 0.0, %v1281
    %1283 = vdwg.mxu0
    %1284 = vmatpush.msra.mxu0 0.0
    %1285 = vmatpush.msra.mxu0 0.0
    %1286 = vmatpush.msra.mxu0 0.0
    %1287 = vmatpush.msra.mxu0 0.0
    %1288 = vmatpush.msra.mxu0 0.0
    %1289 = vmatpush.msra.mxu0 0.0
    %1290 = vmatpush.msra.mxu0 0.0
    %1291 = vmatpush.msra.mxu0 0.0
    %1292 = vmatpush.msra.mxu0 0.0
    %1293 = vmatpush.msra.mxu0 0.0
    %1294 = vmatpush.msra.mxu0 0.0
    %1295 = vmatpush.msra.mxu0 %v1256
    %1296 = vmatpush.msra.mxu0 %v1233
    %1297 = vmatpush.msra.mxu0 %v1231
    %1298 = vmatpush.msra.mxu0 %v1228
    %1299 = vmatpush.msra.mxu0 %v1226
    %1300 = vmatmul.f32.gmra.mxu0 %v1244
    %v1301 = vpop.f32.mrf.mxu0
    %v1302 = vadd.f32 0.0, %v1301
    %1303 = vmatmul.f32.gmra.mxu0 %v1247
    %v1304 = vpop.f32.mrf.mxu0
    %v1305 = vadd.f32 0.0, %v1304
    %1306 = vmatmul.f32.gmra.mxu0 %v1250
    %v1307 = vpop.f32.mrf.mxu0
    %v1308 = vadd.f32 0.0, %v1307
    %1309 = vdwg.mxu0
    %v1310 = vadd.f32 %v1098, %v1276
    %v1311 = vadd.f32 %v1124, %v1302
    %v1312 = vadd.f32 %v1101, %v1279
    %v1313 = vadd.f32 %v1127, %v1305
    %v1314 = vadd.f32 %v1104, %v1282
    %v1315 = vadd.f32 %v1130, %v1308
    %v1316 = vmax.f32 %v1310, 0.0
    %v1317 = vmax.f32 %v1311, 0.0
    %v1318 = vmax.f32 %v1312, 0.0
    %v1319 = vmax.f32 %v1313, 0.0
    %v1320 = vmax.f32 %v1314, 0.0
    %v1321 = vmax.f32 %v1315, 0.0
    %v1322 = vld [vmem:[#allocation10] sm:$0xff]
    %v1323 = vld [vmem:[#allocation10 + $0x8] sm:$0xf]
    %v1324 = vld [vmem:[#allocation10 + $0xc] sm:$0xff]
    %v1325 = vld [vmem:[#allocation10 + $0x14] sm:$0xf]
    %v1326 = vld [vmem:[#allocation10 + $0x18] sm:$0xff]
    %v1327 = vld [vmem:[#allocation10 + $0x20] sm:$0xf]
    %v1328 = vld [vmem:[#allocation10 + $0x24] sm:$0xff]
    %v1329 = vld [vmem:[#allocation10 + $0x2c] sm:$0xf]
    %v1330 = vld [vmem:[#allocation10 + $0x30] sm:$0xff]
    %v1331 = vld [vmem:[#allocation10 + $0x38] sm:$0xf]
    %v1332 = vld [vmem:[#allocation10 + $0x3c] sm:$0xff]
    %v1333 = vld [vmem:[#allocation10 + $0x44] sm:$0xf]
    %v1334 = vld [vmem:[#allocation10 + $0x48] sm:$0xff]
    %v1335 = vld [vmem:[#allocation10 + $0x50] sm:$0xf]
    %v1336 = vld [vmem:[#allocation10 + $0x54] sm:$0xff]
    %v1337 = vld [vmem:[#allocation10 + $0x5c] sm:$0xf]
    %v1338 = vld [vmem:[#allocation10 + $0x60] sm:$0xff]
    %v1339 = vld [vmem:[#allocation10 + $0x68] sm:$0xf]
    %v1340 = vld [vmem:[#allocation10 + $0x6c] sm:$0xff]
    %v1341 = vld [vmem:[#allocation10 + $0x74] sm:$0xf]
    %v1342 = vld [vmem:[#allocation10 + $0x78] sm:$0xff]
    %v1343 = vld [vmem:[#allocation10 + $0x80] sm:$0xf]
    %v1344 = vld [vmem:[#allocation10 + $0x84] sm:$0xff]
    %v1345 = vld [vmem:[#allocation10 + $0x8c] sm:$0xf]
    %v1346 = vld [vmem:[#allocation10 + $0x90] sm:$0xff]
    %v1347 = vld [vmem:[#allocation10 + $0x98] sm:$0xf]
    %v1348 = vld [vmem:[#allocation10 + $0x9c] sm:$0xff]
    %v1349 = vld [vmem:[#allocation10 + $0xa4] sm:$0xf]
    %v1350 = vld [vmem:[#allocation10 + $0xa8] sm:$0xff]
    %v1351 = vld [vmem:[#allocation10 + $0xb0] sm:$0xf]
    %v1352 = vld [vmem:[#allocation10 + $0xb4] sm:$0xff]
    %v1353 = vld [vmem:[#allocation10 + $0xbc] sm:$0xf]
    %v1354 = vld [vmem:[#allocation10 + $0xc0] sm:$0xff]
    %v1355 = vld [vmem:[#allocation10 + $0xc8] sm:$0xf]
    %v1356 = vld [vmem:[#allocation10 + $0xcc] sm:$0xff]
    %v1357 = vld [vmem:[#allocation10 + $0xd4] sm:$0xf]
    %v1358 = vld [vmem:[#allocation10 + $0xd8] sm:$0xff]
    %v1359 = vld [vmem:[#allocation10 + $0xe0] sm:$0xf]
    %v1360 = vld [vmem:[#allocation10 + $0xe4] sm:$0xff]
    %v1361 = vld [vmem:[#allocation10 + $0xec] sm:$0xf]
    %v1362 = vpack.c.bf16 %v1318, %v1316
    %v1363 = vpack.c.bf16 %v1319, %v1317
    %v1364 = vpack.c.bf16 %v1320, %v1320
    %v1365 = vpack.c.bf16 %v1321, %v1321
    %v1406 = vunpack.c.l.b16 %v1322
    %v1407 = vunpack.c.h.b16 %v1322
    %v1408 = vunpack.c.l.b16 %v1323
    %v1409 = vunpack.c.l.b16 %v1324
    %v1410 = vunpack.c.h.b16 %v1324
    %v1411 = vunpack.c.l.b16 %v1325
    %v1412 = vunpack.c.l.b16 %v1326
    %v1413 = vunpack.c.h.b16 %v1326
    %v1414 = vunpack.c.l.b16 %v1327
    %v1415 = vunpack.c.l.b16 %v1328
    %v1416 = vunpack.c.h.b16 %v1328
    %v1417 = vunpack.c.l.b16 %v1329
    %v1418 = vunpack.c.l.b16 %v1330
    %v1419 = vunpack.c.h.b16 %v1330
    %v1420 = vunpack.c.l.b16 %v1331
    %v1421 = vunpack.c.l.b16 %v1332
    %v1422 = vunpack.c.h.b16 %v1332
    %v1423 = vunpack.c.l.b16 %v1333
    %v1424 = vunpack.c.l.b16 %v1334
    %v1425 = vunpack.c.h.b16 %v1334
    %v1426 = vunpack.c.l.b16 %v1335
    %v1427 = vunpack.c.l.b16 %v1336
    %v1428 = vunpack.c.h.b16 %v1336
    %v1429 = vunpack.c.l.b16 %v1337
    %v1430 = vunpack.c.l.b16 %v1338
    %v1431 = vunpack.c.h.b16 %v1338
    %v1432 = vunpack.c.l.b16 %v1339
    %v1433 = vunpack.c.l.b16 %v1340
    %v1434 = vunpack.c.h.b16 %v1340
    %v1435 = vunpack.c.l.b16 %v1341
    %v1436 = vunpack.c.l.b16 %v1342
    %v1437 = vunpack.c.h.b16 %v1342
    %v1438 = vunpack.c.l.b16 %v1343
    %v1439 = vunpack.c.l.b16 %v1344
    %v1440 = vunpack.c.h.b16 %v1344
    %v1441 = vunpack.c.l.b16 %v1345
    %v1442 = vunpack.c.l.b16 %v1346
    %v1443 = vunpack.c.h.b16 %v1346
    %v1444 = vunpack.c.l.b16 %v1347
    %v1445 = vunpack.c.l.b16 %v1348
    %v1446 = vunpack.c.h.b16 %v1348
    %v1447 = vunpack.c.l.b16 %v1349
    %v1448 = vunpack.c.l.b16 %v1350
    %v1449 = vunpack.c.h.b16 %v1350
    %v1450 = vunpack.c.l.b16 %v1351
    %v1451 = vunpack.c.l.b16 %v1352
    %v1452 = vunpack.c.h.b16 %v1352
    %v1453 = vunpack.c.l.b16 %v1353
    %v1454 = vunpack.c.l.b16 %v1354
    %v1455 = vunpack.c.h.b16 %v1354
    %v1456 = vunpack.c.l.b16 %v1355
    %v1457 = vunpack.c.l.b16 %v1356
    %v1458 = vunpack.c.h.b16 %v1356
    %v1459 = vunpack.c.l.b16 %v1357
    %v1460 = vunpack.c.l.b16 %v1358
    %v1461 = vunpack.c.h.b16 %v1358
    %v1462 = vunpack.c.l.b16 %v1359
    %v1463 = vunpack.c.l.b16 %v1360
    %v1464 = vunpack.c.h.b16 %v1360
    %v1465 = vunpack.c.l.b16 %v1361
    %v1466 = vpack.c.b16 %v1409, %v1406
    %v1467 = vpack.c.b16 %v1410, %v1407
    %v1468 = vpack.c.b16 %v1411, %v1408
    %v1469 = vpack.c.b16 %v1415, %v1412
    %v1470 = vpack.c.b16 %v1416, %v1413
    %v1471 = vpack.c.b16 %v1417, %v1414
    %v1472 = vpack.c.b16 %v1421, %v1418
    %v1473 = vpack.c.b16 %v1422, %v1419
    %v1474 = vpack.c.b16 %v1423, %v1420
    %v1475 = vpack.c.b16 %v1427, %v1424
    %v1476 = vpack.c.b16 %v1428, %v1425
    %v1477 = vpack.c.b16 %v1429, %v1426
    %v1478 = vpack.c.b16 %v1433, %v1430
    %v1479 = vpack.c.b16 %v1434, %v1431
    %v1480 = vpack.c.b16 %v1435, %v1432
    %v1481 = vpack.c.b16 %v1439, %v1436
    %v1482 = vpack.c.b16 %v1440, %v1437
    %v1483 = vpack.c.b16 %v1441, %v1438
    %v1484 = vpack.c.b16 %v1445, %v1442
    %v1485 = vpack.c.b16 %v1446, %v1443
    %v1486 = vpack.c.b16 %v1447, %v1444
    %v1487 = vpack.c.b16 %v1451, %v1448
    %v1488 = vpack.c.b16 %v1452, %v1449
    %v1489 = vpack.c.b16 %v1453, %v1450
    %v1490 = vpack.c.b16 %v1457, %v1454
    %v1491 = vpack.c.b16 %v1458, %v1455
    %v1492 = vpack.c.b16 %v1459, %v1456
    %v1493 = vpack.c.b16 %v1463, %v1460
    %v1494 = vpack.c.b16 %v1464, %v1461
    %v1495 = vpack.c.b16 %v1465, %v1462
    %vm1526 = vcmask 261120
    %v1528 = vsel %vm1526, %v1363, 0
    %v1531 = vsel %vm1526, %v1365, 0
    %1533 = vmatpush.bf16.msra.mxu0 %v1487
    %1534 = vmatpush.bf16.msra.mxu0 %v1484
    %1535 = vmatpush.bf16.msra.mxu0 %v1481
    %1536 = vmatpush.bf16.msra.mxu0 %v1478
    %1537 = vmatpush.bf16.msra.mxu0 %v1475
    %1538 = vmatpush.bf16.msra.mxu0 %v1472
    %1539 = vmatpush.bf16.msra.mxu0 %v1469
    %1540 = vmatpush.bf16.msra.mxu0 %v1466
    %1541 = vmatmul.bf16.gmra.mxu0 %v1362
    %v1542 = vpop.f32.mrf.mxu0
    %v1543 = vadd.f32 0.0, %v1542
    %v1544 = vpop.f32.mrf.mxu0
    %v1545 = vadd.f32 0.0, %v1544
    %1546 = vmatmul.bf16.gmra.mxu0 %v1364
    %v1547 = vpop.f32.mrf.mxu0
    %v1548 = vadd.f32 0.0, %v1547
    %v1549 = vpop.f32.mrf.mxu0
    %1550 = vdwg.mxu0
    %1551 = vmatpush.bf16.msra.mxu0 0
    %1552 = vmatpush.bf16.msra.mxu0 0
    %1553 = vmatpush.bf16.msra.mxu0 0
    %1554 = vmatpush.bf16.msra.mxu0 0
    %1555 = vmatpush.bf16.msra.mxu0 0
    %1556 = vmatpush.bf16.msra.mxu0 0
    %1557 = vmatpush.bf16.msra.mxu0 %v1493
    %1558 = vmatpush.bf16.msra.mxu0 %v1490
    %1559 = vmatmul.bf16.gmra.mxu0 %v1528
    %v1560 = vpop.f32.mrf.mxu0
    %v1561 = vadd.f32 %v1543, %v1560
    %v1562 = vpop.f32.mrf.mxu0
    %v1563 = vadd.f32 %v1545, %v1562
    %1564 = vmatmul.bf16.gmra.mxu0 %v1531
    %v1565 = vpop.f32.mrf.mxu0
    %v1566 = vadd.f32 %v1548, %v1565
    %v1567 = vpop.f32.mrf.mxu0
    %1568 = vdwg.mxu0
    %1569 = vmatpush.bf16.msra.mxu0 %v1488
    %1570 = vmatpush.bf16.msra.mxu0 %v1485
    %1571 = vmatpush.bf16.msra.mxu0 %v1482
    %1572 = vmatpush.bf16.msra.mxu0 %v1479
    %1573 = vmatpush.bf16.msra.mxu0 %v1476
    %1574 = vmatpush.bf16.msra.mxu0 %v1473
    %1575 = vmatpush.bf16.msra.mxu0 %v1470
    %1576 = vmatpush.bf16.msra.mxu0 %v1467
    %1577 = vmatmul.bf16.gmra.mxu0 %v1362
    %v1578 = vpop.f32.mrf.mxu0
    %v1579 = vadd.f32 0.0, %v1578
    %v1580 = vpop.f32.mrf.mxu0
    %v1581 = vadd.f32 0.0, %v1580
    %1582 = vmatmul.bf16.gmra.mxu0 %v1364
    %v1583 = vpop.f32.mrf.mxu0
    %v1584 = vadd.f32 0.0, %v1583
    %v1585 = vpop.f32.mrf.mxu0
    %1586 = vdwg.mxu0
    %1587 = vmatpush.bf16.msra.mxu0 0
    %1588 = vmatpush.bf16.msra.mxu0 0
    %1589 = vmatpush.bf16.msra.mxu0 0
    %1590 = vmatpush.bf16.msra.mxu0 0
    %1591 = vmatpush.bf16.msra.mxu0 0
    %1592 = vmatpush.bf16.msra.mxu0 0
    %1593 = vmatpush.bf16.msra.mxu0 %v1494
    %1594 = vmatpush.bf16.msra.mxu0 %v1491
    %1595 = vmatmul.bf16.gmra.mxu0 %v1528
    %v1596 = vpop.f32.mrf.mxu0
    %v1597 = vadd.f32 %v1579, %v1596
    %v1598 = vpop.f32.mrf.mxu0
    %v1599 = vadd.f32 %v1581, %v1598
    %1600 = vmatmul.bf16.gmra.mxu0 %v1531
    %v1601 = vpop.f32.mrf.mxu0
    %v1602 = vadd.f32 %v1584, %v1601
    %v1603 = vpop.f32.mrf.mxu0
    %1604 = vdwg.mxu0
    %1605 = vmatpush.bf16.msra.mxu0 %v1489
    %1606 = vmatpush.bf16.msra.mxu0 %v1486
    %1607 = vmatpush.bf16.msra.mxu0 %v1483
    %1608 = vmatpush.bf16.msra.mxu0 %v1480
    %1609 = vmatpush.bf16.msra.mxu0 %v1477
    %1610 = vmatpush.bf16.msra.mxu0 %v1474
    %1611 = vmatpush.bf16.msra.mxu0 %v1471
    %1612 = vmatpush.bf16.msra.mxu0 %v1468
    %1613 = vmatmul.bf16.gmra.mxu0 %v1362
    %v1614 = vpop.f32.mrf.mxu0
    %v1615 = vadd.f32 0.0, %v1614
    %v1616 = vpop.f32.mrf.mxu0
    %v1617 = vadd.f32 0.0, %v1616
    %1618 = vmatmul.bf16.gmra.mxu0 %v1364
    %v1619 = vpop.f32.mrf.mxu0
    %v1620 = vadd.f32 0.0, %v1619
    %v1621 = vpop.f32.mrf.mxu0
    %1622 = vdwg.mxu0
    %1623 = vmatpush.bf16.msra.mxu0 0
    %1624 = vmatpush.bf16.msra.mxu0 0
    %1625 = vmatpush.bf16.msra.mxu0 0
    %1626 = vmatpush.bf16.msra.mxu0 0
    %1627 = vmatpush.bf16.msra.mxu0 0
    %1628 = vmatpush.bf16.msra.mxu0 0
    %1629 = vmatpush.bf16.msra.mxu0 %v1495
    %1630 = vmatpush.bf16.msra.mxu0 %v1492
    %1631 = vmatmul.bf16.gmra.mxu0 %v1528
    %v1632 = vpop.f32.mrf.mxu0
    %v1633 = vadd.f32 %v1615, %v1632
    %v1634 = vpop.f32.mrf.mxu0
    %v1635 = vadd.f32 %v1617, %v1634
    %1636 = vmatmul.bf16.gmra.mxu0 %v1531
    %v1637 = vpop.f32.mrf.mxu0
    %v1638 = vadd.f32 %v1620, %v1637
    %v1639 = vpop.f32.mrf.mxu0
    %1640 = vdwg.mxu0
    %v1641 = vmax.f32 %v1561, 0.0
    %v1642 = vmax.f32 %v1597, 0.0
    %v1643 = vmax.f32 %v1633, 0.0
    %v1644 = vmax.f32 %v1563, 0.0
    %v1645 = vmax.f32 %v1599, 0.0
    %v1646 = vmax.f32 %v1635, 0.0
    %v1647 = vmax.f32 %v1566, 0.0
    %v1648 = vmax.f32 %v1602, 0.0
    %v1649 = vmax.f32 %v1638, 0.0
    %v1650 = vpack.c.bf16 %v1644, %v1641
    %v1651 = vpack.c.bf16 %v1645, %v1642
    %v1652 = vpack.c.bf16 %v1646, %v1643
    %v1653 = vpack.c.bf16 %v1647, %v1647
    %v1654 = vpack.c.bf16 %v1648, %v1648
    %v1655 = vpack.c.bf16 %v1649, %v1649
    %v1656 = vld [vmem:[#allocation13] sm:$0xff]
    %v1657 = vld [vmem:[#allocation13 + $0x8] sm:$0xf]
    %v1658 = vld [vmem:[#allocation13 + $0xc] sm:$0xff]
    %v1659 = vld [vmem:[#allocation13 + $0x14] sm:$0xf]
    %v1660 = vld [vmem:[#allocation13 + $0x18] sm:$0xff]
    %v1661 = vld [vmem:[#allocation13 + $0x20] sm:$0xf]
    %v1662 = vld [vmem:[#allocation13 + $0x24] sm:$0xff]
    %v1663 = vld [vmem:[#allocation13 + $0x2c] sm:$0xf]
    %v1664 = vld [vmem:[#allocation13 + $0x30] sm:$0xff]
    %v1665 = vld [vmem:[#allocation13 + $0x38] sm:$0xf]
    %v1666 = vld [vmem:[#allocation13 + $0x3c] sm:$0xff]
    %v1667 = vld [vmem:[#allocation13 + $0x44] sm:$0xf]
    %v1668 = vld [vmem:[#allocation13 + $0x48] sm:$0xff]
    %v1669 = vld [vmem:[#allocation13 + $0x50] sm:$0xf]
    %v1670 = vld [vmem:[#allocation13 + $0x54] sm:$0xff]
    %v1671 = vld [vmem:[#allocation13 + $0x5c] sm:$0xf]
    %v1672 = vld [vmem:[#allocation13 + $0x60] sm:$0xff]
    %v1673 = vld [vmem:[#allocation13 + $0x68] sm:$0xf]
    %v1674 = vld [vmem:[#allocation13 + $0x6c] sm:$0xff]
    %v1675 = vld [vmem:[#allocation13 + $0x74] sm:$0xf]
    %v1676 = vld [vmem:[#allocation13 + $0x78] sm:$0xff]
    %v1677 = vld [vmem:[#allocation13 + $0x80] sm:$0xf]
    %v1678 = vld [vmem:[#allocation13 + $0x84] sm:$0xff]
    %v1679 = vld [vmem:[#allocation13 + $0x8c] sm:$0xf]
    %v1680 = vld [vmem:[#allocation13 + $0x90] sm:$0xff]
    %v1681 = vld [vmem:[#allocation13 + $0x98] sm:$0xf]
    %v1682 = vld [vmem:[#allocation13 + $0x9c] sm:$0xff]
    %v1683 = vld [vmem:[#allocation13 + $0xa4] sm:$0xf]
    %v1684 = vld [vmem:[#allocation13 + $0xa8] sm:$0xff]
    %v1685 = vld [vmem:[#allocation13 + $0xb0] sm:$0xf]
    %v1686 = vld [vmem:[#allocation13 + $0xb4] sm:$0xff]
    %v1687 = vld [vmem:[#allocation13 + $0xbc] sm:$0xf]
    %v1688 = vld [vmem:[#allocation13 + $0xc0] sm:$0xff]
    %v1689 = vld [vmem:[#allocation13 + $0xc8] sm:$0xf]
    %v1690 = vld [vmem:[#allocation13 + $0xcc] sm:$0xff]
    %v1691 = vld [vmem:[#allocation13 + $0xd4] sm:$0xf]
    %v1692 = vld [vmem:[#allocation13 + $0xd8] sm:$0xff]
    %v1693 = vld [vmem:[#allocation13 + $0xe0] sm:$0xf]
    %v1694 = vld [vmem:[#allocation13 + $0xe4] sm:$0xff]
    %v1695 = vld [vmem:[#allocation13 + $0xec] sm:$0xf]
    %v1696 = vld [vmem:[#allocation13 + $0xf0] sm:$0xff]
    %v1697 = vld [vmem:[#allocation13 + $0xf8] sm:$0xf]
    %v1698 = vld [vmem:[#allocation13 + $0xfc] sm:$0xff]
    %v1699 = vld [vmem:[#allocation13 + $0x104] sm:$0xf]
    %v1700 = vld [vmem:[#allocation13 + $0x108] sm:$0xff]
    %v1701 = vld [vmem:[#allocation13 + $0x110] sm:$0xf]
    %v1702 = vld [vmem:[#allocation13 + $0x114] sm:$0xff]
    %v1703 = vld [vmem:[#allocation13 + $0x11c] sm:$0xf]
    %v1704 = vld [vmem:[#allocation13 + $0x120] sm:$0xff]
    %v1705 = vld [vmem:[#allocation13 + $0x128] sm:$0xf]
    %v1706 = vld [vmem:[#allocation13 + $0x12c] sm:$0xff]
    %v1707 = vld [vmem:[#allocation13 + $0x134] sm:$0xf]
    %v1708 = vld [vmem:[#allocation13 + $0x138] sm:$0xff]
    %v1709 = vld [vmem:[#allocation13 + $0x140] sm:$0xf]
    %v1710 = vld [vmem:[#allocation13 + $0x144] sm:$0xff]
    %v1711 = vld [vmem:[#allocation13 + $0x14c] sm:$0xf]
    %v1712 = vld [vmem:[#allocation13 + $0x150] sm:$0xff]
    %v1713 = vld [vmem:[#allocation13 + $0x158] sm:$0xf]
    %v1714 = vld [vmem:[#allocation13 + $0x15c] sm:$0xff]
    %v1715 = vld [vmem:[#allocation13 + $0x164] sm:$0xf]
    %v1716 = vld [vmem:[#allocation13 + $0x168] sm:$0xff]
    %v1717 = vld [vmem:[#allocation13 + $0x170] sm:$0xf]
    %v1718 = vld [vmem:[#allocation13 + $0x174] sm:$0xff]
    %v1719 = vld [vmem:[#allocation13 + $0x17c] sm:$0xf]
    %v1720 = vld [vmem:[#allocation13 + $0x180] sm:$0xff]
    %v1721 = vld [vmem:[#allocation13 + $0x188] sm:$0xf]
    %v1722 = vld [vmem:[#allocation13 + $0x18c] sm:$0xff]
    %v1723 = vld [vmem:[#allocation13 + $0x194] sm:$0xf]
    %v1724 = vld [vmem:[#allocation13 + $0x198] sm:$0xff]
    %v1725 = vld [vmem:[#allocation13 + $0x1a0] sm:$0xf]
    %v1726 = vld [vmem:[#allocation13 + $0x1a4] sm:$0xff]
    %v1727 = vld [vmem:[#allocation13 + $0x1ac] sm:$0xf]
    %v1728 = vld [vmem:[#allocation13 + $0x1b0] sm:$0xff]
    %v1729 = vld [vmem:[#allocation13 + $0x1b8] sm:$0xf]
    %v1730 = vld [vmem:[#allocation13 + $0x1bc] sm:$0xff]
    %v1731 = vld [vmem:[#allocation13 + $0x1c4] sm:$0xf]
    %v1732 = vld [vmem:[#allocation13 + $0x1c8] sm:$0xff]
    %v1733 = vld [vmem:[#allocation13 + $0x1d0] sm:$0xf]
    %v1734 = vld [vmem:[#allocation13 + $0x1d4] sm:$0xff]
    %v1735 = vld [vmem:[#allocation13 + $0x1dc] sm:$0xf]
    %v1816 = vunpack.c.l.b16 %v1656
    %v1817 = vunpack.c.h.b16 %v1656
    %v1818 = vunpack.c.l.b16 %v1657
    %v1819 = vunpack.c.l.b16 %v1658
    %v1820 = vunpack.c.h.b16 %v1658
    %v1821 = vunpack.c.l.b16 %v1659
    %v1822 = vunpack.c.l.b16 %v1660
    %v1823 = vunpack.c.h.b16 %v1660
    %v1824 = vunpack.c.l.b16 %v1661
    %v1825 = vunpack.c.l.b16 %v1662
    %v1826 = vunpack.c.h.b16 %v1662
    %v1827 = vunpack.c.l.b16 %v1663
    %v1828 = vunpack.c.l.b16 %v1664
    %v1829 = vunpack.c.h.b16 %v1664
    %v1830 = vunpack.c.l.b16 %v1665
    %v1831 = vunpack.c.l.b16 %v1666
    %v1832 = vunpack.c.h.b16 %v1666
    %v1833 = vunpack.c.l.b16 %v1667
    %v1834 = vunpack.c.l.b16 %v1668
    %v1835 = vunpack.c.h.b16 %v1668
    %v1836 = vunpack.c.l.b16 %v1669
    %v1837 = vunpack.c.l.b16 %v1670
    %v1838 = vunpack.c.h.b16 %v1670
    %v1839 = vunpack.c.l.b16 %v1671
    %v1840 = vunpack.c.l.b16 %v1672
    %v1841 = vunpack.c.h.b16 %v1672
    %v1842 = vunpack.c.l.b16 %v1673
    %v1843 = vunpack.c.l.b16 %v1674
    %v1844 = vunpack.c.h.b16 %v1674
    %v1845 = vunpack.c.l.b16 %v1675
    %v1846 = vunpack.c.l.b16 %v1676
    %v1847 = vunpack.c.h.b16 %v1676
    %v1848 = vunpack.c.l.b16 %v1677
    %v1849 = vunpack.c.l.b16 %v1678
    %v1850 = vunpack.c.h.b16 %v1678
    %v1851 = vunpack.c.l.b16 %v1679
    %v1852 = vunpack.c.l.b16 %v1680
    %v1853 = vunpack.c.h.b16 %v1680
    %v1854 = vunpack.c.l.b16 %v1681
    %v1855 = vunpack.c.l.b16 %v1682
    %v1856 = vunpack.c.h.b16 %v1682
    %v1857 = vunpack.c.l.b16 %v1683
    %v1858 = vunpack.c.l.b16 %v1684
    %v1859 = vunpack.c.h.b16 %v1684
    %v1860 = vunpack.c.l.b16 %v1685
    %v1861 = vunpack.c.l.b16 %v1686
    %v1862 = vunpack.c.h.b16 %v1686
    %v1863 = vunpack.c.l.b16 %v1687
    %v1864 = vunpack.c.l.b16 %v1688
    %v1865 = vunpack.c.h.b16 %v1688
    %v1866 = vunpack.c.l.b16 %v1689
    %v1867 = vunpack.c.l.b16 %v1690
    %v1868 = vunpack.c.h.b16 %v1690
    %v1869 = vunpack.c.l.b16 %v1691
    %v1870 = vunpack.c.l.b16 %v1692
    %v1871 = vunpack.c.h.b16 %v1692
    %v1872 = vunpack.c.l.b16 %v1693
    %v1873 = vunpack.c.l.b16 %v1694
    %v1874 = vunpack.c.h.b16 %v1694
    %v1875 = vunpack.c.l.b16 %v1695
    %v1876 = vunpack.c.l.b16 %v1696
    %v1877 = vunpack.c.h.b16 %v1696
    %v1878 = vunpack.c.l.b16 %v1697
    %v1879 = vunpack.c.l.b16 %v1698
    %v1880 = vunpack.c.h.b16 %v1698
    %v1881 = vunpack.c.l.b16 %v1699
    %v1882 = vunpack.c.l.b16 %v1700
    %v1883 = vunpack.c.h.b16 %v1700
    %v1884 = vunpack.c.l.b16 %v1701
    %v1885 = vunpack.c.l.b16 %v1702
    %v1886 = vunpack.c.h.b16 %v1702
    %v1887 = vunpack.c.l.b16 %v1703
    %v1888 = vunpack.c.l.b16 %v1704
    %v1889 = vunpack.c.h.b16 %v1704
    %v1890 = vunpack.c.l.b16 %v1705
    %v1891 = vunpack.c.l.b16 %v1706
    %v1892 = vunpack.c.h.b16 %v1706
    %v1893 = vunpack.c.l.b16 %v1707
    %v1894 = vunpack.c.l.b16 %v1708
    %v1895 = vunpack.c.h.b16 %v1708
    %v1896 = vunpack.c.l.b16 %v1709
    %v1897 = vunpack.c.l.b16 %v1710
    %v1898 = vunpack.c.h.b16 %v1710
    %v1899 = vunpack.c.l.b16 %v1711
    %v1900 = vunpack.c.l.b16 %v1712
    %v1901 = vunpack.c.h.b16 %v1712
    %v1902 = vunpack.c.l.b16 %v1713
    %v1903 = vunpack.c.l.b16 %v1714
    %v1904 = vunpack.c.h.b16 %v1714
    %v1905 = vunpack.c.l.b16 %v1715
    %v1906 = vunpack.c.l.b16 %v1716
    %v1907 = vunpack.c.h.b16 %v1716
    %v1908 = vunpack.c.l.b16 %v1717
    %v1909 = vunpack.c.l.b16 %v1718
    %v1910 = vunpack.c.h.b16 %v1718
    %v1911 = vunpack.c.l.b16 %v1719
    %v1912 = vunpack.c.l.b16 %v1720
    %v1913 = vunpack.c.h.b16 %v1720
    %v1914 = vunpack.c.l.b16 %v1721
    %v1915 = vunpack.c.l.b16 %v1722
    %v1916 = vunpack.c.h.b16 %v1722
    %v1917 = vunpack.c.l.b16 %v1723
    %v1918 = vunpack.c.l.b16 %v1724
    %v1919 = vunpack.c.h.b16 %v1724
    %v1920 = vunpack.c.l.b16 %v1725
    %v1921 = vunpack.c.l.b16 %v1726
    %v1922 = vunpack.c.h.b16 %v1726
    %v1923 = vunpack.c.l.b16 %v1727
    %v1924 = vunpack.c.l.b16 %v1728
    %v1925 = vunpack.c.h.b16 %v1728
    %v1926 = vunpack.c.l.b16 %v1729
    %v1927 = vunpack.c.l.b16 %v1730
    %v1928 = vunpack.c.h.b16 %v1730
    %v1929 = vunpack.c.l.b16 %v1731
    %v1930 = vunpack.c.l.b16 %v1732
    %v1931 = vunpack.c.h.b16 %v1732
    %v1932 = vunpack.c.l.b16 %v1733
    %v1933 = vunpack.c.l.b16 %v1734
    %v1934 = vunpack.c.h.b16 %v1734
    %v1935 = vunpack.c.l.b16 %v1735
    %v1936 = vpack.c.b16 %v1819, %v1816
    %v1937 = vpack.c.b16 %v1820, %v1817
    %v1938 = vpack.c.b16 %v1821, %v1818
    %v1939 = vpack.c.b16 %v1825, %v1822
    %v1940 = vpack.c.b16 %v1826, %v1823
    %v1941 = vpack.c.b16 %v1827, %v1824
    %v1942 = vpack.c.b16 %v1831, %v1828
    %v1943 = vpack.c.b16 %v1832, %v1829
    %v1944 = vpack.c.b16 %v1833, %v1830
    %v1945 = vpack.c.b16 %v1837, %v1834
    %v1946 = vpack.c.b16 %v1838, %v1835
    %v1947 = vpack.c.b16 %v1839, %v1836
    %v1948 = vpack.c.b16 %v1843, %v1840
    %v1949 = vpack.c.b16 %v1844, %v1841
    %v1950 = vpack.c.b16 %v1845, %v1842
    %v1951 = vpack.c.b16 %v1849, %v1846
    %v1952 = vpack.c.b16 %v1850, %v1847
    %v1953 = vpack.c.b16 %v1851, %v1848
    %v1954 = vpack.c.b16 %v1855, %v1852
    %v1955 = vpack.c.b16 %v1856, %v1853
    %v1956 = vpack.c.b16 %v1857, %v1854
    %v1957 = vpack.c.b16 %v1861, %v1858
    %v1958 = vpack.c.b16 %v1862, %v1859
    %v1959 = vpack.c.b16 %v1863, %v1860
    %v1960 = vpack.c.b16 %v1867, %v1864
    %v1961 = vpack.c.b16 %v1868, %v1865
    %v1962 = vpack.c.b16 %v1869, %v1866
    %v1963 = vpack.c.b16 %v1873, %v1870
    %v1964 = vpack.c.b16 %v1874, %v1871
    %v1965 = vpack.c.b16 %v1875, %v1872
    %v1966 = vpack.c.b16 %v1879, %v1876
    %v1967 = vpack.c.b16 %v1880, %v1877
    %v1968 = vpack.c.b16 %v1881, %v1878
    %v1969 = vpack.c.b16 %v1885, %v1882
    %v1970 = vpack.c.b16 %v1886, %v1883
    %v1971 = vpack.c.b16 %v1887, %v1884
    %v1972 = vpack.c.b16 %v1891, %v1888
    %v1973 = vpack.c.b16 %v1892, %v1889
    %v1974 = vpack.c.b16 %v1893, %v1890
    %v1975 = vpack.c.b16 %v1897, %v1894
    %v1976 = vpack.c.b16 %v1898, %v1895
    %v1977 = vpack.c.b16 %v1899, %v1896
    %v1978 = vpack.c.b16 %v1903, %v1900
    %v1979 = vpack.c.b16 %v1904, %v1901
    %v1980 = vpack.c.b16 %v1905, %v1902
    %v1981 = vpack.c.b16 %v1909, %v1906
    %v1982 = vpack.c.b16 %v1910, %v1907
    %v1983 = vpack.c.b16 %v1911, %v1908
    %v1984 = vpack.c.b16 %v1915, %v1912
    %v1985 = vpack.c.b16 %v1916, %v1913
    %v1986 = vpack.c.b16 %v1917, %v1914
    %v1987 = vpack.c.b16 %v1921, %v1918
    %v1988 = vpack.c.b16 %v1922, %v1919
    %v1989 = vpack.c.b16 %v1923, %v1920
    %v1990 = vpack.c.b16 %v1927, %v1924
    %v1991 = vpack.c.b16 %v1928, %v1925
    %v1992 = vpack.c.b16 %v1929, %v1926
    %v1993 = vpack.c.b16 %v1933, %v1930
    %v1994 = vpack.c.b16 %v1934, %v1931
    %v1995 = vpack.c.b16 %v1935, %v1932
    %vm2056 = vcmask 523264
    %v2058 = vsel %vm2056, %v1652, 0
    %v2061 = vsel %vm2056, %v1655, 0
    %2063 = vmatpush.bf16.msra.mxu0 %v1957
    %2064 = vmatpush.bf16.msra.mxu0 %v1954
    %2065 = vmatpush.bf16.msra.mxu0 %v1951
    %2066 = vmatpush.bf16.msra.mxu0 %v1948
    %2067 = vmatpush.bf16.msra.mxu0 %v1945
    %2068 = vmatpush.bf16.msra.mxu0 %v1942
    %2069 = vmatpush.bf16.msra.mxu0 %v1939
    %2070 = vmatpush.bf16.msra.mxu0 %v1936
    %2071 = vmatmul.bf16.gmra.mxu0 %v1650
    %v2072 = vpop.f32.mrf.mxu0
    %v2073 = vadd.f32 0.0, %v2072
    %v2074 = vpop.f32.mrf.mxu0
    %v2075 = vadd.f32 0.0, %v2074
    %2076 = vmatmul.bf16.gmra.mxu0 %v1653
    %v2077 = vpop.f32.mrf.mxu0
    %v2078 = vadd.f32 0.0, %v2077
    %v2079 = vpop.f32.mrf.mxu0
    %2080 = vdwg.mxu0
    %2081 = vmatpush.bf16.msra.mxu0 %v1981
    %2082 = vmatpush.bf16.msra.mxu0 %v1978
    %2083 = vmatpush.bf16.msra.mxu0 %v1975
    %2084 = vmatpush.bf16.msra.mxu0 %v1972
    %2085 = vmatpush.bf16.msra.mxu0 %v1969
    %2086 = vmatpush.bf16.msra.mxu0 %v1966
    %2087 = vmatpush.bf16.msra.mxu0 %v1963
    %2088 = vmatpush.bf16.msra.mxu0 %v1960
    %2089 = vmatmul.bf16.gmra.mxu0 %v1651
    %v2090 = vpop.f32.mrf.mxu0
    %v2091 = vadd.f32 %v2073, %v2090
    %v2092 = vpop.f32.mrf.mxu0
    %v2093 = vadd.f32 %v2075, %v2092
    %2094 = vmatmul.bf16.gmra.mxu0 %v1654
    %v2095 = vpop.f32.mrf.mxu0
    %v2096 = vadd.f32 %v2078, %v2095
    %v2097 = vpop.f32.mrf.mxu0
    %2098 = vdwg.mxu0
    %2099 = vmatpush.bf16.msra.mxu0 0
    %2100 = vmatpush.bf16.msra.mxu0 0
    %2101 = vmatpush.bf16.msra.mxu0 0
    %2102 = vmatpush.bf16.msra.mxu0 0
    %2103 = vmatpush.bf16.msra.mxu0 %v1993
    %2104 = vmatpush.bf16.msra.mxu0 %v1990
    %2105 = vmatpush.bf16.msra.mxu0 %v1987
    %2106 = vmatpush.bf16.msra.mxu0 %v1984
    %2107 = vmatmul.bf16.gmra.mxu0 %v2058
    %v2108 = vpop.f32.mrf.mxu0
    %v2109 = vadd.f32 %v2091, %v2108
    %v2110 = vpop.f32.mrf.mxu0
    %v2111 = vadd.f32 %v2093, %v2110
    %2112 = vmatmul.bf16.gmra.mxu0 %v2061
    %v2113 = vpop.f32.mrf.mxu0
    %v2114 = vadd.f32 %v2096, %v2113
    %v2115 = vpop.f32.mrf.mxu0
    %2116 = vdwg.mxu0
    %2117 = vmatpush.bf16.msra.mxu0 %v1958
    %2118 = vmatpush.bf16.msra.mxu0 %v1955
    %2119 = vmatpush.bf16.msra.mxu0 %v1952
    %2120 = vmatpush.bf16.msra.mxu0 %v1949
    %2121 = vmatpush.bf16.msra.mxu0 %v1946
    %2122 = vmatpush.bf16.msra.mxu0 %v1943
    %2123 = vmatpush.bf16.msra.mxu0 %v1940
    %2124 = vmatpush.bf16.msra.mxu0 %v1937
    %2125 = vmatmul.bf16.gmra.mxu0 %v1650
    %v2126 = vpop.f32.mrf.mxu0
    %v2127 = vadd.f32 0.0, %v2126
    %v2128 = vpop.f32.mrf.mxu0
    %v2129 = vadd.f32 0.0, %v2128
    %2130 = vmatmul.bf16.gmra.mxu0 %v1653
    %v2131 = vpop.f32.mrf.mxu0
    %v2132 = vadd.f32 0.0, %v2131
    %v2133 = vpop.f32.mrf.mxu0
    %2134 = vdwg.mxu0
    %2135 = vmatpush.bf16.msra.mxu0 %v1982
    %2136 = vmatpush.bf16.msra.mxu0 %v1979
    %2137 = vmatpush.bf16.msra.mxu0 %v1976
    %2138 = vmatpush.bf16.msra.mxu0 %v1973
    %2139 = vmatpush.bf16.msra.mxu0 %v1970
    %2140 = vmatpush.bf16.msra.mxu0 %v1967
    %2141 = vmatpush.bf16.msra.mxu0 %v1964
    %2142 = vmatpush.bf16.msra.mxu0 %v1961
    %2143 = vmatmul.bf16.gmra.mxu0 %v1651
    %v2144 = vpop.f32.mrf.mxu0
    %v2145 = vadd.f32 %v2127, %v2144
    %v2146 = vpop.f32.mrf.mxu0
    %v2147 = vadd.f32 %v2129, %v2146
    %2148 = vmatmul.bf16.gmra.mxu0 %v1654
    %v2149 = vpop.f32.mrf.mxu0
    %v2150 = vadd.f32 %v2132, %v2149
    %v2151 = vpop.f32.mrf.mxu0
    %2152 = vdwg.mxu0
    %2153 = vmatpush.bf16.msra.mxu0 0
    %2154 = vmatpush.bf16.msra.mxu0 0
    %2155 = vmatpush.bf16.msra.mxu0 0
    %2156 = vmatpush.bf16.msra.mxu0 0
    %2157 = vmatpush.bf16.msra.mxu0 %v1994
    %2158 = vmatpush.bf16.msra.mxu0 %v1991
    %2159 = vmatpush.bf16.msra.mxu0 %v1988
    %2160 = vmatpush.bf16.msra.mxu0 %v1985
    %2161 = vmatmul.bf16.gmra.mxu0 %v2058
    %v2162 = vpop.f32.mrf.mxu0
    %v2163 = vadd.f32 %v2145, %v2162
    %v2164 = vpop.f32.mrf.mxu0
    %v2165 = vadd.f32 %v2147, %v2164
    %2166 = vmatmul.bf16.gmra.mxu0 %v2061
    %v2167 = vpop.f32.mrf.mxu0
    %v2168 = vadd.f32 %v2150, %v2167
    %v2169 = vpop.f32.mrf.mxu0
    %2170 = vdwg.mxu0
    %2171 = vmatpush.bf16.msra.mxu0 %v1959
    %2172 = vmatpush.bf16.msra.mxu0 %v1956
    %2173 = vmatpush.bf16.msra.mxu0 %v1953
    %2174 = vmatpush.bf16.msra.mxu0 %v1950
    %2175 = vmatpush.bf16.msra.mxu0 %v1947
    %2176 = vmatpush.bf16.msra.mxu0 %v1944
    %2177 = vmatpush.bf16.msra.mxu0 %v1941
    %2178 = vmatpush.bf16.msra.mxu0 %v1938
    %2179 = vmatmul.bf16.gmra.mxu0 %v1650
    %v2180 = vpop.f32.mrf.mxu0
    %v2181 = vadd.f32 0.0, %v2180
    %v2182 = vpop.f32.mrf.mxu0
    %v2183 = vadd.f32 0.0, %v2182
    %2184 = vmatmul.bf16.gmra.mxu0 %v1653
    %v2185 = vpop.f32.mrf.mxu0
    %v2186 = vadd.f32 0.0, %v2185
    %v2187 = vpop.f32.mrf.mxu0
    %2188 = vdwg.mxu0
    %2189 = vmatpush.bf16.msra.mxu0 %v1983
    %2190 = vmatpush.bf16.msra.mxu0 %v1980
    %2191 = vmatpush.bf16.msra.mxu0 %v1977
    %2192 = vmatpush.bf16.msra.mxu0 %v1974
    %2193 = vmatpush.bf16.msra.mxu0 %v1971
    %2194 = vmatpush.bf16.msra.mxu0 %v1968
    %2195 = vmatpush.bf16.msra.mxu0 %v1965
    %2196 = vmatpush.bf16.msra.mxu0 %v1962
    %2197 = vmatmul.bf16.gmra.mxu0 %v1651
    %v2198 = vpop.f32.mrf.mxu0
    %v2199 = vadd.f32 %v2181, %v2198
    %v2200 = vpop.f32.mrf.mxu0
    %v2201 = vadd.f32 %v2183, %v2200
    %2202 = vmatmul.bf16.gmra.mxu0 %v1654
    %v2203 = vpop.f32.mrf.mxu0
    %v2204 = vadd.f32 %v2186, %v2203
    %v2205 = vpop.f32.mrf.mxu0
    %2206 = vdwg.mxu0
    %2207 = vmatpush.bf16.msra.mxu0 0
    %2208 = vmatpush.bf16.msra.mxu0 0
    %2209 = vmatpush.bf16.msra.mxu0 0
    %2210 = vmatpush.bf16.msra.mxu0 0
    %2211 = vmatpush.bf16.msra.mxu0 %v1995
    %2212 = vmatpush.bf16.msra.mxu0 %v1992
    %2213 = vmatpush.bf16.msra.mxu0 %v1989
    %2214 = vmatpush.bf16.msra.mxu0 %v1986
    %2215 = vmatmul.bf16.gmra.mxu0 %v2058
    %v2216 = vpop.f32.mrf.mxu0
    %v2217 = vadd.f32 %v2199, %v2216
    %v2218 = vpop.f32.mrf.mxu0
    %v2219 = vadd.f32 %v2201, %v2218
    %2220 = vmatmul.bf16.gmra.mxu0 %v2061
    %v2221 = vpop.f32.mrf.mxu0
    %v2222 = vadd.f32 %v2204, %v2221
    %v2223 = vpop.f32.mrf.mxu0
    %2224 = vdwg.mxu0
    %v2225 = vld [vmem:[#allocation11] sm:$0xff]
    %v2226 = vld [vmem:[#allocation11 + $0x8] sm:$0xff]
    %v2227 = vld [vmem:[#allocation11 + $0x10] sm:$0xf]
    %s2228 = scalar_lea.vmem [#allocation13], 480
    %v2229 = vld [vmem:[%s2228] sm:$0xff]
    %v2230 = vld [vmem:[%s2228 + $0x8] sm:$0xf]
    %v2231 = vld [vmem:[%s2228 + $0xc] sm:$0xff]
    %v2232 = vld [vmem:[%s2228 + $0x14] sm:$0xf]
    %v2233 = vld [vmem:[%s2228 + $0x18] sm:$0xff]
    %v2234 = vld [vmem:[%s2228 + $0x20] sm:$0xf]
    %v2235 = vld [vmem:[%s2228 + $0x24] sm:$0xff]
    %v2236 = vld [vmem:[%s2228 + $0x2c] sm:$0xf]
    %v2237 = vld [vmem:[%s2228 + $0x30] sm:$0xff]
    %v2238 = vld [vmem:[%s2228 + $0x38] sm:$0xf]
    %v2239 = vld [vmem:[%s2228 + $0x3c] sm:$0xff]
    %v2240 = vld [vmem:[%s2228 + $0x44] sm:$0xf]
    %v2241 = vld [vmem:[%s2228 + $0x48] sm:$0xff]
    %v2242 = vld [vmem:[%s2228 + $0x50] sm:$0xf]
    %v2243 = vld [vmem:[%s2228 + $0x54] sm:$0xff]
    %v2244 = vld [vmem:[%s2228 + $0x5c] sm:$0xf]
    %v2245 = vld [vmem:[%s2228 + $0x60] sm:$0xff]
    %v2246 = vld [vmem:[%s2228 + $0x68] sm:$0xf]
    %v2247 = vld [vmem:[%s2228 + $0x6c] sm:$0xff]
    %v2248 = vld [vmem:[%s2228 + $0x74] sm:$0xf]
    %v2249 = vld [vmem:[%s2228 + $0x78] sm:$0xff]
    %v2250 = vld [vmem:[%s2228 + $0x80] sm:$0xf]
    %v2251 = vld [vmem:[%s2228 + $0x84] sm:$0xff]
    %v2252 = vld [vmem:[%s2228 + $0x8c] sm:$0xf]
    %v2253 = vld [vmem:[%s2228 + $0x90] sm:$0xff]
    %v2254 = vld [vmem:[%s2228 + $0x98] sm:$0xf]
    %v2255 = vld [vmem:[%s2228 + $0x9c] sm:$0xff]
    %v2256 = vld [vmem:[%s2228 + $0xa4] sm:$0xf]
    %v2257 = vld [vmem:[%s2228 + $0xa8] sm:$0xff]
    %v2258 = vld [vmem:[%s2228 + $0xb0] sm:$0xf]
    %v2259 = vld [vmem:[%s2228 + $0xb4] sm:$0xff]
    %v2260 = vld [vmem:[%s2228 + $0xbc] sm:$0xf]
    %v2261 = vld [vmem:[%s2228 + $0xc0] sm:$0xff]
    %v2262 = vld [vmem:[%s2228 + $0xc8] sm:$0xf]
    %v2263 = vld [vmem:[%s2228 + $0xcc] sm:$0xff]
    %v2264 = vld [vmem:[%s2228 + $0xd4] sm:$0xf]
    %v2265 = vld [vmem:[%s2228 + $0xd8] sm:$0xff]
    %v2266 = vld [vmem:[%s2228 + $0xe0] sm:$0xf]
    %v2267 = vld [vmem:[%s2228 + $0xe4] sm:$0xff]
    %v2268 = vld [vmem:[%s2228 + $0xec] sm:$0xf]
    %v2269 = vld [vmem:[%s2228 + $0xf0] sm:$0xff]
    %v2270 = vld [vmem:[%s2228 + $0xf8] sm:$0xf]
    %v2271 = vld [vmem:[%s2228 + $0xfc] sm:$0xff]
    %v2272 = vld [vmem:[%s2228 + $0x104] sm:$0xf]
    %v2273 = vld [vmem:[%s2228 + $0x108] sm:$0xff]
    %v2274 = vld [vmem:[%s2228 + $0x110] sm:$0xf]
    %v2275 = vld [vmem:[%s2228 + $0x114] sm:$0xff]
    %v2276 = vld [vmem:[%s2228 + $0x11c] sm:$0xf]
    %v2277 = vld [vmem:[%s2228 + $0x120] sm:$0xff]
    %v2278 = vld [vmem:[%s2228 + $0x128] sm:$0xf]
    %v2279 = vld [vmem:[%s2228 + $0x12c] sm:$0xff]
    %v2280 = vld [vmem:[%s2228 + $0x134] sm:$0xf]
    %v2281 = vld [vmem:[%s2228 + $0x138] sm:$0xff]
    %v2282 = vld [vmem:[%s2228 + $0x140] sm:$0xf]
    %v2283 = vld [vmem:[%s2228 + $0x144] sm:$0xff]
    %v2284 = vld [vmem:[%s2228 + $0x14c] sm:$0xf]
    %v2285 = vld [vmem:[%s2228 + $0x150] sm:$0xff]
    %v2286 = vld [vmem:[%s2228 + $0x158] sm:$0xf]
    %v2287 = vld [vmem:[%s2228 + $0x15c] sm:$0xff]
    %v2288 = vld [vmem:[%s2228 + $0x164] sm:$0xf]
    %v2289 = vld [vmem:[%s2228 + $0x168] sm:$0xff]
    %v2290 = vld [vmem:[%s2228 + $0x170] sm:$0xf]
    %v2291 = vld [vmem:[%s2228 + $0x174] sm:$0xff]
    %v2292 = vld [vmem:[%s2228 + $0x17c] sm:$0xf]
    %v2293 = vld [vmem:[%s2228 + $0x180] sm:$0xff]
    %v2294 = vld [vmem:[%s2228 + $0x188] sm:$0xf]
    %v2295 = vld [vmem:[%s2228 + $0x18c] sm:$0xff]
    %v2296 = vld [vmem:[%s2228 + $0x194] sm:$0xf]
    %v2297 = vld [vmem:[%s2228 + $0x198] sm:$0xff]
    %v2298 = vld [vmem:[%s2228 + $0x1a0] sm:$0xf]
    %v2299 = vld [vmem:[%s2228 + $0x1a4] sm:$0xff]
    %v2300 = vld [vmem:[%s2228 + $0x1ac] sm:$0xf]
    %v2301 = vld [vmem:[%s2228 + $0x1b0] sm:$0xff]
    %v2302 = vld [vmem:[%s2228 + $0x1b8] sm:$0xf]
    %v2303 = vld [vmem:[%s2228 + $0x1bc] sm:$0xff]
    %v2304 = vld [vmem:[%s2228 + $0x1c4] sm:$0xf]
    %v2305 = vld [vmem:[%s2228 + $0x1c8] sm:$0xff]
    %v2306 = vld [vmem:[%s2228 + $0x1d0] sm:$0xf]
    %v2307 = vld [vmem:[%s2228 + $0x1d4] sm:$0xff]
    %v2308 = vld [vmem:[%s2228 + $0x1dc] sm:$0xf]
    %v2389 = vunpack.c.l.b16 %v2229
    %v2390 = vunpack.c.h.b16 %v2229
    %v2391 = vunpack.c.l.b16 %v2230
    %v2392 = vunpack.c.l.b16 %v2231
    %v2393 = vunpack.c.h.b16 %v2231
    %v2394 = vunpack.c.l.b16 %v2232
    %v2395 = vunpack.c.l.b16 %v2233
    %v2396 = vunpack.c.h.b16 %v2233
    %v2397 = vunpack.c.l.b16 %v2234
    %v2398 = vunpack.c.l.b16 %v2235
    %v2399 = vunpack.c.h.b16 %v2235
    %v2400 = vunpack.c.l.b16 %v2236
    %v2401 = vunpack.c.l.b16 %v2237
    %v2402 = vunpack.c.h.b16 %v2237
    %v2403 = vunpack.c.l.b16 %v2238
    %v2404 = vunpack.c.l.b16 %v2239
    %v2405 = vunpack.c.h.b16 %v2239
    %v2406 = vunpack.c.l.b16 %v2240
    %v2407 = vunpack.c.l.b16 %v2241
    %v2408 = vunpack.c.h.b16 %v2241
    %v2409 = vunpack.c.l.b16 %v2242
    %v2410 = vunpack.c.l.b16 %v2243
    %v2411 = vunpack.c.h.b16 %v2243
    %v2412 = vunpack.c.l.b16 %v2244
    %v2413 = vunpack.c.l.b16 %v2245
    %v2414 = vunpack.c.h.b16 %v2245
    %v2415 = vunpack.c.l.b16 %v2246
    %v2416 = vunpack.c.l.b16 %v2247
    %v2417 = vunpack.c.h.b16 %v2247
    %v2418 = vunpack.c.l.b16 %v2248
    %v2419 = vunpack.c.l.b16 %v2249
    %v2420 = vunpack.c.h.b16 %v2249
    %v2421 = vunpack.c.l.b16 %v2250
    %v2422 = vunpack.c.l.b16 %v2251
    %v2423 = vunpack.c.h.b16 %v2251
    %v2424 = vunpack.c.l.b16 %v2252
    %v2425 = vunpack.c.l.b16 %v2253
    %v2426 = vunpack.c.h.b16 %v2253
    %v2427 = vunpack.c.l.b16 %v2254
    %v2428 = vunpack.c.l.b16 %v2255
    %v2429 = vunpack.c.h.b16 %v2255
    %v2430 = vunpack.c.l.b16 %v2256
    %v2431 = vunpack.c.l.b16 %v2257
    %v2432 = vunpack.c.h.b16 %v2257
    %v2433 = vunpack.c.l.b16 %v2258
    %v2434 = vunpack.c.l.b16 %v2259
    %v2435 = vunpack.c.h.b16 %v2259
    %v2436 = vunpack.c.l.b16 %v2260
    %v2437 = vunpack.c.l.b16 %v2261
    %v2438 = vunpack.c.h.b16 %v2261
    %v2439 = vunpack.c.l.b16 %v2262
    %v2440 = vunpack.c.l.b16 %v2263
    %v2441 = vunpack.c.h.b16 %v2263
    %v2442 = vunpack.c.l.b16 %v2264
    %v2443 = vunpack.c.l.b16 %v2265
    %v2444 = vunpack.c.h.b16 %v2265
    %v2445 = vunpack.c.l.b16 %v2266
    %v2446 = vunpack.c.l.b16 %v2267
    %v2447 = vunpack.c.h.b16 %v2267
    %v2448 = vunpack.c.l.b16 %v2268
    %v2449 = vunpack.c.l.b16 %v2269
    %v2450 = vunpack.c.h.b16 %v2269
    %v2451 = vunpack.c.l.b16 %v2270
    %v2452 = vunpack.c.l.b16 %v2271
    %v2453 = vunpack.c.h.b16 %v2271
    %v2454 = vunpack.c.l.b16 %v2272
    %v2455 = vunpack.c.l.b16 %v2273
    %v2456 = vunpack.c.h.b16 %v2273
    %v2457 = vunpack.c.l.b16 %v2274
    %v2458 = vunpack.c.l.b16 %v2275
    %v2459 = vunpack.c.h.b16 %v2275
    %v2460 = vunpack.c.l.b16 %v2276
    %v2461 = vunpack.c.l.b16 %v2277
    %v2462 = vunpack.c.h.b16 %v2277
    %v2463 = vunpack.c.l.b16 %v2278
    %v2464 = vunpack.c.l.b16 %v2279
    %v2465 = vunpack.c.h.b16 %v2279
    %v2466 = vunpack.c.l.b16 %v2280
    %v2467 = vunpack.c.l.b16 %v2281
    %v2468 = vunpack.c.h.b16 %v2281
    %v2469 = vunpack.c.l.b16 %v2282
    %v2470 = vunpack.c.l.b16 %v2283
    %v2471 = vunpack.c.h.b16 %v2283
    %v2472 = vunpack.c.l.b16 %v2284
    %v2473 = vunpack.c.l.b16 %v2285
    %v2474 = vunpack.c.h.b16 %v2285
    %v2475 = vunpack.c.l.b16 %v2286
    %v2476 = vunpack.c.l.b16 %v2287
    %v2477 = vunpack.c.h.b16 %v2287
    %v2478 = vunpack.c.l.b16 %v2288
    %v2479 = vunpack.c.l.b16 %v2289
    %v2480 = vunpack.c.h.b16 %v2289
    %v2481 = vunpack.c.l.b16 %v2290
    %v2482 = vunpack.c.l.b16 %v2291
    %v2483 = vunpack.c.h.b16 %v2291
    %v2484 = vunpack.c.l.b16 %v2292
    %v2485 = vunpack.c.l.b16 %v2293
    %v2486 = vunpack.c.h.b16 %v2293
    %v2487 = vunpack.c.l.b16 %v2294
    %v2488 = vunpack.c.l.b16 %v2295
    %v2489 = vunpack.c.h.b16 %v2295
    %v2490 = vunpack.c.l.b16 %v2296
    %v2491 = vunpack.c.l.b16 %v2297
    %v2492 = vunpack.c.h.b16 %v2297
    %v2493 = vunpack.c.l.b16 %v2298
    %v2494 = vunpack.c.l.b16 %v2299
    %v2495 = vunpack.c.h.b16 %v2299
    %v2496 = vunpack.c.l.b16 %v2300
    %v2497 = vunpack.c.l.b16 %v2301
    %v2498 = vunpack.c.h.b16 %v2301
    %v2499 = vunpack.c.l.b16 %v2302
    %v2500 = vunpack.c.l.b16 %v2303
    %v2501 = vunpack.c.h.b16 %v2303
    %v2502 = vunpack.c.l.b16 %v2304
    %v2503 = vunpack.c.l.b16 %v2305
    %v2504 = vunpack.c.h.b16 %v2305
    %v2505 = vunpack.c.l.b16 %v2306
    %v2506 = vunpack.c.l.b16 %v2307
    %v2507 = vunpack.c.h.b16 %v2307
    %v2508 = vunpack.c.l.b16 %v2308
    %v2509 = vpack.c.b16 %v2392, %v2389
    %v2510 = vpack.c.b16 %v2393, %v2390
    %v2511 = vpack.c.b16 %v2394, %v2391
    %v2512 = vpack.c.b16 %v2398, %v2395
    %v2513 = vpack.c.b16 %v2399, %v2396
    %v2514 = vpack.c.b16 %v2400, %v2397
    %v2515 = vpack.c.b16 %v2404, %v2401
    %v2516 = vpack.c.b16 %v2405, %v2402
    %v2517 = vpack.c.b16 %v2406, %v2403
    %v2518 = vpack.c.b16 %v2410, %v2407
    %v2519 = vpack.c.b16 %v2411, %v2408
    %v2520 = vpack.c.b16 %v2412, %v2409
    %v2521 = vpack.c.b16 %v2416, %v2413
    %v2522 = vpack.c.b16 %v2417, %v2414
    %v2523 = vpack.c.b16 %v2418, %v2415
    %v2524 = vpack.c.b16 %v2422, %v2419
    %v2525 = vpack.c.b16 %v2423, %v2420
    %v2526 = vpack.c.b16 %v2424, %v2421
    %v2527 = vpack.c.b16 %v2428, %v2425
    %v2528 = vpack.c.b16 %v2429, %v2426
    %v2529 = vpack.c.b16 %v2430, %v2427
    %v2530 = vpack.c.b16 %v2434, %v2431
    %v2531 = vpack.c.b16 %v2435, %v2432
    %v2532 = vpack.c.b16 %v2436, %v2433
    %v2533 = vpack.c.b16 %v2440, %v2437
    %v2534 = vpack.c.b16 %v2441, %v2438
    %v2535 = vpack.c.b16 %v2442, %v2439
    %v2536 = vpack.c.b16 %v2446, %v2443
    %v2537 = vpack.c.b16 %v2447, %v2444
    %v2538 = vpack.c.b16 %v2448, %v2445
    %v2539 = vpack.c.b16 %v2452, %v2449
    %v2540 = vpack.c.b16 %v2453, %v2450
    %v2541 = vpack.c.b16 %v2454, %v2451
    %v2542 = vpack.c.b16 %v2458, %v2455
    %v2543 = vpack.c.b16 %v2459, %v2456
    %v2544 = vpack.c.b16 %v2460, %v2457
    %v2545 = vpack.c.b16 %v2464, %v2461
    %v2546 = vpack.c.b16 %v2465, %v2462
    %v2547 = vpack.c.b16 %v2466, %v2463
    %v2548 = vpack.c.b16 %v2470, %v2467
    %v2549 = vpack.c.b16 %v2471, %v2468
    %v2550 = vpack.c.b16 %v2472, %v2469
    %v2551 = vpack.c.b16 %v2476, %v2473
    %v2552 = vpack.c.b16 %v2477, %v2474
    %v2553 = vpack.c.b16 %v2478, %v2475
    %v2554 = vpack.c.b16 %v2482, %v2479
    %v2555 = vpack.c.b16 %v2483, %v2480
    %v2556 = vpack.c.b16 %v2484, %v2481
    %v2557 = vpack.c.b16 %v2488, %v2485
    %v2558 = vpack.c.b16 %v2489, %v2486
    %v2559 = vpack.c.b16 %v2490, %v2487
    %v2560 = vpack.c.b16 %v2494, %v2491
    %v2561 = vpack.c.b16 %v2495, %v2492
    %v2562 = vpack.c.b16 %v2496, %v2493
    %v2563 = vpack.c.b16 %v2500, %v2497
    %v2564 = vpack.c.b16 %v2501, %v2498
    %v2565 = vpack.c.b16 %v2502, %v2499
    %v2566 = vpack.c.b16 %v2506, %v2503
    %v2567 = vpack.c.b16 %v2507, %v2504
    %v2568 = vpack.c.b16 %v2508, %v2505
    %2629 = vmatpush.bf16.msra.mxu0 %v2530
    %2630 = vmatpush.bf16.msra.mxu0 %v2527
    %2631 = vmatpush.bf16.msra.mxu0 %v2524
    %2632 = vmatpush.bf16.msra.mxu0 %v2521
    %2633 = vmatpush.bf16.msra.mxu0 %v2518
    %2634 = vmatpush.bf16.msra.mxu0 %v2515
    %2635 = vmatpush.bf16.msra.mxu0 %v2512
    %2636 = vmatpush.bf16.msra.mxu0 %v2509
    %2637 = vmatmul.bf16.gmra.mxu0 %v1650
    %v2638 = vpop.f32.mrf.mxu0
    %v2639 = vadd.f32 0.0, %v2638
    %v2640 = vpop.f32.mrf.mxu0
    %v2641 = vadd.f32 0.0, %v2640
    %2642 = vmatmul.bf16.gmra.mxu0 %v1653
    %v2643 = vpop.f32.mrf.mxu0
    %v2644 = vadd.f32 0.0, %v2643
    %v2645 = vpop.f32.mrf.mxu0
    %2646 = vdwg.mxu0
    %2647 = vmatpush.bf16.msra.mxu0 %v2554
    %2648 = vmatpush.bf16.msra.mxu0 %v2551
    %2649 = vmatpush.bf16.msra.mxu0 %v2548
    %2650 = vmatpush.bf16.msra.mxu0 %v2545
    %2651 = vmatpush.bf16.msra.mxu0 %v2542
    %2652 = vmatpush.bf16.msra.mxu0 %v2539
    %2653 = vmatpush.bf16.msra.mxu0 %v2536
    %2654 = vmatpush.bf16.msra.mxu0 %v2533
    %2655 = vmatmul.bf16.gmra.mxu0 %v1651
    %v2656 = vpop.f32.mrf.mxu0
    %v2657 = vadd.f32 %v2639, %v2656
    %v2658 = vpop.f32.mrf.mxu0
    %v2659 = vadd.f32 %v2641, %v2658
    %2660 = vmatmul.bf16.gmra.mxu0 %v1654
    %v2661 = vpop.f32.mrf.mxu0
    %v2662 = vadd.f32 %v2644, %v2661
    %v2663 = vpop.f32.mrf.mxu0
    %2664 = vdwg.mxu0
    %2665 = vmatpush.bf16.msra.mxu0 0
    %2666 = vmatpush.bf16.msra.mxu0 0
    %2667 = vmatpush.bf16.msra.mxu0 0
    %2668 = vmatpush.bf16.msra.mxu0 0
    %2669 = vmatpush.bf16.msra.mxu0 %v2566
    %2670 = vmatpush.bf16.msra.mxu0 %v2563
    %2671 = vmatpush.bf16.msra.mxu0 %v2560
    %2672 = vmatpush.bf16.msra.mxu0 %v2557
    %2673 = vmatmul.bf16.gmra.mxu0 %v2058
    %v2674 = vpop.f32.mrf.mxu0
    %v2675 = vadd.f32 %v2657, %v2674
    %v2676 = vpop.f32.mrf.mxu0
    %v2677 = vadd.f32 %v2659, %v2676
    %2678 = vmatmul.bf16.gmra.mxu0 %v2061
    %v2679 = vpop.f32.mrf.mxu0
    %v2680 = vadd.f32 %v2662, %v2679
    %v2681 = vpop.f32.mrf.mxu0
    %2682 = vdwg.mxu0
    %2683 = vmatpush.bf16.msra.mxu0 %v2531
    %2684 = vmatpush.bf16.msra.mxu0 %v2528
    %2685 = vmatpush.bf16.msra.mxu0 %v2525
    %2686 = vmatpush.bf16.msra.mxu0 %v2522
    %2687 = vmatpush.bf16.msra.mxu0 %v2519
    %2688 = vmatpush.bf16.msra.mxu0 %v2516
    %2689 = vmatpush.bf16.msra.mxu0 %v2513
    %2690 = vmatpush.bf16.msra.mxu0 %v2510
    %2691 = vmatmul.bf16.gmra.mxu0 %v1650
    %v2692 = vpop.f32.mrf.mxu0
    %v2693 = vadd.f32 0.0, %v2692
    %v2694 = vpop.f32.mrf.mxu0
    %v2695 = vadd.f32 0.0, %v2694
    %2696 = vmatmul.bf16.gmra.mxu0 %v1653
    %v2697 = vpop.f32.mrf.mxu0
    %v2698 = vadd.f32 0.0, %v2697
    %v2699 = vpop.f32.mrf.mxu0
    %2700 = vdwg.mxu0
    %2701 = vmatpush.bf16.msra.mxu0 %v2555
    %2702 = vmatpush.bf16.msra.mxu0 %v2552
    %2703 = vmatpush.bf16.msra.mxu0 %v2549
    %2704 = vmatpush.bf16.msra.mxu0 %v2546
    %2705 = vmatpush.bf16.msra.mxu0 %v2543
    %2706 = vmatpush.bf16.msra.mxu0 %v2540
    %2707 = vmatpush.bf16.msra.mxu0 %v2537
    %2708 = vmatpush.bf16.msra.mxu0 %v2534
    %2709 = vmatmul.bf16.gmra.mxu0 %v1651
    %v2710 = vpop.f32.mrf.mxu0
    %v2711 = vadd.f32 %v2693, %v2710
    %v2712 = vpop.f32.mrf.mxu0
    %v2713 = vadd.f32 %v2695, %v2712
    %2714 = vmatmul.bf16.gmra.mxu0 %v1654
    %v2715 = vpop.f32.mrf.mxu0
    %v2716 = vadd.f32 %v2698, %v2715
    %v2717 = vpop.f32.mrf.mxu0
    %2718 = vdwg.mxu0
    %2719 = vmatpush.bf16.msra.mxu0 0
    %2720 = vmatpush.bf16.msra.mxu0 0
    %2721 = vmatpush.bf16.msra.mxu0 0
    %2722 = vmatpush.bf16.msra.mxu0 0
    %2723 = vmatpush.bf16.msra.mxu0 %v2567
    %2724 = vmatpush.bf16.msra.mxu0 %v2564
    %2725 = vmatpush.bf16.msra.mxu0 %v2561
    %2726 = vmatpush.bf16.msra.mxu0 %v2558
    %2727 = vmatmul.bf16.gmra.mxu0 %v2058
    %v2728 = vpop.f32.mrf.mxu0
    %v2729 = vadd.f32 %v2711, %v2728
    %v2730 = vpop.f32.mrf.mxu0
    %v2731 = vadd.f32 %v2713, %v2730
    %2732 = vmatmul.bf16.gmra.mxu0 %v2061
    %v2733 = vpop.f32.mrf.mxu0
    %v2734 = vadd.f32 %v2716, %v2733
    %v2735 = vpop.f32.mrf.mxu0
    %2736 = vdwg.mxu0
    %2737 = vmatpush.bf16.msra.mxu0 %v2532
    %2738 = vmatpush.bf16.msra.mxu0 %v2529
    %2739 = vmatpush.bf16.msra.mxu0 %v2526
    %2740 = vmatpush.bf16.msra.mxu0 %v2523
    %2741 = vmatpush.bf16.msra.mxu0 %v2520
    %2742 = vmatpush.bf16.msra.mxu0 %v2517
    %2743 = vmatpush.bf16.msra.mxu0 %v2514
    %2744 = vmatpush.bf16.msra.mxu0 %v2511
    %2745 = vmatmul.bf16.gmra.mxu0 %v1650
    %v2746 = vpop.f32.mrf.mxu0
    %v2747 = vadd.f32 0.0, %v2746
    %v2748 = vpop.f32.mrf.mxu0
    %v2749 = vadd.f32 0.0, %v2748
    %2750 = vmatmul.bf16.gmra.mxu0 %v1653
    %v2751 = vpop.f32.mrf.mxu0
    %v2752 = vadd.f32 0.0, %v2751
    %v2753 = vpop.f32.mrf.mxu0
    %2754 = vdwg.mxu0
    %2755 = vmatpush.bf16.msra.mxu0 %v2556
    %2756 = vmatpush.bf16.msra.mxu0 %v2553
    %2757 = vmatpush.bf16.msra.mxu0 %v2550
    %2758 = vmatpush.bf16.msra.mxu0 %v2547
    %2759 = vmatpush.bf16.msra.mxu0 %v2544
    %2760 = vmatpush.bf16.msra.mxu0 %v2541
    %2761 = vmatpush.bf16.msra.mxu0 %v2538
    %2762 = vmatpush.bf16.msra.mxu0 %v2535
    %2763 = vmatmul.bf16.gmra.mxu0 %v1651
    %v2764 = vpop.f32.mrf.mxu0
    %v2765 = vadd.f32 %v2747, %v2764
    %v2766 = vpop.f32.mrf.mxu0
    %v2767 = vadd.f32 %v2749, %v2766
    %2768 = vmatmul.bf16.gmra.mxu0 %v1654
    %v2769 = vpop.f32.mrf.mxu0
    %v2770 = vadd.f32 %v2752, %v2769
    %v2771 = vpop.f32.mrf.mxu0
    %2772 = vdwg.mxu0
    %2773 = vmatpush.bf16.msra.mxu0 0
    %2774 = vmatpush.bf16.msra.mxu0 0
    %2775 = vmatpush.bf16.msra.mxu0 0
    %2776 = vmatpush.bf16.msra.mxu0 0
    %2777 = vmatpush.bf16.msra.mxu0 %v2568
    %2778 = vmatpush.bf16.msra.mxu0 %v2565
    %2779 = vmatpush.bf16.msra.mxu0 %v2562
    %2780 = vmatpush.bf16.msra.mxu0 %v2559
    %2781 = vmatmul.bf16.gmra.mxu0 %v2058
    %v2782 = vpop.f32.mrf.mxu0
    %v2783 = vadd.f32 %v2765, %v2782
    %v2784 = vpop.f32.mrf.mxu0
    %v2785 = vadd.f32 %v2767, %v2784
    %2786 = vmatmul.bf16.gmra.mxu0 %v2061
    %v2787 = vpop.f32.mrf.mxu0
    %v2788 = vadd.f32 %v2770, %v2787
    %v2789 = vpop.f32.mrf.mxu0
    %2790 = vdwg.mxu0
    %s2791 = scalar_lea.vmem [#allocation11], 24
    %v2792 = vld [vmem:[%s2791] sm:$0xff]
    %v2793 = vld [vmem:[%s2791 + $0x8] sm:$0xff]
    %v2794 = vld [vmem:[%s2791 + $0x10] sm:$0xf]
    %vm2795 = vcmask 162816
    %v2797 = vsel %vm2795, %v2792, 0
    %v2800 = vsel %vm2795, %v2793, 0
    %v2803 = vsel %vm2795, %v2794, 0
    %v2806 = vsel %vm555, %v2680, 0
    %v2809 = vsel %vm555, %v2734, 0
    %v2812 = vsel %vm555, %v2788, 0
    %2814 = vmatpush.msra.mxu0 0.0
    %2815 = vmatpush.msra.mxu0 0.0
    %2816 = vmatpush.msra.mxu0 0.0
    %2817 = vmatpush.msra.mxu0 0.0
    %2818 = vmatpush.msra.mxu0 0.0
    %2819 = vmatpush.msra.mxu0 0.0
    %2820 = vmatpush.msra.mxu0 0.0
    %2821 = vmatpush.msra.mxu0 0.0
    %2822 = vmatpush.msra.mxu0 0.0
    %2823 = vmatpush.msra.mxu0 0.0
    %2824 = vmatpush.msra.mxu0 0.0
    %2825 = vmatpush.msra.mxu0 0.0
    %2826 = vmatpush.msra.mxu0 0.0
    %2827 = vmatpush.msra.mxu0 %v2806
    %2828 = vmatpush.msra.mxu0 %v2677
    %2829 = vmatpush.msra.mxu0 %v2675
    %2830 = vmatmul.f32.gmra.mxu0 %v2797
    %v2831 = vpop.f32.mrf.mxu0
    %v2832 = vadd.f32 0.0, %v2831
    %2833 = vmatmul.f32.gmra.mxu0 %v2800
    %v2834 = vpop.f32.mrf.mxu0
    %v2835 = vadd.f32 0.0, %v2834
    %2836 = vmatmul.f32.gmra.mxu0 %v2803
    %v2837 = vpop.f32.mrf.mxu0
    %v2838 = vadd.f32 0.0, %v2837
    %2839 = vdwg.mxu0
    %2840 = vmatpush.msra.mxu0 0.0
    %2841 = vmatpush.msra.mxu0 0.0
    %2842 = vmatpush.msra.mxu0 0.0
    %2843 = vmatpush.msra.mxu0 0.0
    %2844 = vmatpush.msra.mxu0 0.0
    %2845 = vmatpush.msra.mxu0 0.0
    %2846 = vmatpush.msra.mxu0 0.0
    %2847 = vmatpush.msra.mxu0 0.0
    %2848 = vmatpush.msra.mxu0 0.0
    %2849 = vmatpush.msra.mxu0 0.0
    %2850 = vmatpush.msra.mxu0 0.0
    %2851 = vmatpush.msra.mxu0 0.0
    %2852 = vmatpush.msra.mxu0 0.0
    %2853 = vmatpush.msra.mxu0 %v2809
    %2854 = vmatpush.msra.mxu0 %v2731
    %2855 = vmatpush.msra.mxu0 %v2729
    %2856 = vmatmul.f32.gmra.mxu0 %v2797
    %v2857 = vpop.f32.mrf.mxu0
    %v2858 = vadd.f32 0.0, %v2857
    %2859 = vmatmul.f32.gmra.mxu0 %v2800
    %v2860 = vpop.f32.mrf.mxu0
    %v2861 = vadd.f32 0.0, %v2860
    %2862 = vmatmul.f32.gmra.mxu0 %v2803
    %v2863 = vpop.f32.mrf.mxu0
    %v2864 = vadd.f32 0.0, %v2863
    %2865 = vdwg.mxu0
    %2866 = vmatpush.msra.mxu0 0.0
    %2867 = vmatpush.msra.mxu0 0.0
    %2868 = vmatpush.msra.mxu0 0.0
    %2869 = vmatpush.msra.mxu0 0.0
    %2870 = vmatpush.msra.mxu0 0.0
    %2871 = vmatpush.msra.mxu0 0.0
    %2872 = vmatpush.msra.mxu0 0.0
    %2873 = vmatpush.msra.mxu0 0.0
    %2874 = vmatpush.msra.mxu0 0.0
    %2875 = vmatpush.msra.mxu0 0.0
    %2876 = vmatpush.msra.mxu0 0.0
    %2877 = vmatpush.msra.mxu0 0.0
    %2878 = vmatpush.msra.mxu0 0.0
    %2879 = vmatpush.msra.mxu0 %v2812
    %2880 = vmatpush.msra.mxu0 %v2785
    %2881 = vmatpush.msra.mxu0 %v2783
    %2882 = vmatmul.f32.gmra.mxu0 %v2797
    %v2883 = vpop.f32.mrf.mxu0
    %v2884 = vadd.f32 0.0, %v2883
    %2885 = vmatmul.f32.gmra.mxu0 %v2800
    %v2886 = vpop.f32.mrf.mxu0
    %v2887 = vadd.f32 0.0, %v2886
    %2888 = vmatmul.f32.gmra.mxu0 %v2803
    %v2889 = vpop.f32.mrf.mxu0
    %v2890 = vadd.f32 0.0, %v2889
    %2891 = vdwg.mxu0
    %v2893 = vsel %vm2795, %v2225, 0
    %v2896 = vsel %vm2795, %v2226, 0
    %v2899 = vsel %vm2795, %v2227, 0
    %v2902 = vsel %vm555, %v2114, 0
    %v2905 = vsel %vm555, %v2168, 0
    %v2908 = vsel %vm555, %v2222, 0
    %2910 = vmatpush.msra.mxu0 0.0
    %2911 = vmatpush.msra.mxu0 0.0
    %2912 = vmatpush.msra.mxu0 0.0
    %2913 = vmatpush.msra.mxu0 0.0
    %2914 = vmatpush.msra.mxu0 0.0
    %2915 = vmatpush.msra.mxu0 0.0
    %2916 = vmatpush.msra.mxu0 0.0
    %2917 = vmatpush.msra.mxu0 0.0
    %2918 = vmatpush.msra.mxu0 0.0
    %2919 = vmatpush.msra.mxu0 0.0
    %2920 = vmatpush.msra.mxu0 0.0
    %2921 = vmatpush.msra.mxu0 0.0
    %2922 = vmatpush.msra.mxu0 0.0
    %2923 = vmatpush.msra.mxu0 %v2902
    %2924 = vmatpush.msra.mxu0 %v2111
    %2925 = vmatpush.msra.mxu0 %v2109
    %2926 = vmatmul.f32.gmra.mxu0 %v2893
    %v2927 = vpop.f32.mrf.mxu0
    %v2928 = vadd.f32 %v2832, %v2927
    %2929 = vmatmul.f32.gmra.mxu0 %v2896
    %v2930 = vpop.f32.mrf.mxu0
    %v2931 = vadd.f32 %v2835, %v2930
    %2932 = vmatmul.f32.gmra.mxu0 %v2899
    %v2933 = vpop.f32.mrf.mxu0
    %v2934 = vadd.f32 %v2838, %v2933
    %2935 = vdwg.mxu0
    %2936 = vmatpush.msra.mxu0 0.0
    %2937 = vmatpush.msra.mxu0 0.0
    %2938 = vmatpush.msra.mxu0 0.0
    %2939 = vmatpush.msra.mxu0 0.0
    %2940 = vmatpush.msra.mxu0 0.0
    %2941 = vmatpush.msra.mxu0 0.0
    %2942 = vmatpush.msra.mxu0 0.0
    %2943 = vmatpush.msra.mxu0 0.0
    %2944 = vmatpush.msra.mxu0 0.0
    %2945 = vmatpush.msra.mxu0 0.0
    %2946 = vmatpush.msra.mxu0 0.0
    %2947 = vmatpush.msra.mxu0 0.0
    %2948 = vmatpush.msra.mxu0 0.0
    %2949 = vmatpush.msra.mxu0 %v2905
    %2950 = vmatpush.msra.mxu0 %v2165
    %2951 = vmatpush.msra.mxu0 %v2163
    %2952 = vmatmul.f32.gmra.mxu0 %v2893
    %v2953 = vpop.f32.mrf.mxu0
    %v2954 = vadd.f32 %v2858, %v2953
    %2955 = vmatmul.f32.gmra.mxu0 %v2896
    %v2956 = vpop.f32.mrf.mxu0
    %v2957 = vadd.f32 %v2861, %v2956
    %2958 = vmatmul.f32.gmra.mxu0 %v2899
    %v2959 = vpop.f32.mrf.mxu0
    %v2960 = vadd.f32 %v2864, %v2959
    %2961 = vdwg.mxu0
    %2962 = vmatpush.msra.mxu0 0.0
    %2963 = vmatpush.msra.mxu0 0.0
    %2964 = vmatpush.msra.mxu0 0.0
    %2965 = vmatpush.msra.mxu0 0.0
    %2966 = vmatpush.msra.mxu0 0.0
    %2967 = vmatpush.msra.mxu0 0.0
    %2968 = vmatpush.msra.mxu0 0.0
    %2969 = vmatpush.msra.mxu0 0.0
    %2970 = vmatpush.msra.mxu0 0.0
    %2971 = vmatpush.msra.mxu0 0.0
    %2972 = vmatpush.msra.mxu0 0.0
    %2973 = vmatpush.msra.mxu0 0.0
    %2974 = vmatpush.msra.mxu0 0.0
    %2975 = vmatpush.msra.mxu0 %v2908
    %2976 = vmatpush.msra.mxu0 %v2219
    %2977 = vmatpush.msra.mxu0 %v2217
    %2978 = vmatmul.f32.gmra.mxu0 %v2893
    %v2979 = vpop.f32.mrf.mxu0
    %v2980 = vadd.f32 %v2884, %v2979
    %2981 = vmatmul.f32.gmra.mxu0 %v2896
    %v2982 = vpop.f32.mrf.mxu0
    %v2983 = vadd.f32 %v2887, %v2982
    %2984 = vmatmul.f32.gmra.mxu0 %v2899
    %v2985 = vpop.f32.mrf.mxu0
    %v2986 = vadd.f32 %v2890, %v2985
    %2987 = vdwg.mxu0
    %s2988 = scalar_lea.vmem [#allocation13], 960
    %v2989 = vld [vmem:[%s2988] sm:$0xff]
    %v2990 = vld [vmem:[%s2988 + $0x8] sm:$0xf]
    %v2991 = vld [vmem:[%s2988 + $0xc] sm:$0xff]
    %v2992 = vld [vmem:[%s2988 + $0x14] sm:$0xf]
    %v2993 = vld [vmem:[%s2988 + $0x18] sm:$0xff]
    %v2994 = vld [vmem:[%s2988 + $0x20] sm:$0xf]
    %v2995 = vld [vmem:[%s2988 + $0x24] sm:$0xff]
    %v2996 = vld [vmem:[%s2988 + $0x2c] sm:$0xf]
    %v2997 = vld [vmem:[%s2988 + $0x30] sm:$0xff]
    %v2998 = vld [vmem:[%s2988 + $0x38] sm:$0xf]
    %v2999 = vld [vmem:[%s2988 + $0x3c] sm:$0xff]
    %v3000 = vld [vmem:[%s2988 + $0x44] sm:$0xf]
    %v3001 = vld [vmem:[%s2988 + $0x48] sm:$0xff]
    %v3002 = vld [vmem:[%s2988 + $0x50] sm:$0xf]
    %v3003 = vld [vmem:[%s2988 + $0x54] sm:$0xff]
    %v3004 = vld [vmem:[%s2988 + $0x5c] sm:$0xf]
    %v3005 = vld [vmem:[%s2988 + $0x60] sm:$0xff]
    %v3006 = vld [vmem:[%s2988 + $0x68] sm:$0xf]
    %v3007 = vld [vmem:[%s2988 + $0x6c] sm:$0xff]
    %v3008 = vld [vmem:[%s2988 + $0x74] sm:$0xf]
    %v3009 = vld [vmem:[%s2988 + $0x78] sm:$0xff]
    %v3010 = vld [vmem:[%s2988 + $0x80] sm:$0xf]
    %v3011 = vld [vmem:[%s2988 + $0x84] sm:$0xff]
    %v3012 = vld [vmem:[%s2988 + $0x8c] sm:$0xf]
    %v3013 = vld [vmem:[%s2988 + $0x90] sm:$0xff]
    %v3014 = vld [vmem:[%s2988 + $0x98] sm:$0xf]
    %v3015 = vld [vmem:[%s2988 + $0x9c] sm:$0xff]
    %v3016 = vld [vmem:[%s2988 + $0xa4] sm:$0xf]
    %v3017 = vld [vmem:[%s2988 + $0xa8] sm:$0xff]
    %v3018 = vld [vmem:[%s2988 + $0xb0] sm:$0xf]
    %v3019 = vld [vmem:[%s2988 + $0xb4] sm:$0xff]
    %v3020 = vld [vmem:[%s2988 + $0xbc] sm:$0xf]
    %v3021 = vld [vmem:[%s2988 + $0xc0] sm:$0xff]
    %v3022 = vld [vmem:[%s2988 + $0xc8] sm:$0xf]
    %v3023 = vld [vmem:[%s2988 + $0xcc] sm:$0xff]
    %v3024 = vld [vmem:[%s2988 + $0xd4] sm:$0xf]
    %v3025 = vld [vmem:[%s2988 + $0xd8] sm:$0xff]
    %v3026 = vld [vmem:[%s2988 + $0xe0] sm:$0xf]
    %v3027 = vld [vmem:[%s2988 + $0xe4] sm:$0xff]
    %v3028 = vld [vmem:[%s2988 + $0xec] sm:$0xf]
    %v3029 = vld [vmem:[%s2988 + $0xf0] sm:$0xff]
    %v3030 = vld [vmem:[%s2988 + $0xf8] sm:$0xf]
    %v3031 = vld [vmem:[%s2988 + $0xfc] sm:$0xff]
    %v3032 = vld [vmem:[%s2988 + $0x104] sm:$0xf]
    %v3033 = vld [vmem:[%s2988 + $0x108] sm:$0xff]
    %v3034 = vld [vmem:[%s2988 + $0x110] sm:$0xf]
    %v3035 = vld [vmem:[%s2988 + $0x114] sm:$0xff]
    %v3036 = vld [vmem:[%s2988 + $0x11c] sm:$0xf]
    %v3037 = vld [vmem:[%s2988 + $0x120] sm:$0xff]
    %v3038 = vld [vmem:[%s2988 + $0x128] sm:$0xf]
    %v3039 = vld [vmem:[%s2988 + $0x12c] sm:$0xff]
    %v3040 = vld [vmem:[%s2988 + $0x134] sm:$0xf]
    %v3041 = vld [vmem:[%s2988 + $0x138] sm:$0xff]
    %v3042 = vld [vmem:[%s2988 + $0x140] sm:$0xf]
    %v3043 = vld [vmem:[%s2988 + $0x144] sm:$0xff]
    %v3044 = vld [vmem:[%s2988 + $0x14c] sm:$0xf]
    %v3045 = vld [vmem:[%s2988 + $0x150] sm:$0xff]
    %v3046 = vld [vmem:[%s2988 + $0x158] sm:$0xf]
    %v3047 = vld [vmem:[%s2988 + $0x15c] sm:$0xff]
    %v3048 = vld [vmem:[%s2988 + $0x164] sm:$0xf]
    %v3049 = vld [vmem:[%s2988 + $0x168] sm:$0xff]
    %v3050 = vld [vmem:[%s2988 + $0x170] sm:$0xf]
    %v3051 = vld [vmem:[%s2988 + $0x174] sm:$0xff]
    %v3052 = vld [vmem:[%s2988 + $0x17c] sm:$0xf]
    %v3053 = vld [vmem:[%s2988 + $0x180] sm:$0xff]
    %v3054 = vld [vmem:[%s2988 + $0x188] sm:$0xf]
    %v3055 = vld [vmem:[%s2988 + $0x18c] sm:$0xff]
    %v3056 = vld [vmem:[%s2988 + $0x194] sm:$0xf]
    %v3057 = vld [vmem:[%s2988 + $0x198] sm:$0xff]
    %v3058 = vld [vmem:[%s2988 + $0x1a0] sm:$0xf]
    %v3059 = vld [vmem:[%s2988 + $0x1a4] sm:$0xff]
    %v3060 = vld [vmem:[%s2988 + $0x1ac] sm:$0xf]
    %v3061 = vld [vmem:[%s2988 + $0x1b0] sm:$0xff]
    %v3062 = vld [vmem:[%s2988 + $0x1b8] sm:$0xf]
    %v3063 = vld [vmem:[%s2988 + $0x1bc] sm:$0xff]
    %v3064 = vld [vmem:[%s2988 + $0x1c4] sm:$0xf]
    %v3065 = vld [vmem:[%s2988 + $0x1c8] sm:$0xff]
    %v3066 = vld [vmem:[%s2988 + $0x1d0] sm:$0xf]
    %v3067 = vld [vmem:[%s2988 + $0x1d4] sm:$0xff]
    %v3068 = vld [vmem:[%s2988 + $0x1dc] sm:$0xf]
    %v3149 = vunpack.c.l.b16 %v2989
    %v3150 = vunpack.c.h.b16 %v2989
    %v3151 = vunpack.c.l.b16 %v2990
    %v3152 = vunpack.c.l.b16 %v2991
    %v3153 = vunpack.c.h.b16 %v2991
    %v3154 = vunpack.c.l.b16 %v2992
    %v3155 = vunpack.c.l.b16 %v2993
    %v3156 = vunpack.c.h.b16 %v2993
    %v3157 = vunpack.c.l.b16 %v2994
    %v3158 = vunpack.c.l.b16 %v2995
    %v3159 = vunpack.c.h.b16 %v2995
    %v3160 = vunpack.c.l.b16 %v2996
    %v3161 = vunpack.c.l.b16 %v2997
    %v3162 = vunpack.c.h.b16 %v2997
    %v3163 = vunpack.c.l.b16 %v2998
    %v3164 = vunpack.c.l.b16 %v2999
    %v3165 = vunpack.c.h.b16 %v2999
    %v3166 = vunpack.c.l.b16 %v3000
    %v3167 = vunpack.c.l.b16 %v3001
    %v3168 = vunpack.c.h.b16 %v3001
    %v3169 = vunpack.c.l.b16 %v3002
    %v3170 = vunpack.c.l.b16 %v3003
    %v3171 = vunpack.c.h.b16 %v3003
    %v3172 = vunpack.c.l.b16 %v3004
    %v3173 = vunpack.c.l.b16 %v3005
    %v3174 = vunpack.c.h.b16 %v3005
    %v3175 = vunpack.c.l.b16 %v3006
    %v3176 = vunpack.c.l.b16 %v3007
    %v3177 = vunpack.c.h.b16 %v3007
    %v3178 = vunpack.c.l.b16 %v3008
    %v3179 = vunpack.c.l.b16 %v3009
    %v3180 = vunpack.c.h.b16 %v3009
    %v3181 = vunpack.c.l.b16 %v3010
    %v3182 = vunpack.c.l.b16 %v3011
    %v3183 = vunpack.c.h.b16 %v3011
    %v3184 = vunpack.c.l.b16 %v3012
    %v3185 = vunpack.c.l.b16 %v3013
    %v3186 = vunpack.c.h.b16 %v3013
    %v3187 = vunpack.c.l.b16 %v3014
    %v3188 = vunpack.c.l.b16 %v3015
    %v3189 = vunpack.c.h.b16 %v3015
    %v3190 = vunpack.c.l.b16 %v3016
    %v3191 = vunpack.c.l.b16 %v3017
    %v3192 = vunpack.c.h.b16 %v3017
    %v3193 = vunpack.c.l.b16 %v3018
    %v3194 = vunpack.c.l.b16 %v3019
    %v3195 = vunpack.c.h.b16 %v3019
    %v3196 = vunpack.c.l.b16 %v3020
    %v3197 = vunpack.c.l.b16 %v3021
    %v3198 = vunpack.c.h.b16 %v3021
    %v3199 = vunpack.c.l.b16 %v3022
    %v3200 = vunpack.c.l.b16 %v3023
    %v3201 = vunpack.c.h.b16 %v3023
    %v3202 = vunpack.c.l.b16 %v3024
    %v3203 = vunpack.c.l.b16 %v3025
    %v3204 = vunpack.c.h.b16 %v3025
    %v3205 = vunpack.c.l.b16 %v3026
    %v3206 = vunpack.c.l.b16 %v3027
    %v3207 = vunpack.c.h.b16 %v3027
    %v3208 = vunpack.c.l.b16 %v3028
    %v3209 = vunpack.c.l.b16 %v3029
    %v3210 = vunpack.c.h.b16 %v3029
    %v3211 = vunpack.c.l.b16 %v3030
    %v3212 = vunpack.c.l.b16 %v3031
    %v3213 = vunpack.c.h.b16 %v3031
    %v3214 = vunpack.c.l.b16 %v3032
    %v3215 = vunpack.c.l.b16 %v3033
    %v3216 = vunpack.c.h.b16 %v3033
    %v3217 = vunpack.c.l.b16 %v3034
    %v3218 = vunpack.c.l.b16 %v3035
    %v3219 = vunpack.c.h.b16 %v3035
    %v3220 = vunpack.c.l.b16 %v3036
    %v3221 = vunpack.c.l.b16 %v3037
    %v3222 = vunpack.c.h.b16 %v3037
    %v3223 = vunpack.c.l.b16 %v3038
    %v3224 = vunpack.c.l.b16 %v3039
    %v3225 = vunpack.c.h.b16 %v3039
    %v3226 = vunpack.c.l.b16 %v3040
    %v3227 = vunpack.c.l.b16 %v3041
    %v3228 = vunpack.c.h.b16 %v3041
    %v3229 = vunpack.c.l.b16 %v3042
    %v3230 = vunpack.c.l.b16 %v3043
    %v3231 = vunpack.c.h.b16 %v3043
    %v3232 = vunpack.c.l.b16 %v3044
    %v3233 = vunpack.c.l.b16 %v3045
    %v3234 = vunpack.c.h.b16 %v3045
    %v3235 = vunpack.c.l.b16 %v3046
    %v3236 = vunpack.c.l.b16 %v3047
    %v3237 = vunpack.c.h.b16 %v3047
    %v3238 = vunpack.c.l.b16 %v3048
    %v3239 = vunpack.c.l.b16 %v3049
    %v3240 = vunpack.c.h.b16 %v3049
    %v3241 = vunpack.c.l.b16 %v3050
    %v3242 = vunpack.c.l.b16 %v3051
    %v3243 = vunpack.c.h.b16 %v3051
    %v3244 = vunpack.c.l.b16 %v3052
    %v3245 = vunpack.c.l.b16 %v3053
    %v3246 = vunpack.c.h.b16 %v3053
    %v3247 = vunpack.c.l.b16 %v3054
    %v3248 = vunpack.c.l.b16 %v3055
    %v3249 = vunpack.c.h.b16 %v3055
    %v3250 = vunpack.c.l.b16 %v3056
    %v3251 = vunpack.c.l.b16 %v3057
    %v3252 = vunpack.c.h.b16 %v3057
    %v3253 = vunpack.c.l.b16 %v3058
    %v3254 = vunpack.c.l.b16 %v3059
    %v3255 = vunpack.c.h.b16 %v3059
    %v3256 = vunpack.c.l.b16 %v3060
    %v3257 = vunpack.c.l.b16 %v3061
    %v3258 = vunpack.c.h.b16 %v3061
    %v3259 = vunpack.c.l.b16 %v3062
    %v3260 = vunpack.c.l.b16 %v3063
    %v3261 = vunpack.c.h.b16 %v3063
    %v3262 = vunpack.c.l.b16 %v3064
    %v3263 = vunpack.c.l.b16 %v3065
    %v3264 = vunpack.c.h.b16 %v3065
    %v3265 = vunpack.c.l.b16 %v3066
    %v3266 = vunpack.c.l.b16 %v3067
    %v3267 = vunpack.c.h.b16 %v3067
    %v3268 = vunpack.c.l.b16 %v3068
    %v3269 = vpack.c.b16 %v3152, %v3149
    %v3270 = vpack.c.b16 %v3153, %v3150
    %v3271 = vpack.c.b16 %v3154, %v3151
    %v3272 = vpack.c.b16 %v3158, %v3155
    %v3273 = vpack.c.b16 %v3159, %v3156
    %v3274 = vpack.c.b16 %v3160, %v3157
    %v3275 = vpack.c.b16 %v3164, %v3161
    %v3276 = vpack.c.b16 %v3165, %v3162
    %v3277 = vpack.c.b16 %v3166, %v3163
    %v3278 = vpack.c.b16 %v3170, %v3167
    %v3279 = vpack.c.b16 %v3171, %v3168
    %v3280 = vpack.c.b16 %v3172, %v3169
    %v3281 = vpack.c.b16 %v3176, %v3173
    %v3282 = vpack.c.b16 %v3177, %v3174
    %v3283 = vpack.c.b16 %v3178, %v3175
    %v3284 = vpack.c.b16 %v3182, %v3179
    %v3285 = vpack.c.b16 %v3183, %v3180
    %v3286 = vpack.c.b16 %v3184, %v3181
    %v3287 = vpack.c.b16 %v3188, %v3185
    %v3288 = vpack.c.b16 %v3189, %v3186
    %v3289 = vpack.c.b16 %v3190, %v3187
    %v3290 = vpack.c.b16 %v3194, %v3191
    %v3291 = vpack.c.b16 %v3195, %v3192
    %v3292 = vpack.c.b16 %v3196, %v3193
    %v3293 = vpack.c.b16 %v3200, %v3197
    %v3294 = vpack.c.b16 %v3201, %v3198
    %v3295 = vpack.c.b16 %v3202, %v3199
    %v3296 = vpack.c.b16 %v3206, %v3203
    %v3297 = vpack.c.b16 %v3207, %v3204
    %v3298 = vpack.c.b16 %v3208, %v3205
    %v3299 = vpack.c.b16 %v3212, %v3209
    %v3300 = vpack.c.b16 %v3213, %v3210
    %v3301 = vpack.c.b16 %v3214, %v3211
    %v3302 = vpack.c.b16 %v3218, %v3215
    %v3303 = vpack.c.b16 %v3219, %v3216
    %v3304 = vpack.c.b16 %v3220, %v3217
    %v3305 = vpack.c.b16 %v3224, %v3221
    %v3306 = vpack.c.b16 %v3225, %v3222
    %v3307 = vpack.c.b16 %v3226, %v3223
    %v3308 = vpack.c.b16 %v3230, %v3227
    %v3309 = vpack.c.b16 %v3231, %v3228
    %v3310 = vpack.c.b16 %v3232, %v3229
    %v3311 = vpack.c.b16 %v3236, %v3233
    %v3312 = vpack.c.b16 %v3237, %v3234
    %v3313 = vpack.c.b16 %v3238, %v3235
    %v3314 = vpack.c.b16 %v3242, %v3239
    %v3315 = vpack.c.b16 %v3243, %v3240
    %v3316 = vpack.c.b16 %v3244, %v3241
    %v3317 = vpack.c.b16 %v3248, %v3245
    %v3318 = vpack.c.b16 %v3249, %v3246
    %v3319 = vpack.c.b16 %v3250, %v3247
    %v3320 = vpack.c.b16 %v3254, %v3251
    %v3321 = vpack.c.b16 %v3255, %v3252
    %v3322 = vpack.c.b16 %v3256, %v3253
    %v3323 = vpack.c.b16 %v3260, %v3257
    %v3324 = vpack.c.b16 %v3261, %v3258
    %v3325 = vpack.c.b16 %v3262, %v3259
    %v3326 = vpack.c.b16 %v3266, %v3263
    %v3327 = vpack.c.b16 %v3267, %v3264
    %v3328 = vpack.c.b16 %v3268, %v3265
    %3389 = vmatpush.bf16.msra.mxu0 %v3290
    %3390 = vmatpush.bf16.msra.mxu0 %v3287
    %3391 = vmatpush.bf16.msra.mxu0 %v3284
    %3392 = vmatpush.bf16.msra.mxu0 %v3281
    %3393 = vmatpush.bf16.msra.mxu0 %v3278
    %3394 = vmatpush.bf16.msra.mxu0 %v3275
    %3395 = vmatpush.bf16.msra.mxu0 %v3272
    %3396 = vmatpush.bf16.msra.mxu0 %v3269
    %3397 = vmatmul.bf16.gmra.mxu0 %v1650
    %v3398 = vpop.f32.mrf.mxu0
    %v3399 = vadd.f32 0.0, %v3398
    %v3400 = vpop.f32.mrf.mxu0
    %v3401 = vadd.f32 0.0, %v3400
    %3402 = vmatmul.bf16.gmra.mxu0 %v1653
    %v3403 = vpop.f32.mrf.mxu0
    %v3404 = vadd.f32 0.0, %v3403
    %v3405 = vpop.f32.mrf.mxu0
    %3406 = vdwg.mxu0
    %3407 = vmatpush.bf16.msra.mxu0 %v3314
    %3408 = vmatpush.bf16.msra.mxu0 %v3311
    %3409 = vmatpush.bf16.msra.mxu0 %v3308
    %3410 = vmatpush.bf16.msra.mxu0 %v3305
    %3411 = vmatpush.bf16.msra.mxu0 %v3302
    %3412 = vmatpush.bf16.msra.mxu0 %v3299
    %3413 = vmatpush.bf16.msra.mxu0 %v3296
    %3414 = vmatpush.bf16.msra.mxu0 %v3293
    %3415 = vmatmul.bf16.gmra.mxu0 %v1651
    %v3416 = vpop.f32.mrf.mxu0
    %v3417 = vadd.f32 %v3399, %v3416
    %v3418 = vpop.f32.mrf.mxu0
    %v3419 = vadd.f32 %v3401, %v3418
    %3420 = vmatmul.bf16.gmra.mxu0 %v1654
    %v3421 = vpop.f32.mrf.mxu0
    %v3422 = vadd.f32 %v3404, %v3421
    %v3423 = vpop.f32.mrf.mxu0
    %3424 = vdwg.mxu0
    %3425 = vmatpush.bf16.msra.mxu0 0
    %3426 = vmatpush.bf16.msra.mxu0 0
    %3427 = vmatpush.bf16.msra.mxu0 0
    %3428 = vmatpush.bf16.msra.mxu0 0
    %3429 = vmatpush.bf16.msra.mxu0 %v3326
    %3430 = vmatpush.bf16.msra.mxu0 %v3323
    %3431 = vmatpush.bf16.msra.mxu0 %v3320
    %3432 = vmatpush.bf16.msra.mxu0 %v3317
    %3433 = vmatmul.bf16.gmra.mxu0 %v2058
    %v3434 = vpop.f32.mrf.mxu0
    %v3435 = vadd.f32 %v3417, %v3434
    %v3436 = vpop.f32.mrf.mxu0
    %v3437 = vadd.f32 %v3419, %v3436
    %3438 = vmatmul.bf16.gmra.mxu0 %v2061
    %v3439 = vpop.f32.mrf.mxu0
    %v3440 = vadd.f32 %v3422, %v3439
    %v3441 = vpop.f32.mrf.mxu0
    %3442 = vdwg.mxu0
    %3443 = vmatpush.bf16.msra.mxu0 %v3291
    %3444 = vmatpush.bf16.msra.mxu0 %v3288
    %3445 = vmatpush.bf16.msra.mxu0 %v3285
    %3446 = vmatpush.bf16.msra.mxu0 %v3282
    %3447 = vmatpush.bf16.msra.mxu0 %v3279
    %3448 = vmatpush.bf16.msra.mxu0 %v3276
    %3449 = vmatpush.bf16.msra.mxu0 %v3273
    %3450 = vmatpush.bf16.msra.mxu0 %v3270
    %3451 = vmatmul.bf16.gmra.mxu0 %v1650
    %v3452 = vpop.f32.mrf.mxu0
    %v3453 = vadd.f32 0.0, %v3452
    %v3454 = vpop.f32.mrf.mxu0
    %v3455 = vadd.f32 0.0, %v3454
    %3456 = vmatmul.bf16.gmra.mxu0 %v1653
    %v3457 = vpop.f32.mrf.mxu0
    %v3458 = vadd.f32 0.0, %v3457
    %v3459 = vpop.f32.mrf.mxu0
    %3460 = vdwg.mxu0
    %3461 = vmatpush.bf16.msra.mxu0 %v3315
    %3462 = vmatpush.bf16.msra.mxu0 %v3312
    %3463 = vmatpush.bf16.msra.mxu0 %v3309
    %3464 = vmatpush.bf16.msra.mxu0 %v3306
    %3465 = vmatpush.bf16.msra.mxu0 %v3303
    %3466 = vmatpush.bf16.msra.mxu0 %v3300
    %3467 = vmatpush.bf16.msra.mxu0 %v3297
    %3468 = vmatpush.bf16.msra.mxu0 %v3294
    %3469 = vmatmul.bf16.gmra.mxu0 %v1651
    %v3470 = vpop.f32.mrf.mxu0
    %v3471 = vadd.f32 %v3453, %v3470
    %v3472 = vpop.f32.mrf.mxu0
    %v3473 = vadd.f32 %v3455, %v3472
    %3474 = vmatmul.bf16.gmra.mxu0 %v1654
    %v3475 = vpop.f32.mrf.mxu0
    %v3476 = vadd.f32 %v3458, %v3475
    %v3477 = vpop.f32.mrf.mxu0
    %3478 = vdwg.mxu0
    %3479 = vmatpush.bf16.msra.mxu0 0
    %3480 = vmatpush.bf16.msra.mxu0 0
    %3481 = vmatpush.bf16.msra.mxu0 0
    %3482 = vmatpush.bf16.msra.mxu0 0
    %3483 = vmatpush.bf16.msra.mxu0 %v3327
    %3484 = vmatpush.bf16.msra.mxu0 %v3324
    %3485 = vmatpush.bf16.msra.mxu0 %v3321
    %3486 = vmatpush.bf16.msra.mxu0 %v3318
    %3487 = vmatmul.bf16.gmra.mxu0 %v2058
    %v3488 = vpop.f32.mrf.mxu0
    %v3489 = vadd.f32 %v3471, %v3488
    %v3490 = vpop.f32.mrf.mxu0
    %v3491 = vadd.f32 %v3473, %v3490
    %3492 = vmatmul.bf16.gmra.mxu0 %v2061
    %v3493 = vpop.f32.mrf.mxu0
    %v3494 = vadd.f32 %v3476, %v3493
    %v3495 = vpop.f32.mrf.mxu0
    %3496 = vdwg.mxu0
    %3497 = vmatpush.bf16.msra.mxu0 %v3292
    %3498 = vmatpush.bf16.msra.mxu0 %v3289
    %3499 = vmatpush.bf16.msra.mxu0 %v3286
    %3500 = vmatpush.bf16.msra.mxu0 %v3283
    %3501 = vmatpush.bf16.msra.mxu0 %v3280
    %3502 = vmatpush.bf16.msra.mxu0 %v3277
    %3503 = vmatpush.bf16.msra.mxu0 %v3274
    %3504 = vmatpush.bf16.msra.mxu0 %v3271
    %3505 = vmatmul.bf16.gmra.mxu0 %v1650
    %v3506 = vpop.f32.mrf.mxu0
    %v3507 = vadd.f32 0.0, %v3506
    %v3508 = vpop.f32.mrf.mxu0
    %v3509 = vadd.f32 0.0, %v3508
    %3510 = vmatmul.bf16.gmra.mxu0 %v1653
    %v3511 = vpop.f32.mrf.mxu0
    %v3512 = vadd.f32 0.0, %v3511
    %v3513 = vpop.f32.mrf.mxu0
    %3514 = vdwg.mxu0
    %3515 = vmatpush.bf16.msra.mxu0 %v3316
    %3516 = vmatpush.bf16.msra.mxu0 %v3313
    %3517 = vmatpush.bf16.msra.mxu0 %v3310
    %3518 = vmatpush.bf16.msra.mxu0 %v3307
    %3519 = vmatpush.bf16.msra.mxu0 %v3304
    %3520 = vmatpush.bf16.msra.mxu0 %v3301
    %3521 = vmatpush.bf16.msra.mxu0 %v3298
    %3522 = vmatpush.bf16.msra.mxu0 %v3295
    %3523 = vmatmul.bf16.gmra.mxu0 %v1651
    %v3524 = vpop.f32.mrf.mxu0
    %v3525 = vadd.f32 %v3507, %v3524
    %v3526 = vpop.f32.mrf.mxu0
    %v3527 = vadd.f32 %v3509, %v3526
    %3528 = vmatmul.bf16.gmra.mxu0 %v1654
    %v3529 = vpop.f32.mrf.mxu0
    %v3530 = vadd.f32 %v3512, %v3529
    %v3531 = vpop.f32.mrf.mxu0
    %3532 = vdwg.mxu0
    %3533 = vmatpush.bf16.msra.mxu0 0
    %3534 = vmatpush.bf16.msra.mxu0 0
    %3535 = vmatpush.bf16.msra.mxu0 0
    %3536 = vmatpush.bf16.msra.mxu0 0
    %3537 = vmatpush.bf16.msra.mxu0 %v3328
    %3538 = vmatpush.bf16.msra.mxu0 %v3325
    %3539 = vmatpush.bf16.msra.mxu0 %v3322
    %3540 = vmatpush.bf16.msra.mxu0 %v3319
    %3541 = vmatmul.bf16.gmra.mxu0 %v2058
    %v3542 = vpop.f32.mrf.mxu0
    %v3543 = vadd.f32 %v3525, %v3542
    %v3544 = vpop.f32.mrf.mxu0
    %v3545 = vadd.f32 %v3527, %v3544
    %3546 = vmatmul.bf16.gmra.mxu0 %v2061
    %v3547 = vpop.f32.mrf.mxu0
    %v3548 = vadd.f32 %v3530, %v3547
    %v3549 = vpop.f32.mrf.mxu0
    %3550 = vdwg.mxu0
    %s3551 = scalar_lea.vmem [#allocation11], 48
    %v3552 = vld [vmem:[%s3551] sm:$0xff]
    %v3553 = vld [vmem:[%s3551 + $0x8] sm:$0xff]
    %v3554 = vld [vmem:[%s3551 + $0x10] sm:$0xf]
    %v3556 = vsel %vm2795, %v3552, 0
    %v3559 = vsel %vm2795, %v3553, 0
    %v3562 = vsel %vm2795, %v3554, 0
    %v3565 = vsel %vm555, %v3440, 0
    %v3568 = vsel %vm555, %v3494, 0
    %v3571 = vsel %vm555, %v3548, 0
    %3573 = vmatpush.msra.mxu0 0.0
    %3574 = vmatpush.msra.mxu0 0.0
    %3575 = vmatpush.msra.mxu0 0.0
    %3576 = vmatpush.msra.mxu0 0.0
    %3577 = vmatpush.msra.mxu0 0.0
    %3578 = vmatpush.msra.mxu0 0.0
    %3579 = vmatpush.msra.mxu0 0.0
    %3580 = vmatpush.msra.mxu0 0.0
    %3581 = vmatpush.msra.mxu0 0.0
    %3582 = vmatpush.msra.mxu0 0.0
    %3583 = vmatpush.msra.mxu0 0.0
    %3584 = vmatpush.msra.mxu0 0.0
    %3585 = vmatpush.msra.mxu0 0.0
    %3586 = vmatpush.msra.mxu0 %v3565
    %3587 = vmatpush.msra.mxu0 %v3437
    %3588 = vmatpush.msra.mxu0 %v3435
    %3589 = vmatmul.f32.gmra.mxu0 %v3556
    %v3590 = vpop.f32.mrf.mxu0
    %v3591 = vadd.f32 0.0, %v3590
    %3592 = vmatmul.f32.gmra.mxu0 %v3559
    %v3593 = vpop.f32.mrf.mxu0
    %v3594 = vadd.f32 0.0, %v3593
    %3595 = vmatmul.f32.gmra.mxu0 %v3562
    %v3596 = vpop.f32.mrf.mxu0
    %v3597 = vadd.f32 0.0, %v3596
    %3598 = vdwg.mxu0
    %3599 = vmatpush.msra.mxu0 0.0
    %3600 = vmatpush.msra.mxu0 0.0
    %3601 = vmatpush.msra.mxu0 0.0
    %3602 = vmatpush.msra.mxu0 0.0
    %3603 = vmatpush.msra.mxu0 0.0
    %3604 = vmatpush.msra.mxu0 0.0
    %3605 = vmatpush.msra.mxu0 0.0
    %3606 = vmatpush.msra.mxu0 0.0
    %3607 = vmatpush.msra.mxu0 0.0
    %3608 = vmatpush.msra.mxu0 0.0
    %3609 = vmatpush.msra.mxu0 0.0
    %3610 = vmatpush.msra.mxu0 0.0
    %3611 = vmatpush.msra.mxu0 0.0
    %3612 = vmatpush.msra.mxu0 %v3568
    %3613 = vmatpush.msra.mxu0 %v3491
    %3614 = vmatpush.msra.mxu0 %v3489
    %3615 = vmatmul.f32.gmra.mxu0 %v3556
    %v3616 = vpop.f32.mrf.mxu0
    %v3617 = vadd.f32 0.0, %v3616
    %3618 = vmatmul.f32.gmra.mxu0 %v3559
    %v3619 = vpop.f32.mrf.mxu0
    %v3620 = vadd.f32 0.0, %v3619
    %3621 = vmatmul.f32.gmra.mxu0 %v3562
    %v3622 = vpop.f32.mrf.mxu0
    %v3623 = vadd.f32 0.0, %v3622
    %3624 = vdwg.mxu0
    %3625 = vmatpush.msra.mxu0 0.0
    %3626 = vmatpush.msra.mxu0 0.0
    %3627 = vmatpush.msra.mxu0 0.0
    %3628 = vmatpush.msra.mxu0 0.0
    %3629 = vmatpush.msra.mxu0 0.0
    %3630 = vmatpush.msra.mxu0 0.0
    %3631 = vmatpush.msra.mxu0 0.0
    %3632 = vmatpush.msra.mxu0 0.0
    %3633 = vmatpush.msra.mxu0 0.0
    %3634 = vmatpush.msra.mxu0 0.0
    %3635 = vmatpush.msra.mxu0 0.0
    %3636 = vmatpush.msra.mxu0 0.0
    %3637 = vmatpush.msra.mxu0 0.0
    %3638 = vmatpush.msra.mxu0 %v3571
    %3639 = vmatpush.msra.mxu0 %v3545
    %3640 = vmatpush.msra.mxu0 %v3543
    %3641 = vmatmul.f32.gmra.mxu0 %v3556
    %v3642 = vpop.f32.mrf.mxu0
    %v3643 = vadd.f32 0.0, %v3642
    %3644 = vmatmul.f32.gmra.mxu0 %v3559
    %v3645 = vpop.f32.mrf.mxu0
    %v3646 = vadd.f32 0.0, %v3645
    %3647 = vmatmul.f32.gmra.mxu0 %v3562
    %v3648 = vpop.f32.mrf.mxu0
    %v3649 = vadd.f32 0.0, %v3648
    %3650 = vdwg.mxu0
    %v3651 = vadd.f32 %v2928, %v3591
    %v3652 = vadd.f32 %v2954, %v3617
    %v3653 = vadd.f32 %v2980, %v3643
    %v3654 = vadd.f32 %v2931, %v3594
    %v3655 = vadd.f32 %v2957, %v3620
    %v3656 = vadd.f32 %v2983, %v3646
    %v3657 = vadd.f32 %v2934, %v3597
    %v3658 = vadd.f32 %v2960, %v3623
    %v3659 = vadd.f32 %v2986, %v3649
    %v3660 = vmax.f32 %v3651, 0.0
    %v3661 = vmax.f32 %v3652, 0.0
    %v3662 = vmax.f32 %v3653, 0.0
    %v3663 = vmax.f32 %v3654, 0.0
    %v3664 = vmax.f32 %v3655, 0.0
    %v3665 = vmax.f32 %v3656, 0.0
    %v3666 = vmax.f32 %v3657, 0.0
    %v3667 = vmax.f32 %v3658, 0.0
    %v3668 = vmax.f32 %v3659, 0.0
    %v3669 = vld [vmem:[#allocation14] sm:$0xff]
    %v3670 = vld [vmem:[#allocation14 + $0x8] sm:$0xff]
    %v3671 = vld [vmem:[#allocation14 + $0x10] sm:$0xff]
    %v3672 = vld [vmem:[#allocation14 + $0x18] sm:$0xff]
    %v3673 = vld [vmem:[#allocation14 + $0x20] sm:$0xff]
    %v3674 = vld [vmem:[#allocation14 + $0x28] sm:$0xff]
    %v3675 = vld [vmem:[#allocation14 + $0x30] sm:$0xff]
    %v3676 = vld [vmem:[#allocation14 + $0x38] sm:$0xff]
    %v3677 = vld [vmem:[#allocation14 + $0x40] sm:$0xff]
    %v3678 = vld [vmem:[#allocation14 + $0x48] sm:$0xff]
    %v3679 = vld [vmem:[#allocation14 + $0x50] sm:$0xff]
    %v3680 = vld [vmem:[#allocation14 + $0x58] sm:$0xff]
    %v3681 = vld [vmem:[#allocation14 + $0x60] sm:$0xff]
    %v3682 = vld [vmem:[#allocation14 + $0x68] sm:$0xff]
    %v3683 = vld [vmem:[#allocation14 + $0x70] sm:$0xff]
    %v3684 = vld [vmem:[#allocation14 + $0x78] sm:$0xff]
    %v3685 = vld [vmem:[#allocation14 + $0x80] sm:$0xff]
    %v3686 = vld [vmem:[#allocation14 + $0x88] sm:$0xff]
    %v3687 = vld [vmem:[#allocation14 + $0x90] sm:$0xff]
    %v3688 = vld [vmem:[#allocation14 + $0x98] sm:$0xff]
    %v3689 = vld [vmem:[#allocation14 + $0xa0] sm:$0xff]
    %v3690 = vld [vmem:[#allocation14 + $0xa8] sm:$0xff]
    %v3691 = vld [vmem:[#allocation14 + $0xb0] sm:$0xff]
    %v3692 = vld [vmem:[#allocation14 + $0xb8] sm:$0xff]
    %v3693 = vld [vmem:[#allocation14 + $0xc0] sm:$0xff]
    %v3694 = vld [vmem:[#allocation14 + $0xc8] sm:$0xff]
    %v3695 = vld [vmem:[#allocation14 + $0xd0] sm:$0xff]
    %v3696 = vld [vmem:[#allocation14 + $0xd8] sm:$0xff]
    %v3697 = vld [vmem:[#allocation14 + $0xe0] sm:$0xff]
    %v3698 = vld [vmem:[#allocation14 + $0xe8] sm:$0xff]
    %v3699 = vld [vmem:[#allocation14 + $0xf0] sm:$0xff]
    %v3700 = vld [vmem:[#allocation14 + $0xf8] sm:$0xff]
    %v3701 = vld [vmem:[#allocation14 + $0x100] sm:$0xff]
    %v3702 = vld [vmem:[#allocation14 + $0x108] sm:$0xff]
    %v3703 = vld [vmem:[#allocation14 + $0x110] sm:$0xff]
    %v3704 = vld [vmem:[#allocation14 + $0x118] sm:$0xff]
    %v3705 = vld [vmem:[#allocation14 + $0x120] sm:$0xff]
    %v3706 = vld [vmem:[#allocation14 + $0x128] sm:$0xff]
    %v3707 = vld [vmem:[#allocation14 + $0x130] sm:$0xff]
    %v3708 = vld [vmem:[#allocation14 + $0x138] sm:$0xff]
    %v3709 = vpack.c.bf16 %v3663, %v3660
    %v3710 = vpack.c.bf16 %v3664, %v3661
    %v3711 = vpack.c.bf16 %v3665, %v3662
    %v3712 = vpack.c.bf16 %v3666, %v3666
    %v3713 = vpack.c.bf16 %v3667, %v3667
    %v3714 = vpack.c.bf16 %v3668, %v3668
    %v3755 = vunpack.c.l.b16 %v3669
    %v3756 = vunpack.c.h.b16 %v3669
    %v3757 = vunpack.c.l.b16 %v3670
    %v3758 = vunpack.c.h.b16 %v3670
    %v3759 = vunpack.c.l.b16 %v3671
    %v3760 = vunpack.c.h.b16 %v3671
    %v3761 = vunpack.c.l.b16 %v3672
    %v3762 = vunpack.c.h.b16 %v3672
    %v3763 = vunpack.c.l.b16 %v3673
    %v3764 = vunpack.c.h.b16 %v3673
    %v3765 = vunpack.c.l.b16 %v3674
    %v3766 = vunpack.c.h.b16 %v3674
    %v3767 = vunpack.c.l.b16 %v3675
    %v3768 = vunpack.c.h.b16 %v3675
    %v3769 = vunpack.c.l.b16 %v3676
    %v3770 = vunpack.c.h.b16 %v3676
    %v3771 = vunpack.c.l.b16 %v3677
    %v3772 = vunpack.c.h.b16 %v3677
    %v3773 = vunpack.c.l.b16 %v3678
    %v3774 = vunpack.c.h.b16 %v3678
    %v3775 = vunpack.c.l.b16 %v3679
    %v3776 = vunpack.c.h.b16 %v3679
    %v3777 = vunpack.c.l.b16 %v3680
    %v3778 = vunpack.c.h.b16 %v3680
    %v3779 = vunpack.c.l.b16 %v3681
    %v3780 = vunpack.c.h.b16 %v3681
    %v3781 = vunpack.c.l.b16 %v3682
    %v3782 = vunpack.c.h.b16 %v3682
    %v3783 = vunpack.c.l.b16 %v3683
    %v3784 = vunpack.c.h.b16 %v3683
    %v3785 = vunpack.c.l.b16 %v3684
    %v3786 = vunpack.c.h.b16 %v3684
    %v3787 = vunpack.c.l.b16 %v3685
    %v3788 = vunpack.c.h.b16 %v3685
    %v3789 = vunpack.c.l.b16 %v3686
    %v3790 = vunpack.c.h.b16 %v3686
    %v3791 = vunpack.c.l.b16 %v3687
    %v3792 = vunpack.c.h.b16 %v3687
    %v3793 = vunpack.c.l.b16 %v3688
    %v3794 = vunpack.c.h.b16 %v3688
    %v3795 = vunpack.c.l.b16 %v3689
    %v3796 = vunpack.c.h.b16 %v3689
    %v3797 = vunpack.c.l.b16 %v3690
    %v3798 = vunpack.c.h.b16 %v3690
    %v3799 = vunpack.c.l.b16 %v3691
    %v3800 = vunpack.c.h.b16 %v3691
    %v3801 = vunpack.c.l.b16 %v3692
    %v3802 = vunpack.c.h.b16 %v3692
    %v3803 = vunpack.c.l.b16 %v3693
    %v3804 = vunpack.c.h.b16 %v3693
    %v3805 = vunpack.c.l.b16 %v3694
    %v3806 = vunpack.c.h.b16 %v3694
    %v3807 = vunpack.c.l.b16 %v3695
    %v3808 = vunpack.c.h.b16 %v3695
    %v3809 = vunpack.c.l.b16 %v3696
    %v3810 = vunpack.c.h.b16 %v3696
    %v3811 = vunpack.c.l.b16 %v3697
    %v3812 = vunpack.c.h.b16 %v3697
    %v3813 = vunpack.c.l.b16 %v3698
    %v3814 = vunpack.c.h.b16 %v3698
    %v3815 = vunpack.c.l.b16 %v3699
    %v3816 = vunpack.c.h.b16 %v3699
    %v3817 = vunpack.c.l.b16 %v3700
    %v3818 = vunpack.c.h.b16 %v3700
    %v3819 = vunpack.c.l.b16 %v3701
    %v3820 = vunpack.c.h.b16 %v3701
    %v3821 = vunpack.c.l.b16 %v3702
    %v3822 = vunpack.c.h.b16 %v3702
    %v3823 = vunpack.c.l.b16 %v3703
    %v3824 = vunpack.c.h.b16 %v3703
    %v3825 = vunpack.c.l.b16 %v3704
    %v3826 = vunpack.c.h.b16 %v3704
    %v3827 = vunpack.c.l.b16 %v3705
    %v3828 = vunpack.c.h.b16 %v3705
    %v3829 = vunpack.c.l.b16 %v3706
    %v3830 = vunpack.c.h.b16 %v3706
    %v3831 = vunpack.c.l.b16 %v3707
    %v3832 = vunpack.c.h.b16 %v3707
    %v3833 = vunpack.c.l.b16 %v3708
    %v3834 = vunpack.c.h.b16 %v3708
    %v3835 = vpack.c.b16 %v3757, %v3755
    %v3836 = vpack.c.b16 %v3758, %v3756
    %v3837 = vpack.c.b16 %v3761, %v3759
    %v3838 = vpack.c.b16 %v3762, %v3760
    %v3839 = vpack.c.b16 %v3765, %v3763
    %v3840 = vpack.c.b16 %v3766, %v3764
    %v3841 = vpack.c.b16 %v3769, %v3767
    %v3842 = vpack.c.b16 %v3770, %v3768
    %v3843 = vpack.c.b16 %v3773, %v3771
    %v3844 = vpack.c.b16 %v3774, %v3772
    %v3845 = vpack.c.b16 %v3777, %v3775
    %v3846 = vpack.c.b16 %v3778, %v3776
    %v3847 = vpack.c.b16 %v3781, %v3779
    %v3848 = vpack.c.b16 %v3782, %v3780
    %v3849 = vpack.c.b16 %v3785, %v3783
    %v3850 = vpack.c.b16 %v3786, %v3784
    %v3851 = vpack.c.b16 %v3789, %v3787
    %v3852 = vpack.c.b16 %v3790, %v3788
    %v3853 = vpack.c.b16 %v3793, %v3791
    %v3854 = vpack.c.b16 %v3794, %v3792
    %v3855 = vpack.c.b16 %v3797, %v3795
    %v3856 = vpack.c.b16 %v3798, %v3796
    %v3857 = vpack.c.b16 %v3801, %v3799
    %v3858 = vpack.c.b16 %v3802, %v3800
    %v3859 = vpack.c.b16 %v3805, %v3803
    %v3860 = vpack.c.b16 %v3806, %v3804
    %v3861 = vpack.c.b16 %v3809, %v3807
    %v3862 = vpack.c.b16 %v3810, %v3808
    %v3863 = vpack.c.b16 %v3813, %v3811
    %v3864 = vpack.c.b16 %v3814, %v3812
    %v3865 = vpack.c.b16 %v3817, %v3815
    %v3866 = vpack.c.b16 %v3818, %v3816
    %v3867 = vpack.c.b16 %v3821, %v3819
    %v3868 = vpack.c.b16 %v3822, %v3820
    %v3869 = vpack.c.b16 %v3825, %v3823
    %v3870 = vpack.c.b16 %v3826, %v3824
    %v3871 = vpack.c.b16 %v3829, %v3827
    %v3872 = vpack.c.b16 %v3830, %v3828
    %v3873 = vpack.c.b16 %v3833, %v3831
    %v3874 = vpack.c.b16 %v3834, %v3832
    %v3916 = vsel %vm2056, %v3711, 0
    %v3919 = vsel %vm2056, %v3714, 0
    %3921 = vmatpush.bf16.msra.mxu0 %v3849
    %3922 = vmatpush.bf16.msra.mxu0 %v3847
    %3923 = vmatpush.bf16.msra.mxu0 %v3845
    %3924 = vmatpush.bf16.msra.mxu0 %v3843
    %3925 = vmatpush.bf16.msra.mxu0 %v3841
    %3926 = vmatpush.bf16.msra.mxu0 %v3839
    %3927 = vmatpush.bf16.msra.mxu0 %v3837
    %3928 = vmatpush.bf16.msra.mxu0 %v3835
    %3929 = vmatmul.bf16.gmra.mxu0 %v3709
    %v3930 = vpop.f32.mrf.mxu0
    %v3931 = vadd.f32 %v1316, %v3930
    %v3932 = vpop.f32.mrf.mxu0
    %v3933 = vadd.f32 %v1318, %v3932
    %3934 = vmatmul.bf16.gmra.mxu0 %v3712
    %v3935 = vpop.f32.mrf.mxu0
    %v3936 = vadd.f32 %v1320, %v3935
    %v3937 = vpop.f32.mrf.mxu0
    %3938 = vdwg.mxu0
    %3939 = vmatpush.bf16.msra.mxu0 %v3865
    %3940 = vmatpush.bf16.msra.mxu0 %v3863
    %3941 = vmatpush.bf16.msra.mxu0 %v3861
    %3942 = vmatpush.bf16.msra.mxu0 %v3859
    %3943 = vmatpush.bf16.msra.mxu0 %v3857
    %3944 = vmatpush.bf16.msra.mxu0 %v3855
    %3945 = vmatpush.bf16.msra.mxu0 %v3853
    %3946 = vmatpush.bf16.msra.mxu0 %v3851
    %3947 = vmatmul.bf16.gmra.mxu0 %v3710
    %v3948 = vpop.f32.mrf.mxu0
    %v3949 = vadd.f32 %v3931, %v3948
    %v3950 = vpop.f32.mrf.mxu0
    %v3951 = vadd.f32 %v3933, %v3950
    %3952 = vmatmul.bf16.gmra.mxu0 %v3713
    %v3953 = vpop.f32.mrf.mxu0
    %v3954 = vadd.f32 %v3936, %v3953
    %v3955 = vpop.f32.mrf.mxu0
    %3956 = vdwg.mxu0
    %3957 = vmatpush.bf16.msra.mxu0 0
    %3958 = vmatpush.bf16.msra.mxu0 0
    %3959 = vmatpush.bf16.msra.mxu0 0
    %3960 = vmatpush.bf16.msra.mxu0 0
    %3961 = vmatpush.bf16.msra.mxu0 %v3873
    %3962 = vmatpush.bf16.msra.mxu0 %v3871
    %3963 = vmatpush.bf16.msra.mxu0 %v3869
    %3964 = vmatpush.bf16.msra.mxu0 %v3867
    %3965 = vmatmul.bf16.gmra.mxu0 %v3916
    %v3966 = vpop.f32.mrf.mxu0
    %v3967 = vadd.f32 %v3949, %v3966
    %v3968 = vpop.f32.mrf.mxu0
    %v3969 = vadd.f32 %v3951, %v3968
    %3970 = vmatmul.bf16.gmra.mxu0 %v3919
    %v3971 = vpop.f32.mrf.mxu0
    %v3972 = vadd.f32 %v3954, %v3971
    %v3973 = vpop.f32.mrf.mxu0
    %3974 = vdwg.mxu0
    %3975 = vmatpush.bf16.msra.mxu0 %v3850
    %3976 = vmatpush.bf16.msra.mxu0 %v3848
    %3977 = vmatpush.bf16.msra.mxu0 %v3846
    %3978 = vmatpush.bf16.msra.mxu0 %v3844
    %3979 = vmatpush.bf16.msra.mxu0 %v3842
    %3980 = vmatpush.bf16.msra.mxu0 %v3840
    %3981 = vmatpush.bf16.msra.mxu0 %v3838
    %3982 = vmatpush.bf16.msra.mxu0 %v3836
    %3983 = vmatmul.bf16.gmra.mxu0 %v3709
    %v3984 = vpop.f32.mrf.mxu0
    %v3985 = vadd.f32 %v1317, %v3984
    %v3986 = vpop.f32.mrf.mxu0
    %v3987 = vadd.f32 %v1319, %v3986
    %3988 = vmatmul.bf16.gmra.mxu0 %v3712
    %v3989 = vpop.f32.mrf.mxu0
    %v3990 = vadd.f32 %v1321, %v3989
    %v3991 = vpop.f32.mrf.mxu0
    %3992 = vdwg.mxu0
    %3993 = vmatpush.bf16.msra.mxu0 %v3866
    %3994 = vmatpush.bf16.msra.mxu0 %v3864
    %3995 = vmatpush.bf16.msra.mxu0 %v3862
    %3996 = vmatpush.bf16.msra.mxu0 %v3860
    %3997 = vmatpush.bf16.msra.mxu0 %v3858
    %3998 = vmatpush.bf16.msra.mxu0 %v3856
    %3999 = vmatpush.bf16.msra.mxu0 %v3854
    %4000 = vmatpush.bf16.msra.mxu0 %v3852
    %4001 = vmatmul.bf16.gmra.mxu0 %v3710
    %v4002 = vpop.f32.mrf.mxu0
    %v4003 = vadd.f32 %v3985, %v4002
    %v4004 = vpop.f32.mrf.mxu0
    %v4005 = vadd.f32 %v3987, %v4004
    %4006 = vmatmul.bf16.gmra.mxu0 %v3713
    %v4007 = vpop.f32.mrf.mxu0
    %v4008 = vadd.f32 %v3990, %v4007
    %v4009 = vpop.f32.mrf.mxu0
    %4010 = vdwg.mxu0
    %4011 = vmatpush.bf16.msra.mxu0 0
    %4012 = vmatpush.bf16.msra.mxu0 0
    %4013 = vmatpush.bf16.msra.mxu0 0
    %4014 = vmatpush.bf16.msra.mxu0 0
    %4015 = vmatpush.bf16.msra.mxu0 %v3874
    %4016 = vmatpush.bf16.msra.mxu0 %v3872
    %4017 = vmatpush.bf16.msra.mxu0 %v3870
    %4018 = vmatpush.bf16.msra.mxu0 %v3868
    %4019 = vmatmul.bf16.gmra.mxu0 %v3916
    %v4020 = vpop.f32.mrf.mxu0
    %v4021 = vadd.f32 %v4003, %v4020
    %v4022 = vpop.f32.mrf.mxu0
    %v4023 = vadd.f32 %v4005, %v4022
    %4024 = vmatmul.bf16.gmra.mxu0 %v3919
    %v4025 = vpop.f32.mrf.mxu0
    %v4026 = vadd.f32 %v4008, %v4025
    %v4027 = vpop.f32.mrf.mxu0
    %4028 = vdwg.mxu0
    %v4029 = vmax.f32 %v3967, 0.0
    %v4030 = vmax.f32 %v4021, 0.0
    %v4031 = vmax.f32 %v3969, 0.0
    %v4032 = vmax.f32 %v4023, 0.0
    %v4033 = vmax.f32 %v3972, 0.0
    %v4034 = vmax.f32 %v4026, 0.0
    %v4035 = vld [vmem:[#allocation16] sm:$0xff]
    %v4036 = vld [vmem:[#allocation16 + $0x8] sm:$0xf]
    %v4037 = vld [vmem:[#allocation16 + $0xc] sm:$0xff]
    %v4038 = vld [vmem:[#allocation16 + $0x14] sm:$0xf]
    %v4039 = vld [vmem:[#allocation16 + $0x18] sm:$0xff]
    %v4040 = vld [vmem:[#allocation16 + $0x20] sm:$0xf]
    %v4041 = vld [vmem:[#allocation16 + $0x24] sm:$0xff]
    %v4042 = vld [vmem:[#allocation16 + $0x2c] sm:$0xf]
    %v4043 = vld [vmem:[#allocation16 + $0x30] sm:$0xff]
    %v4044 = vld [vmem:[#allocation16 + $0x38] sm:$0xf]
    %v4045 = vld [vmem:[#allocation16 + $0x3c] sm:$0xff]
    %v4046 = vld [vmem:[#allocation16 + $0x44] sm:$0xf]
    %v4047 = vld [vmem:[#allocation16 + $0x48] sm:$0xff]
    %v4048 = vld [vmem:[#allocation16 + $0x50] sm:$0xf]
    %v4049 = vld [vmem:[#allocation16 + $0x54] sm:$0xff]
    %v4050 = vld [vmem:[#allocation16 + $0x5c] sm:$0xf]
    %v4051 = vld [vmem:[#allocation16 + $0x60] sm:$0xff]
    %v4052 = vld [vmem:[#allocation16 + $0x68] sm:$0xf]
    %v4053 = vld [vmem:[#allocation16 + $0x6c] sm:$0xff]
    %v4054 = vld [vmem:[#allocation16 + $0x74] sm:$0xf]
    %v4055 = vld [vmem:[#allocation16 + $0x78] sm:$0xff]
    %v4056 = vld [vmem:[#allocation16 + $0x80] sm:$0xf]
    %v4057 = vld [vmem:[#allocation16 + $0x84] sm:$0xff]
    %v4058 = vld [vmem:[#allocation16 + $0x8c] sm:$0xf]
    %v4059 = vld [vmem:[#allocation16 + $0x90] sm:$0xff]
    %v4060 = vld [vmem:[#allocation16 + $0x98] sm:$0xf]
    %v4061 = vld [vmem:[#allocation16 + $0x9c] sm:$0xff]
    %v4062 = vld [vmem:[#allocation16 + $0xa4] sm:$0xf]
    %v4063 = vld [vmem:[#allocation16 + $0xa8] sm:$0xff]
    %v4064 = vld [vmem:[#allocation16 + $0xb0] sm:$0xf]
    %v4065 = vld [vmem:[#allocation16 + $0xb4] sm:$0xff]
    %v4066 = vld [vmem:[#allocation16 + $0xbc] sm:$0xf]
    %v4067 = vld [vmem:[#allocation16 + $0xc0] sm:$0xff]
    %v4068 = vld [vmem:[#allocation16 + $0xc8] sm:$0xf]
    %v4069 = vld [vmem:[#allocation16 + $0xcc] sm:$0xff]
    %v4070 = vld [vmem:[#allocation16 + $0xd4] sm:$0xf]
    %v4071 = vld [vmem:[#allocation16 + $0xd8] sm:$0xff]
    %v4072 = vld [vmem:[#allocation16 + $0xe0] sm:$0xf]
    %v4073 = vld [vmem:[#allocation16 + $0xe4] sm:$0xff]
    %v4074 = vld [vmem:[#allocation16 + $0xec] sm:$0xf]
    %v4075 = vpack.c.bf16 %v4031, %v4029
    %v4076 = vpack.c.bf16 %v4032, %v4030
    %v4077 = vpack.c.bf16 %v4033, %v4033
    %v4078 = vpack.c.bf16 %v4034, %v4034
    %v4119 = vunpack.c.l.b16 %v4035
    %v4120 = vunpack.c.h.b16 %v4035
    %v4121 = vunpack.c.l.b16 %v4036
    %v4122 = vunpack.c.l.b16 %v4037
    %v4123 = vunpack.c.h.b16 %v4037
    %v4124 = vunpack.c.l.b16 %v4038
    %v4125 = vunpack.c.l.b16 %v4039
    %v4126 = vunpack.c.h.b16 %v4039
    %v4127 = vunpack.c.l.b16 %v4040
    %v4128 = vunpack.c.l.b16 %v4041
    %v4129 = vunpack.c.h.b16 %v4041
    %v4130 = vunpack.c.l.b16 %v4042
    %v4131 = vunpack.c.l.b16 %v4043
    %v4132 = vunpack.c.h.b16 %v4043
    %v4133 = vunpack.c.l.b16 %v4044
    %v4134 = vunpack.c.l.b16 %v4045
    %v4135 = vunpack.c.h.b16 %v4045
    %v4136 = vunpack.c.l.b16 %v4046
    %v4137 = vunpack.c.l.b16 %v4047
    %v4138 = vunpack.c.h.b16 %v4047
    %v4139 = vunpack.c.l.b16 %v4048
    %v4140 = vunpack.c.l.b16 %v4049
    %v4141 = vunpack.c.h.b16 %v4049
    %v4142 = vunpack.c.l.b16 %v4050
    %v4143 = vunpack.c.l.b16 %v4051
    %v4144 = vunpack.c.h.b16 %v4051
    %v4145 = vunpack.c.l.b16 %v4052
    %v4146 = vunpack.c.l.b16 %v4053
    %v4147 = vunpack.c.h.b16 %v4053
    %v4148 = vunpack.c.l.b16 %v4054
    %v4149 = vunpack.c.l.b16 %v4055
    %v4150 = vunpack.c.h.b16 %v4055
    %v4151 = vunpack.c.l.b16 %v4056
    %v4152 = vunpack.c.l.b16 %v4057
    %v4153 = vunpack.c.h.b16 %v4057
    %v4154 = vunpack.c.l.b16 %v4058
    %v4155 = vunpack.c.l.b16 %v4059
    %v4156 = vunpack.c.h.b16 %v4059
    %v4157 = vunpack.c.l.b16 %v4060
    %v4158 = vunpack.c.l.b16 %v4061
    %v4159 = vunpack.c.h.b16 %v4061
    %v4160 = vunpack.c.l.b16 %v4062
    %v4161 = vunpack.c.l.b16 %v4063
    %v4162 = vunpack.c.h.b16 %v4063
    %v4163 = vunpack.c.l.b16 %v4064
    %v4164 = vunpack.c.l.b16 %v4065
    %v4165 = vunpack.c.h.b16 %v4065
    %v4166 = vunpack.c.l.b16 %v4066
    %v4167 = vunpack.c.l.b16 %v4067
    %v4168 = vunpack.c.h.b16 %v4067
    %v4169 = vunpack.c.l.b16 %v4068
    %v4170 = vunpack.c.l.b16 %v4069
    %v4171 = vunpack.c.h.b16 %v4069
    %v4172 = vunpack.c.l.b16 %v4070
    %v4173 = vunpack.c.l.b16 %v4071
    %v4174 = vunpack.c.h.b16 %v4071
    %v4175 = vunpack.c.l.b16 %v4072
    %v4176 = vunpack.c.l.b16 %v4073
    %v4177 = vunpack.c.h.b16 %v4073
    %v4178 = vunpack.c.l.b16 %v4074
    %v4179 = vpack.c.b16 %v4122, %v4119
    %v4180 = vpack.c.b16 %v4123, %v4120
    %v4181 = vpack.c.b16 %v4124, %v4121
    %v4182 = vpack.c.b16 %v4128, %v4125
    %v4183 = vpack.c.b16 %v4129, %v4126
    %v4184 = vpack.c.b16 %v4130, %v4127
    %v4185 = vpack.c.b16 %v4134, %v4131
    %v4186 = vpack.c.b16 %v4135, %v4132
    %v4187 = vpack.c.b16 %v4136, %v4133
    %v4188 = vpack.c.b16 %v4140, %v4137
    %v4189 = vpack.c.b16 %v4141, %v4138
    %v4190 = vpack.c.b16 %v4142, %v4139
    %v4191 = vpack.c.b16 %v4146, %v4143
    %v4192 = vpack.c.b16 %v4147, %v4144
    %v4193 = vpack.c.b16 %v4148, %v4145
    %v4194 = vpack.c.b16 %v4152, %v4149
    %v4195 = vpack.c.b16 %v4153, %v4150
    %v4196 = vpack.c.b16 %v4154, %v4151
    %v4197 = vpack.c.b16 %v4158, %v4155
    %v4198 = vpack.c.b16 %v4159, %v4156
    %v4199 = vpack.c.b16 %v4160, %v4157
    %v4200 = vpack.c.b16 %v4164, %v4161
    %v4201 = vpack.c.b16 %v4165, %v4162
    %v4202 = vpack.c.b16 %v4166, %v4163
    %v4203 = vpack.c.b16 %v4170, %v4167
    %v4204 = vpack.c.b16 %v4171, %v4168
    %v4205 = vpack.c.b16 %v4172, %v4169
    %v4206 = vpack.c.b16 %v4176, %v4173
    %v4207 = vpack.c.b16 %v4177, %v4174
    %v4208 = vpack.c.b16 %v4178, %v4175
    %v4240 = vsel %vm1526, %v4076, 0
    %v4243 = vsel %vm1526, %v4078, 0
    %4245 = vmatpush.bf16.msra.mxu0 %v4200
    %4246 = vmatpush.bf16.msra.mxu0 %v4197
    %4247 = vmatpush.bf16.msra.mxu0 %v4194
    %4248 = vmatpush.bf16.msra.mxu0 %v4191
    %4249 = vmatpush.bf16.msra.mxu0 %v4188
    %4250 = vmatpush.bf16.msra.mxu0 %v4185
    %4251 = vmatpush.bf16.msra.mxu0 %v4182
    %4252 = vmatpush.bf16.msra.mxu0 %v4179
    %4253 = vmatmul.bf16.gmra.mxu0 %v4075
    %v4254 = vpop.f32.mrf.mxu0
    %v4255 = vadd.f32 0.0, %v4254
    %v4256 = vpop.f32.mrf.mxu0
    %v4257 = vadd.f32 0.0, %v4256
    %4258 = vmatmul.bf16.gmra.mxu0 %v4077
    %v4259 = vpop.f32.mrf.mxu0
    %v4260 = vadd.f32 0.0, %v4259
    %v4261 = vpop.f32.mrf.mxu0
    %4262 = vdwg.mxu0
    %4263 = vmatpush.bf16.msra.mxu0 0
    %4264 = vmatpush.bf16.msra.mxu0 0
    %4265 = vmatpush.bf16.msra.mxu0 0
    %4266 = vmatpush.bf16.msra.mxu0 0
    %4267 = vmatpush.bf16.msra.mxu0 0
    %4268 = vmatpush.bf16.msra.mxu0 0
    %4269 = vmatpush.bf16.msra.mxu0 %v4206
    %4270 = vmatpush.bf16.msra.mxu0 %v4203
    %4271 = vmatmul.bf16.gmra.mxu0 %v4240
    %v4272 = vpop.f32.mrf.mxu0
    %v4273 = vadd.f32 %v4255, %v4272
    %v4274 = vpop.f32.mrf.mxu0
    %v4275 = vadd.f32 %v4257, %v4274
    %4276 = vmatmul.bf16.gmra.mxu0 %v4243
    %v4277 = vpop.f32.mrf.mxu0
    %v4278 = vadd.f32 %v4260, %v4277
    %v4279 = vpop.f32.mrf.mxu0
    %4280 = vdwg.mxu0
    %4281 = vmatpush.bf16.msra.mxu0 %v4201
    %4282 = vmatpush.bf16.msra.mxu0 %v4198
    %4283 = vmatpush.bf16.msra.mxu0 %v4195
    %4284 = vmatpush.bf16.msra.mxu0 %v4192
    %4285 = vmatpush.bf16.msra.mxu0 %v4189
    %4286 = vmatpush.bf16.msra.mxu0 %v4186
    %4287 = vmatpush.bf16.msra.mxu0 %v4183
    %4288 = vmatpush.bf16.msra.mxu0 %v4180
    %4289 = vmatmul.bf16.gmra.mxu0 %v4075
    %v4290 = vpop.f32.mrf.mxu0
    %v4291 = vadd.f32 0.0, %v4290
    %v4292 = vpop.f32.mrf.mxu0
    %v4293 = vadd.f32 0.0, %v4292
    %4294 = vmatmul.bf16.gmra.mxu0 %v4077
    %v4295 = vpop.f32.mrf.mxu0
    %v4296 = vadd.f32 0.0, %v4295
    %v4297 = vpop.f32.mrf.mxu0
    %4298 = vdwg.mxu0
    %4299 = vmatpush.bf16.msra.mxu0 0
    %4300 = vmatpush.bf16.msra.mxu0 0
    %4301 = vmatpush.bf16.msra.mxu0 0
    %4302 = vmatpush.bf16.msra.mxu0 0
    %4303 = vmatpush.bf16.msra.mxu0 0
    %4304 = vmatpush.bf16.msra.mxu0 0
    %4305 = vmatpush.bf16.msra.mxu0 %v4207
    %4306 = vmatpush.bf16.msra.mxu0 %v4204
    %4307 = vmatmul.bf16.gmra.mxu0 %v4240
    %v4308 = vpop.f32.mrf.mxu0
    %v4309 = vadd.f32 %v4291, %v4308
    %v4310 = vpop.f32.mrf.mxu0
    %v4311 = vadd.f32 %v4293, %v4310
    %4312 = vmatmul.bf16.gmra.mxu0 %v4243
    %v4313 = vpop.f32.mrf.mxu0
    %v4314 = vadd.f32 %v4296, %v4313
    %v4315 = vpop.f32.mrf.mxu0
    %4316 = vdwg.mxu0
    %4317 = vmatpush.bf16.msra.mxu0 %v4202
    %4318 = vmatpush.bf16.msra.mxu0 %v4199
    %4319 = vmatpush.bf16.msra.mxu0 %v4196
    %4320 = vmatpush.bf16.msra.mxu0 %v4193
    %4321 = vmatpush.bf16.msra.mxu0 %v4190
    %4322 = vmatpush.bf16.msra.mxu0 %v4187
    %4323 = vmatpush.bf16.msra.mxu0 %v4184
    %4324 = vmatpush.bf16.msra.mxu0 %v4181
    %4325 = vmatmul.bf16.gmra.mxu0 %v4075
    %v4326 = vpop.f32.mrf.mxu0
    %v4327 = vadd.f32 0.0, %v4326
    %v4328 = vpop.f32.mrf.mxu0
    %v4329 = vadd.f32 0.0, %v4328
    %4330 = vmatmul.bf16.gmra.mxu0 %v4077
    %v4331 = vpop.f32.mrf.mxu0
    %v4332 = vadd.f32 0.0, %v4331
    %v4333 = vpop.f32.mrf.mxu0
    %4334 = vdwg.mxu0
    %4335 = vmatpush.bf16.msra.mxu0 0
    %4336 = vmatpush.bf16.msra.mxu0 0
    %4337 = vmatpush.bf16.msra.mxu0 0
    %4338 = vmatpush.bf16.msra.mxu0 0
    %4339 = vmatpush.bf16.msra.mxu0 0
    %4340 = vmatpush.bf16.msra.mxu0 0
    %4341 = vmatpush.bf16.msra.mxu0 %v4208
    %4342 = vmatpush.bf16.msra.mxu0 %v4205
    %4343 = vmatmul.bf16.gmra.mxu0 %v4240
    %v4344 = vpop.f32.mrf.mxu0
    %v4345 = vadd.f32 %v4327, %v4344
    %v4346 = vpop.f32.mrf.mxu0
    %v4347 = vadd.f32 %v4329, %v4346
    %4348 = vmatmul.bf16.gmra.mxu0 %v4243
    %v4349 = vpop.f32.mrf.mxu0
    %v4350 = vadd.f32 %v4332, %v4349
    %v4351 = vpop.f32.mrf.mxu0
    %4352 = vdwg.mxu0
    %v4353 = vmax.f32 %v4273, 0.0
    %v4354 = vmax.f32 %v4309, 0.0
    %v4355 = vmax.f32 %v4345, 0.0
    %v4356 = vmax.f32 %v4275, 0.0
    %v4357 = vmax.f32 %v4311, 0.0
    %v4358 = vmax.f32 %v4347, 0.0
    %v4359 = vmax.f32 %v4278, 0.0
    %v4360 = vmax.f32 %v4314, 0.0
    %v4361 = vmax.f32 %v4350, 0.0
    %v4362 = vpack.c.bf16 %v4356, %v4353
    %v4363 = vpack.c.bf16 %v4357, %v4354
    %v4364 = vpack.c.bf16 %v4358, %v4355
    %v4365 = vpack.c.bf16 %v4359, %v4359
    %v4366 = vpack.c.bf16 %v4360, %v4360
    %v4367 = vpack.c.bf16 %v4361, %v4361
    %v4368 = vld [vmem:[#allocation19] sm:$0xff]
    %v4369 = vld [vmem:[#allocation19 + $0x8] sm:$0xff]
    %v4370 = vld [vmem:[#allocation19 + $0x10] sm:$0xff]
    %v4371 = vld [vmem:[#allocation19 + $0x18] sm:$0xff]
    %v4372 = vld [vmem:[#allocation19 + $0x20] sm:$0xff]
    %v4373 = vld [vmem:[#allocation19 + $0x28] sm:$0xff]
    %v4374 = vld [vmem:[#allocation19 + $0x30] sm:$0xff]
    %v4375 = vld [vmem:[#allocation19 + $0x38] sm:$0xff]
    %v4376 = vld [vmem:[#allocation19 + $0x40] sm:$0xff]
    %v4377 = vld [vmem:[#allocation19 + $0x48] sm:$0xff]
    %v4378 = vld [vmem:[#allocation19 + $0x50] sm:$0xff]
    %v4379 = vld [vmem:[#allocation19 + $0x58] sm:$0xff]
    %v4380 = vld [vmem:[#allocation19 + $0x60] sm:$0xff]
    %v4381 = vld [vmem:[#allocation19 + $0x68] sm:$0xff]
    %v4382 = vld [vmem:[#allocation19 + $0x70] sm:$0xff]
    %v4383 = vld [vmem:[#allocation19 + $0x78] sm:$0xff]
    %v4384 = vld [vmem:[#allocation19 + $0x80] sm:$0xff]
    %v4385 = vld [vmem:[#allocation19 + $0x88] sm:$0xff]
    %v4386 = vld [vmem:[#allocation19 + $0x90] sm:$0xff]
    %v4387 = vld [vmem:[#allocation19 + $0x98] sm:$0xff]
    %v4388 = vld [vmem:[#allocation19 + $0xa0] sm:$0xff]
    %v4389 = vld [vmem:[#allocation19 + $0xa8] sm:$0xff]
    %v4390 = vld [vmem:[#allocation19 + $0xb0] sm:$0xff]
    %v4391 = vld [vmem:[#allocation19 + $0xb8] sm:$0xff]
    %v4392 = vld [vmem:[#allocation19 + $0xc0] sm:$0xff]
    %v4393 = vld [vmem:[#allocation19 + $0xc8] sm:$0xff]
    %v4394 = vld [vmem:[#allocation19 + $0xd0] sm:$0xff]
    %v4395 = vld [vmem:[#allocation19 + $0xd8] sm:$0xff]
    %v4396 = vld [vmem:[#allocation19 + $0xe0] sm:$0xff]
    %v4397 = vld [vmem:[#allocation19 + $0xe8] sm:$0xff]
    %v4398 = vld [vmem:[#allocation19 + $0xf0] sm:$0xff]
    %v4399 = vld [vmem:[#allocation19 + $0xf8] sm:$0xff]
    %v4400 = vld [vmem:[#allocation19 + $0x100] sm:$0xff]
    %v4401 = vld [vmem:[#allocation19 + $0x108] sm:$0xff]
    %v4402 = vld [vmem:[#allocation19 + $0x110] sm:$0xff]
    %v4403 = vld [vmem:[#allocation19 + $0x118] sm:$0xff]
    %v4404 = vld [vmem:[#allocation19 + $0x120] sm:$0xff]
    %v4405 = vld [vmem:[#allocation19 + $0x128] sm:$0xff]
    %v4406 = vld [vmem:[#allocation19 + $0x130] sm:$0xff]
    %v4407 = vld [vmem:[#allocation19 + $0x138] sm:$0xff]
    %v4448 = vunpack.c.l.b16 %v4368
    %v4449 = vunpack.c.h.b16 %v4368
    %v4450 = vunpack.c.l.b16 %v4369
    %v4451 = vunpack.c.h.b16 %v4369
    %v4452 = vunpack.c.l.b16 %v4370
    %v4453 = vunpack.c.h.b16 %v4370
    %v4454 = vunpack.c.l.b16 %v4371
    %v4455 = vunpack.c.h.b16 %v4371
    %v4456 = vunpack.c.l.b16 %v4372
    %v4457 = vunpack.c.h.b16 %v4372
    %v4458 = vunpack.c.l.b16 %v4373
    %v4459 = vunpack.c.h.b16 %v4373
    %v4460 = vunpack.c.l.b16 %v4374
    %v4461 = vunpack.c.h.b16 %v4374
    %v4462 = vunpack.c.l.b16 %v4375
    %v4463 = vunpack.c.h.b16 %v4375
    %v4464 = vunpack.c.l.b16 %v4376
    %v4465 = vunpack.c.h.b16 %v4376
    %v4466 = vunpack.c.l.b16 %v4377
    %v4467 = vunpack.c.h.b16 %v4377
    %v4468 = vunpack.c.l.b16 %v4378
    %v4469 = vunpack.c.h.b16 %v4378
    %v4470 = vunpack.c.l.b16 %v4379
    %v4471 = vunpack.c.h.b16 %v4379
    %v4472 = vunpack.c.l.b16 %v4380
    %v4473 = vunpack.c.h.b16 %v4380
    %v4474 = vunpack.c.l.b16 %v4381
    %v4475 = vunpack.c.h.b16 %v4381
    %v4476 = vunpack.c.l.b16 %v4382
    %v4477 = vunpack.c.h.b16 %v4382
    %v4478 = vunpack.c.l.b16 %v4383
    %v4479 = vunpack.c.h.b16 %v4383
    %v4480 = vunpack.c.l.b16 %v4384
    %v4481 = vunpack.c.h.b16 %v4384
    %v4482 = vunpack.c.l.b16 %v4385
    %v4483 = vunpack.c.h.b16 %v4385
    %v4484 = vunpack.c.l.b16 %v4386
    %v4485 = vunpack.c.h.b16 %v4386
    %v4486 = vunpack.c.l.b16 %v4387
    %v4487 = vunpack.c.h.b16 %v4387
    %v4488 = vunpack.c.l.b16 %v4388
    %v4489 = vunpack.c.h.b16 %v4388
    %v4490 = vunpack.c.l.b16 %v4389
    %v4491 = vunpack.c.h.b16 %v4389
    %v4492 = vunpack.c.l.b16 %v4390
    %v4493 = vunpack.c.h.b16 %v4390
    %v4494 = vunpack.c.l.b16 %v4391
    %v4495 = vunpack.c.h.b16 %v4391
    %v4496 = vunpack.c.l.b16 %v4392
    %v4497 = vunpack.c.h.b16 %v4392
    %v4498 = vunpack.c.l.b16 %v4393
    %v4499 = vunpack.c.h.b16 %v4393
    %v4500 = vunpack.c.l.b16 %v4394
    %v4501 = vunpack.c.h.b16 %v4394
    %v4502 = vunpack.c.l.b16 %v4395
    %v4503 = vunpack.c.h.b16 %v4395
    %v4504 = vunpack.c.l.b16 %v4396
    %v4505 = vunpack.c.h.b16 %v4396
    %v4506 = vunpack.c.l.b16 %v4397
    %v4507 = vunpack.c.h.b16 %v4397
    %v4508 = vunpack.c.l.b16 %v4398
    %v4509 = vunpack.c.h.b16 %v4398
    %v4510 = vunpack.c.l.b16 %v4399
    %v4511 = vunpack.c.h.b16 %v4399
    %v4512 = vunpack.c.l.b16 %v4400
    %v4513 = vunpack.c.h.b16 %v4400
    %v4514 = vunpack.c.l.b16 %v4401
    %v4515 = vunpack.c.h.b16 %v4401
    %v4516 = vunpack.c.l.b16 %v4402
    %v4517 = vunpack.c.h.b16 %v4402
    %v4518 = vunpack.c.l.b16 %v4403
    %v4519 = vunpack.c.h.b16 %v4403
    %v4520 = vunpack.c.l.b16 %v4404
    %v4521 = vunpack.c.h.b16 %v4404
    %v4522 = vunpack.c.l.b16 %v4405
    %v4523 = vunpack.c.h.b16 %v4405
    %v4524 = vunpack.c.l.b16 %v4406
    %v4525 = vunpack.c.h.b16 %v4406
    %v4526 = vunpack.c.l.b16 %v4407
    %v4527 = vunpack.c.h.b16 %v4407
    %v4528 = vpack.c.b16 %v4450, %v4448
    %v4529 = vpack.c.b16 %v4451, %v4449
    %v4530 = vpack.c.b16 %v4454, %v4452
    %v4531 = vpack.c.b16 %v4455, %v4453
    %v4532 = vpack.c.b16 %v4458, %v4456
    %v4533 = vpack.c.b16 %v4459, %v4457
    %v4534 = vpack.c.b16 %v4462, %v4460
    %v4535 = vpack.c.b16 %v4463, %v4461
    %v4536 = vpack.c.b16 %v4466, %v4464
    %v4537 = vpack.c.b16 %v4467, %v4465
    %v4538 = vpack.c.b16 %v4470, %v4468
    %v4539 = vpack.c.b16 %v4471, %v4469
    %v4540 = vpack.c.b16 %v4474, %v4472
    %v4541 = vpack.c.b16 %v4475, %v4473
    %v4542 = vpack.c.b16 %v4478, %v4476
    %v4543 = vpack.c.b16 %v4479, %v4477
    %v4544 = vpack.c.b16 %v4482, %v4480
    %v4545 = vpack.c.b16 %v4483, %v4481
    %v4546 = vpack.c.b16 %v4486, %v4484
    %v4547 = vpack.c.b16 %v4487, %v4485
    %v4548 = vpack.c.b16 %v4490, %v4488
    %v4549 = vpack.c.b16 %v4491, %v4489
    %v4550 = vpack.c.b16 %v4494, %v4492
    %v4551 = vpack.c.b16 %v4495, %v4493
    %v4552 = vpack.c.b16 %v4498, %v4496
    %v4553 = vpack.c.b16 %v4499, %v4497
    %v4554 = vpack.c.b16 %v4502, %v4500
    %v4555 = vpack.c.b16 %v4503, %v4501
    %v4556 = vpack.c.b16 %v4506, %v4504
    %v4557 = vpack.c.b16 %v4507, %v4505
    %v4558 = vpack.c.b16 %v4510, %v4508
    %v4559 = vpack.c.b16 %v4511, %v4509
    %v4560 = vpack.c.b16 %v4514, %v4512
    %v4561 = vpack.c.b16 %v4515, %v4513
    %v4562 = vpack.c.b16 %v4518, %v4516
    %v4563 = vpack.c.b16 %v4519, %v4517
    %v4564 = vpack.c.b16 %v4522, %v4520
    %v4565 = vpack.c.b16 %v4523, %v4521
    %v4566 = vpack.c.b16 %v4526, %v4524
    %v4567 = vpack.c.b16 %v4527, %v4525
    %v4609 = vsel %vm2056, %v4364, 0
    %v4612 = vsel %vm2056, %v4367, 0
    %4614 = vmatpush.bf16.msra.mxu0 %v4542
    %4615 = vmatpush.bf16.msra.mxu0 %v4540
    %4616 = vmatpush.bf16.msra.mxu0 %v4538
    %4617 = vmatpush.bf16.msra.mxu0 %v4536
    %4618 = vmatpush.bf16.msra.mxu0 %v4534
    %4619 = vmatpush.bf16.msra.mxu0 %v4532
    %4620 = vmatpush.bf16.msra.mxu0 %v4530
    %4621 = vmatpush.bf16.msra.mxu0 %v4528
    %4622 = vmatmul.bf16.gmra.mxu0 %v4362
    %v4623 = vpop.f32.mrf.mxu0
    %v4624 = vadd.f32 0.0, %v4623
    %v4625 = vpop.f32.mrf.mxu0
    %v4626 = vadd.f32 0.0, %v4625
    %4627 = vmatmul.bf16.gmra.mxu0 %v4365
    %v4628 = vpop.f32.mrf.mxu0
    %v4629 = vadd.f32 0.0, %v4628
    %v4630 = vpop.f32.mrf.mxu0
    %4631 = vdwg.mxu0
    %4632 = vmatpush.bf16.msra.mxu0 %v4558
    %4633 = vmatpush.bf16.msra.mxu0 %v4556
    %4634 = vmatpush.bf16.msra.mxu0 %v4554
    %4635 = vmatpush.bf16.msra.mxu0 %v4552
    %4636 = vmatpush.bf16.msra.mxu0 %v4550
    %4637 = vmatpush.bf16.msra.mxu0 %v4548
    %4638 = vmatpush.bf16.msra.mxu0 %v4546
    %4639 = vmatpush.bf16.msra.mxu0 %v4544
    %4640 = vmatmul.bf16.gmra.mxu0 %v4363
    %v4641 = vpop.f32.mrf.mxu0
    %v4642 = vadd.f32 %v4624, %v4641
    %v4643 = vpop.f32.mrf.mxu0
    %v4644 = vadd.f32 %v4626, %v4643
    %4645 = vmatmul.bf16.gmra.mxu0 %v4366
    %v4646 = vpop.f32.mrf.mxu0
    %v4647 = vadd.f32 %v4629, %v4646
    %v4648 = vpop.f32.mrf.mxu0
    %4649 = vdwg.mxu0
    %4650 = vmatpush.bf16.msra.mxu0 0
    %4651 = vmatpush.bf16.msra.mxu0 0
    %4652 = vmatpush.bf16.msra.mxu0 0
    %4653 = vmatpush.bf16.msra.mxu0 0
    %4654 = vmatpush.bf16.msra.mxu0 %v4566
    %4655 = vmatpush.bf16.msra.mxu0 %v4564
    %4656 = vmatpush.bf16.msra.mxu0 %v4562
    %4657 = vmatpush.bf16.msra.mxu0 %v4560
    %4658 = vmatmul.bf16.gmra.mxu0 %v4609
    %v4659 = vpop.f32.mrf.mxu0
    %v4660 = vadd.f32 %v4642, %v4659
    %v4661 = vpop.f32.mrf.mxu0
    %v4662 = vadd.f32 %v4644, %v4661
    %4663 = vmatmul.bf16.gmra.mxu0 %v4612
    %v4664 = vpop.f32.mrf.mxu0
    %v4665 = vadd.f32 %v4647, %v4664
    %v4666 = vpop.f32.mrf.mxu0
    %4667 = vdwg.mxu0
    %4668 = vmatpush.bf16.msra.mxu0 %v4543
    %4669 = vmatpush.bf16.msra.mxu0 %v4541
    %4670 = vmatpush.bf16.msra.mxu0 %v4539
    %4671 = vmatpush.bf16.msra.mxu0 %v4537
    %4672 = vmatpush.bf16.msra.mxu0 %v4535
    %4673 = vmatpush.bf16.msra.mxu0 %v4533
    %4674 = vmatpush.bf16.msra.mxu0 %v4531
    %4675 = vmatpush.bf16.msra.mxu0 %v4529
    %4676 = vmatmul.bf16.gmra.mxu0 %v4362
    %v4677 = vpop.f32.mrf.mxu0
    %v4678 = vadd.f32 0.0, %v4677
    %v4679 = vpop.f32.mrf.mxu0
    %v4680 = vadd.f32 0.0, %v4679
    %4681 = vmatmul.bf16.gmra.mxu0 %v4365
    %v4682 = vpop.f32.mrf.mxu0
    %v4683 = vadd.f32 0.0, %v4682
    %v4684 = vpop.f32.mrf.mxu0
    %4685 = vdwg.mxu0
    %4686 = vmatpush.bf16.msra.mxu0 %v4559
    %4687 = vmatpush.bf16.msra.mxu0 %v4557
    %4688 = vmatpush.bf16.msra.mxu0 %v4555
    %4689 = vmatpush.bf16.msra.mxu0 %v4553
    %4690 = vmatpush.bf16.msra.mxu0 %v4551
    %4691 = vmatpush.bf16.msra.mxu0 %v4549
    %4692 = vmatpush.bf16.msra.mxu0 %v4547
    %4693 = vmatpush.bf16.msra.mxu0 %v4545
    %4694 = vmatmul.bf16.gmra.mxu0 %v4363
    %v4695 = vpop.f32.mrf.mxu0
    %v4696 = vadd.f32 %v4678, %v4695
    %v4697 = vpop.f32.mrf.mxu0
    %v4698 = vadd.f32 %v4680, %v4697
    %4699 = vmatmul.bf16.gmra.mxu0 %v4366
    %v4700 = vpop.f32.mrf.mxu0
    %v4701 = vadd.f32 %v4683, %v4700
    %v4702 = vpop.f32.mrf.mxu0
    %4703 = vdwg.mxu0
    %4704 = vmatpush.bf16.msra.mxu0 0
    %4705 = vmatpush.bf16.msra.mxu0 0
    %4706 = vmatpush.bf16.msra.mxu0 0
    %4707 = vmatpush.bf16.msra.mxu0 0
    %4708 = vmatpush.bf16.msra.mxu0 %v4567
    %4709 = vmatpush.bf16.msra.mxu0 %v4565
    %4710 = vmatpush.bf16.msra.mxu0 %v4563
    %4711 = vmatpush.bf16.msra.mxu0 %v4561
    %4712 = vmatmul.bf16.gmra.mxu0 %v4609
    %v4713 = vpop.f32.mrf.mxu0
    %v4714 = vadd.f32 %v4696, %v4713
    %v4715 = vpop.f32.mrf.mxu0
    %v4716 = vadd.f32 %v4698, %v4715
    %4717 = vmatmul.bf16.gmra.mxu0 %v4612
    %v4718 = vpop.f32.mrf.mxu0
    %v4719 = vadd.f32 %v4701, %v4718
    %v4720 = vpop.f32.mrf.mxu0
    %4721 = vdwg.mxu0
    %v4722 = vld [vmem:[#allocation17] sm:$0xff]
    %v4723 = vld [vmem:[#allocation17 + $0x8] sm:$0xf]
    %s4724 = scalar_lea.vmem [#allocation19], 320
    %v4725 = vld [vmem:[%s4724] sm:$0xff]
    %v4726 = vld [vmem:[%s4724 + $0x8] sm:$0xff]
    %v4727 = vld [vmem:[%s4724 + $0x10] sm:$0xff]
    %v4728 = vld [vmem:[%s4724 + $0x18] sm:$0xff]
    %v4729 = vld [vmem:[%s4724 + $0x20] sm:$0xff]
    %v4730 = vld [vmem:[%s4724 + $0x28] sm:$0xff]
    %v4731 = vld [vmem:[%s4724 + $0x30] sm:$0xff]
    %v4732 = vld [vmem:[%s4724 + $0x38] sm:$0xff]
    %v4733 = vld [vmem:[%s4724 + $0x40] sm:$0xff]
    %v4734 = vld [vmem:[%s4724 + $0x48] sm:$0xff]
    %v4735 = vld [vmem:[%s4724 + $0x50] sm:$0xff]
    %v4736 = vld [vmem:[%s4724 + $0x58] sm:$0xff]
    %v4737 = vld [vmem:[%s4724 + $0x60] sm:$0xff]
    %v4738 = vld [vmem:[%s4724 + $0x68] sm:$0xff]
    %v4739 = vld [vmem:[%s4724 + $0x70] sm:$0xff]
    %v4740 = vld [vmem:[%s4724 + $0x78] sm:$0xff]
    %v4741 = vld [vmem:[%s4724 + $0x80] sm:$0xff]
    %v4742 = vld [vmem:[%s4724 + $0x88] sm:$0xff]
    %v4743 = vld [vmem:[%s4724 + $0x90] sm:$0xff]
    %v4744 = vld [vmem:[%s4724 + $0x98] sm:$0xff]
    %v4745 = vld [vmem:[%s4724 + $0xa0] sm:$0xff]
    %v4746 = vld [vmem:[%s4724 + $0xa8] sm:$0xff]
    %v4747 = vld [vmem:[%s4724 + $0xb0] sm:$0xff]
    %v4748 = vld [vmem:[%s4724 + $0xb8] sm:$0xff]
    %v4749 = vld [vmem:[%s4724 + $0xc0] sm:$0xff]
    %v4750 = vld [vmem:[%s4724 + $0xc8] sm:$0xff]
    %v4751 = vld [vmem:[%s4724 + $0xd0] sm:$0xff]
    %v4752 = vld [vmem:[%s4724 + $0xd8] sm:$0xff]
    %v4753 = vld [vmem:[%s4724 + $0xe0] sm:$0xff]
    %v4754 = vld [vmem:[%s4724 + $0xe8] sm:$0xff]
    %v4755 = vld [vmem:[%s4724 + $0xf0] sm:$0xff]
    %v4756 = vld [vmem:[%s4724 + $0xf8] sm:$0xff]
    %v4757 = vld [vmem:[%s4724 + $0x100] sm:$0xff]
    %v4758 = vld [vmem:[%s4724 + $0x108] sm:$0xff]
    %v4759 = vld [vmem:[%s4724 + $0x110] sm:$0xff]
    %v4760 = vld [vmem:[%s4724 + $0x118] sm:$0xff]
    %v4761 = vld [vmem:[%s4724 + $0x120] sm:$0xff]
    %v4762 = vld [vmem:[%s4724 + $0x128] sm:$0xff]
    %v4763 = vld [vmem:[%s4724 + $0x130] sm:$0xff]
    %v4764 = vld [vmem:[%s4724 + $0x138] sm:$0xff]
    %v4805 = vunpack.c.l.b16 %v4725
    %v4806 = vunpack.c.h.b16 %v4725
    %v4807 = vunpack.c.l.b16 %v4726
    %v4808 = vunpack.c.h.b16 %v4726
    %v4809 = vunpack.c.l.b16 %v4727
    %v4810 = vunpack.c.h.b16 %v4727
    %v4811 = vunpack.c.l.b16 %v4728
    %v4812 = vunpack.c.h.b16 %v4728
    %v4813 = vunpack.c.l.b16 %v4729
    %v4814 = vunpack.c.h.b16 %v4729
    %v4815 = vunpack.c.l.b16 %v4730
    %v4816 = vunpack.c.h.b16 %v4730
    %v4817 = vunpack.c.l.b16 %v4731
    %v4818 = vunpack.c.h.b16 %v4731
    %v4819 = vunpack.c.l.b16 %v4732
    %v4820 = vunpack.c.h.b16 %v4732
    %v4821 = vunpack.c.l.b16 %v4733
    %v4822 = vunpack.c.h.b16 %v4733
    %v4823 = vunpack.c.l.b16 %v4734
    %v4824 = vunpack.c.h.b16 %v4734
    %v4825 = vunpack.c.l.b16 %v4735
    %v4826 = vunpack.c.h.b16 %v4735
    %v4827 = vunpack.c.l.b16 %v4736
    %v4828 = vunpack.c.h.b16 %v4736
    %v4829 = vunpack.c.l.b16 %v4737
    %v4830 = vunpack.c.h.b16 %v4737
    %v4831 = vunpack.c.l.b16 %v4738
    %v4832 = vunpack.c.h.b16 %v4738
    %v4833 = vunpack.c.l.b16 %v4739
    %v4834 = vunpack.c.h.b16 %v4739
    %v4835 = vunpack.c.l.b16 %v4740
    %v4836 = vunpack.c.h.b16 %v4740
    %v4837 = vunpack.c.l.b16 %v4741
    %v4838 = vunpack.c.h.b16 %v4741
    %v4839 = vunpack.c.l.b16 %v4742
    %v4840 = vunpack.c.h.b16 %v4742
    %v4841 = vunpack.c.l.b16 %v4743
    %v4842 = vunpack.c.h.b16 %v4743
    %v4843 = vunpack.c.l.b16 %v4744
    %v4844 = vunpack.c.h.b16 %v4744
    %v4845 = vunpack.c.l.b16 %v4745
    %v4846 = vunpack.c.h.b16 %v4745
    %v4847 = vunpack.c.l.b16 %v4746
    %v4848 = vunpack.c.h.b16 %v4746
    %v4849 = vunpack.c.l.b16 %v4747
    %v4850 = vunpack.c.h.b16 %v4747
    %v4851 = vunpack.c.l.b16 %v4748
    %v4852 = vunpack.c.h.b16 %v4748
    %v4853 = vunpack.c.l.b16 %v4749
    %v4854 = vunpack.c.h.b16 %v4749
    %v4855 = vunpack.c.l.b16 %v4750
    %v4856 = vunpack.c.h.b16 %v4750
    %v4857 = vunpack.c.l.b16 %v4751
    %v4858 = vunpack.c.h.b16 %v4751
    %v4859 = vunpack.c.l.b16 %v4752
    %v4860 = vunpack.c.h.b16 %v4752
    %v4861 = vunpack.c.l.b16 %v4753
    %v4862 = vunpack.c.h.b16 %v4753
    %v4863 = vunpack.c.l.b16 %v4754
    %v4864 = vunpack.c.h.b16 %v4754
    %v4865 = vunpack.c.l.b16 %v4755
    %v4866 = vunpack.c.h.b16 %v4755
    %v4867 = vunpack.c.l.b16 %v4756
    %v4868 = vunpack.c.h.b16 %v4756
    %v4869 = vunpack.c.l.b16 %v4757
    %v4870 = vunpack.c.h.b16 %v4757
    %v4871 = vunpack.c.l.b16 %v4758
    %v4872 = vunpack.c.h.b16 %v4758
    %v4873 = vunpack.c.l.b16 %v4759
    %v4874 = vunpack.c.h.b16 %v4759
    %v4875 = vunpack.c.l.b16 %v4760
    %v4876 = vunpack.c.h.b16 %v4760
    %v4877 = vunpack.c.l.b16 %v4761
    %v4878 = vunpack.c.h.b16 %v4761
    %v4879 = vunpack.c.l.b16 %v4762
    %v4880 = vunpack.c.h.b16 %v4762
    %v4881 = vunpack.c.l.b16 %v4763
    %v4882 = vunpack.c.h.b16 %v4763
    %v4883 = vunpack.c.l.b16 %v4764
    %v4884 = vunpack.c.h.b16 %v4764
    %v4885 = vpack.c.b16 %v4807, %v4805
    %v4886 = vpack.c.b16 %v4808, %v4806
    %v4887 = vpack.c.b16 %v4811, %v4809
    %v4888 = vpack.c.b16 %v4812, %v4810
    %v4889 = vpack.c.b16 %v4815, %v4813
    %v4890 = vpack.c.b16 %v4816, %v4814
    %v4891 = vpack.c.b16 %v4819, %v4817
    %v4892 = vpack.c.b16 %v4820, %v4818
    %v4893 = vpack.c.b16 %v4823, %v4821
    %v4894 = vpack.c.b16 %v4824, %v4822
    %v4895 = vpack.c.b16 %v4827, %v4825
    %v4896 = vpack.c.b16 %v4828, %v4826
    %v4897 = vpack.c.b16 %v4831, %v4829
    %v4898 = vpack.c.b16 %v4832, %v4830
    %v4899 = vpack.c.b16 %v4835, %v4833
    %v4900 = vpack.c.b16 %v4836, %v4834
    %v4901 = vpack.c.b16 %v4839, %v4837
    %v4902 = vpack.c.b16 %v4840, %v4838
    %v4903 = vpack.c.b16 %v4843, %v4841
    %v4904 = vpack.c.b16 %v4844, %v4842
    %v4905 = vpack.c.b16 %v4847, %v4845
    %v4906 = vpack.c.b16 %v4848, %v4846
    %v4907 = vpack.c.b16 %v4851, %v4849
    %v4908 = vpack.c.b16 %v4852, %v4850
    %v4909 = vpack.c.b16 %v4855, %v4853
    %v4910 = vpack.c.b16 %v4856, %v4854
    %v4911 = vpack.c.b16 %v4859, %v4857
    %v4912 = vpack.c.b16 %v4860, %v4858
    %v4913 = vpack.c.b16 %v4863, %v4861
    %v4914 = vpack.c.b16 %v4864, %v4862
    %v4915 = vpack.c.b16 %v4867, %v4865
    %v4916 = vpack.c.b16 %v4868, %v4866
    %v4917 = vpack.c.b16 %v4871, %v4869
    %v4918 = vpack.c.b16 %v4872, %v4870
    %v4919 = vpack.c.b16 %v4875, %v4873
    %v4920 = vpack.c.b16 %v4876, %v4874
    %v4921 = vpack.c.b16 %v4879, %v4877
    %v4922 = vpack.c.b16 %v4880, %v4878
    %v4923 = vpack.c.b16 %v4883, %v4881
    %v4924 = vpack.c.b16 %v4884, %v4882
    %4965 = vmatpush.bf16.msra.mxu0 %v4899
    %4966 = vmatpush.bf16.msra.mxu0 %v4897
    %4967 = vmatpush.bf16.msra.mxu0 %v4895
    %4968 = vmatpush.bf16.msra.mxu0 %v4893
    %4969 = vmatpush.bf16.msra.mxu0 %v4891
    %4970 = vmatpush.bf16.msra.mxu0 %v4889
    %4971 = vmatpush.bf16.msra.mxu0 %v4887
    %4972 = vmatpush.bf16.msra.mxu0 %v4885
    %4973 = vmatmul.bf16.gmra.mxu0 %v4362
    %v4974 = vpop.f32.mrf.mxu0
    %v4975 = vadd.f32 0.0, %v4974
    %v4976 = vpop.f32.mrf.mxu0
    %v4977 = vadd.f32 0.0, %v4976
    %4978 = vmatmul.bf16.gmra.mxu0 %v4365
    %v4979 = vpop.f32.mrf.mxu0
    %v4980 = vadd.f32 0.0, %v4979
    %v4981 = vpop.f32.mrf.mxu0
    %4982 = vdwg.mxu0
    %4983 = vmatpush.bf16.msra.mxu0 %v4915
    %4984 = vmatpush.bf16.msra.mxu0 %v4913
    %4985 = vmatpush.bf16.msra.mxu0 %v4911
    %4986 = vmatpush.bf16.msra.mxu0 %v4909
    %4987 = vmatpush.bf16.msra.mxu0 %v4907
    %4988 = vmatpush.bf16.msra.mxu0 %v4905
    %4989 = vmatpush.bf16.msra.mxu0 %v4903
    %4990 = vmatpush.bf16.msra.mxu0 %v4901
    %4991 = vmatmul.bf16.gmra.mxu0 %v4363
    %v4992 = vpop.f32.mrf.mxu0
    %v4993 = vadd.f32 %v4975, %v4992
    %v4994 = vpop.f32.mrf.mxu0
    %v4995 = vadd.f32 %v4977, %v4994
    %4996 = vmatmul.bf16.gmra.mxu0 %v4366
    %v4997 = vpop.f32.mrf.mxu0
    %v4998 = vadd.f32 %v4980, %v4997
    %v4999 = vpop.f32.mrf.mxu0
    %5000 = vdwg.mxu0
    %5001 = vmatpush.bf16.msra.mxu0 0
    %5002 = vmatpush.bf16.msra.mxu0 0
    %5003 = vmatpush.bf16.msra.mxu0 0
    %5004 = vmatpush.bf16.msra.mxu0 0
    %5005 = vmatpush.bf16.msra.mxu0 %v4923
    %5006 = vmatpush.bf16.msra.mxu0 %v4921
    %5007 = vmatpush.bf16.msra.mxu0 %v4919
    %5008 = vmatpush.bf16.msra.mxu0 %v4917
    %5009 = vmatmul.bf16.gmra.mxu0 %v4609
    %v5010 = vpop.f32.mrf.mxu0
    %v5011 = vadd.f32 %v4993, %v5010
    %v5012 = vpop.f32.mrf.mxu0
    %v5013 = vadd.f32 %v4995, %v5012
    %5014 = vmatmul.bf16.gmra.mxu0 %v4612
    %v5015 = vpop.f32.mrf.mxu0
    %v5016 = vadd.f32 %v4998, %v5015
    %v5017 = vpop.f32.mrf.mxu0
    %5018 = vdwg.mxu0
    %5019 = vmatpush.bf16.msra.mxu0 %v4900
    %5020 = vmatpush.bf16.msra.mxu0 %v4898
    %5021 = vmatpush.bf16.msra.mxu0 %v4896
    %5022 = vmatpush.bf16.msra.mxu0 %v4894
    %5023 = vmatpush.bf16.msra.mxu0 %v4892
    %5024 = vmatpush.bf16.msra.mxu0 %v4890
    %5025 = vmatpush.bf16.msra.mxu0 %v4888
    %5026 = vmatpush.bf16.msra.mxu0 %v4886
    %5027 = vmatmul.bf16.gmra.mxu0 %v4362
    %v5028 = vpop.f32.mrf.mxu0
    %v5029 = vadd.f32 0.0, %v5028
    %v5030 = vpop.f32.mrf.mxu0
    %v5031 = vadd.f32 0.0, %v5030
    %5032 = vmatmul.bf16.gmra.mxu0 %v4365
    %v5033 = vpop.f32.mrf.mxu0
    %v5034 = vadd.f32 0.0, %v5033
    %v5035 = vpop.f32.mrf.mxu0
    %5036 = vdwg.mxu0
    %5037 = vmatpush.bf16.msra.mxu0 %v4916
    %5038 = vmatpush.bf16.msra.mxu0 %v4914
    %5039 = vmatpush.bf16.msra.mxu0 %v4912
    %5040 = vmatpush.bf16.msra.mxu0 %v4910
    %5041 = vmatpush.bf16.msra.mxu0 %v4908
    %5042 = vmatpush.bf16.msra.mxu0 %v4906
    %5043 = vmatpush.bf16.msra.mxu0 %v4904
    %5044 = vmatpush.bf16.msra.mxu0 %v4902
    %5045 = vmatmul.bf16.gmra.mxu0 %v4363
    %v5046 = vpop.f32.mrf.mxu0
    %v5047 = vadd.f32 %v5029, %v5046
    %v5048 = vpop.f32.mrf.mxu0
    %v5049 = vadd.f32 %v5031, %v5048
    %5050 = vmatmul.bf16.gmra.mxu0 %v4366
    %v5051 = vpop.f32.mrf.mxu0
    %v5052 = vadd.f32 %v5034, %v5051
    %v5053 = vpop.f32.mrf.mxu0
    %5054 = vdwg.mxu0
    %5055 = vmatpush.bf16.msra.mxu0 0
    %5056 = vmatpush.bf16.msra.mxu0 0
    %5057 = vmatpush.bf16.msra.mxu0 0
    %5058 = vmatpush.bf16.msra.mxu0 0
    %5059 = vmatpush.bf16.msra.mxu0 %v4924
    %5060 = vmatpush.bf16.msra.mxu0 %v4922
    %5061 = vmatpush.bf16.msra.mxu0 %v4920
    %5062 = vmatpush.bf16.msra.mxu0 %v4918
    %5063 = vmatmul.bf16.gmra.mxu0 %v4609
    %v5064 = vpop.f32.mrf.mxu0
    %v5065 = vadd.f32 %v5047, %v5064
    %v5066 = vpop.f32.mrf.mxu0
    %v5067 = vadd.f32 %v5049, %v5066
    %5068 = vmatmul.bf16.gmra.mxu0 %v4612
    %v5069 = vpop.f32.mrf.mxu0
    %v5070 = vadd.f32 %v5052, %v5069
    %v5071 = vpop.f32.mrf.mxu0
    %5072 = vdwg.mxu0
    %s5073 = scalar_lea.vmem [#allocation17], 16
    %v5074 = vld [vmem:[%s5073] sm:$0xff]
    %v5075 = vld [vmem:[%s5073 + $0x8] sm:$0xf]
    %v5077 = vsel %vm2795, %v5074, 0
    %v5080 = vsel %vm2795, %v5075, 0
    %v5083 = vsel %vm555, %v5016, 0
    %v5086 = vsel %vm555, %v5070, 0
    %5088 = vmatpush.msra.mxu0 0.0
    %5089 = vmatpush.msra.mxu0 0.0
    %5090 = vmatpush.msra.mxu0 0.0
    %5091 = vmatpush.msra.mxu0 0.0
    %5092 = vmatpush.msra.mxu0 0.0
    %5093 = vmatpush.msra.mxu0 0.0
    %5094 = vmatpush.msra.mxu0 0.0
    %5095 = vmatpush.msra.mxu0 0.0
    %5096 = vmatpush.msra.mxu0 0.0
    %5097 = vmatpush.msra.mxu0 0.0
    %5098 = vmatpush.msra.mxu0 0.0
    %5099 = vmatpush.msra.mxu0 0.0
    %5100 = vmatpush.msra.mxu0 0.0
    %5101 = vmatpush.msra.mxu0 %v5083
    %5102 = vmatpush.msra.mxu0 %v5013
    %5103 = vmatpush.msra.mxu0 %v5011
    %5104 = vmatmul.f32.gmra.mxu0 %v5077
    %v5105 = vpop.f32.mrf.mxu0
    %v5106 = vadd.f32 0.0, %v5105
    %5107 = vmatmul.f32.gmra.mxu0 %v5080
    %v5108 = vpop.f32.mrf.mxu0
    %v5109 = vadd.f32 0.0, %v5108
    %5110 = vdwg.mxu0
    %5111 = vmatpush.msra.mxu0 0.0
    %5112 = vmatpush.msra.mxu0 0.0
    %5113 = vmatpush.msra.mxu0 0.0
    %5114 = vmatpush.msra.mxu0 0.0
    %5115 = vmatpush.msra.mxu0 0.0
    %5116 = vmatpush.msra.mxu0 0.0
    %5117 = vmatpush.msra.mxu0 0.0
    %5118 = vmatpush.msra.mxu0 0.0
    %5119 = vmatpush.msra.mxu0 0.0
    %5120 = vmatpush.msra.mxu0 0.0
    %5121 = vmatpush.msra.mxu0 0.0
    %5122 = vmatpush.msra.mxu0 0.0
    %5123 = vmatpush.msra.mxu0 0.0
    %5124 = vmatpush.msra.mxu0 %v5086
    %5125 = vmatpush.msra.mxu0 %v5067
    %5126 = vmatpush.msra.mxu0 %v5065
    %5127 = vmatmul.f32.gmra.mxu0 %v5077
    %v5128 = vpop.f32.mrf.mxu0
    %v5129 = vadd.f32 0.0, %v5128
    %5130 = vmatmul.f32.gmra.mxu0 %v5080
    %v5131 = vpop.f32.mrf.mxu0
    %v5132 = vadd.f32 0.0, %v5131
    %5133 = vdwg.mxu0
    %v5135 = vsel %vm2795, %v4722, 0
    %v5138 = vsel %vm2795, %v4723, 0
    %v5141 = vsel %vm555, %v4665, 0
    %v5144 = vsel %vm555, %v4719, 0
    %5146 = vmatpush.msra.mxu0 0.0
    %5147 = vmatpush.msra.mxu0 0.0
    %5148 = vmatpush.msra.mxu0 0.0
    %5149 = vmatpush.msra.mxu0 0.0
    %5150 = vmatpush.msra.mxu0 0.0
    %5151 = vmatpush.msra.mxu0 0.0
    %5152 = vmatpush.msra.mxu0 0.0
    %5153 = vmatpush.msra.mxu0 0.0
    %5154 = vmatpush.msra.mxu0 0.0
    %5155 = vmatpush.msra.mxu0 0.0
    %5156 = vmatpush.msra.mxu0 0.0
    %5157 = vmatpush.msra.mxu0 0.0
    %5158 = vmatpush.msra.mxu0 0.0
    %5159 = vmatpush.msra.mxu0 %v5141
    %5160 = vmatpush.msra.mxu0 %v4662
    %5161 = vmatpush.msra.mxu0 %v4660
    %5162 = vmatmul.f32.gmra.mxu0 %v5135
    %v5163 = vpop.f32.mrf.mxu0
    %v5164 = vadd.f32 %v5106, %v5163
    %5165 = vmatmul.f32.gmra.mxu0 %v5138
    %v5166 = vpop.f32.mrf.mxu0
    %v5167 = vadd.f32 %v5109, %v5166
    %5168 = vdwg.mxu0
    %5169 = vmatpush.msra.mxu0 0.0
    %5170 = vmatpush.msra.mxu0 0.0
    %5171 = vmatpush.msra.mxu0 0.0
    %5172 = vmatpush.msra.mxu0 0.0
    %5173 = vmatpush.msra.mxu0 0.0
    %5174 = vmatpush.msra.mxu0 0.0
    %5175 = vmatpush.msra.mxu0 0.0
    %5176 = vmatpush.msra.mxu0 0.0
    %5177 = vmatpush.msra.mxu0 0.0
    %5178 = vmatpush.msra.mxu0 0.0
    %5179 = vmatpush.msra.mxu0 0.0
    %5180 = vmatpush.msra.mxu0 0.0
    %5181 = vmatpush.msra.mxu0 0.0
    %5182 = vmatpush.msra.mxu0 %v5144
    %5183 = vmatpush.msra.mxu0 %v4716
    %5184 = vmatpush.msra.mxu0 %v4714
    %5185 = vmatmul.f32.gmra.mxu0 %v5135
    %v5186 = vpop.f32.mrf.mxu0
    %v5187 = vadd.f32 %v5129, %v5186
    %5188 = vmatmul.f32.gmra.mxu0 %v5138
    %v5189 = vpop.f32.mrf.mxu0
    %v5190 = vadd.f32 %v5132, %v5189
    %5191 = vdwg.mxu0
    %s5192 = scalar_lea.vmem [#allocation19], 640
    %v5193 = vld [vmem:[%s5192] sm:$0xff]
    %v5194 = vld [vmem:[%s5192 + $0x8] sm:$0xff]
    %v5195 = vld [vmem:[%s5192 + $0x10] sm:$0xff]
    %v5196 = vld [vmem:[%s5192 + $0x18] sm:$0xff]
    %v5197 = vld [vmem:[%s5192 + $0x20] sm:$0xff]
    %v5198 = vld [vmem:[%s5192 + $0x28] sm:$0xff]
    %v5199 = vld [vmem:[%s5192 + $0x30] sm:$0xff]
    %v5200 = vld [vmem:[%s5192 + $0x38] sm:$0xff]
    %v5201 = vld [vmem:[%s5192 + $0x40] sm:$0xff]
    %v5202 = vld [vmem:[%s5192 + $0x48] sm:$0xff]
    %v5203 = vld [vmem:[%s5192 + $0x50] sm:$0xff]
    %v5204 = vld [vmem:[%s5192 + $0x58] sm:$0xff]
    %v5205 = vld [vmem:[%s5192 + $0x60] sm:$0xff]
    %v5206 = vld [vmem:[%s5192 + $0x68] sm:$0xff]
    %v5207 = vld [vmem:[%s5192 + $0x70] sm:$0xff]
    %v5208 = vld [vmem:[%s5192 + $0x78] sm:$0xff]
    %v5209 = vld [vmem:[%s5192 + $0x80] sm:$0xff]
    %v5210 = vld [vmem:[%s5192 + $0x88] sm:$0xff]
    %v5211 = vld [vmem:[%s5192 + $0x90] sm:$0xff]
    %v5212 = vld [vmem:[%s5192 + $0x98] sm:$0xff]
    %v5213 = vld [vmem:[%s5192 + $0xa0] sm:$0xff]
    %v5214 = vld [vmem:[%s5192 + $0xa8] sm:$0xff]
    %v5215 = vld [vmem:[%s5192 + $0xb0] sm:$0xff]
    %v5216 = vld [vmem:[%s5192 + $0xb8] sm:$0xff]
    %v5217 = vld [vmem:[%s5192 + $0xc0] sm:$0xff]
    %v5218 = vld [vmem:[%s5192 + $0xc8] sm:$0xff]
    %v5219 = vld [vmem:[%s5192 + $0xd0] sm:$0xff]
    %v5220 = vld [vmem:[%s5192 + $0xd8] sm:$0xff]
    %v5221 = vld [vmem:[%s5192 + $0xe0] sm:$0xff]
    %v5222 = vld [vmem:[%s5192 + $0xe8] sm:$0xff]
    %v5223 = vld [vmem:[%s5192 + $0xf0] sm:$0xff]
    %v5224 = vld [vmem:[%s5192 + $0xf8] sm:$0xff]
    %v5225 = vld [vmem:[%s5192 + $0x100] sm:$0xff]
    %v5226 = vld [vmem:[%s5192 + $0x108] sm:$0xff]
    %v5227 = vld [vmem:[%s5192 + $0x110] sm:$0xff]
    %v5228 = vld [vmem:[%s5192 + $0x118] sm:$0xff]
    %v5229 = vld [vmem:[%s5192 + $0x120] sm:$0xff]
    %v5230 = vld [vmem:[%s5192 + $0x128] sm:$0xff]
    %v5231 = vld [vmem:[%s5192 + $0x130] sm:$0xff]
    %v5232 = vld [vmem:[%s5192 + $0x138] sm:$0xff]
    %v5273 = vunpack.c.l.b16 %v5193
    %v5274 = vunpack.c.h.b16 %v5193
    %v5275 = vunpack.c.l.b16 %v5194
    %v5276 = vunpack.c.h.b16 %v5194
    %v5277 = vunpack.c.l.b16 %v5195
    %v5278 = vunpack.c.h.b16 %v5195
    %v5279 = vunpack.c.l.b16 %v5196
    %v5280 = vunpack.c.h.b16 %v5196
    %v5281 = vunpack.c.l.b16 %v5197
    %v5282 = vunpack.c.h.b16 %v5197
    %v5283 = vunpack.c.l.b16 %v5198
    %v5284 = vunpack.c.h.b16 %v5198
    %v5285 = vunpack.c.l.b16 %v5199
    %v5286 = vunpack.c.h.b16 %v5199
    %v5287 = vunpack.c.l.b16 %v5200
    %v5288 = vunpack.c.h.b16 %v5200
    %v5289 = vunpack.c.l.b16 %v5201
    %v5290 = vunpack.c.h.b16 %v5201
    %v5291 = vunpack.c.l.b16 %v5202
    %v5292 = vunpack.c.h.b16 %v5202
    %v5293 = vunpack.c.l.b16 %v5203
    %v5294 = vunpack.c.h.b16 %v5203
    %v5295 = vunpack.c.l.b16 %v5204
    %v5296 = vunpack.c.h.b16 %v5204
    %v5297 = vunpack.c.l.b16 %v5205
    %v5298 = vunpack.c.h.b16 %v5205
    %v5299 = vunpack.c.l.b16 %v5206
    %v5300 = vunpack.c.h.b16 %v5206
    %v5301 = vunpack.c.l.b16 %v5207
    %v5302 = vunpack.c.h.b16 %v5207
    %v5303 = vunpack.c.l.b16 %v5208
    %v5304 = vunpack.c.h.b16 %v5208
    %v5305 = vunpack.c.l.b16 %v5209
    %v5306 = vunpack.c.h.b16 %v5209
    %v5307 = vunpack.c.l.b16 %v5210
    %v5308 = vunpack.c.h.b16 %v5210
    %v5309 = vunpack.c.l.b16 %v5211
    %v5310 = vunpack.c.h.b16 %v5211
    %v5311 = vunpack.c.l.b16 %v5212
    %v5312 = vunpack.c.h.b16 %v5212
    %v5313 = vunpack.c.l.b16 %v5213
    %v5314 = vunpack.c.h.b16 %v5213
    %v5315 = vunpack.c.l.b16 %v5214
    %v5316 = vunpack.c.h.b16 %v5214
    %v5317 = vunpack.c.l.b16 %v5215
    %v5318 = vunpack.c.h.b16 %v5215
    %v5319 = vunpack.c.l.b16 %v5216
    %v5320 = vunpack.c.h.b16 %v5216
    %v5321 = vunpack.c.l.b16 %v5217
    %v5322 = vunpack.c.h.b16 %v5217
    %v5323 = vunpack.c.l.b16 %v5218
    %v5324 = vunpack.c.h.b16 %v5218
    %v5325 = vunpack.c.l.b16 %v5219
    %v5326 = vunpack.c.h.b16 %v5219
    %v5327 = vunpack.c.l.b16 %v5220
    %v5328 = vunpack.c.h.b16 %v5220
    %v5329 = vunpack.c.l.b16 %v5221
    %v5330 = vunpack.c.h.b16 %v5221
    %v5331 = vunpack.c.l.b16 %v5222
    %v5332 = vunpack.c.h.b16 %v5222
    %v5333 = vunpack.c.l.b16 %v5223
    %v5334 = vunpack.c.h.b16 %v5223
    %v5335 = vunpack.c.l.b16 %v5224
    %v5336 = vunpack.c.h.b16 %v5224
    %v5337 = vunpack.c.l.b16 %v5225
    %v5338 = vunpack.c.h.b16 %v5225
    %v5339 = vunpack.c.l.b16 %v5226
    %v5340 = vunpack.c.h.b16 %v5226
    %v5341 = vunpack.c.l.b16 %v5227
    %v5342 = vunpack.c.h.b16 %v5227
    %v5343 = vunpack.c.l.b16 %v5228
    %v5344 = vunpack.c.h.b16 %v5228
    %v5345 = vunpack.c.l.b16 %v5229
    %v5346 = vunpack.c.h.b16 %v5229
    %v5347 = vunpack.c.l.b16 %v5230
    %v5348 = vunpack.c.h.b16 %v5230
    %v5349 = vunpack.c.l.b16 %v5231
    %v5350 = vunpack.c.h.b16 %v5231
    %v5351 = vunpack.c.l.b16 %v5232
    %v5352 = vunpack.c.h.b16 %v5232
    %v5353 = vpack.c.b16 %v5275, %v5273
    %v5354 = vpack.c.b16 %v5276, %v5274
    %v5355 = vpack.c.b16 %v5279, %v5277
    %v5356 = vpack.c.b16 %v5280, %v5278
    %v5357 = vpack.c.b16 %v5283, %v5281
    %v5358 = vpack.c.b16 %v5284, %v5282
    %v5359 = vpack.c.b16 %v5287, %v5285
    %v5360 = vpack.c.b16 %v5288, %v5286
    %v5361 = vpack.c.b16 %v5291, %v5289
    %v5362 = vpack.c.b16 %v5292, %v5290
    %v5363 = vpack.c.b16 %v5295, %v5293
    %v5364 = vpack.c.b16 %v5296, %v5294
    %v5365 = vpack.c.b16 %v5299, %v5297
    %v5366 = vpack.c.b16 %v5300, %v5298
    %v5367 = vpack.c.b16 %v5303, %v5301
    %v5368 = vpack.c.b16 %v5304, %v5302
    %v5369 = vpack.c.b16 %v5307, %v5305
    %v5370 = vpack.c.b16 %v5308, %v5306
    %v5371 = vpack.c.b16 %v5311, %v5309
    %v5372 = vpack.c.b16 %v5312, %v5310
    %v5373 = vpack.c.b16 %v5315, %v5313
    %v5374 = vpack.c.b16 %v5316, %v5314
    %v5375 = vpack.c.b16 %v5319, %v5317
    %v5376 = vpack.c.b16 %v5320, %v5318
    %v5377 = vpack.c.b16 %v5323, %v5321
    %v5378 = vpack.c.b16 %v5324, %v5322
    %v5379 = vpack.c.b16 %v5327, %v5325
    %v5380 = vpack.c.b16 %v5328, %v5326
    %v5381 = vpack.c.b16 %v5331, %v5329
    %v5382 = vpack.c.b16 %v5332, %v5330
    %v5383 = vpack.c.b16 %v5335, %v5333
    %v5384 = vpack.c.b16 %v5336, %v5334
    %v5385 = vpack.c.b16 %v5339, %v5337
    %v5386 = vpack.c.b16 %v5340, %v5338
    %v5387 = vpack.c.b16 %v5343, %v5341
    %v5388 = vpack.c.b16 %v5344, %v5342
    %v5389 = vpack.c.b16 %v5347, %v5345
    %v5390 = vpack.c.b16 %v5348, %v5346
    %v5391 = vpack.c.b16 %v5351, %v5349
    %v5392 = vpack.c.b16 %v5352, %v5350
    %5433 = vmatpush.bf16.msra.mxu0 %v5367
    %5434 = vmatpush.bf16.msra.mxu0 %v5365
    %5435 = vmatpush.bf16.msra.mxu0 %v5363
    %5436 = vmatpush.bf16.msra.mxu0 %v5361
    %5437 = vmatpush.bf16.msra.mxu0 %v5359
    %5438 = vmatpush.bf16.msra.mxu0 %v5357
    %5439 = vmatpush.bf16.msra.mxu0 %v5355
    %5440 = vmatpush.bf16.msra.mxu0 %v5353
    %5441 = vmatmul.bf16.gmra.mxu0 %v4362
    %v5442 = vpop.f32.mrf.mxu0
    %v5443 = vadd.f32 0.0, %v5442
    %v5444 = vpop.f32.mrf.mxu0
    %v5445 = vadd.f32 0.0, %v5444
    %5446 = vmatmul.bf16.gmra.mxu0 %v4365
    %v5447 = vpop.f32.mrf.mxu0
    %v5448 = vadd.f32 0.0, %v5447
    %v5449 = vpop.f32.mrf.mxu0
    %5450 = vdwg.mxu0
    %5451 = vmatpush.bf16.msra.mxu0 %v5383
    %5452 = vmatpush.bf16.msra.mxu0 %v5381
    %5453 = vmatpush.bf16.msra.mxu0 %v5379
    %5454 = vmatpush.bf16.msra.mxu0 %v5377
    %5455 = vmatpush.bf16.msra.mxu0 %v5375
    %5456 = vmatpush.bf16.msra.mxu0 %v5373
    %5457 = vmatpush.bf16.msra.mxu0 %v5371
    %5458 = vmatpush.bf16.msra.mxu0 %v5369
    %5459 = vmatmul.bf16.gmra.mxu0 %v4363
    %v5460 = vpop.f32.mrf.mxu0
    %v5461 = vadd.f32 %v5443, %v5460
    %v5462 = vpop.f32.mrf.mxu0
    %v5463 = vadd.f32 %v5445, %v5462
    %5464 = vmatmul.bf16.gmra.mxu0 %v4366
    %v5465 = vpop.f32.mrf.mxu0
    %v5466 = vadd.f32 %v5448, %v5465
    %v5467 = vpop.f32.mrf.mxu0
    %5468 = vdwg.mxu0
    %5469 = vmatpush.bf16.msra.mxu0 0
    %5470 = vmatpush.bf16.msra.mxu0 0
    %5471 = vmatpush.bf16.msra.mxu0 0
    %5472 = vmatpush.bf16.msra.mxu0 0
    %5473 = vmatpush.bf16.msra.mxu0 %v5391
    %5474 = vmatpush.bf16.msra.mxu0 %v5389
    %5475 = vmatpush.bf16.msra.mxu0 %v5387
    %5476 = vmatpush.bf16.msra.mxu0 %v5385
    %5477 = vmatmul.bf16.gmra.mxu0 %v4609
    %v5478 = vpop.f32.mrf.mxu0
    %v5479 = vadd.f32 %v5461, %v5478
    %v5480 = vpop.f32.mrf.mxu0
    %v5481 = vadd.f32 %v5463, %v5480
    %5482 = vmatmul.bf16.gmra.mxu0 %v4612
    %v5483 = vpop.f32.mrf.mxu0
    %v5484 = vadd.f32 %v5466, %v5483
    %v5485 = vpop.f32.mrf.mxu0
    %5486 = vdwg.mxu0
    %5487 = vmatpush.bf16.msra.mxu0 %v5368
    %5488 = vmatpush.bf16.msra.mxu0 %v5366
    %5489 = vmatpush.bf16.msra.mxu0 %v5364
    %5490 = vmatpush.bf16.msra.mxu0 %v5362
    %5491 = vmatpush.bf16.msra.mxu0 %v5360
    %5492 = vmatpush.bf16.msra.mxu0 %v5358
    %5493 = vmatpush.bf16.msra.mxu0 %v5356
    %5494 = vmatpush.bf16.msra.mxu0 %v5354
    %5495 = vmatmul.bf16.gmra.mxu0 %v4362
    %v5496 = vpop.f32.mrf.mxu0
    %v5497 = vadd.f32 0.0, %v5496
    %v5498 = vpop.f32.mrf.mxu0
    %v5499 = vadd.f32 0.0, %v5498
    %5500 = vmatmul.bf16.gmra.mxu0 %v4365
    %v5501 = vpop.f32.mrf.mxu0
    %v5502 = vadd.f32 0.0, %v5501
    %v5503 = vpop.f32.mrf.mxu0
    %5504 = vdwg.mxu0
    %5505 = vmatpush.bf16.msra.mxu0 %v5384
    %5506 = vmatpush.bf16.msra.mxu0 %v5382
    %5507 = vmatpush.bf16.msra.mxu0 %v5380
    %5508 = vmatpush.bf16.msra.mxu0 %v5378
    %5509 = vmatpush.bf16.msra.mxu0 %v5376
    %5510 = vmatpush.bf16.msra.mxu0 %v5374
    %5511 = vmatpush.bf16.msra.mxu0 %v5372
    %5512 = vmatpush.bf16.msra.mxu0 %v5370
    %5513 = vmatmul.bf16.gmra.mxu0 %v4363
    %v5514 = vpop.f32.mrf.mxu0
    %v5515 = vadd.f32 %v5497, %v5514
    %v5516 = vpop.f32.mrf.mxu0
    %v5517 = vadd.f32 %v5499, %v5516
    %5518 = vmatmul.bf16.gmra.mxu0 %v4366
    %v5519 = vpop.f32.mrf.mxu0
    %v5520 = vadd.f32 %v5502, %v5519
    %v5521 = vpop.f32.mrf.mxu0
    %5522 = vdwg.mxu0
    %5523 = vmatpush.bf16.msra.mxu0 0
    %5524 = vmatpush.bf16.msra.mxu0 0
    %5525 = vmatpush.bf16.msra.mxu0 0
    %5526 = vmatpush.bf16.msra.mxu0 0
    %5527 = vmatpush.bf16.msra.mxu0 %v5392
    %5528 = vmatpush.bf16.msra.mxu0 %v5390
    %5529 = vmatpush.bf16.msra.mxu0 %v5388
    %5530 = vmatpush.bf16.msra.mxu0 %v5386
    %5531 = vmatmul.bf16.gmra.mxu0 %v4609
    %v5532 = vpop.f32.mrf.mxu0
    %v5533 = vadd.f32 %v5515, %v5532
    %v5534 = vpop.f32.mrf.mxu0
    %v5535 = vadd.f32 %v5517, %v5534
    %5536 = vmatmul.bf16.gmra.mxu0 %v4612
    %v5537 = vpop.f32.mrf.mxu0
    %v5538 = vadd.f32 %v5520, %v5537
    %v5539 = vpop.f32.mrf.mxu0
    %5540 = vdwg.mxu0
    %s5541 = scalar_lea.vmem [#allocation17], 32
    %v5542 = vld [vmem:[%s5541] sm:$0xff]
    %v5543 = vld [vmem:[%s5541 + $0x8] sm:$0xf]
    %v5545 = vsel %vm2795, %v5542, 0
    %v5548 = vsel %vm2795, %v5543, 0
    %v5551 = vsel %vm555, %v5484, 0
    %v5554 = vsel %vm555, %v5538, 0
    %5556 = vmatpush.msra.mxu0 0.0
    %5557 = vmatpush.msra.mxu0 0.0
    %5558 = vmatpush.msra.mxu0 0.0
    %5559 = vmatpush.msra.mxu0 0.0
    %5560 = vmatpush.msra.mxu0 0.0
    %5561 = vmatpush.msra.mxu0 0.0
    %5562 = vmatpush.msra.mxu0 0.0
    %5563 = vmatpush.msra.mxu0 0.0
    %5564 = vmatpush.msra.mxu0 0.0
    %5565 = vmatpush.msra.mxu0 0.0
    %5566 = vmatpush.msra.mxu0 0.0
    %5567 = vmatpush.msra.mxu0 0.0
    %5568 = vmatpush.msra.mxu0 0.0
    %5569 = vmatpush.msra.mxu0 %v5551
    %5570 = vmatpush.msra.mxu0 %v5481
    %5571 = vmatpush.msra.mxu0 %v5479
    %5572 = vmatmul.f32.gmra.mxu0 %v5545
    %v5573 = vpop.f32.mrf.mxu0
    %v5574 = vadd.f32 0.0, %v5573
    %5575 = vmatmul.f32.gmra.mxu0 %v5548
    %v5576 = vpop.f32.mrf.mxu0
    %v5577 = vadd.f32 0.0, %v5576
    %5578 = vdwg.mxu0
    %5579 = vmatpush.msra.mxu0 0.0
    %5580 = vmatpush.msra.mxu0 0.0
    %5581 = vmatpush.msra.mxu0 0.0
    %5582 = vmatpush.msra.mxu0 0.0
    %5583 = vmatpush.msra.mxu0 0.0
    %5584 = vmatpush.msra.mxu0 0.0
    %5585 = vmatpush.msra.mxu0 0.0
    %5586 = vmatpush.msra.mxu0 0.0
    %5587 = vmatpush.msra.mxu0 0.0
    %5588 = vmatpush.msra.mxu0 0.0
    %5589 = vmatpush.msra.mxu0 0.0
    %5590 = vmatpush.msra.mxu0 0.0
    %5591 = vmatpush.msra.mxu0 0.0
    %5592 = vmatpush.msra.mxu0 %v5554
    %5593 = vmatpush.msra.mxu0 %v5535
    %5594 = vmatpush.msra.mxu0 %v5533
    %5595 = vmatmul.f32.gmra.mxu0 %v5545
    %v5596 = vpop.f32.mrf.mxu0
    %v5597 = vadd.f32 0.0, %v5596
    %5598 = vmatmul.f32.gmra.mxu0 %v5548
    %v5599 = vpop.f32.mrf.mxu0
    %v5600 = vadd.f32 0.0, %v5599
    %5601 = vdwg.mxu0
    %v5602 = vadd.f32 %v5164, %v5574
    %v5603 = vadd.f32 %v5187, %v5597
    %v5604 = vadd.f32 %v5167, %v5577
    %v5605 = vadd.f32 %v5190, %v5600
    %v5606 = vmax.f32 %v5602, 0.0
    %v5607 = vmax.f32 %v5603, 0.0
    %v5608 = vmax.f32 %v5604, 0.0
    %v5609 = vmax.f32 %v5605, 0.0
    %v5610 = vld [vmem:[#allocation20] sm:$0xf]
    %v5611 = vld [vmem:[#allocation20 + $0x4] sm:$0xf]
    %v5612 = vld [vmem:[#allocation20 + $0x8] sm:$0xf]
    %v5613 = vld [vmem:[#allocation20 + $0xc] sm:$0xf]
    %v5614 = vld [vmem:[#allocation20 + $0x10] sm:$0xf]
    %v5615 = vld [vmem:[#allocation20 + $0x14] sm:$0xf]
    %v5616 = vld [vmem:[#allocation20 + $0x18] sm:$0xf]
    %v5617 = vld [vmem:[#allocation20 + $0x1c] sm:$0xf]
    %v5618 = vld [vmem:[#allocation20 + $0x20] sm:$0xf]
    %v5619 = vld [vmem:[#allocation20 + $0x24] sm:$0xf]
    %v5620 = vld [vmem:[#allocation20 + $0x28] sm:$0xf]
    %v5621 = vld [vmem:[#allocation20 + $0x2c] sm:$0xf]
    %v5622 = vld [vmem:[#allocation20 + $0x30] sm:$0xf]
    %v5623 = vld [vmem:[#allocation20 + $0x34] sm:$0xf]
    %v5624 = vld [vmem:[#allocation20 + $0x38] sm:$0xf]
    %v5625 = vld [vmem:[#allocation20 + $0x3c] sm:$0xf]
    %v5626 = vld [vmem:[#allocation20 + $0x40] sm:$0xf]
    %v5627 = vld [vmem:[#allocation20 + $0x44] sm:$0xf]
    %v5628 = vld [vmem:[#allocation20 + $0x48] sm:$0xf]
    %v5629 = vld [vmem:[#allocation20 + $0x4c] sm:$0xf]
    %v5630 = vld [vmem:[#allocation20 + $0x50] sm:$0xf]
    %v5631 = vld [vmem:[#allocation20 + $0x54] sm:$0xf]
    %v5632 = vld [vmem:[#allocation20 + $0x58] sm:$0xf]
    %v5633 = vld [vmem:[#allocation20 + $0x5c] sm:$0xf]
    %v5634 = vpack.c.bf16 %v5608, %v5606
    %v5635 = vpack.c.bf16 %v5609, %v5607
    %v5636 = vld [vmem:[#allocation22] sm:$0xf]
    %v5637 = vld [vmem:[#allocation22 + $0x4] sm:$0xf]
    %v5638 = vld [vmem:[#allocation22 + $0x8] sm:$0xf]
    %v5639 = vld [vmem:[#allocation22 + $0xc] sm:$0xf]
    %v5640 = vld [vmem:[#allocation22 + $0x10] sm:$0xf]
    %v5641 = vld [vmem:[#allocation22 + $0x14] sm:$0xf]
    %v5642 = vld [vmem:[#allocation22 + $0x18] sm:$0xf]
    %v5643 = vld [vmem:[#allocation22 + $0x1c] sm:$0xf]
    %v5644 = vld [vmem:[#allocation22 + $0x20] sm:$0xf]
    %v5645 = vld [vmem:[#allocation22 + $0x24] sm:$0xf]
    %v5646 = vld [vmem:[#allocation22 + $0x28] sm:$0xf]
    %v5647 = vld [vmem:[#allocation22 + $0x2c] sm:$0xf]
    %v5648 = vld [vmem:[#allocation22 + $0x30] sm:$0xf]
    %v5649 = vld [vmem:[#allocation22 + $0x34] sm:$0xf]
    %v5650 = vld [vmem:[#allocation22 + $0x38] sm:$0xf]
    %v5651 = vld [vmem:[#allocation22 + $0x3c] sm:$0xf]
    %v5652 = vld [vmem:[#allocation22 + $0x40] sm:$0xf]
    %v5653 = vld [vmem:[#allocation22 + $0x44] sm:$0xf]
    %v5654 = vld [vmem:[#allocation22 + $0x48] sm:$0xf]
    %v5655 = vld [vmem:[#allocation22 + $0x4c] sm:$0xf]
    %v5676 = vunpack.c.l.b16 %v5636
    %v5677 = vunpack.c.l.b16 %v5637
    %v5678 = vunpack.c.l.b16 %v5638
    %v5679 = vunpack.c.l.b16 %v5639
    %v5680 = vunpack.c.l.b16 %v5640
    %v5681 = vunpack.c.l.b16 %v5641
    %v5682 = vunpack.c.l.b16 %v5642
    %v5683 = vunpack.c.l.b16 %v5643
    %v5684 = vunpack.c.l.b16 %v5644
    %v5685 = vunpack.c.l.b16 %v5645
    %v5686 = vunpack.c.l.b16 %v5646
    %v5687 = vunpack.c.l.b16 %v5647
    %v5688 = vunpack.c.l.b16 %v5648
    %v5689 = vunpack.c.l.b16 %v5649
    %v5690 = vunpack.c.l.b16 %v5650
    %v5691 = vunpack.c.l.b16 %v5651
    %v5692 = vunpack.c.l.b16 %v5652
    %v5693 = vunpack.c.l.b16 %v5653
    %v5694 = vunpack.c.l.b16 %v5654
    %v5695 = vunpack.c.l.b16 %v5655
    %v5696 = vpack.c.b16 %v5677, %v5676
    %v5697 = vpack.c.b16 %v5679, %v5678
    %v5698 = vpack.c.b16 %v5681, %v5680
    %v5699 = vpack.c.b16 %v5683, %v5682
    %v5700 = vpack.c.b16 %v5685, %v5684
    %v5701 = vpack.c.b16 %v5687, %v5686
    %v5702 = vpack.c.b16 %v5689, %v5688
    %v5703 = vpack.c.b16 %v5691, %v5690
    %v5704 = vpack.c.b16 %v5693, %v5692
    %v5705 = vpack.c.b16 %v5695, %v5694
    %5716 = vmatpush.bf16.msra.mxu0 %v5703
    %5717 = vmatpush.bf16.msra.mxu0 %v5702
    %5718 = vmatpush.bf16.msra.mxu0 %v5701
    %5719 = vmatpush.bf16.msra.mxu0 %v5700
    %5720 = vmatpush.bf16.msra.mxu0 %v5699
    %5721 = vmatpush.bf16.msra.mxu0 %v5698
    %5722 = vmatpush.bf16.msra.mxu0 %v5697
    %5723 = vmatpush.bf16.msra.mxu0 %v5696
    %5724 = vmatmul.bf16.gmra.mxu0 %v4075
    %v5725 = vpop.f32.mrf.mxu0
    %v5726 = vadd.f32 0.0, %v5725
    %v5727 = vpop.f32.mrf.mxu0
    %v5728 = vadd.f32 0.0, %v5727
    %5729 = vmatmul.bf16.gmra.mxu0 %v4077
    %v5730 = vpop.f32.mrf.mxu0
    %v5731 = vadd.f32 0.0, %v5730
    %v5732 = vpop.f32.mrf.mxu0
    %5733 = vdwg.mxu0
    %5734 = vmatpush.bf16.msra.mxu0 0
    %5735 = vmatpush.bf16.msra.mxu0 0
    %5736 = vmatpush.bf16.msra.mxu0 0
    %5737 = vmatpush.bf16.msra.mxu0 0
    %5738 = vmatpush.bf16.msra.mxu0 0
    %5739 = vmatpush.bf16.msra.mxu0 0
    %5740 = vmatpush.bf16.msra.mxu0 %v5705
    %5741 = vmatpush.bf16.msra.mxu0 %v5704
    %5742 = vmatmul.bf16.gmra.mxu0 %v4240
    %v5743 = vpop.f32.mrf.mxu0
    %v5744 = vadd.f32 %v5726, %v5743
    %v5745 = vpop.f32.mrf.mxu0
    %v5746 = vadd.f32 %v5728, %v5745
    %5747 = vmatmul.bf16.gmra.mxu0 %v4243
    %v5748 = vpop.f32.mrf.mxu0
    %v5749 = vadd.f32 %v5731, %v5748
    %v5750 = vpop.f32.mrf.mxu0
    %5751 = vdwg.mxu0
    %s5752 = scalar_lea.vmem [#allocation22], 80
    %v5753 = vld [vmem:[%s5752] sm:$0xf]
    %v5754 = vld [vmem:[%s5752 + $0x4] sm:$0xf]
    %v5755 = vld [vmem:[%s5752 + $0x8] sm:$0xf]
    %v5756 = vld [vmem:[%s5752 + $0xc] sm:$0xf]
    %v5757 = vld [vmem:[%s5752 + $0x10] sm:$0xf]
    %v5758 = vld [vmem:[%s5752 + $0x14] sm:$0xf]
    %v5759 = vld [vmem:[%s5752 + $0x18] sm:$0xf]
    %v5760 = vld [vmem:[%s5752 + $0x1c] sm:$0xf]
    %v5761 = vld [vmem:[%s5752 + $0x20] sm:$0xf]
    %v5762 = vld [vmem:[%s5752 + $0x24] sm:$0xf]
    %v5763 = vld [vmem:[%s5752 + $0x28] sm:$0xf]
    %v5764 = vld [vmem:[%s5752 + $0x2c] sm:$0xf]
    %v5765 = vld [vmem:[%s5752 + $0x30] sm:$0xf]
    %v5766 = vld [vmem:[%s5752 + $0x34] sm:$0xf]
    %v5767 = vld [vmem:[%s5752 + $0x38] sm:$0xf]
    %v5768 = vld [vmem:[%s5752 + $0x3c] sm:$0xf]
    %v5769 = vld [vmem:[%s5752 + $0x40] sm:$0xf]
    %v5770 = vld [vmem:[%s5752 + $0x44] sm:$0xf]
    %v5771 = vld [vmem:[%s5752 + $0x48] sm:$0xf]
    %v5772 = vld [vmem:[%s5752 + $0x4c] sm:$0xf]
    %v5793 = vunpack.c.l.b16 %v5753
    %v5794 = vunpack.c.l.b16 %v5754
    %v5795 = vunpack.c.l.b16 %v5755
    %v5796 = vunpack.c.l.b16 %v5756
    %v5797 = vunpack.c.l.b16 %v5757
    %v5798 = vunpack.c.l.b16 %v5758
    %v5799 = vunpack.c.l.b16 %v5759
    %v5800 = vunpack.c.l.b16 %v5760
    %v5801 = vunpack.c.l.b16 %v5761
    %v5802 = vunpack.c.l.b16 %v5762
    %v5803 = vunpack.c.l.b16 %v5763
    %v5804 = vunpack.c.l.b16 %v5764
    %v5805 = vunpack.c.l.b16 %v5765
    %v5806 = vunpack.c.l.b16 %v5766
    %v5807 = vunpack.c.l.b16 %v5767
    %v5808 = vunpack.c.l.b16 %v5768
    %v5809 = vunpack.c.l.b16 %v5769
    %v5810 = vunpack.c.l.b16 %v5770
    %v5811 = vunpack.c.l.b16 %v5771
    %v5812 = vunpack.c.l.b16 %v5772
    %v5813 = vpack.c.b16 %v5794, %v5793
    %v5814 = vpack.c.b16 %v5796, %v5795
    %v5815 = vpack.c.b16 %v5798, %v5797
    %v5816 = vpack.c.b16 %v5800, %v5799
    %v5817 = vpack.c.b16 %v5802, %v5801
    %v5818 = vpack.c.b16 %v5804, %v5803
    %v5819 = vpack.c.b16 %v5806, %v5805
    %v5820 = vpack.c.b16 %v5808, %v5807
    %v5821 = vpack.c.b16 %v5810, %v5809
    %v5822 = vpack.c.b16 %v5812, %v5811
    %5833 = vmatpush.bf16.msra.mxu0 %v5820
    %5834 = vmatpush.bf16.msra.mxu0 %v5819
    %5835 = vmatpush.bf16.msra.mxu0 %v5818
    %5836 = vmatpush.bf16.msra.mxu0 %v5817
    %5837 = vmatpush.bf16.msra.mxu0 %v5816
    %5838 = vmatpush.bf16.msra.mxu0 %v5815
    %5839 = vmatpush.bf16.msra.mxu0 %v5814
    %5840 = vmatpush.bf16.msra.mxu0 %v5813
    %5841 = vmatmul.bf16.gmra.mxu0 %v4075
    %v5842 = vpop.f32.mrf.mxu0
    %v5843 = vadd.f32 0.0, %v5842
    %v5844 = vpop.f32.mrf.mxu0
    %v5845 = vadd.f32 0.0, %v5844
    %5846 = vmatmul.bf16.gmra.mxu0 %v4077
    %v5847 = vpop.f32.mrf.mxu0
    %v5848 = vadd.f32 0.0, %v5847
    %v5849 = vpop.f32.mrf.mxu0
    %5850 = vdwg.mxu0
    %5851 = vmatpush.bf16.msra.mxu0 0
    %5852 = vmatpush.bf16.msra.mxu0 0
    %5853 = vmatpush.bf16.msra.mxu0 0
    %5854 = vmatpush.bf16.msra.mxu0 0
    %5855 = vmatpush.bf16.msra.mxu0 0
    %5856 = vmatpush.bf16.msra.mxu0 0
    %5857 = vmatpush.bf16.msra.mxu0 %v5822
    %5858 = vmatpush.bf16.msra.mxu0 %v5821
    %5859 = vmatmul.bf16.gmra.mxu0 %v4240
    %v5860 = vpop.f32.mrf.mxu0
    %v5861 = vadd.f32 %v5843, %v5860
    %v5862 = vpop.f32.mrf.mxu0
    %v5863 = vadd.f32 %v5845, %v5862
    %5864 = vmatmul.bf16.gmra.mxu0 %v4243
    %v5865 = vpop.f32.mrf.mxu0
    %v5866 = vadd.f32 %v5848, %v5865
    %v5867 = vpop.f32.mrf.mxu0
    %5868 = vdwg.mxu0
    %v5870 = vsel %vm555, %v5866, 0
    %5872 = vmatpush.msra.mxu0 0.0
    %5873 = vmatpush.msra.mxu0 0.0
    %5874 = vmatpush.msra.mxu0 0.0
    %5875 = vmatpush.msra.mxu0 0.0
    %5876 = vmatpush.msra.mxu0 0.0
    %5877 = vmatpush.msra.mxu0 0.0
    %5878 = vmatpush.msra.mxu0 0.0
    %5879 = vmatpush.msra.mxu0 0.0
    %5880 = vmatpush.msra.mxu0 0.0
    %5881 = vmatpush.msra.mxu0 0.0
    %5882 = vmatpush.msra.mxu0 0.0
    %5883 = vmatpush.msra.mxu0 0.0
    %5884 = vmatpush.msra.mxu0 0.0
    %5885 = vmatpush.msra.mxu0 %v5870
    %5886 = vmatpush.msra.mxu0 %v5863
    %5887 = vmatpush.msra.mxu0 %v5861
    %5888 = vmatmul.f32.gmra.mxu0 %v5077
    %v5889 = vpop.f32.mrf.mxu0
    %v5890 = vadd.f32 0.0, %v5889
    %5891 = vmatmul.f32.gmra.mxu0 %v5080
    %v5892 = vpop.f32.mrf.mxu0
    %v5893 = vadd.f32 0.0, %v5892
    %5894 = vdwg.mxu0
    %v5896 = vsel %vm555, %v5749, 0
    %5898 = vmatpush.msra.mxu0 0.0
    %5899 = vmatpush.msra.mxu0 0.0
    %5900 = vmatpush.msra.mxu0 0.0
    %5901 = vmatpush.msra.mxu0 0.0
    %5902 = vmatpush.msra.mxu0 0.0
    %5903 = vmatpush.msra.mxu0 0.0
    %5904 = vmatpush.msra.mxu0 0.0
    %5905 = vmatpush.msra.mxu0 0.0
    %5906 = vmatpush.msra.mxu0 0.0
    %5907 = vmatpush.msra.mxu0 0.0
    %5908 = vmatpush.msra.mxu0 0.0
    %5909 = vmatpush.msra.mxu0 0.0
    %5910 = vmatpush.msra.mxu0 0.0
    %5911 = vmatpush.msra.mxu0 %v5896
    %5912 = vmatpush.msra.mxu0 %v5746
    %5913 = vmatpush.msra.mxu0 %v5744
    %5914 = vmatmul.f32.gmra.mxu0 %v5135
    %v5915 = vpop.f32.mrf.mxu0
    %v5916 = vadd.f32 %v5890, %v5915
    %5917 = vmatmul.f32.gmra.mxu0 %v5138
    %v5918 = vpop.f32.mrf.mxu0
    %v5919 = vadd.f32 %v5893, %v5918
    %5920 = vdwg.mxu0
    %s5921 = scalar_lea.vmem [#allocation22], 160
    %v5922 = vld [vmem:[%s5921] sm:$0xf]
    %v5923 = vld [vmem:[%s5921 + $0x4] sm:$0xf]
    %v5924 = vld [vmem:[%s5921 + $0x8] sm:$0xf]
    %v5925 = vld [vmem:[%s5921 + $0xc] sm:$0xf]
    %v5926 = vld [vmem:[%s5921 + $0x10] sm:$0xf]
    %v5927 = vld [vmem:[%s5921 + $0x14] sm:$0xf]
    %v5928 = vld [vmem:[%s5921 + $0x18] sm:$0xf]
    %v5929 = vld [vmem:[%s5921 + $0x1c] sm:$0xf]
    %v5930 = vld [vmem:[%s5921 + $0x20] sm:$0xf]
    %v5931 = vld [vmem:[%s5921 + $0x24] sm:$0xf]
    %v5932 = vld [vmem:[%s5921 + $0x28] sm:$0xf]
    %v5933 = vld [vmem:[%s5921 + $0x2c] sm:$0xf]
    %v5934 = vld [vmem:[%s5921 + $0x30] sm:$0xf]
    %v5935 = vld [vmem:[%s5921 + $0x34] sm:$0xf]
    %v5936 = vld [vmem:[%s5921 + $0x38] sm:$0xf]
    %v5937 = vld [vmem:[%s5921 + $0x3c] sm:$0xf]
    %v5938 = vld [vmem:[%s5921 + $0x40] sm:$0xf]
    %v5939 = vld [vmem:[%s5921 + $0x44] sm:$0xf]
    %v5940 = vld [vmem:[%s5921 + $0x48] sm:$0xf]
    %v5941 = vld [vmem:[%s5921 + $0x4c] sm:$0xf]
    %v5962 = vunpack.c.l.b16 %v5922
    %v5963 = vunpack.c.l.b16 %v5923
    %v5964 = vunpack.c.l.b16 %v5924
    %v5965 = vunpack.c.l.b16 %v5925
    %v5966 = vunpack.c.l.b16 %v5926
    %v5967 = vunpack.c.l.b16 %v5927
    %v5968 = vunpack.c.l.b16 %v5928
    %v5969 = vunpack.c.l.b16 %v5929
    %v5970 = vunpack.c.l.b16 %v5930
    %v5971 = vunpack.c.l.b16 %v5931
    %v5972 = vunpack.c.l.b16 %v5932
    %v5973 = vunpack.c.l.b16 %v5933
    %v5974 = vunpack.c.l.b16 %v5934
    %v5975 = vunpack.c.l.b16 %v5935
    %v5976 = vunpack.c.l.b16 %v5936
    %v5977 = vunpack.c.l.b16 %v5937
    %v5978 = vunpack.c.l.b16 %v5938
    %v5979 = vunpack.c.l.b16 %v5939
    %v5980 = vunpack.c.l.b16 %v5940
    %v5981 = vunpack.c.l.b16 %v5941
    %v5982 = vpack.c.b16 %v5963, %v5962
    %v5983 = vpack.c.b16 %v5965, %v5964
    %v5984 = vpack.c.b16 %v5967, %v5966
    %v5985 = vpack.c.b16 %v5969, %v5968
    %v5986 = vpack.c.b16 %v5971, %v5970
    %v5987 = vpack.c.b16 %v5973, %v5972
    %v5988 = vpack.c.b16 %v5975, %v5974
    %v5989 = vpack.c.b16 %v5977, %v5976
    %v5990 = vpack.c.b16 %v5979, %v5978
    %v5991 = vpack.c.b16 %v5981, %v5980
    %6002 = vmatpush.bf16.msra.mxu0 %v5989
    %6003 = vmatpush.bf16.msra.mxu0 %v5988
    %6004 = vmatpush.bf16.msra.mxu0 %v5987
    %6005 = vmatpush.bf16.msra.mxu0 %v5986
    %6006 = vmatpush.bf16.msra.mxu0 %v5985
    %6007 = vmatpush.bf16.msra.mxu0 %v5984
    %6008 = vmatpush.bf16.msra.mxu0 %v5983
    %6009 = vmatpush.bf16.msra.mxu0 %v5982
    %6010 = vmatmul.bf16.gmra.mxu0 %v4075
    %v6011 = vpop.f32.mrf.mxu0
    %v6012 = vadd.f32 0.0, %v6011
    %v6013 = vpop.f32.mrf.mxu0
    %v6014 = vadd.f32 0.0, %v6013
    %6015 = vmatmul.bf16.gmra.mxu0 %v4077
    %v6016 = vpop.f32.mrf.mxu0
    %v6017 = vadd.f32 0.0, %v6016
    %v6018 = vpop.f32.mrf.mxu0
    %6019 = vdwg.mxu0
    %6020 = vmatpush.bf16.msra.mxu0 0
    %6021 = vmatpush.bf16.msra.mxu0 0
    %6022 = vmatpush.bf16.msra.mxu0 0
    %6023 = vmatpush.bf16.msra.mxu0 0
    %6024 = vmatpush.bf16.msra.mxu0 0
    %6025 = vmatpush.bf16.msra.mxu0 0
    %6026 = vmatpush.bf16.msra.mxu0 %v5991
    %6027 = vmatpush.bf16.msra.mxu0 %v5990
    %6028 = vmatmul.bf16.gmra.mxu0 %v4240
    %v6029 = vpop.f32.mrf.mxu0
    %v6030 = vadd.f32 %v6012, %v6029
    %v6031 = vpop.f32.mrf.mxu0
    %v6032 = vadd.f32 %v6014, %v6031
    %6033 = vmatmul.bf16.gmra.mxu0 %v4243
    %v6034 = vpop.f32.mrf.mxu0
    %v6035 = vadd.f32 %v6017, %v6034
    %v6036 = vpop.f32.mrf.mxu0
    %6037 = vdwg.mxu0
    %v6039 = vsel %vm555, %v6035, 0
    %6041 = vmatpush.msra.mxu0 0.0
    %6042 = vmatpush.msra.mxu0 0.0
    %6043 = vmatpush.msra.mxu0 0.0
    %6044 = vmatpush.msra.mxu0 0.0
    %6045 = vmatpush.msra.mxu0 0.0
    %6046 = vmatpush.msra.mxu0 0.0
    %6047 = vmatpush.msra.mxu0 0.0
    %6048 = vmatpush.msra.mxu0 0.0
    %6049 = vmatpush.msra.mxu0 0.0
    %6050 = vmatpush.msra.mxu0 0.0
    %6051 = vmatpush.msra.mxu0 0.0
    %6052 = vmatpush.msra.mxu0 0.0
    %6053 = vmatpush.msra.mxu0 0.0
    %6054 = vmatpush.msra.mxu0 %v6039
    %6055 = vmatpush.msra.mxu0 %v6032
    %6056 = vmatpush.msra.mxu0 %v6030
    %6057 = vmatmul.f32.gmra.mxu0 %v5545
    %v6058 = vpop.f32.mrf.mxu0
    %v6059 = vadd.f32 0.0, %v6058
    %6060 = vmatmul.f32.gmra.mxu0 %v5548
    %v6061 = vpop.f32.mrf.mxu0
    %v6062 = vadd.f32 0.0, %v6061
    %6063 = vdwg.mxu0
    %v6064 = vadd.f32 %v5916, %v6059
    %v6065 = vadd.f32 %v5919, %v6062
    %v6090 = vunpack.c.l.b16 %v5610
    %v6091 = vunpack.c.l.b16 %v5611
    %v6092 = vunpack.c.l.b16 %v5612
    %v6093 = vunpack.c.l.b16 %v5613
    %v6094 = vunpack.c.l.b16 %v5614
    %v6095 = vunpack.c.l.b16 %v5615
    %v6096 = vunpack.c.l.b16 %v5616
    %v6097 = vunpack.c.l.b16 %v5617
    %v6098 = vunpack.c.l.b16 %v5618
    %v6099 = vunpack.c.l.b16 %v5619
    %v6100 = vunpack.c.l.b16 %v5620
    %v6101 = vunpack.c.l.b16 %v5621
    %v6102 = vunpack.c.l.b16 %v5622
    %v6103 = vunpack.c.l.b16 %v5623
    %v6104 = vunpack.c.l.b16 %v5624
    %v6105 = vunpack.c.l.b16 %v5625
    %v6106 = vunpack.c.l.b16 %v5626
    %v6107 = vunpack.c.l.b16 %v5627
    %v6108 = vunpack.c.l.b16 %v5628
    %v6109 = vunpack.c.l.b16 %v5629
    %v6110 = vunpack.c.l.b16 %v5630
    %v6111 = vunpack.c.l.b16 %v5631
    %v6112 = vunpack.c.l.b16 %v5632
    %v6113 = vunpack.c.l.b16 %v5633
    %v6114 = vpack.c.b16 %v6091, %v6090
    %v6115 = vpack.c.b16 %v6093, %v6092
    %v6116 = vpack.c.b16 %v6095, %v6094
    %v6117 = vpack.c.b16 %v6097, %v6096
    %v6118 = vpack.c.b16 %v6099, %v6098
    %v6119 = vpack.c.b16 %v6101, %v6100
    %v6120 = vpack.c.b16 %v6103, %v6102
    %v6121 = vpack.c.b16 %v6105, %v6104
    %v6122 = vpack.c.b16 %v6107, %v6106
    %v6123 = vpack.c.b16 %v6109, %v6108
    %v6124 = vpack.c.b16 %v6111, %v6110
    %v6125 = vpack.c.b16 %v6113, %v6112
    %v6139 = vsel %vm2056, %v5635, 0
    %6141 = vmatpush.bf16.msra.mxu0 %v6121
    %6142 = vmatpush.bf16.msra.mxu0 %v6120
    %6143 = vmatpush.bf16.msra.mxu0 %v6119
    %6144 = vmatpush.bf16.msra.mxu0 %v6118
    %6145 = vmatpush.bf16.msra.mxu0 %v6117
    %6146 = vmatpush.bf16.msra.mxu0 %v6116
    %6147 = vmatpush.bf16.msra.mxu0 %v6115
    %6148 = vmatpush.bf16.msra.mxu0 %v6114
    %6149 = vmatmul.bf16.gmra.mxu0 %v5634
    %v6150 = vpop.f32.mrf.mxu0
    %v6151 = vadd.f32 %v6064, %v6150
    %v6152 = vpop.f32.mrf.mxu0
    %v6153 = vadd.f32 %v6065, %v6152
    %6154 = vdwg.mxu0
    %6155 = vmatpush.bf16.msra.mxu0 0
    %6156 = vmatpush.bf16.msra.mxu0 0
    %6157 = vmatpush.bf16.msra.mxu0 0
    %6158 = vmatpush.bf16.msra.mxu0 0
    %6159 = vmatpush.bf16.msra.mxu0 %v6125
    %6160 = vmatpush.bf16.msra.mxu0 %v6124
    %6161 = vmatpush.bf16.msra.mxu0 %v6123
    %6162 = vmatpush.bf16.msra.mxu0 %v6122
    %6163 = vmatmul.bf16.gmra.mxu0 %v6139
    %v6164 = vpop.f32.mrf.mxu0
    %v6165 = vadd.f32 %v6151, %v6164
    %v6166 = vpop.f32.mrf.mxu0
    %v6167 = vadd.f32 %v6153, %v6166
    %6168 = vdwg.mxu0
    %v6169 = vmax.f32 %v6165, 0.0
    %v6170 = vmax.f32 %v6167, 0.0
    %v6171 = vld [vmem:[#allocation23] sm:$0xff]
    %v6172 = vld [vmem:[#allocation23 + $0x8] sm:$0xff]
    %v6173 = vld [vmem:[#allocation23 + $0x10] sm:$0xff]
    %v6174 = vld [vmem:[#allocation23 + $0x18] sm:$0xff]
    %v6175 = vld [vmem:[#allocation23 + $0x20] sm:$0xff]
    %v6176 = vld [vmem:[#allocation23 + $0x28] sm:$0xff]
    %v6177 = vld [vmem:[#allocation23 + $0x30] sm:$0xff]
    %v6178 = vld [vmem:[#allocation23 + $0x38] sm:$0xff]
    %v6179 = vld [vmem:[#allocation23 + $0x40] sm:$0xff]
    %v6180 = vld [vmem:[#allocation23 + $0x48] sm:$0xff]
    %v6181 = vld [vmem:[#allocation23 + $0x50] sm:$0xff]
    %v6182 = vld [vmem:[#allocation23 + $0x58] sm:$0xff]
    %v6183 = vpack.c.bf16 %v6170, %v6169
    %v6196 = vunpack.c.l.b16 %v6171
    %v6197 = vunpack.c.h.b16 %v6171
    %v6198 = vunpack.c.l.b16 %v6172
    %v6199 = vunpack.c.h.b16 %v6172
    %v6200 = vunpack.c.l.b16 %v6173
    %v6201 = vunpack.c.h.b16 %v6173
    %v6202 = vunpack.c.l.b16 %v6174
    %v6203 = vunpack.c.h.b16 %v6174
    %v6204 = vunpack.c.l.b16 %v6175
    %v6205 = vunpack.c.h.b16 %v6175
    %v6206 = vunpack.c.l.b16 %v6176
    %v6207 = vunpack.c.h.b16 %v6176
    %v6208 = vunpack.c.l.b16 %v6177
    %v6209 = vunpack.c.h.b16 %v6177
    %v6210 = vunpack.c.l.b16 %v6178
    %v6211 = vunpack.c.h.b16 %v6178
    %v6212 = vunpack.c.l.b16 %v6179
    %v6213 = vunpack.c.h.b16 %v6179
    %v6214 = vunpack.c.l.b16 %v6180
    %v6215 = vunpack.c.h.b16 %v6180
    %v6216 = vunpack.c.l.b16 %v6181
    %v6217 = vunpack.c.h.b16 %v6181
    %v6218 = vunpack.c.l.b16 %v6182
    %v6219 = vunpack.c.h.b16 %v6182
    %v6220 = vpack.c.b16 %v6198, %v6196
    %v6221 = vpack.c.b16 %v6199, %v6197
    %v6222 = vpack.c.b16 %v6202, %v6200
    %v6223 = vpack.c.b16 %v6203, %v6201
    %v6224 = vpack.c.b16 %v6206, %v6204
    %v6225 = vpack.c.b16 %v6207, %v6205
    %v6226 = vpack.c.b16 %v6210, %v6208
    %v6227 = vpack.c.b16 %v6211, %v6209
    %v6228 = vpack.c.b16 %v6214, %v6212
    %v6229 = vpack.c.b16 %v6215, %v6213
    %v6230 = vpack.c.b16 %v6218, %v6216
    %v6231 = vpack.c.b16 %v6219, %v6217
    %vm6244 = vcmask 785408
    %v6246 = vsel %vm6244, %v6183, 0
    %6248 = vmatpush.bf16.msra.mxu0 0
    %6249 = vmatpush.bf16.msra.mxu0 0
    %6250 = vmatpush.bf16.msra.mxu0 %v6230
    %6251 = vmatpush.bf16.msra.mxu0 %v6228
    %6252 = vmatpush.bf16.msra.mxu0 %v6226
    %6253 = vmatpush.bf16.msra.mxu0 %v6224
    %6254 = vmatpush.bf16.msra.mxu0 %v6222
    %6255 = vmatpush.bf16.msra.mxu0 %v6220
    %6256 = vmatmul.bf16.gmra.mxu0 %v6246
    %v6257 = vpop.f32.mrf.mxu0
    %v6258 = vadd.f32 0.0, %v6257
    %v6259 = vpop.f32.mrf.mxu0
    %v6260 = vadd.f32 0.0, %v6259
    %6261 = vdwg.mxu0
    %6262 = vmatpush.bf16.msra.mxu0 0
    %6263 = vmatpush.bf16.msra.mxu0 0
    %6264 = vmatpush.bf16.msra.mxu0 %v6231
    %6265 = vmatpush.bf16.msra.mxu0 %v6229
    %6266 = vmatpush.bf16.msra.mxu0 %v6227
    %6267 = vmatpush.bf16.msra.mxu0 %v6225
    %6268 = vmatpush.bf16.msra.mxu0 %v6223
    %6269 = vmatpush.bf16.msra.mxu0 %v6221
    %6270 = vmatmul.bf16.gmra.mxu0 %v6246
    %v6271 = vpop.f32.mrf.mxu0
    %v6272 = vadd.f32 0.0, %v6271
    %v6273 = vpop.f32.mrf.mxu0
    %v6274 = vadd.f32 0.0, %v6273
    %6275 = vdwg.mxu0
    %v6276 = vmax.f32 %v6258, 0.0
    %v6277 = vmax.f32 %v6272, 0.0
    %v6278 = vmax.f32 %v6260, 0.0
    %v6279 = vmax.f32 %v6274, 0.0
    %v6280 = vpack.c.bf16 %v6278, %v6276
    %v6281 = vpack.c.bf16 %v6279, %v6277
    %v6282 = vld [vmem:[#allocation26] sm:$0xff]
    %v6283 = vld [vmem:[#allocation26 + $0x8] sm:$0xff]
    %v6284 = vld [vmem:[#allocation26 + $0x10] sm:$0xff]
    %v6285 = vld [vmem:[#allocation26 + $0x18] sm:$0xff]
    %v6286 = vld [vmem:[#allocation26 + $0x20] sm:$0xff]
    %v6287 = vld [vmem:[#allocation26 + $0x28] sm:$0xff]
    %v6288 = vld [vmem:[#allocation26 + $0x30] sm:$0xff]
    %v6289 = vld [vmem:[#allocation26 + $0x38] sm:$0xff]
    %v6290 = vld [vmem:[#allocation26 + $0x40] sm:$0xff]
    %v6291 = vld [vmem:[#allocation26 + $0x48] sm:$0xff]
    %v6292 = vld [vmem:[#allocation26 + $0x50] sm:$0xff]
    %v6293 = vld [vmem:[#allocation26 + $0x58] sm:$0xff]
    %v6294 = vld [vmem:[#allocation26 + $0x60] sm:$0xff]
    %v6295 = vld [vmem:[#allocation26 + $0x68] sm:$0xff]
    %v6296 = vld [vmem:[#allocation26 + $0x70] sm:$0xff]
    %v6297 = vld [vmem:[#allocation26 + $0x78] sm:$0xff]
    %v6298 = vld [vmem:[#allocation26 + $0x80] sm:$0xff]
    %v6299 = vld [vmem:[#allocation26 + $0x88] sm:$0xff]
    %v6300 = vld [vmem:[#allocation26 + $0x90] sm:$0xff]
    %v6301 = vld [vmem:[#allocation26 + $0x98] sm:$0xff]
    %v6302 = vld [vmem:[#allocation26 + $0xa0] sm:$0xff]
    %v6303 = vld [vmem:[#allocation26 + $0xa8] sm:$0xff]
    %v6304 = vld [vmem:[#allocation26 + $0xb0] sm:$0xff]
    %v6305 = vld [vmem:[#allocation26 + $0xb8] sm:$0xff]
    %v6330 = vunpack.c.l.b16 %v6282
    %v6331 = vunpack.c.h.b16 %v6282
    %v6332 = vunpack.c.l.b16 %v6283
    %v6333 = vunpack.c.h.b16 %v6283
    %v6334 = vunpack.c.l.b16 %v6284
    %v6335 = vunpack.c.h.b16 %v6284
    %v6336 = vunpack.c.l.b16 %v6285
    %v6337 = vunpack.c.h.b16 %v6285
    %v6338 = vunpack.c.l.b16 %v6286
    %v6339 = vunpack.c.h.b16 %v6286
    %v6340 = vunpack.c.l.b16 %v6287
    %v6341 = vunpack.c.h.b16 %v6287
    %v6342 = vunpack.c.l.b16 %v6288
    %v6343 = vunpack.c.h.b16 %v6288
    %v6344 = vunpack.c.l.b16 %v6289
    %v6345 = vunpack.c.h.b16 %v6289
    %v6346 = vunpack.c.l.b16 %v6290
    %v6347 = vunpack.c.h.b16 %v6290
    %v6348 = vunpack.c.l.b16 %v6291
    %v6349 = vunpack.c.h.b16 %v6291
    %v6350 = vunpack.c.l.b16 %v6292
    %v6351 = vunpack.c.h.b16 %v6292
    %v6352 = vunpack.c.l.b16 %v6293
    %v6353 = vunpack.c.h.b16 %v6293
    %v6354 = vunpack.c.l.b16 %v6294
    %v6355 = vunpack.c.h.b16 %v6294
    %v6356 = vunpack.c.l.b16 %v6295
    %v6357 = vunpack.c.h.b16 %v6295
    %v6358 = vunpack.c.l.b16 %v6296
    %v6359 = vunpack.c.h.b16 %v6296
    %v6360 = vunpack.c.l.b16 %v6297
    %v6361 = vunpack.c.h.b16 %v6297
    %v6362 = vunpack.c.l.b16 %v6298
    %v6363 = vunpack.c.h.b16 %v6298
    %v6364 = vunpack.c.l.b16 %v6299
    %v6365 = vunpack.c.h.b16 %v6299
    %v6366 = vunpack.c.l.b16 %v6300
    %v6367 = vunpack.c.h.b16 %v6300
    %v6368 = vunpack.c.l.b16 %v6301
    %v6369 = vunpack.c.h.b16 %v6301
    %v6370 = vunpack.c.l.b16 %v6302
    %v6371 = vunpack.c.h.b16 %v6302
    %v6372 = vunpack.c.l.b16 %v6303
    %v6373 = vunpack.c.h.b16 %v6303
    %v6374 = vunpack.c.l.b16 %v6304
    %v6375 = vunpack.c.h.b16 %v6304
    %v6376 = vunpack.c.l.b16 %v6305
    %v6377 = vunpack.c.h.b16 %v6305
    %v6378 = vpack.c.b16 %v6332, %v6330
    %v6379 = vpack.c.b16 %v6333, %v6331
    %v6380 = vpack.c.b16 %v6336, %v6334
    %v6381 = vpack.c.b16 %v6337, %v6335
    %v6382 = vpack.c.b16 %v6340, %v6338
    %v6383 = vpack.c.b16 %v6341, %v6339
    %v6384 = vpack.c.b16 %v6344, %v6342
    %v6385 = vpack.c.b16 %v6345, %v6343
    %v6386 = vpack.c.b16 %v6348, %v6346
    %v6387 = vpack.c.b16 %v6349, %v6347
    %v6388 = vpack.c.b16 %v6352, %v6350
    %v6389 = vpack.c.b16 %v6353, %v6351
    %v6390 = vpack.c.b16 %v6356, %v6354
    %v6391 = vpack.c.b16 %v6357, %v6355
    %v6392 = vpack.c.b16 %v6360, %v6358
    %v6393 = vpack.c.b16 %v6361, %v6359
    %v6394 = vpack.c.b16 %v6364, %v6362
    %v6395 = vpack.c.b16 %v6365, %v6363
    %v6396 = vpack.c.b16 %v6368, %v6366
    %v6397 = vpack.c.b16 %v6369, %v6367
    %v6398 = vpack.c.b16 %v6372, %v6370
    %v6399 = vpack.c.b16 %v6373, %v6371
    %v6400 = vpack.c.b16 %v6376, %v6374
    %v6401 = vpack.c.b16 %v6377, %v6375
    %v6427 = vsel %vm2056, %v6281, 0
    %6429 = vmatpush.bf16.msra.mxu0 %v6392
    %6430 = vmatpush.bf16.msra.mxu0 %v6390
    %6431 = vmatpush.bf16.msra.mxu0 %v6388
    %6432 = vmatpush.bf16.msra.mxu0 %v6386
    %6433 = vmatpush.bf16.msra.mxu0 %v6384
    %6434 = vmatpush.bf16.msra.mxu0 %v6382
    %6435 = vmatpush.bf16.msra.mxu0 %v6380
    %6436 = vmatpush.bf16.msra.mxu0 %v6378
    %6437 = vmatmul.bf16.gmra.mxu0 %v6280
    %v6438 = vpop.f32.mrf.mxu0
    %v6439 = vadd.f32 0.0, %v6438
    %v6440 = vpop.f32.mrf.mxu0
    %v6441 = vadd.f32 0.0, %v6440
    %6442 = vdwg.mxu0
    %6443 = vmatpush.bf16.msra.mxu0 0
    %6444 = vmatpush.bf16.msra.mxu0 0
    %6445 = vmatpush.bf16.msra.mxu0 0
    %6446 = vmatpush.bf16.msra.mxu0 0
    %6447 = vmatpush.bf16.msra.mxu0 %v6400
    %6448 = vmatpush.bf16.msra.mxu0 %v6398
    %6449 = vmatpush.bf16.msra.mxu0 %v6396
    %6450 = vmatpush.bf16.msra.mxu0 %v6394
    %6451 = vmatmul.bf16.gmra.mxu0 %v6427
    %v6452 = vpop.f32.mrf.mxu0
    %v6453 = vadd.f32 %v6439, %v6452
    %v6454 = vpop.f32.mrf.mxu0
    %v6455 = vadd.f32 %v6441, %v6454
    %6456 = vdwg.mxu0
    %6457 = vmatpush.bf16.msra.mxu0 %v6393
    %6458 = vmatpush.bf16.msra.mxu0 %v6391
    %6459 = vmatpush.bf16.msra.mxu0 %v6389
    %6460 = vmatpush.bf16.msra.mxu0 %v6387
    %6461 = vmatpush.bf16.msra.mxu0 %v6385
    %6462 = vmatpush.bf16.msra.mxu0 %v6383
    %6463 = vmatpush.bf16.msra.mxu0 %v6381
    %6464 = vmatpush.bf16.msra.mxu0 %v6379
    %6465 = vmatmul.bf16.gmra.mxu0 %v6280
    %v6466 = vpop.f32.mrf.mxu0
    %v6467 = vadd.f32 0.0, %v6466
    %v6468 = vpop.f32.mrf.mxu0
    %v6469 = vadd.f32 0.0, %v6468
    %6470 = vdwg.mxu0
    %6471 = vmatpush.bf16.msra.mxu0 0
    %6472 = vmatpush.bf16.msra.mxu0 0
    %6473 = vmatpush.bf16.msra.mxu0 0
    %6474 = vmatpush.bf16.msra.mxu0 0
    %6475 = vmatpush.bf16.msra.mxu0 %v6401
    %6476 = vmatpush.bf16.msra.mxu0 %v6399
    %6477 = vmatpush.bf16.msra.mxu0 %v6397
    %6478 = vmatpush.bf16.msra.mxu0 %v6395
    %6479 = vmatmul.bf16.gmra.mxu0 %v6427
    %v6480 = vpop.f32.mrf.mxu0
    %v6481 = vadd.f32 %v6467, %v6480
    %v6482 = vpop.f32.mrf.mxu0
    %v6483 = vadd.f32 %v6469, %v6482
    %6484 = vdwg.mxu0
    %v6485 = vld [vmem:[#allocation25] sm:$0xff]
    %v6486 = vld [vmem:[#allocation25 + $0x8] sm:$0xf]
    %s6487 = scalar_lea.vmem [#allocation26], 192
    %v6488 = vld [vmem:[%s6487] sm:$0xff]
    %v6489 = vld [vmem:[%s6487 + $0x8] sm:$0xff]
    %v6490 = vld [vmem:[%s6487 + $0x10] sm:$0xff]
    %v6491 = vld [vmem:[%s6487 + $0x18] sm:$0xff]
    %v6492 = vld [vmem:[%s6487 + $0x20] sm:$0xff]
    %v6493 = vld [vmem:[%s6487 + $0x28] sm:$0xff]
    %v6494 = vld [vmem:[%s6487 + $0x30] sm:$0xff]
    %v6495 = vld [vmem:[%s6487 + $0x38] sm:$0xff]
    %v6496 = vld [vmem:[%s6487 + $0x40] sm:$0xff]
    %v6497 = vld [vmem:[%s6487 + $0x48] sm:$0xff]
    %v6498 = vld [vmem:[%s6487 + $0x50] sm:$0xff]
    %v6499 = vld [vmem:[%s6487 + $0x58] sm:$0xff]
    %v6500 = vld [vmem:[%s6487 + $0x60] sm:$0xff]
    %v6501 = vld [vmem:[%s6487 + $0x68] sm:$0xff]
    %v6502 = vld [vmem:[%s6487 + $0x70] sm:$0xff]
    %v6503 = vld [vmem:[%s6487 + $0x78] sm:$0xff]
    %v6504 = vld [vmem:[%s6487 + $0x80] sm:$0xff]
    %v6505 = vld [vmem:[%s6487 + $0x88] sm:$0xff]
    %v6506 = vld [vmem:[%s6487 + $0x90] sm:$0xff]
    %v6507 = vld [vmem:[%s6487 + $0x98] sm:$0xff]
    %v6508 = vld [vmem:[%s6487 + $0xa0] sm:$0xff]
    %v6509 = vld [vmem:[%s6487 + $0xa8] sm:$0xff]
    %v6510 = vld [vmem:[%s6487 + $0xb0] sm:$0xff]
    %v6511 = vld [vmem:[%s6487 + $0xb8] sm:$0xff]
    %v6536 = vunpack.c.l.b16 %v6488
    %v6537 = vunpack.c.h.b16 %v6488
    %v6538 = vunpack.c.l.b16 %v6489
    %v6539 = vunpack.c.h.b16 %v6489
    %v6540 = vunpack.c.l.b16 %v6490
    %v6541 = vunpack.c.h.b16 %v6490
    %v6542 = vunpack.c.l.b16 %v6491
    %v6543 = vunpack.c.h.b16 %v6491
    %v6544 = vunpack.c.l.b16 %v6492
    %v6545 = vunpack.c.h.b16 %v6492
    %v6546 = vunpack.c.l.b16 %v6493
    %v6547 = vunpack.c.h.b16 %v6493
    %v6548 = vunpack.c.l.b16 %v6494
    %v6549 = vunpack.c.h.b16 %v6494
    %v6550 = vunpack.c.l.b16 %v6495
    %v6551 = vunpack.c.h.b16 %v6495
    %v6552 = vunpack.c.l.b16 %v6496
    %v6553 = vunpack.c.h.b16 %v6496
    %v6554 = vunpack.c.l.b16 %v6497
    %v6555 = vunpack.c.h.b16 %v6497
    %v6556 = vunpack.c.l.b16 %v6498
    %v6557 = vunpack.c.h.b16 %v6498
    %v6558 = vunpack.c.l.b16 %v6499
    %v6559 = vunpack.c.h.b16 %v6499
    %v6560 = vunpack.c.l.b16 %v6500
    %v6561 = vunpack.c.h.b16 %v6500
    %v6562 = vunpack.c.l.b16 %v6501
    %v6563 = vunpack.c.h.b16 %v6501
    %v6564 = vunpack.c.l.b16 %v6502
    %v6565 = vunpack.c.h.b16 %v6502
    %v6566 = vunpack.c.l.b16 %v6503
    %v6567 = vunpack.c.h.b16 %v6503
    %v6568 = vunpack.c.l.b16 %v6504
    %v6569 = vunpack.c.h.b16 %v6504
    %v6570 = vunpack.c.l.b16 %v6505
    %v6571 = vunpack.c.h.b16 %v6505
    %v6572 = vunpack.c.l.b16 %v6506
    %v6573 = vunpack.c.h.b16 %v6506
    %v6574 = vunpack.c.l.b16 %v6507
    %v6575 = vunpack.c.h.b16 %v6507
    %v6576 = vunpack.c.l.b16 %v6508
    %v6577 = vunpack.c.h.b16 %v6508
    %v6578 = vunpack.c.l.b16 %v6509
    %v6579 = vunpack.c.h.b16 %v6509
    %v6580 = vunpack.c.l.b16 %v6510
    %v6581 = vunpack.c.h.b16 %v6510
    %v6582 = vunpack.c.l.b16 %v6511
    %v6583 = vunpack.c.h.b16 %v6511
    %v6584 = vpack.c.b16 %v6538, %v6536
    %v6585 = vpack.c.b16 %v6539, %v6537
    %v6586 = vpack.c.b16 %v6542, %v6540
    %v6587 = vpack.c.b16 %v6543, %v6541
    %v6588 = vpack.c.b16 %v6546, %v6544
    %v6589 = vpack.c.b16 %v6547, %v6545
    %v6590 = vpack.c.b16 %v6550, %v6548
    %v6591 = vpack.c.b16 %v6551, %v6549
    %v6592 = vpack.c.b16 %v6554, %v6552
    %v6593 = vpack.c.b16 %v6555, %v6553
    %v6594 = vpack.c.b16 %v6558, %v6556
    %v6595 = vpack.c.b16 %v6559, %v6557
    %v6596 = vpack.c.b16 %v6562, %v6560
    %v6597 = vpack.c.b16 %v6563, %v6561
    %v6598 = vpack.c.b16 %v6566, %v6564
    %v6599 = vpack.c.b16 %v6567, %v6565
    %v6600 = vpack.c.b16 %v6570, %v6568
    %v6601 = vpack.c.b16 %v6571, %v6569
    %v6602 = vpack.c.b16 %v6574, %v6572
    %v6603 = vpack.c.b16 %v6575, %v6573
    %v6604 = vpack.c.b16 %v6578, %v6576
    %v6605 = vpack.c.b16 %v6579, %v6577
    %v6606 = vpack.c.b16 %v6582, %v6580
    %v6607 = vpack.c.b16 %v6583, %v6581
    %6632 = vmatpush.bf16.msra.mxu0 %v6598
    %6633 = vmatpush.bf16.msra.mxu0 %v6596
    %6634 = vmatpush.bf16.msra.mxu0 %v6594
    %6635 = vmatpush.bf16.msra.mxu0 %v6592
    %6636 = vmatpush.bf16.msra.mxu0 %v6590
    %6637 = vmatpush.bf16.msra.mxu0 %v6588
    %6638 = vmatpush.bf16.msra.mxu0 %v6586
    %6639 = vmatpush.bf16.msra.mxu0 %v6584
    %6640 = vmatmul.bf16.gmra.mxu0 %v6280
    %v6641 = vpop.f32.mrf.mxu0
    %v6642 = vadd.f32 0.0, %v6641
    %v6643 = vpop.f32.mrf.mxu0
    %v6644 = vadd.f32 0.0, %v6643
    %6645 = vdwg.mxu0
    %6646 = vmatpush.bf16.msra.mxu0 0
    %6647 = vmatpush.bf16.msra.mxu0 0
    %6648 = vmatpush.bf16.msra.mxu0 0
    %6649 = vmatpush.bf16.msra.mxu0 0
    %6650 = vmatpush.bf16.msra.mxu0 %v6606
    %6651 = vmatpush.bf16.msra.mxu0 %v6604
    %6652 = vmatpush.bf16.msra.mxu0 %v6602
    %6653 = vmatpush.bf16.msra.mxu0 %v6600
    %6654 = vmatmul.bf16.gmra.mxu0 %v6427
    %v6655 = vpop.f32.mrf.mxu0
    %v6656 = vadd.f32 %v6642, %v6655
    %v6657 = vpop.f32.mrf.mxu0
    %v6658 = vadd.f32 %v6644, %v6657
    %6659 = vdwg.mxu0
    %6660 = vmatpush.bf16.msra.mxu0 %v6599
    %6661 = vmatpush.bf16.msra.mxu0 %v6597
    %6662 = vmatpush.bf16.msra.mxu0 %v6595
    %6663 = vmatpush.bf16.msra.mxu0 %v6593
    %6664 = vmatpush.bf16.msra.mxu0 %v6591
    %6665 = vmatpush.bf16.msra.mxu0 %v6589
    %6666 = vmatpush.bf16.msra.mxu0 %v6587
    %6667 = vmatpush.bf16.msra.mxu0 %v6585
    %6668 = vmatmul.bf16.gmra.mxu0 %v6280
    %v6669 = vpop.f32.mrf.mxu0
    %v6670 = vadd.f32 0.0, %v6669
    %v6671 = vpop.f32.mrf.mxu0
    %v6672 = vadd.f32 0.0, %v6671
    %6673 = vdwg.mxu0
    %6674 = vmatpush.bf16.msra.mxu0 0
    %6675 = vmatpush.bf16.msra.mxu0 0
    %6676 = vmatpush.bf16.msra.mxu0 0
    %6677 = vmatpush.bf16.msra.mxu0 0
    %6678 = vmatpush.bf16.msra.mxu0 %v6607
    %6679 = vmatpush.bf16.msra.mxu0 %v6605
    %6680 = vmatpush.bf16.msra.mxu0 %v6603
    %6681 = vmatpush.bf16.msra.mxu0 %v6601
    %6682 = vmatmul.bf16.gmra.mxu0 %v6427
    %v6683 = vpop.f32.mrf.mxu0
    %v6684 = vadd.f32 %v6670, %v6683
    %v6685 = vpop.f32.mrf.mxu0
    %v6686 = vadd.f32 %v6672, %v6685
    %6687 = vdwg.mxu0
    %s6688 = scalar_lea.vmem [#allocation25], 16
    %v6689 = vld [vmem:[%s6688] sm:$0xff]
    %v6690 = vld [vmem:[%s6688 + $0x8] sm:$0xf]
    %vm6691 = vcmask 97280
    %v6693 = vsel %vm6691, %v6689, 0
    %v6696 = vsel %vm6691, %v6690, 0
    %v6699 = vsel %vm555, %v6658, 0
    %v6702 = vsel %vm555, %v6686, 0
    %6704 = vmatpush.msra.mxu0 0.0
    %6705 = vmatpush.msra.mxu0 0.0
    %6706 = vmatpush.msra.mxu0 0.0
    %6707 = vmatpush.msra.mxu0 0.0
    %6708 = vmatpush.msra.mxu0 0.0
    %6709 = vmatpush.msra.mxu0 0.0
    %6710 = vmatpush.msra.mxu0 0.0
    %6711 = vmatpush.msra.mxu0 0.0
    %6712 = vmatpush.msra.mxu0 0.0
    %6713 = vmatpush.msra.mxu0 0.0
    %6714 = vmatpush.msra.mxu0 0.0
    %6715 = vmatpush.msra.mxu0 0.0
    %6716 = vmatpush.msra.mxu0 0.0
    %6717 = vmatpush.msra.mxu0 0.0
    %6718 = vmatpush.msra.mxu0 %v6699
    %6719 = vmatpush.msra.mxu0 %v6656
    %6720 = vmatmul.f32.gmra.mxu0 %v6693
    %v6721 = vpop.f32.mrf.mxu0
    %v6722 = vadd.f32 0.0, %v6721
    %6723 = vmatmul.f32.gmra.mxu0 %v6696
    %v6724 = vpop.f32.mrf.mxu0
    %v6725 = vadd.f32 0.0, %v6724
    %6726 = vdwg.mxu0
    %6727 = vmatpush.msra.mxu0 0.0
    %6728 = vmatpush.msra.mxu0 0.0
    %6729 = vmatpush.msra.mxu0 0.0
    %6730 = vmatpush.msra.mxu0 0.0
    %6731 = vmatpush.msra.mxu0 0.0
    %6732 = vmatpush.msra.mxu0 0.0
    %6733 = vmatpush.msra.mxu0 0.0
    %6734 = vmatpush.msra.mxu0 0.0
    %6735 = vmatpush.msra.mxu0 0.0
    %6736 = vmatpush.msra.mxu0 0.0
    %6737 = vmatpush.msra.mxu0 0.0
    %6738 = vmatpush.msra.mxu0 0.0
    %6739 = vmatpush.msra.mxu0 0.0
    %6740 = vmatpush.msra.mxu0 0.0
    %6741 = vmatpush.msra.mxu0 %v6702
    %6742 = vmatpush.msra.mxu0 %v6684
    %6743 = vmatmul.f32.gmra.mxu0 %v6693
    %v6744 = vpop.f32.mrf.mxu0
    %v6745 = vadd.f32 0.0, %v6744
    %6746 = vmatmul.f32.gmra.mxu0 %v6696
    %v6747 = vpop.f32.mrf.mxu0
    %v6748 = vadd.f32 0.0, %v6747
    %6749 = vdwg.mxu0
    %v6751 = vsel %vm6691, %v6485, 0
    %v6754 = vsel %vm6691, %v6486, 0
    %v6757 = vsel %vm555, %v6455, 0
    %v6760 = vsel %vm555, %v6483, 0
    %6762 = vmatpush.msra.mxu0 0.0
    %6763 = vmatpush.msra.mxu0 0.0
    %6764 = vmatpush.msra.mxu0 0.0
    %6765 = vmatpush.msra.mxu0 0.0
    %6766 = vmatpush.msra.mxu0 0.0
    %6767 = vmatpush.msra.mxu0 0.0
    %6768 = vmatpush.msra.mxu0 0.0
    %6769 = vmatpush.msra.mxu0 0.0
    %6770 = vmatpush.msra.mxu0 0.0
    %6771 = vmatpush.msra.mxu0 0.0
    %6772 = vmatpush.msra.mxu0 0.0
    %6773 = vmatpush.msra.mxu0 0.0
    %6774 = vmatpush.msra.mxu0 0.0
    %6775 = vmatpush.msra.mxu0 0.0
    %6776 = vmatpush.msra.mxu0 %v6757
    %6777 = vmatpush.msra.mxu0 %v6453
    %6778 = vmatmul.f32.gmra.mxu0 %v6751
    %v6779 = vpop.f32.mrf.mxu0
    %v6780 = vadd.f32 %v6722, %v6779
    %6781 = vmatmul.f32.gmra.mxu0 %v6754
    %v6782 = vpop.f32.mrf.mxu0
    %v6783 = vadd.f32 %v6725, %v6782
    %6784 = vdwg.mxu0
    %6785 = vmatpush.msra.mxu0 0.0
    %6786 = vmatpush.msra.mxu0 0.0
    %6787 = vmatpush.msra.mxu0 0.0
    %6788 = vmatpush.msra.mxu0 0.0
    %6789 = vmatpush.msra.mxu0 0.0
    %6790 = vmatpush.msra.mxu0 0.0
    %6791 = vmatpush.msra.mxu0 0.0
    %6792 = vmatpush.msra.mxu0 0.0
    %6793 = vmatpush.msra.mxu0 0.0
    %6794 = vmatpush.msra.mxu0 0.0
    %6795 = vmatpush.msra.mxu0 0.0
    %6796 = vmatpush.msra.mxu0 0.0
    %6797 = vmatpush.msra.mxu0 0.0
    %6798 = vmatpush.msra.mxu0 0.0
    %6799 = vmatpush.msra.mxu0 %v6760
    %6800 = vmatpush.msra.mxu0 %v6481
    %6801 = vmatmul.f32.gmra.mxu0 %v6751
    %v6802 = vpop.f32.mrf.mxu0
    %v6803 = vadd.f32 %v6745, %v6802
    %6804 = vmatmul.f32.gmra.mxu0 %v6754
    %v6805 = vpop.f32.mrf.mxu0
    %v6806 = vadd.f32 %v6748, %v6805
    %6807 = vdwg.mxu0
    %s6808 = scalar_lea.vmem [#allocation26], 384
    %v6809 = vld [vmem:[%s6808] sm:$0xff]
    %v6810 = vld [vmem:[%s6808 + $0x8] sm:$0xff]
    %v6811 = vld [vmem:[%s6808 + $0x10] sm:$0xff]
    %v6812 = vld [vmem:[%s6808 + $0x18] sm:$0xff]
    %v6813 = vld [vmem:[%s6808 + $0x20] sm:$0xff]
    %v6814 = vld [vmem:[%s6808 + $0x28] sm:$0xff]
    %v6815 = vld [vmem:[%s6808 + $0x30] sm:$0xff]
    %v6816 = vld [vmem:[%s6808 + $0x38] sm:$0xff]
    %v6817 = vld [vmem:[%s6808 + $0x40] sm:$0xff]
    %v6818 = vld [vmem:[%s6808 + $0x48] sm:$0xff]
    %v6819 = vld [vmem:[%s6808 + $0x50] sm:$0xff]
    %v6820 = vld [vmem:[%s6808 + $0x58] sm:$0xff]
    %v6821 = vld [vmem:[%s6808 + $0x60] sm:$0xff]
    %v6822 = vld [vmem:[%s6808 + $0x68] sm:$0xff]
    %v6823 = vld [vmem:[%s6808 + $0x70] sm:$0xff]
    %v6824 = vld [vmem:[%s6808 + $0x78] sm:$0xff]
    %v6825 = vld [vmem:[%s6808 + $0x80] sm:$0xff]
    %v6826 = vld [vmem:[%s6808 + $0x88] sm:$0xff]
    %v6827 = vld [vmem:[%s6808 + $0x90] sm:$0xff]
    %v6828 = vld [vmem:[%s6808 + $0x98] sm:$0xff]
    %v6829 = vld [vmem:[%s6808 + $0xa0] sm:$0xff]
    %v6830 = vld [vmem:[%s6808 + $0xa8] sm:$0xff]
    %v6831 = vld [vmem:[%s6808 + $0xb0] sm:$0xff]
    %v6832 = vld [vmem:[%s6808 + $0xb8] sm:$0xff]
    %v6857 = vunpack.c.l.b16 %v6809
    %v6858 = vunpack.c.h.b16 %v6809
    %v6859 = vunpack.c.l.b16 %v6810
    %v6860 = vunpack.c.h.b16 %v6810
    %v6861 = vunpack.c.l.b16 %v6811
    %v6862 = vunpack.c.h.b16 %v6811
    %v6863 = vunpack.c.l.b16 %v6812
    %v6864 = vunpack.c.h.b16 %v6812
    %v6865 = vunpack.c.l.b16 %v6813
    %v6866 = vunpack.c.h.b16 %v6813
    %v6867 = vunpack.c.l.b16 %v6814
    %v6868 = vunpack.c.h.b16 %v6814
    %v6869 = vunpack.c.l.b16 %v6815
    %v6870 = vunpack.c.h.b16 %v6815
    %v6871 = vunpack.c.l.b16 %v6816
    %v6872 = vunpack.c.h.b16 %v6816
    %v6873 = vunpack.c.l.b16 %v6817
    %v6874 = vunpack.c.h.b16 %v6817
    %v6875 = vunpack.c.l.b16 %v6818
    %v6876 = vunpack.c.h.b16 %v6818
    %v6877 = vunpack.c.l.b16 %v6819
    %v6878 = vunpack.c.h.b16 %v6819
    %v6879 = vunpack.c.l.b16 %v6820
    %v6880 = vunpack.c.h.b16 %v6820
    %v6881 = vunpack.c.l.b16 %v6821
    %v6882 = vunpack.c.h.b16 %v6821
    %v6883 = vunpack.c.l.b16 %v6822
    %v6884 = vunpack.c.h.b16 %v6822
    %v6885 = vunpack.c.l.b16 %v6823
    %v6886 = vunpack.c.h.b16 %v6823
    %v6887 = vunpack.c.l.b16 %v6824
    %v6888 = vunpack.c.h.b16 %v6824
    %v6889 = vunpack.c.l.b16 %v6825
    %v6890 = vunpack.c.h.b16 %v6825
    %v6891 = vunpack.c.l.b16 %v6826
    %v6892 = vunpack.c.h.b16 %v6826
    %v6893 = vunpack.c.l.b16 %v6827
    %v6894 = vunpack.c.h.b16 %v6827
    %v6895 = vunpack.c.l.b16 %v6828
    %v6896 = vunpack.c.h.b16 %v6828
    %v6897 = vunpack.c.l.b16 %v6829
    %v6898 = vunpack.c.h.b16 %v6829
    %v6899 = vunpack.c.l.b16 %v6830
    %v6900 = vunpack.c.h.b16 %v6830
    %v6901 = vunpack.c.l.b16 %v6831
    %v6902 = vunpack.c.h.b16 %v6831
    %v6903 = vunpack.c.l.b16 %v6832
    %v6904 = vunpack.c.h.b16 %v6832
    %v6905 = vpack.c.b16 %v6859, %v6857
    %v6906 = vpack.c.b16 %v6860, %v6858
    %v6907 = vpack.c.b16 %v6863, %v6861
    %v6908 = vpack.c.b16 %v6864, %v6862
    %v6909 = vpack.c.b16 %v6867, %v6865
    %v6910 = vpack.c.b16 %v6868, %v6866
    %v6911 = vpack.c.b16 %v6871, %v6869
    %v6912 = vpack.c.b16 %v6872, %v6870
    %v6913 = vpack.c.b16 %v6875, %v6873
    %v6914 = vpack.c.b16 %v6876, %v6874
    %v6915 = vpack.c.b16 %v6879, %v6877
    %v6916 = vpack.c.b16 %v6880, %v6878
    %v6917 = vpack.c.b16 %v6883, %v6881
    %v6918 = vpack.c.b16 %v6884, %v6882
    %v6919 = vpack.c.b16 %v6887, %v6885
    %v6920 = vpack.c.b16 %v6888, %v6886
    %v6921 = vpack.c.b16 %v6891, %v6889
    %v6922 = vpack.c.b16 %v6892, %v6890
    %v6923 = vpack.c.b16 %v6895, %v6893
    %v6924 = vpack.c.b16 %v6896, %v6894
    %v6925 = vpack.c.b16 %v6899, %v6897
    %v6926 = vpack.c.b16 %v6900, %v6898
    %v6927 = vpack.c.b16 %v6903, %v6901
    %v6928 = vpack.c.b16 %v6904, %v6902
    %6953 = vmatpush.bf16.msra.mxu0 %v6919
    %6954 = vmatpush.bf16.msra.mxu0 %v6917
    %6955 = vmatpush.bf16.msra.mxu0 %v6915
    %6956 = vmatpush.bf16.msra.mxu0 %v6913
    %6957 = vmatpush.bf16.msra.mxu0 %v6911
    %6958 = vmatpush.bf16.msra.mxu0 %v6909
    %6959 = vmatpush.bf16.msra.mxu0 %v6907
    %6960 = vmatpush.bf16.msra.mxu0 %v6905
    %6961 = vmatmul.bf16.gmra.mxu0 %v6280
    %v6962 = vpop.f32.mrf.mxu0
    %v6963 = vadd.f32 0.0, %v6962
    %v6964 = vpop.f32.mrf.mxu0
    %v6965 = vadd.f32 0.0, %v6964
    %6966 = vdwg.mxu0
    %6967 = vmatpush.bf16.msra.mxu0 0
    %6968 = vmatpush.bf16.msra.mxu0 0
    %6969 = vmatpush.bf16.msra.mxu0 0
    %6970 = vmatpush.bf16.msra.mxu0 0
    %6971 = vmatpush.bf16.msra.mxu0 %v6927
    %6972 = vmatpush.bf16.msra.mxu0 %v6925
    %6973 = vmatpush.bf16.msra.mxu0 %v6923
    %6974 = vmatpush.bf16.msra.mxu0 %v6921
    %6975 = vmatmul.bf16.gmra.mxu0 %v6427
    %v6976 = vpop.f32.mrf.mxu0
    %v6977 = vadd.f32 %v6963, %v6976
    %v6978 = vpop.f32.mrf.mxu0
    %v6979 = vadd.f32 %v6965, %v6978
    %6980 = vdwg.mxu0
    %6981 = vmatpush.bf16.msra.mxu0 %v6920
    %6982 = vmatpush.bf16.msra.mxu0 %v6918
    %6983 = vmatpush.bf16.msra.mxu0 %v6916
    %6984 = vmatpush.bf16.msra.mxu0 %v6914
    %6985 = vmatpush.bf16.msra.mxu0 %v6912
    %6986 = vmatpush.bf16.msra.mxu0 %v6910
    %6987 = vmatpush.bf16.msra.mxu0 %v6908
    %6988 = vmatpush.bf16.msra.mxu0 %v6906
    %6989 = vmatmul.bf16.gmra.mxu0 %v6280
    %v6990 = vpop.f32.mrf.mxu0
    %v6991 = vadd.f32 0.0, %v6990
    %v6992 = vpop.f32.mrf.mxu0
    %v6993 = vadd.f32 0.0, %v6992
    %6994 = vdwg.mxu0
    %6995 = vmatpush.bf16.msra.mxu0 0
    %6996 = vmatpush.bf16.msra.mxu0 0
    %6997 = vmatpush.bf16.msra.mxu0 0
    %6998 = vmatpush.bf16.msra.mxu0 0
    %6999 = vmatpush.bf16.msra.mxu0 %v6928
    %7000 = vmatpush.bf16.msra.mxu0 %v6926
    %7001 = vmatpush.bf16.msra.mxu0 %v6924
    %7002 = vmatpush.bf16.msra.mxu0 %v6922
    %7003 = vmatmul.bf16.gmra.mxu0 %v6427
    %v7004 = vpop.f32.mrf.mxu0
    %v7005 = vadd.f32 %v6991, %v7004
    %v7006 = vpop.f32.mrf.mxu0
    %v7007 = vadd.f32 %v6993, %v7006
    %7008 = vdwg.mxu0
    %s7009 = scalar_lea.vmem [#allocation25], 32
    %v7010 = vld [vmem:[%s7009] sm:$0xff]
    %v7011 = vld [vmem:[%s7009 + $0x8] sm:$0xf]
    %v7013 = vsel %vm6691, %v7010, 0
    %v7016 = vsel %vm6691, %v7011, 0
    %v7019 = vsel %vm555, %v6979, 0
    %v7022 = vsel %vm555, %v7007, 0
    %7024 = vmatpush.msra.mxu0 0.0
    %7025 = vmatpush.msra.mxu0 0.0
    %7026 = vmatpush.msra.mxu0 0.0
    %7027 = vmatpush.msra.mxu0 0.0
    %7028 = vmatpush.msra.mxu0 0.0
    %7029 = vmatpush.msra.mxu0 0.0
    %7030 = vmatpush.msra.mxu0 0.0
    %7031 = vmatpush.msra.mxu0 0.0
    %7032 = vmatpush.msra.mxu0 0.0
    %7033 = vmatpush.msra.mxu0 0.0
    %7034 = vmatpush.msra.mxu0 0.0
    %7035 = vmatpush.msra.mxu0 0.0
    %7036 = vmatpush.msra.mxu0 0.0
    %7037 = vmatpush.msra.mxu0 0.0
    %7038 = vmatpush.msra.mxu0 %v7019
    %7039 = vmatpush.msra.mxu0 %v6977
    %7040 = vmatmul.f32.gmra.mxu0 %v7013
    %v7041 = vpop.f32.mrf.mxu0
    %v7042 = vadd.f32 0.0, %v7041
    %7043 = vmatmul.f32.gmra.mxu0 %v7016
    %v7044 = vpop.f32.mrf.mxu0
    %v7045 = vadd.f32 0.0, %v7044
    %7046 = vdwg.mxu0
    %7047 = vmatpush.msra.mxu0 0.0
    %7048 = vmatpush.msra.mxu0 0.0
    %7049 = vmatpush.msra.mxu0 0.0
    %7050 = vmatpush.msra.mxu0 0.0
    %7051 = vmatpush.msra.mxu0 0.0
    %7052 = vmatpush.msra.mxu0 0.0
    %7053 = vmatpush.msra.mxu0 0.0
    %7054 = vmatpush.msra.mxu0 0.0
    %7055 = vmatpush.msra.mxu0 0.0
    %7056 = vmatpush.msra.mxu0 0.0
    %7057 = vmatpush.msra.mxu0 0.0
    %7058 = vmatpush.msra.mxu0 0.0
    %7059 = vmatpush.msra.mxu0 0.0
    %7060 = vmatpush.msra.mxu0 0.0
    %7061 = vmatpush.msra.mxu0 %v7022
    %7062 = vmatpush.msra.mxu0 %v7005
    %7063 = vmatmul.f32.gmra.mxu0 %v7013
    %v7064 = vpop.f32.mrf.mxu0
    %v7065 = vadd.f32 0.0, %v7064
    %7066 = vmatmul.f32.gmra.mxu0 %v7016
    %v7067 = vpop.f32.mrf.mxu0
    %v7068 = vadd.f32 0.0, %v7067
    %7069 = vdwg.mxu0
    %v7070 = vadd.f32 %v6780, %v7042
    %v7071 = vadd.f32 %v6803, %v7065
    %v7072 = vadd.f32 %v6783, %v7045
    %v7073 = vadd.f32 %v6806, %v7068
    %v7074 = vmax.f32 %v7070, 0.0
    %v7075 = vmax.f32 %v7071, 0.0
    %v7076 = vmax.f32 %v7072, 0.0
    %v7077 = vmax.f32 %v7073, 0.0
    %v7078 = vld [vmem:[#allocation28] sm:$0xff]
    %v7079 = vld [vmem:[#allocation28 + $0x8] sm:$0xff]
    %v7080 = vld [vmem:[#allocation28 + $0x10] sm:$0xff]
    %v7081 = vld [vmem:[#allocation28 + $0x18] sm:$0xff]
    %v7082 = vld [vmem:[#allocation28 + $0x20] sm:$0xff]
    %v7083 = vld [vmem:[#allocation28 + $0x28] sm:$0xff]
    %v7084 = vld [vmem:[#allocation28 + $0x30] sm:$0xff]
    %v7085 = vld [vmem:[#allocation28 + $0x38] sm:$0xff]
    %v7086 = vld [vmem:[#allocation28 + $0x40] sm:$0xff]
    %v7087 = vld [vmem:[#allocation28 + $0x48] sm:$0xff]
    %v7088 = vld [vmem:[#allocation28 + $0x50] sm:$0xff]
    %v7089 = vld [vmem:[#allocation28 + $0x58] sm:$0xff]
    %v7090 = vld [vmem:[#allocation28 + $0x60] sm:$0xff]
    %v7091 = vld [vmem:[#allocation28 + $0x68] sm:$0xff]
    %v7092 = vld [vmem:[#allocation28 + $0x70] sm:$0xff]
    %v7093 = vld [vmem:[#allocation28 + $0x78] sm:$0xff]
    %v7094 = vld [vmem:[#allocation28 + $0x80] sm:$0xff]
    %v7095 = vld [vmem:[#allocation28 + $0x88] sm:$0xff]
    %v7096 = vld [vmem:[#allocation28 + $0x90] sm:$0xff]
    %v7097 = vld [vmem:[#allocation28 + $0x98] sm:$0xff]
    %v7098 = vld [vmem:[#allocation28 + $0xa0] sm:$0xff]
    %v7099 = vld [vmem:[#allocation28 + $0xa8] sm:$0xff]
    %v7100 = vld [vmem:[#allocation28 + $0xb0] sm:$0xff]
    %v7101 = vld [vmem:[#allocation28 + $0xb8] sm:$0xff]
    %v7102 = vpack.c.bf16 %v7076, %v7074
    %v7103 = vpack.c.bf16 %v7077, %v7075
    %v7128 = vunpack.c.l.b16 %v7078
    %v7129 = vunpack.c.h.b16 %v7078
    %v7130 = vunpack.c.l.b16 %v7079
    %v7131 = vunpack.c.h.b16 %v7079
    %v7132 = vunpack.c.l.b16 %v7080
    %v7133 = vunpack.c.h.b16 %v7080
    %v7134 = vunpack.c.l.b16 %v7081
    %v7135 = vunpack.c.h.b16 %v7081
    %v7136 = vunpack.c.l.b16 %v7082
    %v7137 = vunpack.c.h.b16 %v7082
    %v7138 = vunpack.c.l.b16 %v7083
    %v7139 = vunpack.c.h.b16 %v7083
    %v7140 = vunpack.c.l.b16 %v7084
    %v7141 = vunpack.c.h.b16 %v7084
    %v7142 = vunpack.c.l.b16 %v7085
    %v7143 = vunpack.c.h.b16 %v7085
    %v7144 = vunpack.c.l.b16 %v7086
    %v7145 = vunpack.c.h.b16 %v7086
    %v7146 = vunpack.c.l.b16 %v7087
    %v7147 = vunpack.c.h.b16 %v7087
    %v7148 = vunpack.c.l.b16 %v7088
    %v7149 = vunpack.c.h.b16 %v7088
    %v7150 = vunpack.c.l.b16 %v7089
    %v7151 = vunpack.c.h.b16 %v7089
    %v7152 = vunpack.c.l.b16 %v7090
    %v7153 = vunpack.c.h.b16 %v7090
    %v7154 = vunpack.c.l.b16 %v7091
    %v7155 = vunpack.c.h.b16 %v7091
    %v7156 = vunpack.c.l.b16 %v7092
    %v7157 = vunpack.c.h.b16 %v7092
    %v7158 = vunpack.c.l.b16 %v7093
    %v7159 = vunpack.c.h.b16 %v7093
    %v7160 = vunpack.c.l.b16 %v7094
    %v7161 = vunpack.c.h.b16 %v7094
    %v7162 = vunpack.c.l.b16 %v7095
    %v7163 = vunpack.c.h.b16 %v7095
    %v7164 = vunpack.c.l.b16 %v7096
    %v7165 = vunpack.c.h.b16 %v7096
    %v7166 = vunpack.c.l.b16 %v7097
    %v7167 = vunpack.c.h.b16 %v7097
    %v7168 = vunpack.c.l.b16 %v7098
    %v7169 = vunpack.c.h.b16 %v7098
    %v7170 = vunpack.c.l.b16 %v7099
    %v7171 = vunpack.c.h.b16 %v7099
    %v7172 = vunpack.c.l.b16 %v7100
    %v7173 = vunpack.c.h.b16 %v7100
    %v7174 = vunpack.c.l.b16 %v7101
    %v7175 = vunpack.c.h.b16 %v7101
    %v7176 = vpack.c.b16 %v7130, %v7128
    %v7177 = vpack.c.b16 %v7131, %v7129
    %v7178 = vpack.c.b16 %v7134, %v7132
    %v7179 = vpack.c.b16 %v7135, %v7133
    %v7180 = vpack.c.b16 %v7138, %v7136
    %v7181 = vpack.c.b16 %v7139, %v7137
    %v7182 = vpack.c.b16 %v7142, %v7140
    %v7183 = vpack.c.b16 %v7143, %v7141
    %v7184 = vpack.c.b16 %v7146, %v7144
    %v7185 = vpack.c.b16 %v7147, %v7145
    %v7186 = vpack.c.b16 %v7150, %v7148
    %v7187 = vpack.c.b16 %v7151, %v7149
    %v7188 = vpack.c.b16 %v7154, %v7152
    %v7189 = vpack.c.b16 %v7155, %v7153
    %v7190 = vpack.c.b16 %v7158, %v7156
    %v7191 = vpack.c.b16 %v7159, %v7157
    %v7192 = vpack.c.b16 %v7162, %v7160
    %v7193 = vpack.c.b16 %v7163, %v7161
    %v7194 = vpack.c.b16 %v7166, %v7164
    %v7195 = vpack.c.b16 %v7167, %v7165
    %v7196 = vpack.c.b16 %v7170, %v7168
    %v7197 = vpack.c.b16 %v7171, %v7169
    %v7198 = vpack.c.b16 %v7174, %v7172
    %v7199 = vpack.c.b16 %v7175, %v7173
    %v7225 = vsel %vm2056, %v7103, 0
    %7227 = vmatpush.bf16.msra.mxu0 %v7190
    %7228 = vmatpush.bf16.msra.mxu0 %v7188
    %7229 = vmatpush.bf16.msra.mxu0 %v7186
    %7230 = vmatpush.bf16.msra.mxu0 %v7184
    %7231 = vmatpush.bf16.msra.mxu0 %v7182
    %7232 = vmatpush.bf16.msra.mxu0 %v7180
    %7233 = vmatpush.bf16.msra.mxu0 %v7178
    %7234 = vmatpush.bf16.msra.mxu0 %v7176
    %7235 = vmatmul.bf16.gmra.mxu0 %v7102
    %v7236 = vpop.f32.mrf.mxu0
    %v7237 = vadd.f32 0.0, %v7236
    %v7238 = vpop.f32.mrf.mxu0
    %v7239 = vadd.f32 0.0, %v7238
    %7240 = vdwg.mxu0
    %7241 = vmatpush.bf16.msra.mxu0 0
    %7242 = vmatpush.bf16.msra.mxu0 0
    %7243 = vmatpush.bf16.msra.mxu0 0
    %7244 = vmatpush.bf16.msra.mxu0 0
    %7245 = vmatpush.bf16.msra.mxu0 %v7198
    %7246 = vmatpush.bf16.msra.mxu0 %v7196
    %7247 = vmatpush.bf16.msra.mxu0 %v7194
    %7248 = vmatpush.bf16.msra.mxu0 %v7192
    %7249 = vmatmul.bf16.gmra.mxu0 %v7225
    %v7250 = vpop.f32.mrf.mxu0
    %v7251 = vadd.f32 %v7237, %v7250
    %v7252 = vpop.f32.mrf.mxu0
    %v7253 = vadd.f32 %v7239, %v7252
    %7254 = vdwg.mxu0
    %7255 = vmatpush.bf16.msra.mxu0 %v7191
    %7256 = vmatpush.bf16.msra.mxu0 %v7189
    %7257 = vmatpush.bf16.msra.mxu0 %v7187
    %7258 = vmatpush.bf16.msra.mxu0 %v7185
    %7259 = vmatpush.bf16.msra.mxu0 %v7183
    %7260 = vmatpush.bf16.msra.mxu0 %v7181
    %7261 = vmatpush.bf16.msra.mxu0 %v7179
    %7262 = vmatpush.bf16.msra.mxu0 %v7177
    %7263 = vmatmul.bf16.gmra.mxu0 %v7102
    %v7264 = vpop.f32.mrf.mxu0
    %v7265 = vadd.f32 0.0, %v7264
    %v7266 = vpop.f32.mrf.mxu0
    %v7267 = vadd.f32 0.0, %v7266
    %7268 = vdwg.mxu0
    %7269 = vmatpush.bf16.msra.mxu0 0
    %7270 = vmatpush.bf16.msra.mxu0 0
    %7271 = vmatpush.bf16.msra.mxu0 0
    %7272 = vmatpush.bf16.msra.mxu0 0
    %7273 = vmatpush.bf16.msra.mxu0 %v7199
    %7274 = vmatpush.bf16.msra.mxu0 %v7197
    %7275 = vmatpush.bf16.msra.mxu0 %v7195
    %7276 = vmatpush.bf16.msra.mxu0 %v7193
    %7277 = vmatmul.bf16.gmra.mxu0 %v7225
    %v7278 = vpop.f32.mrf.mxu0
    %v7279 = vadd.f32 %v7265, %v7278
    %v7280 = vpop.f32.mrf.mxu0
    %v7281 = vadd.f32 %v7267, %v7280
    %7282 = vdwg.mxu0
    %v7283 = vmax.f32 %v7251, 0.0
    %v7284 = vmax.f32 %v7279, 0.0
    %v7285 = vmax.f32 %v7253, 0.0
    %v7286 = vmax.f32 %v7281, 0.0
    %v7287 = vld [vmem:[%s19] sm:$0x3]
    %v7289 = vsel %vm6691, %v7287, 0
    %v7292 = vsel %vm555, %v7285, 0
    %v7295 = vsel %vm555, %v7286, 0
    %7297 = vmatpush.msra.mxu0 0.0
    %7298 = vmatpush.msra.mxu0 0.0
    %7299 = vmatpush.msra.mxu0 0.0
    %7300 = vmatpush.msra.mxu0 0.0
    %7301 = vmatpush.msra.mxu0 0.0
    %7302 = vmatpush.msra.mxu0 0.0
    %7303 = vmatpush.msra.mxu0 0.0
    %7304 = vmatpush.msra.mxu0 0.0
    %7305 = vmatpush.msra.mxu0 0.0
    %7306 = vmatpush.msra.mxu0 0.0
    %7307 = vmatpush.msra.mxu0 0.0
    %7308 = vmatpush.msra.mxu0 0.0
    %7309 = vmatpush.msra.mxu0 0.0
    %7310 = vmatpush.msra.mxu0 0.0
    %7311 = vmatpush.msra.mxu0 %v7292
    %7312 = vmatpush.msra.mxu0 %v7283
    %7313 = vmatmul.f32.gmra.mxu0 %v7289
    %v7314 = vpop.f32.mrf.mxu0
    %v7315 = vadd.f32 0.0, %v7314
    %7316 = vdwg.mxu0
    %7317 = vmatpush.msra.mxu0 0.0
    %7318 = vmatpush.msra.mxu0 0.0
    %7319 = vmatpush.msra.mxu0 0.0
    %7320 = vmatpush.msra.mxu0 0.0
    %7321 = vmatpush.msra.mxu0 0.0
    %7322 = vmatpush.msra.mxu0 0.0
    %7323 = vmatpush.msra.mxu0 0.0
    %7324 = vmatpush.msra.mxu0 0.0
    %7325 = vmatpush.msra.mxu0 0.0
    %7326 = vmatpush.msra.mxu0 0.0
    %7327 = vmatpush.msra.mxu0 0.0
    %7328 = vmatpush.msra.mxu0 0.0
    %7329 = vmatpush.msra.mxu0 0.0
    %7330 = vmatpush.msra.mxu0 0.0
    %7331 = vmatpush.msra.mxu0 %v7295
    %7332 = vmatpush.msra.mxu0 %v7284
    %7333 = vmatmul.f32.gmra.mxu0 %v7289
    %v7334 = vpop.f32.mrf.mxu0
    %v7335 = vadd.f32 0.0, %v7334
    %7336 = vdwg.mxu0
    %v7337 = vld [vmem:[#allocation29] sm:$0xff]
    %v7338 = vld [vmem:[#allocation29 + $0x8] sm:$0xff]
    %v7339 = vld [vmem:[#allocation29 + $0x10] sm:$0xff]
    %v7340 = vld [vmem:[#allocation29 + $0x18] sm:$0xff]
    %v7341 = vld [vmem:[#allocation29 + $0x20] sm:$0xff]
    %v7342 = vld [vmem:[#allocation29 + $0x28] sm:$0xff]
    %v7343 = vld [vmem:[#allocation29 + $0x30] sm:$0xff]
    %v7344 = vld [vmem:[#allocation29 + $0x38] sm:$0xff]
    %v7345 = vld [vmem:[#allocation29 + $0x40] sm:$0xff]
    %v7346 = vld [vmem:[#allocation29 + $0x48] sm:$0xff]
    %v7347 = vld [vmem:[#allocation29 + $0x50] sm:$0xff]
    %v7348 = vld [vmem:[#allocation29 + $0x58] sm:$0xff]
    %v7349 = vld [vmem:[#allocation29 + $0x60] sm:$0xff]
    %v7350 = vld [vmem:[#allocation29 + $0x68] sm:$0xff]
    %v7351 = vld [vmem:[#allocation29 + $0x70] sm:$0xff]
    %v7352 = vld [vmem:[#allocation29 + $0x78] sm:$0xff]
    %v7353 = vld [vmem:[#allocation29 + $0x80] sm:$0xff]
    %v7354 = vld [vmem:[#allocation29 + $0x88] sm:$0xff]
    %v7355 = vld [vmem:[#allocation29 + $0x90] sm:$0xff]
    %v7356 = vld [vmem:[#allocation29 + $0x98] sm:$0xff]
    %v7357 = vld [vmem:[#allocation29 + $0xa0] sm:$0xff]
    %v7358 = vld [vmem:[#allocation29 + $0xa8] sm:$0xff]
    %v7359 = vld [vmem:[#allocation29 + $0xb0] sm:$0xff]
    %v7360 = vld [vmem:[#allocation29 + $0xb8] sm:$0xff]
    %v7361 = vld [vmem:[#allocation29 + $0xc0] sm:$0xff]
    %v7362 = vld [vmem:[#allocation29 + $0xc8] sm:$0xff]
    %v7363 = vld [vmem:[#allocation29 + $0xd0] sm:$0xff]
    %v7364 = vld [vmem:[#allocation29 + $0xd8] sm:$0xff]
    %v7365 = vld [vmem:[#allocation29 + $0xe0] sm:$0xff]
    %v7366 = vld [vmem:[#allocation29 + $0xe8] sm:$0xff]
    %v7367 = vld [vmem:[#allocation29 + $0xf0] sm:$0xff]
    %v7368 = vld [vmem:[#allocation29 + $0xf8] sm:$0xff]
    %v7369 = vld [vmem:[#allocation29 + $0x100] sm:$0xff]
    %v7370 = vld [vmem:[#allocation29 + $0x108] sm:$0xff]
    %v7371 = vld [vmem:[#allocation29 + $0x110] sm:$0xff]
    %v7372 = vld [vmem:[#allocation29 + $0x118] sm:$0xff]
    %v7373 = vld [vmem:[#allocation29 + $0x120] sm:$0xff]
    %v7374 = vld [vmem:[#allocation29 + $0x128] sm:$0xff]
    %v7375 = vld [vmem:[#allocation29 + $0x130] sm:$0xff]
    %v7376 = vld [vmem:[#allocation29 + $0x138] sm:$0xff]
    %v7377 = vld [vmem:[#allocation29 + $0x140] sm:$0xff]
    %v7378 = vld [vmem:[#allocation29 + $0x148] sm:$0xff]
    %v7379 = vld [vmem:[#allocation29 + $0x150] sm:$0xff]
    %v7380 = vld [vmem:[#allocation29 + $0x158] sm:$0xff]
    %v7381 = vld [vmem:[#allocation29 + $0x160] sm:$0xff]
    %v7382 = vld [vmem:[#allocation29 + $0x168] sm:$0xff]
    %v7383 = vld [vmem:[#allocation29 + $0x170] sm:$0xff]
    %v7384 = vld [vmem:[#allocation29 + $0x178] sm:$0xff]
    %v7385 = vpack.c.bf16 %v7315, %v7315
    %v7386 = vpack.c.bf16 %v7335, %v7335
    %v7387 = vld [vmem:[%s21] sm:$0xf]
    %v7389 = vperm.slane %v7387, 0
    %v7390 = vperm.slane %v7387, 1
    %v7391 = vperm.slane %v7387, 2
    %v7392 = vperm.slane %v7387, 3
    %v7445 = vunpack.c.l.b16 %v7337
    %v7446 = vunpack.c.h.b16 %v7337
    %v7447 = vunpack.c.l.b16 %v7338
    %v7448 = vunpack.c.h.b16 %v7338
    %v7449 = vunpack.c.l.b16 %v7339
    %v7450 = vunpack.c.h.b16 %v7339
    %v7451 = vunpack.c.l.b16 %v7340
    %v7452 = vunpack.c.h.b16 %v7340
    %v7453 = vunpack.c.l.b16 %v7341
    %v7454 = vunpack.c.h.b16 %v7341
    %v7455 = vunpack.c.l.b16 %v7342
    %v7456 = vunpack.c.h.b16 %v7342
    %v7457 = vunpack.c.l.b16 %v7343
    %v7458 = vunpack.c.h.b16 %v7343
    %v7459 = vunpack.c.l.b16 %v7344
    %v7460 = vunpack.c.h.b16 %v7344
    %v7461 = vunpack.c.l.b16 %v7345
    %v7462 = vunpack.c.h.b16 %v7345
    %v7463 = vunpack.c.l.b16 %v7346
    %v7464 = vunpack.c.h.b16 %v7346
    %v7465 = vunpack.c.l.b16 %v7347
    %v7466 = vunpack.c.h.b16 %v7347
    %v7467 = vunpack.c.l.b16 %v7348
    %v7468 = vunpack.c.h.b16 %v7348
    %v7469 = vunpack.c.l.b16 %v7349
    %v7470 = vunpack.c.h.b16 %v7349
    %v7471 = vunpack.c.l.b16 %v7350
    %v7472 = vunpack.c.h.b16 %v7350
    %v7473 = vunpack.c.l.b16 %v7351
    %v7474 = vunpack.c.h.b16 %v7351
    %v7475 = vunpack.c.l.b16 %v7352
    %v7476 = vunpack.c.h.b16 %v7352
    %v7477 = vunpack.c.l.b16 %v7353
    %v7478 = vunpack.c.h.b16 %v7353
    %v7479 = vunpack.c.l.b16 %v7354
    %v7480 = vunpack.c.h.b16 %v7354
    %v7481 = vunpack.c.l.b16 %v7355
    %v7482 = vunpack.c.h.b16 %v7355
    %v7483 = vunpack.c.l.b16 %v7356
    %v7484 = vunpack.c.h.b16 %v7356
    %v7485 = vunpack.c.l.b16 %v7357
    %v7486 = vunpack.c.h.b16 %v7357
    %v7487 = vunpack.c.l.b16 %v7358
    %v7488 = vunpack.c.h.b16 %v7358
    %v7489 = vunpack.c.l.b16 %v7359
    %v7490 = vunpack.c.h.b16 %v7359
    %v7491 = vunpack.c.l.b16 %v7360
    %v7492 = vunpack.c.h.b16 %v7360
    %v7493 = vunpack.c.l.b16 %v7361
    %v7494 = vunpack.c.h.b16 %v7361
    %v7495 = vunpack.c.l.b16 %v7362
    %v7496 = vunpack.c.h.b16 %v7362
    %v7497 = vunpack.c.l.b16 %v7363
    %v7498 = vunpack.c.h.b16 %v7363
    %v7499 = vunpack.c.l.b16 %v7364
    %v7500 = vunpack.c.h.b16 %v7364
    %v7501 = vunpack.c.l.b16 %v7365
    %v7502 = vunpack.c.h.b16 %v7365
    %v7503 = vunpack.c.l.b16 %v7366
    %v7504 = vunpack.c.h.b16 %v7366
    %v7505 = vunpack.c.l.b16 %v7367
    %v7506 = vunpack.c.h.b16 %v7367
    %v7507 = vunpack.c.l.b16 %v7368
    %v7508 = vunpack.c.h.b16 %v7368
    %v7509 = vunpack.c.l.b16 %v7369
    %v7510 = vunpack.c.h.b16 %v7369
    %v7511 = vunpack.c.l.b16 %v7370
    %v7512 = vunpack.c.h.b16 %v7370
    %v7513 = vunpack.c.l.b16 %v7371
    %v7514 = vunpack.c.h.b16 %v7371
    %v7515 = vunpack.c.l.b16 %v7372
    %v7516 = vunpack.c.h.b16 %v7372
    %v7517 = vunpack.c.l.b16 %v7373
    %v7518 = vunpack.c.h.b16 %v7373
    %v7519 = vunpack.c.l.b16 %v7374
    %v7520 = vunpack.c.h.b16 %v7374
    %v7521 = vunpack.c.l.b16 %v7375
    %v7522 = vunpack.c.h.b16 %v7375
    %v7523 = vunpack.c.l.b16 %v7376
    %v7524 = vunpack.c.h.b16 %v7376
    %v7525 = vunpack.c.l.b16 %v7377
    %v7526 = vunpack.c.h.b16 %v7377
    %v7527 = vunpack.c.l.b16 %v7378
    %v7528 = vunpack.c.h.b16 %v7378
    %v7529 = vunpack.c.l.b16 %v7379
    %v7530 = vunpack.c.h.b16 %v7379
    %v7531 = vunpack.c.l.b16 %v7380
    %v7532 = vunpack.c.h.b16 %v7380
    %v7533 = vunpack.c.l.b16 %v7381
    %v7534 = vunpack.c.h.b16 %v7381
    %v7535 = vunpack.c.l.b16 %v7382
    %v7536 = vunpack.c.h.b16 %v7382
    %v7537 = vunpack.c.l.b16 %v7383
    %v7538 = vunpack.c.h.b16 %v7383
    %v7539 = vunpack.c.l.b16 %v7384
    %v7540 = vunpack.c.h.b16 %v7384
    %v7541 = vpack.c.b16 %v7449, %v7445
    %v7542 = vpack.c.b16 %v7450, %v7446
    %v7543 = vpack.c.b16 %v7451, %v7447
    %v7544 = vpack.c.b16 %v7452, %v7448
    %v7545 = vpack.c.b16 %v7457, %v7453
    %v7546 = vpack.c.b16 %v7458, %v7454
    %v7547 = vpack.c.b16 %v7459, %v7455
    %v7548 = vpack.c.b16 %v7460, %v7456
    %v7549 = vpack.c.b16 %v7465, %v7461
    %v7550 = vpack.c.b16 %v7466, %v7462
    %v7551 = vpack.c.b16 %v7467, %v7463
    %v7552 = vpack.c.b16 %v7468, %v7464
    %v7553 = vpack.c.b16 %v7473, %v7469
    %v7554 = vpack.c.b16 %v7474, %v7470
    %v7555 = vpack.c.b16 %v7475, %v7471
    %v7556 = vpack.c.b16 %v7476, %v7472
    %v7557 = vpack.c.b16 %v7481, %v7477
    %v7558 = vpack.c.b16 %v7482, %v7478
    %v7559 = vpack.c.b16 %v7483, %v7479
    %v7560 = vpack.c.b16 %v7484, %v7480
    %v7561 = vpack.c.b16 %v7489, %v7485
    %v7562 = vpack.c.b16 %v7490, %v7486
    %v7563 = vpack.c.b16 %v7491, %v7487
    %v7564 = vpack.c.b16 %v7492, %v7488
    %v7565 = vpack.c.b16 %v7497, %v7493
    %v7566 = vpack.c.b16 %v7498, %v7494
    %v7567 = vpack.c.b16 %v7499, %v7495
    %v7568 = vpack.c.b16 %v7500, %v7496
    %v7569 = vpack.c.b16 %v7505, %v7501
    %v7570 = vpack.c.b16 %v7506, %v7502
    %v7571 = vpack.c.b16 %v7507, %v7503
    %v7572 = vpack.c.b16 %v7508, %v7504
    %v7573 = vpack.c.b16 %v7513, %v7509
    %v7574 = vpack.c.b16 %v7514, %v7510
    %v7575 = vpack.c.b16 %v7515, %v7511
    %v7576 = vpack.c.b16 %v7516, %v7512
    %v7577 = vpack.c.b16 %v7521, %v7517
    %v7578 = vpack.c.b16 %v7522, %v7518
    %v7579 = vpack.c.b16 %v7523, %v7519
    %v7580 = vpack.c.b16 %v7524, %v7520
    %v7581 = vpack.c.b16 %v7529, %v7525
    %v7582 = vpack.c.b16 %v7530, %v7526
    %v7583 = vpack.c.b16 %v7531, %v7527
    %v7584 = vpack.c.b16 %v7532, %v7528
    %v7585 = vpack.c.b16 %v7537, %v7533
    %v7586 = vpack.c.b16 %v7538, %v7534
    %v7587 = vpack.c.b16 %v7539, %v7535
    %v7588 = vpack.c.b16 %v7540, %v7536
    %v7638 = vsel %vm2056, %v7386, 0
    %7640 = vmatpush.bf16.msra.mxu0 %v7569
    %7641 = vmatpush.bf16.msra.mxu0 %v7565
    %7642 = vmatpush.bf16.msra.mxu0 %v7561
    %7643 = vmatpush.bf16.msra.mxu0 %v7557
    %7644 = vmatpush.bf16.msra.mxu0 %v7553
    %7645 = vmatpush.bf16.msra.mxu0 %v7549
    %7646 = vmatpush.bf16.msra.mxu0 %v7545
    %7647 = vmatpush.bf16.msra.mxu0 %v7541
    %7648 = vmatmul.bf16.gmra.mxu0 %v7385
    %v7649 = vpop.f32.mrf.mxu0
    %v7650 = vadd.f32 %v7389, %v7649
    %v7651 = vpop.f32.mrf.mxu0
    %7652 = vdwg.mxu0
    %7653 = vmatpush.bf16.msra.mxu0 0
    %7654 = vmatpush.bf16.msra.mxu0 0
    %7655 = vmatpush.bf16.msra.mxu0 0
    %7656 = vmatpush.bf16.msra.mxu0 0
    %7657 = vmatpush.bf16.msra.mxu0 %v7585
    %7658 = vmatpush.bf16.msra.mxu0 %v7581
    %7659 = vmatpush.bf16.msra.mxu0 %v7577
    %7660 = vmatpush.bf16.msra.mxu0 %v7573
    %7661 = vmatmul.bf16.gmra.mxu0 %v7638
    %v7662 = vpop.f32.mrf.mxu0
    %v7663 = vadd.f32 %v7650, %v7662
    %v7664 = vpop.f32.mrf.mxu0
    %7665 = vdwg.mxu0
    %7666 = vmatpush.bf16.msra.mxu0 %v7570
    %7667 = vmatpush.bf16.msra.mxu0 %v7566
    %7668 = vmatpush.bf16.msra.mxu0 %v7562
    %7669 = vmatpush.bf16.msra.mxu0 %v7558
    %7670 = vmatpush.bf16.msra.mxu0 %v7554
    %7671 = vmatpush.bf16.msra.mxu0 %v7550
    %7672 = vmatpush.bf16.msra.mxu0 %v7546
    %7673 = vmatpush.bf16.msra.mxu0 %v7542
    %7674 = vmatmul.bf16.gmra.mxu0 %v7385
    %v7675 = vpop.f32.mrf.mxu0
    %v7676 = vadd.f32 %v7390, %v7675
    %v7677 = vpop.f32.mrf.mxu0
    %7678 = vdwg.mxu0
    %7679 = vmatpush.bf16.msra.mxu0 0
    %7680 = vmatpush.bf16.msra.mxu0 0
    %7681 = vmatpush.bf16.msra.mxu0 0
    %7682 = vmatpush.bf16.msra.mxu0 0
    %7683 = vmatpush.bf16.msra.mxu0 %v7586
    %7684 = vmatpush.bf16.msra.mxu0 %v7582
    %7685 = vmatpush.bf16.msra.mxu0 %v7578
    %7686 = vmatpush.bf16.msra.mxu0 %v7574
    %7687 = vmatmul.bf16.gmra.mxu0 %v7638
    %v7688 = vpop.f32.mrf.mxu0
    %v7689 = vadd.f32 %v7676, %v7688
    %v7690 = vpop.f32.mrf.mxu0
    %7691 = vdwg.mxu0
    %7692 = vmatpush.bf16.msra.mxu0 %v7571
    %7693 = vmatpush.bf16.msra.mxu0 %v7567
    %7694 = vmatpush.bf16.msra.mxu0 %v7563
    %7695 = vmatpush.bf16.msra.mxu0 %v7559
    %7696 = vmatpush.bf16.msra.mxu0 %v7555
    %7697 = vmatpush.bf16.msra.mxu0 %v7551
    %7698 = vmatpush.bf16.msra.mxu0 %v7547
    %7699 = vmatpush.bf16.msra.mxu0 %v7543
    %7700 = vmatmul.bf16.gmra.mxu0 %v7385
    %v7701 = vpop.f32.mrf.mxu0
    %v7702 = vadd.f32 %v7391, %v7701
    %v7703 = vpop.f32.mrf.mxu0
    %7704 = vdwg.mxu0
    %7705 = vmatpush.bf16.msra.mxu0 0
    %7706 = vmatpush.bf16.msra.mxu0 0
    %7707 = vmatpush.bf16.msra.mxu0 0
    %7708 = vmatpush.bf16.msra.mxu0 0
    %7709 = vmatpush.bf16.msra.mxu0 %v7587
    %7710 = vmatpush.bf16.msra.mxu0 %v7583
    %7711 = vmatpush.bf16.msra.mxu0 %v7579
    %7712 = vmatpush.bf16.msra.mxu0 %v7575
    %7713 = vmatmul.bf16.gmra.mxu0 %v7638
    %v7714 = vpop.f32.mrf.mxu0
    %v7715 = vadd.f32 %v7702, %v7714
    %v7716 = vpop.f32.mrf.mxu0
    %7717 = vdwg.mxu0
    %7718 = vmatpush.bf16.msra.mxu0 %v7572
    %7719 = vmatpush.bf16.msra.mxu0 %v7568
    %7720 = vmatpush.bf16.msra.mxu0 %v7564
    %7721 = vmatpush.bf16.msra.mxu0 %v7560
    %7722 = vmatpush.bf16.msra.mxu0 %v7556
    %7723 = vmatpush.bf16.msra.mxu0 %v7552
    %7724 = vmatpush.bf16.msra.mxu0 %v7548
    %7725 = vmatpush.bf16.msra.mxu0 %v7544
    %7726 = vmatmul.bf16.gmra.mxu0 %v7385
    %v7727 = vpop.f32.mrf.mxu0
    %v7728 = vadd.f32 %v7392, %v7727
    %v7729 = vpop.f32.mrf.mxu0
    %7730 = vdwg.mxu0
    %7731 = vmatpush.bf16.msra.mxu0 0
    %7732 = vmatpush.bf16.msra.mxu0 0
    %7733 = vmatpush.bf16.msra.mxu0 0
    %7734 = vmatpush.bf16.msra.mxu0 0
    %7735 = vmatpush.bf16.msra.mxu0 %v7588
    %7736 = vmatpush.bf16.msra.mxu0 %v7584
    %7737 = vmatpush.bf16.msra.mxu0 %v7580
    %7738 = vmatpush.bf16.msra.mxu0 %v7576
    %7739 = vmatmul.bf16.gmra.mxu0 %v7638
    %v7740 = vpop.f32.mrf.mxu0
    %v7741 = vadd.f32 %v7728, %v7740
    %v7742 = vpop.f32.mrf.mxu0
    %7743 = vdwg.mxu0
    %v7744 = vld [vmem:[%s22] sm:$0xf]
    %v7745 = vld [vmem:[%s22 + $0x4] sm:$0xf]
    %v7746 = vld [vmem:[%s22 + $0x8] sm:$0xf]
    %v7747 = vld [vmem:[%s22 + $0xc] sm:$0xf]
    %v7748 = vld [vmem:[%s22 + $0x10] sm:$0xf]
    %v7749 = vld [vmem:[%s22 + $0x14] sm:$0xf]
    %v7750 = vld [vmem:[%s22 + $0x18] sm:$0xf]
    %v7751 = vld [vmem:[%s22 + $0x1c] sm:$0xf]
    %v7752 = vld [vmem:[%s22 + $0x20] sm:$0xf]
    %v7753 = vld [vmem:[%s22 + $0x24] sm:$0xf]
    %v7754 = vld [vmem:[%s22 + $0x28] sm:$0xf]
    %v7755 = vld [vmem:[%s22 + $0x2c] sm:$0xf]
    %v7756 = vld [vmem:[%s22 + $0x30] sm:$0xf]
    %v7757 = vld [vmem:[%s22 + $0x34] sm:$0xf]
    %v7758 = vld [vmem:[%s22 + $0x38] sm:$0xf]
    %v7759 = vld [vmem:[%s22 + $0x3c] sm:$0xf]
    %v7760 = vld [vmem:[%s22 + $0x40] sm:$0xf]
    %v7761 = vld [vmem:[%s22 + $0x44] sm:$0xf]
    %v7762 = vld [vmem:[%s22 + $0x48] sm:$0xf]
    %v7763 = vld [vmem:[%s22 + $0x4c] sm:$0xf]
    %v7764 = vld [vmem:[%s22 + $0x50] sm:$0xf]
    %v7765 = vld [vmem:[%s22 + $0x54] sm:$0xf]
    %v7766 = vld [vmem:[%s22 + $0x58] sm:$0xf]
    %v7767 = vld [vmem:[%s22 + $0x5c] sm:$0xf]
    %v7768 = vld [vmem:[%s22 + $0x60] sm:$0xf]
    %v7769 = vld [vmem:[%s22 + $0x64] sm:$0xf]
    %v7770 = vld [vmem:[%s22 + $0x68] sm:$0xf]
    %v7771 = vld [vmem:[%s22 + $0x6c] sm:$0xf]
    %v7772 = vld [vmem:[%s22 + $0x70] sm:$0xf]
    %v7773 = vld [vmem:[%s22 + $0x74] sm:$0xf]
    %v7774 = vld [vmem:[%s22 + $0x78] sm:$0xf]
    %v7775 = vld [vmem:[%s22 + $0x7c] sm:$0xf]
    %v7776 = vld [vmem:[%s22 + $0x80] sm:$0xf]
    %v7777 = vld [vmem:[%s22 + $0x84] sm:$0xf]
    %v7778 = vld [vmem:[%s22 + $0x88] sm:$0xf]
    %v7779 = vld [vmem:[%s22 + $0x8c] sm:$0xf]
    %v7780 = vld [vmem:[%s22 + $0x90] sm:$0xf]
    %v7781 = vld [vmem:[%s22 + $0x94] sm:$0xf]
    %v7782 = vld [vmem:[%s22 + $0x98] sm:$0xf]
    %v7783 = vld [vmem:[%s22 + $0x9c] sm:$0xf]
    %v7784 = vld [vmem:[%s22 + $0xa0] sm:$0xf]
    %v7785 = vld [vmem:[%s22 + $0xa4] sm:$0xf]
    %v7786 = vld [vmem:[%s22 + $0xa8] sm:$0xf]
    %v7787 = vld [vmem:[%s22 + $0xac] sm:$0xf]
    %v7788 = vld [vmem:[%s22 + $0xb0] sm:$0xf]
    %v7789 = vld [vmem:[%s22 + $0xb4] sm:$0xf]
    %v7790 = vld [vmem:[%s22 + $0xb8] sm:$0xf]
    %v7791 = vld [vmem:[%s22 + $0xbc] sm:$0xf]
    %v7792 = vld [vmem:[%s22 + $0xc0] sm:$0xf]
    %v7793 = vld [vmem:[%s22 + $0xc4] sm:$0xf]
    %v7794 = vld [vmem:[%s22 + $0xc8] sm:$0xf]
    %v7795 = vld [vmem:[%s22 + $0xcc] sm:$0xf]
    %v7796 = vld [vmem:[%s22 + $0xd0] sm:$0xf]
    %v7797 = vld [vmem:[%s22 + $0xd4] sm:$0xf]
    %v7798 = vld [vmem:[%s22 + $0xd8] sm:$0xf]
    %v7799 = vld [vmem:[%s22 + $0xdc] sm:$0xf]
    %v7800 = vld [vmem:[%s22 + $0xe0] sm:$0xf]
    %v7801 = vld [vmem:[%s22 + $0xe4] sm:$0xf]
    %v7802 = vld [vmem:[%s22 + $0xe8] sm:$0xf]
    %v7803 = vld [vmem:[%s22 + $0xec] sm:$0xf]
    %v7804 = vld [vmem:[%s22 + $0xf0] sm:$0xf]
    %v7805 = vld [vmem:[%s22 + $0xf4] sm:$0xf]
    %v7806 = vld [vmem:[%s22 + $0xf8] sm:$0xf]
    %v7807 = vld [vmem:[%s22 + $0xfc] sm:$0xf]
    %v7808 = vpack.c.bf16 %v7663, %v7663
    %v7809 = vpack.c.bf16 %v7689, %v7689
    %v7810 = vpack.c.bf16 %v7715, %v7715
    %v7811 = vpack.c.bf16 %v7741, %v7741
    %v7812 = vld [vmem:[#allocation31] sm:$0xf]
    %v7813 = vld [vmem:[#allocation31 + $0x4] sm:$0xf]
    %v7814 = vld [vmem:[#allocation31 + $0x8] sm:$0xf]
    %v7815 = vld [vmem:[#allocation31 + $0xc] sm:$0xf]
    %v7816 = vpack.c.bf16 %v392, %v392
    %v7821 = vunpack.c.l.b16 %v7812
    %v7822 = vunpack.c.l.b16 %v7813
    %v7823 = vunpack.c.l.b16 %v7814
    %v7824 = vunpack.c.l.b16 %v7815
    %v7825 = vpack.c.b16 %v7822, %v7821
    %v7826 = vpack.c.b16 %v7824, %v7823
    %v7830 = vsel %vm1526, %v7816, 0
    %7832 = vmatpush.bf16.msra.mxu0 0
    %7833 = vmatpush.bf16.msra.mxu0 0
    %7834 = vmatpush.bf16.msra.mxu0 0
    %7835 = vmatpush.bf16.msra.mxu0 0
    %7836 = vmatpush.bf16.msra.mxu0 0
    %7837 = vmatpush.bf16.msra.mxu0 0
    %7838 = vmatpush.bf16.msra.mxu0 %v7826
    %7839 = vmatpush.bf16.msra.mxu0 %v7825
    %7840 = vmatmul.bf16.gmra.mxu0 %v7830
    %v7841 = vpop.f32.mrf.mxu0
    %v7842 = vadd.f32 0.0, %v7841
    %v7843 = vpop.f32.mrf.mxu0
    %7844 = vdwg.mxu0
    %v7909 = vunpack.c.l.b16 %v7744
    %v7910 = vunpack.c.l.b16 %v7745
    %v7911 = vunpack.c.l.b16 %v7746
    %v7912 = vunpack.c.l.b16 %v7747
    %v7913 = vunpack.c.l.b16 %v7748
    %v7914 = vunpack.c.l.b16 %v7749
    %v7915 = vunpack.c.l.b16 %v7750
    %v7916 = vunpack.c.l.b16 %v7751
    %v7917 = vunpack.c.l.b16 %v7752
    %v7918 = vunpack.c.l.b16 %v7753
    %v7919 = vunpack.c.l.b16 %v7754
    %v7920 = vunpack.c.l.b16 %v7755
    %v7921 = vunpack.c.l.b16 %v7756
    %v7922 = vunpack.c.l.b16 %v7757
    %v7923 = vunpack.c.l.b16 %v7758
    %v7924 = vunpack.c.l.b16 %v7759
    %v7925 = vunpack.c.l.b16 %v7760
    %v7926 = vunpack.c.l.b16 %v7761
    %v7927 = vunpack.c.l.b16 %v7762
    %v7928 = vunpack.c.l.b16 %v7763
    %v7929 = vunpack.c.l.b16 %v7764
    %v7930 = vunpack.c.l.b16 %v7765
    %v7931 = vunpack.c.l.b16 %v7766
    %v7932 = vunpack.c.l.b16 %v7767
    %v7933 = vunpack.c.l.b16 %v7768
    %v7934 = vunpack.c.l.b16 %v7769
    %v7935 = vunpack.c.l.b16 %v7770
    %v7936 = vunpack.c.l.b16 %v7771
    %v7937 = vunpack.c.l.b16 %v7772
    %v7938 = vunpack.c.l.b16 %v7773
    %v7939 = vunpack.c.l.b16 %v7774
    %v7940 = vunpack.c.l.b16 %v7775
    %v7941 = vunpack.c.l.b16 %v7776
    %v7942 = vunpack.c.l.b16 %v7777
    %v7943 = vunpack.c.l.b16 %v7778
    %v7944 = vunpack.c.l.b16 %v7779
    %v7945 = vunpack.c.l.b16 %v7780
    %v7946 = vunpack.c.l.b16 %v7781
    %v7947 = vunpack.c.l.b16 %v7782
    %v7948 = vunpack.c.l.b16 %v7783
    %v7949 = vunpack.c.l.b16 %v7784
    %v7950 = vunpack.c.l.b16 %v7785
    %v7951 = vunpack.c.l.b16 %v7786
    %v7952 = vunpack.c.l.b16 %v7787
    %v7953 = vunpack.c.l.b16 %v7788
    %v7954 = vunpack.c.l.b16 %v7789
    %v7955 = vunpack.c.l.b16 %v7790
    %v7956 = vunpack.c.l.b16 %v7791
    %v7957 = vunpack.c.l.b16 %v7792
    %v7958 = vunpack.c.l.b16 %v7793
    %v7959 = vunpack.c.l.b16 %v7794
    %v7960 = vunpack.c.l.b16 %v7795
    %v7961 = vunpack.c.l.b16 %v7796
    %v7962 = vunpack.c.l.b16 %v7797
    %v7963 = vunpack.c.l.b16 %v7798
    %v7964 = vunpack.c.l.b16 %v7799
    %v7965 = vunpack.c.l.b16 %v7800
    %v7966 = vunpack.c.l.b16 %v7801
    %v7967 = vunpack.c.l.b16 %v7802
    %v7968 = vunpack.c.l.b16 %v7803
    %v7969 = vunpack.c.l.b16 %v7804
    %v7970 = vunpack.c.l.b16 %v7805
    %v7971 = vunpack.c.l.b16 %v7806
    %v7972 = vunpack.c.l.b16 %v7807
    %v7973 = vpack.c.b16 %v7910, %v7909
    %v7974 = vpack.c.b16 %v7912, %v7911
    %v7975 = vpack.c.b16 %v7914, %v7913
    %v7976 = vpack.c.b16 %v7916, %v7915
    %v7977 = vpack.c.b16 %v7918, %v7917
    %v7978 = vpack.c.b16 %v7920, %v7919
    %v7979 = vpack.c.b16 %v7922, %v7921
    %v7980 = vpack.c.b16 %v7924, %v7923
    %v7981 = vpack.c.b16 %v7926, %v7925
    %v7982 = vpack.c.b16 %v7928, %v7927
    %v7983 = vpack.c.b16 %v7930, %v7929
    %v7984 = vpack.c.b16 %v7932, %v7931
    %v7985 = vpack.c.b16 %v7934, %v7933
    %v7986 = vpack.c.b16 %v7936, %v7935
    %v7987 = vpack.c.b16 %v7938, %v7937
    %v7988 = vpack.c.b16 %v7940, %v7939
    %v7989 = vpack.c.b16 %v7942, %v7941
    %v7990 = vpack.c.b16 %v7944, %v7943
    %v7991 = vpack.c.b16 %v7946, %v7945
    %v7992 = vpack.c.b16 %v7948, %v7947
    %v7993 = vpack.c.b16 %v7950, %v7949
    %v7994 = vpack.c.b16 %v7952, %v7951
    %v7995 = vpack.c.b16 %v7954, %v7953
    %v7996 = vpack.c.b16 %v7956, %v7955
    %v7997 = vpack.c.b16 %v7958, %v7957
    %v7998 = vpack.c.b16 %v7960, %v7959
    %v7999 = vpack.c.b16 %v7962, %v7961
    %v8000 = vpack.c.b16 %v7964, %v7963
    %v8001 = vpack.c.b16 %v7966, %v7965
    %v8002 = vpack.c.b16 %v7968, %v7967
    %v8003 = vpack.c.b16 %v7970, %v7969
    %v8004 = vpack.c.b16 %v7972, %v7971
    %8037 = vmatpush.bf16.msra.mxu0 %v7980
    %8038 = vmatpush.bf16.msra.mxu0 %v7979
    %8039 = vmatpush.bf16.msra.mxu0 %v7978
    %8040 = vmatpush.bf16.msra.mxu0 %v7977
    %8041 = vmatpush.bf16.msra.mxu0 %v7976
    %8042 = vmatpush.bf16.msra.mxu0 %v7975
    %8043 = vmatpush.bf16.msra.mxu0 %v7974
    %8044 = vmatpush.bf16.msra.mxu0 %v7973
    %8045 = vmatmul.bf16.gmra.mxu0 %v7808
    %v8046 = vpop.f32.mrf.mxu0
    %v8047 = vadd.f32 %v7842, %v8046
    %v8048 = vpop.f32.mrf.mxu0
    %8049 = vdwg.mxu0
    %8050 = vmatpush.bf16.msra.mxu0 %v7988
    %8051 = vmatpush.bf16.msra.mxu0 %v7987
    %8052 = vmatpush.bf16.msra.mxu0 %v7986
    %8053 = vmatpush.bf16.msra.mxu0 %v7985
    %8054 = vmatpush.bf16.msra.mxu0 %v7984
    %8055 = vmatpush.bf16.msra.mxu0 %v7983
    %8056 = vmatpush.bf16.msra.mxu0 %v7982
    %8057 = vmatpush.bf16.msra.mxu0 %v7981
    %8058 = vmatmul.bf16.gmra.mxu0 %v7809
    %v8059 = vpop.f32.mrf.mxu0
    %v8060 = vadd.f32 %v8047, %v8059
    %v8061 = vpop.f32.mrf.mxu0
    %8062 = vdwg.mxu0
    %8063 = vmatpush.bf16.msra.mxu0 %v7996
    %8064 = vmatpush.bf16.msra.mxu0 %v7995
    %8065 = vmatpush.bf16.msra.mxu0 %v7994
    %8066 = vmatpush.bf16.msra.mxu0 %v7993
    %8067 = vmatpush.bf16.msra.mxu0 %v7992
    %8068 = vmatpush.bf16.msra.mxu0 %v7991
    %8069 = vmatpush.bf16.msra.mxu0 %v7990
    %8070 = vmatpush.bf16.msra.mxu0 %v7989
    %8071 = vmatmul.bf16.gmra.mxu0 %v7810
    %v8072 = vpop.f32.mrf.mxu0
    %v8073 = vadd.f32 %v8060, %v8072
    %v8074 = vpop.f32.mrf.mxu0
    %8075 = vdwg.mxu0
    %8076 = vmatpush.bf16.msra.mxu0 %v8004
    %8077 = vmatpush.bf16.msra.mxu0 %v8003
    %8078 = vmatpush.bf16.msra.mxu0 %v8002
    %8079 = vmatpush.bf16.msra.mxu0 %v8001
    %8080 = vmatpush.bf16.msra.mxu0 %v8000
    %8081 = vmatpush.bf16.msra.mxu0 %v7999
    %8082 = vmatpush.bf16.msra.mxu0 %v7998
    %8083 = vmatpush.bf16.msra.mxu0 %v7997
    %8084 = vmatmul.bf16.gmra.mxu0 %v7811
    %v8085 = vpop.f32.mrf.mxu0
    %v8086 = vadd.f32 %v8073, %v8085
    %v8087 = vpop.f32.mrf.mxu0
    %8088 = vdwg.mxu0
    %v8089 = vld [vmem:[%s24] sm:$0x1]
    %v8091 = vperm.slane %v8089, 0
    %v8093 = vadd.f32 %v8086, %v8091
    %v8094 = vmax.f32 %v8093, 0.0
    %v8095 = vld [vmem:[%s25] sm:$0xf]
    %v8096 = vld [vmem:[%s25 + $0x4] sm:$0xf]
    %v8097 = vld [vmem:[%s25 + $0x8] sm:$0xf]
    %v8098 = vld [vmem:[%s25 + $0xc] sm:$0xf]
    %v8099 = vld [vmem:[%s25 + $0x10] sm:$0xf]
    %v8100 = vld [vmem:[%s25 + $0x14] sm:$0xf]
    %v8101 = vld [vmem:[%s25 + $0x18] sm:$0xf]
    %v8102 = vld [vmem:[%s25 + $0x1c] sm:$0xf]
    %v8103 = vld [vmem:[%s25 + $0x20] sm:$0xf]
    %v8104 = vld [vmem:[%s25 + $0x24] sm:$0xf]
    %v8105 = vld [vmem:[%s25 + $0x28] sm:$0xf]
    %v8106 = vld [vmem:[%s25 + $0x2c] sm:$0xf]
    %v8107 = vld [vmem:[%s25 + $0x30] sm:$0xf]
    %v8108 = vld [vmem:[%s25 + $0x34] sm:$0xf]
    %v8109 = vld [vmem:[%s25 + $0x38] sm:$0xf]
    %v8110 = vld [vmem:[%s25 + $0x3c] sm:$0xf]
    %v8111 = vpack.c.bf16 %v8094, %v8094
    %v8112 = vld [vmem:[%s26] sm:$0x1]
    %v8114 = vperm.slane %v8112, 0
    %v8132 = vunpack.c.l.b16 %v8095
    %v8133 = vunpack.c.l.b16 %v8096
    %v8134 = vunpack.c.l.b16 %v8097
    %v8135 = vunpack.c.l.b16 %v8098
    %v8136 = vunpack.c.l.b16 %v8099
    %v8137 = vunpack.c.l.b16 %v8100
    %v8138 = vunpack.c.l.b16 %v8101
    %v8139 = vunpack.c.l.b16 %v8102
    %v8140 = vunpack.c.l.b16 %v8103
    %v8141 = vunpack.c.l.b16 %v8104
    %v8142 = vunpack.c.l.b16 %v8105
    %v8143 = vunpack.c.l.b16 %v8106
    %v8144 = vunpack.c.l.b16 %v8107
    %v8145 = vunpack.c.l.b16 %v8108
    %v8146 = vunpack.c.l.b16 %v8109
    %v8147 = vunpack.c.l.b16 %v8110
    %v8148 = vpack.c.b16 %v8133, %v8132
    %v8149 = vpack.c.b16 %v8135, %v8134
    %v8150 = vpack.c.b16 %v8137, %v8136
    %v8151 = vpack.c.b16 %v8139, %v8138
    %v8152 = vpack.c.b16 %v8141, %v8140
    %v8153 = vpack.c.b16 %v8143, %v8142
    %v8154 = vpack.c.b16 %v8145, %v8144
    %v8155 = vpack.c.b16 %v8147, %v8146
    %8164 = vmatpush.bf16.msra.mxu0 %v8155
    %8165 = vmatpush.bf16.msra.mxu0 %v8154
    %8166 = vmatpush.bf16.msra.mxu0 %v8153
    %8167 = vmatpush.bf16.msra.mxu0 %v8152
    %8168 = vmatpush.bf16.msra.mxu0 %v8151
    %8169 = vmatpush.bf16.msra.mxu0 %v8150
    %8170 = vmatpush.bf16.msra.mxu0 %v8149
    %8171 = vmatpush.bf16.msra.mxu0 %v8148
    %8172 = vmatmul.bf16.gmra.mxu0 %v8111
    %v8173 = vpop.f32.mrf.mxu0
    %v8174 = vadd.f32 %v8114, %v8173
    %v8175 = vpop.f32.mrf.mxu0
    %8176 = vdwg.mxu0
    %vm8177 = vcmask 74752
    %8178 = vst.msk [vmem:[#allocation32] sm:$0x3] %vm8177, %v8174
    // Predicated region
    $region186: #{_lambda_.1} parent=1 // pred_check
      _
    $region187: #{_lambda_.1} parent=1 // pred_check_branch
      %8180 = sbr.rel (0) target = $region189
    $region188: #{_lambda_.1} parent=1 // pred_region
      %8182 = vsyncadd [#allocation4], 0
      %s8184 = sshll.u32 [#allocation32], 4
      %s8185 = int_to_ptr.vmem [resolvable:$true] %s8184
      %s8186 = sshll.u32 %s27, 4
      %s8187 = int_to_ptr.hbm [resolvable:$true] %s8186
      %8189 = dma.vmem_to_hbm [thread:$0]  %s8185, 32, %s8187, [#allocation4]
    $region189: #{_lambda_.1} parent=1 // pred_fallthru
      _
    // Predicated region
    $region190: #{_lambda_.1} parent=1 // pred_check
      _
    $region191: #{_lambda_.1} parent=1 // pred_check_branch
      %8191 = sbr.rel (0) target = $region193
    $region192: #{_lambda_.1} parent=1 // pred_region
      %8193 = dma.done [#allocation4], 32
    $region193: #{_lambda_.1} parent=1 // pred_fallthru
      _
    %8194 = vsyncpa [#allocation3], 1
    %8195 = vsyncpa [#allocation6], 1
    %8196 = vsyncpa [#allocation9], 1
    %8197 = vsyncpa [#allocation12], 1
    %8198 = vsyncpa [#allocation15], 1
    %8199 = vsyncpa [#allocation18], 1
    %8200 = vsyncpa [#allocation21], 1
    %8201 = vsyncpa [#allocation24], 1
    %8202 = vsyncpa [#allocation27], 1
    %8203 = vsyncpa [#allocation30], 1
    %8204 = vsyncpa [#allocation4], 1

</llo_original>
